<compile_context>
chip_gen: v7x
topology: tpu7x:2x2x1
jax: 0.10.0
libtpu: 0.0.40
codegen_flags: <defaults>
</compile_context>

<pallas_src>
import jax
import jax.numpy as jnp
from jax.experimental import pallas as pl
from jax.experimental.pallas import tpu as pltpu

LANE = 128


def basic_block_kernel(x_ref, w1_ref, b1_ref, w2_ref, b2_ref, out_ref,
                       xpad_s, patch_s):
    """Fused BasicBlock forward for one image (one grid step).

    x_ref   : (1, H, W, Cp)   input image block, NHWC, channels padded to Cp (mult of 128)
    w1_ref  : (9*Cp, Cp)      im2col conv1 weights (BN1 scale folded in)
    b1_ref  : (1, Cp)         folded BN1 bias (f32)
    w2_ref  : (9*Cp, Cp)      im2col conv2 weights (BN2 scale folded in)
    b2_ref  : (1, Cp)         folded BN2 bias (f32)
    out_ref : (1, H, W, Cp)   output block (f32)
    xpad_s  : VMEM (H+2, W+2, Cp)  spatially padded scratch, reused by both convs
    patch_s : VMEM (H*W, 9*Cp)     im2col patch buffer, reused by both convs
    """
    _, H, W, Cp = x_ref.shape
    Hp, Wp = H + 2, W + 2
    cdt = xpad_s.dtype

    # --- zero ONLY the 1-pixel halo border of the padded scratch (not the whole buffer) ---
    xpad_s[0:1, :, :] = jnp.zeros((1, Wp, Cp), cdt)
    xpad_s[Hp - 1:Hp, :, :] = jnp.zeros((1, Wp, Cp), cdt)
    xpad_s[:, 0:1, :] = jnp.zeros((Hp, 1, Cp), cdt)
    xpad_s[:, Wp - 1:Wp, :] = jnp.zeros((Hp, 1, Cp), cdt)

    def im2col():
        # 9 shifted taps -> lane-aligned column blocks of the patch buffer
        # (column offsets t*Cp are multiples of 128 -> unmasked stores).
        for kh in range(3):
            for kw in range(3):
                t = kh * 3 + kw
                patch_s[:, t * Cp:(t + 1) * Cp] = (
                    xpad_s[kh:kh + H, kw:kw + W, :].reshape(H * W, Cp))

    # ---------------- conv1 (single K=9*Cp matmul) -> BN1 -> ReLU ----------------
    xpad_s[1:H + 1, 1:W + 1, :] = x_ref[0]
    im2col()
    y = jnp.dot(patch_s[...], w1_ref[...], preferred_element_type=jnp.float32)
    y = jnp.maximum(y + b1_ref[...], 0.0)

    # ------------- conv2 (single K=9*Cp matmul) -> BN2 -> +identity -> ReLU -------------
    # Reuse the padded scratch: the border is still zero, only the interior is overwritten.
    xpad_s[1:H + 1, 1:W + 1, :] = y.reshape(H, W, Cp).astype(cdt)
    im2col()
    z = jnp.dot(patch_s[...], w2_ref[...], preferred_element_type=jnp.float32)
    z = z + b2_ref[...]
    # residual: identity comes straight from the resident input block (no extra HBM read)
    z = z + x_ref[0].astype(jnp.float32).reshape(H * W, Cp)
    out_ref[...] = jnp.maximum(z, 0.0).reshape(1, H, W, Cp).astype(out_ref.dtype)


def fold_bn(gamma, beta, running_mean, running_var, eps=1e-5):
    scale = gamma / jnp.sqrt(running_var + eps)
    bias = beta - running_mean * scale
    return scale, bias


def basic_block_forward(x_nchw, w1_oihw, bn1, w2_oihw, bn2, eps=1e-5,
                        compute_dtype=jnp.float32):
    """NCHW wrapper around the fused NHWC Pallas kernel.

    compute_dtype: jnp.float32 (default, matches PyTorch numerics) or jnp.bfloat16
    (halves HBM/VMEM traffic, MXU accumulation stays f32, epilogue stays f32).
    """
    N, C, H, W = x_nchw.shape
    Cout = w1_oihw.shape[0]
    assert Cout == C, "stride=1 / downsample=None BasicBlock requires inplanes == planes"

    Cp = ((C + LANE - 1) // LANE) * LANE   # lane-dense channel axis

    # NCHW -> NHWC, zero-pad channels to Cp (single layout pass; no spatial pad here).
    x = jnp.transpose(x_nchw, (0, 2, 3, 1))
    if Cp != C:
        x = jnp.pad(x, ((0, 0), (0, 0), (0, 0), (0, Cp - C)))
    x = x.astype(compute_dtype)

    s1, b1 = fold_bn(*bn1, eps=eps)
    s2, b2 = fold_bn(*bn2, eps=eps)

    def prep_w(w_oihw, scale):
        # OIHW (Cout,Cin,3,3) -> (kh,kw,Cin,Cout) -> (9,Cin,Cout); fold BN scale into Cout;
        # zero-pad both channel dims to Cp; flatten taps -> (9*Cp, Cp) im2col weight.
        w = jnp.transpose(w_oihw, (2, 3, 1, 0)).reshape(9, C, C)
        w = w * scale[None, None, :]
        if Cp != C:
            w = jnp.pad(w, ((0, 0), (0, Cp - C), (0, Cp - C)))
        return w.reshape(9 * Cp, Cp).astype(compute_dtype)

    def prep_b(bias):
        if Cp != C:
            bias = jnp.pad(bias, ((0, Cp - C),))
        return bias.reshape(1, Cp).astype(jnp.float32)

    w1p, w2p = prep_w(w1_oihw, s1), prep_w(w2_oihw, s2)
    b1p, b2p = prep_b(b1), prep_b(b2)

    out_nhwc = pl.pallas_call(
        basic_block_kernel,
        out_shape=jax.ShapeDtypeStruct((N, H, W, Cp), jnp.float32),
        grid_spec=pltpu.PrefetchScalarGridSpec(
            num_scalar_prefetch=0,
            grid=(N,),
            in_specs=[
                pl.BlockSpec((1, H, W, Cp), lambda n: (n, 0, 0, 0)),   # x (per-image block)
                pl.BlockSpec((9 * Cp, Cp), lambda n: (0, 0)),          # w1 (resident)
                pl.BlockSpec((1, Cp), lambda n: (0, 0)),               # b1
                pl.BlockSpec((9 * Cp, Cp), lambda n: (0, 0)),          # w2
                pl.BlockSpec((1, Cp), lambda n: (0, 0)),               # b2
            ],
            out_specs=pl.BlockSpec((1, H, W, Cp), lambda n: (n, 0, 0, 0)),
            scratch_shapes=[
                pltpu.VMEM((H + 2, W + 2, Cp), compute_dtype),   # padded image scratch
                pltpu.VMEM((H * W, 9 * Cp), compute_dtype),      # im2col patch buffer
            ],
        ),
        compiler_params=pltpu.CompilerParams(
            dimension_semantics=("parallel",),          # shard batch across TCs (v7x)
            vmem_limit_bytes=32 * 1024 * 1024,          # safe on v5e/v6e (128 MiB) & v7x (64 MiB)
        ),
    )(x, w1p, b1p, w2p, b2p)

    out_nhwc = out_nhwc[..., :C]                        # strip channel padding
    return jnp.transpose(out_nhwc, (0, 3, 1, 2))        # back to NCHW


# ----------------------------- pure-JAX reference ----------------------------
def ref_forward(x, w1, bn1, w2, bn2, eps=1e-5):
    def conv(x, w):
        return jax.lax.conv_general_dilated(
            x, w, window_strides=(1, 1), padding=((1, 1), (1, 1)),
            dimension_numbers=("NCHW", "OIHW", "NCHW"))

    def bn(x, params):
        g, b, rm, rv = params
        g = g[None, :, None, None]; b = b[None, :, None, None]
        rm = rm[None, :, None, None]; rv = rv[None, :, None, None]
        return (x - rm) / jnp.sqrt(rv + eps) * g + b

    out = jax.nn.relu(bn(conv(x, w1), bn1))
    out = bn(conv(out, w2), bn2)
    return jax.nn.relu(out + x)


if __name__ == "__main__":
    key = jax.random.PRNGKey(0)
    ks = jax.random.split(key, 11)

    N, C, H, W = 2, 8, 16, 16       # inplanes == planes == 8, stride 1
    x = jax.random.normal(ks[0], (N, C, H, W), jnp.float32)

    # conv weights in PyTorch OIHW layout (bias=False)
    w1 = jax.random.normal(ks[1], (C, C, 3, 3), jnp.float32) * 0.1
    w2 = jax.random.normal(ks[2], (C, C, 3, 3), jnp.float32) * 0.1

    # BatchNorm parameters (gamma, beta, running_mean, running_var)
    bn1 = (1.0 + 0.1 * jax.random.normal(ks[3], (C,), jnp.float32),
           0.1 * jax.random.normal(ks[4], (C,), jnp.float32),
           0.1 * jax.random.normal(ks[5], (C,), jnp.float32),
           0.5 + jnp.abs(jax.random.normal(ks[6], (C,), jnp.float32)))
    bn2 = (1.0 + 0.1 * jax.random.normal(ks[7], (C,), jnp.float32),
           0.1 * jax.random.normal(ks[8], (C,), jnp.float32),
           0.1 * jax.random.normal(ks[9], (C,), jnp.float32),
           0.5 + jnp.abs(jax.random.normal(ks[10], (C,), jnp.float32)))

    out = jax.block_until_ready(basic_block_forward(x, w1, bn1, w2, bn2))
    ref = jax.block_until_ready(ref_forward(x, w1, bn1, w2, bn2))

    assert out.shape == (N, C, H, W)
    max_err = jnp.max(jnp.abs(out - ref))
    assert jnp.allclose(out, ref, atol=1e-4, rtol=1e-4), f"max abs diff = {max_err}"

    print("KERNEL_OK")
</pallas_src>

<mosaic_0001>
module attributes {stable_mosaic.version = 11 : i64} {
  func.func @basic_block_kernel(%arg0: i32, %arg1: memref<1x16x16x128xf32, #tpu.memory_space<vmem>>, %arg2: memref<1152x128xf32, #tpu.memory_space<vmem>>, %arg3: memref<1x128xf32, #tpu.memory_space<vmem>>, %arg4: memref<1152x128xf32, #tpu.memory_space<vmem>>, %arg5: memref<1x128xf32, #tpu.memory_space<vmem>>, %arg6: memref<1x16x16x128xf32, #tpu.memory_space<vmem>>, %arg7: memref<18x18x128xf32, #tpu.memory_space<vmem>>, %arg8: memref<256x1152xf32, #tpu.memory_space<vmem>>) attributes {dimension_semantics = [#tpu.dimension_semantics<parallel>], iteration_bounds = array<i64: 2>, scalar_prefetch = 0 : i64, scratch_operands = 2 : i64, tpu.core_type = #tpu.core_type<tc>, window_params = [{transform_indices = @transform_0, window_bounds = array<i64: 1, 16, 16, 128>}, {pipeline_mode = #tpu.pipeline_mode<synchronous>, transform_indices = @transform_1, window_bounds = array<i64: 1152, 128>}, {pipeline_mode = #tpu.pipeline_mode<synchronous>, transform_indices = @transform_2, window_bounds = array<i64: 1, 128>}, {pipeline_mode = #tpu.pipeline_mode<synchronous>, transform_indices = @transform_3, window_bounds = array<i64: 1152, 128>}, {pipeline_mode = #tpu.pipeline_mode<synchronous>, transform_indices = @transform_4, window_bounds = array<i64: 1, 128>}, {transform_indices = @transform_5, window_bounds = array<i64: 1, 16, 16, 128>}]} {
    %cst = arith.constant 0.000000e+00 : f32
    %0 = vector.broadcast %cst : f32 to vector<1x18x128xf32>
    %c0 = arith.constant 0 : index
    %c0_0 = arith.constant 0 : index
    %c0_1 = arith.constant 0 : index
    %1 = vector.load %arg7[%c0, %c0_0, %c0_1] : memref<18x18x128xf32, #tpu.memory_space<vmem>>, vector<1x18x128xf32>
    tpu.vector_store %arg7[%c0, %c0_0, %c0_1], %0 {strides = array<i32>} : memref<18x18x128xf32, #tpu.memory_space<vmem>>, vector<1x18x128xf32>,
    %cst_2 = arith.constant 0.000000e+00 : f32
    %2 = vector.broadcast %cst_2 : f32 to vector<1x18x128xf32>
    %c17 = arith.constant 17 : index
    %c0_3 = arith.constant 0 : index
    %c0_4 = arith.constant 0 : index
    %3 = vector.load %arg7[%c17, %c0_3, %c0_4] : memref<18x18x128xf32, #tpu.memory_space<vmem>>, vector<1x18x128xf32>
    tpu.vector_store %arg7[%c17, %c0_3, %c0_4], %2 {strides = array<i32>} : memref<18x18x128xf32, #tpu.memory_space<vmem>>, vector<1x18x128xf32>,
    %cst_5 = arith.constant 0.000000e+00 : f32
    %4 = vector.broadcast %cst_5 : f32 to vector<18x1x128xf32>
    %c0_6 = arith.constant 0 : index
    %c0_7 = arith.constant 0 : index
    %c0_8 = arith.constant 0 : index
    %5 = vector.load %arg7[%c0_6, %c0_7, %c0_8] : memref<18x18x128xf32, #tpu.memory_space<vmem>>, vector<18x1x128xf32>
    tpu.vector_store %arg7[%c0_6, %c0_7, %c0_8], %4 {strides = array<i32>} : memref<18x18x128xf32, #tpu.memory_space<vmem>>, vector<18x1x128xf32>,
    %cst_9 = arith.constant 0.000000e+00 : f32
    %6 = vector.broadcast %cst_9 : f32 to vector<18x1x128xf32>
    %c0_10 = arith.constant 0 : index
    %c17_11 = arith.constant 17 : index
    %c0_12 = arith.constant 0 : index
    %7 = vector.load %arg7[%c0_10, %c17_11, %c0_12] : memref<18x18x128xf32, #tpu.memory_space<vmem>>, vector<18x1x128xf32>
    tpu.vector_store %arg7[%c0_10, %c17_11, %c0_12], %6 {strides = array<i32>} : memref<18x18x128xf32, #tpu.memory_space<vmem>>, vector<18x1x128xf32>,
    %c0_13 = arith.constant 0 : index
    %c0_14 = arith.constant 0 : index
    %c0_15 = arith.constant 0 : index
    %c0_16 = arith.constant 0 : index
    %8 = vector.load %arg1[%c0_13, %c0_14, %c0_15, %c0_16] : memref<1x16x16x128xf32, #tpu.memory_space<vmem>>, vector<1x16x16x128xf32>
    %9 = vector.shape_cast %8 : vector<1x16x16x128xf32> to vector<16x16x128xf32>
    %c1 = arith.constant 1 : index
    %c1_17 = arith.constant 1 : index
    %c0_18 = arith.constant 0 : index
    %10 = vector.load %arg7[%c1, %c1_17, %c0_18] : memref<18x18x128xf32, #tpu.memory_space<vmem>>, vector<16x16x128xf32>
    tpu.vector_store %arg7[%c1, %c1_17, %c0_18], %9 {strides = array<i32>} : memref<18x18x128xf32, #tpu.memory_space<vmem>>, vector<16x16x128xf32>,
    %c0_19 = arith.constant 0 : index
    %c0_20 = arith.constant 0 : index
    %c0_21 = arith.constant 0 : index
    %11 = vector.load %arg7[%c0_19, %c0_20, %c0_21] : memref<18x18x128xf32, #tpu.memory_space<vmem>>, vector<16x16x128xf32>
    %12 = vector.shape_cast %11 : vector<16x16x128xf32> to vector<256x128xf32>
    %c0_22 = arith.constant 0 : index
    %c0_23 = arith.constant 0 : index
    %13 = vector.load %arg8[%c0_22, %c0_23] : memref<256x1152xf32, #tpu.memory_space<vmem>>, vector<256x128xf32>
    tpu.vector_store %arg8[%c0_22, %c0_23], %12 {strides = array<i32>} : memref<256x1152xf32, #tpu.memory_space<vmem>>, vector<256x128xf32>,
    %c0_24 = arith.constant 0 : index
    %c1_25 = arith.constant 1 : index
    %c0_26 = arith.constant 0 : index
    %14 = vector.load %arg7[%c0_24, %c1_25, %c0_26] : memref<18x18x128xf32, #tpu.memory_space<vmem>>, vector<16x16x128xf32>
    %15 = vector.shape_cast %14 : vector<16x16x128xf32> to vector<256x128xf32>
    %c0_27 = arith.constant 0 : index
    %c128 = arith.constant 128 : index
    %16 = vector.load %arg8[%c0_27, %c128] : memref<256x1152xf32, #tpu.memory_space<vmem>>, vector<256x128xf32>
    tpu.vector_store %arg8[%c0_27, %c128], %15 {strides = array<i32>} : memref<256x1152xf32, #tpu.memory_space<vmem>>, vector<256x128xf32>,
    %c0_28 = arith.constant 0 : index
    %c2 = arith.constant 2 : index
    %c0_29 = arith.constant 0 : index
    %17 = vector.load %arg7[%c0_28, %c2, %c0_29] : memref<18x18x128xf32, #tpu.memory_space<vmem>>, vector<16x16x128xf32>
    %18 = vector.shape_cast %17 : vector<16x16x128xf32> to vector<256x128xf32>
    %c0_30 = arith.constant 0 : index
    %c256 = arith.constant 256 : index
    %19 = vector.load %arg8[%c0_30, %c256] : memref<256x1152xf32, #tpu.memory_space<vmem>>, vector<256x128xf32>
    tpu.vector_store %arg8[%c0_30, %c256], %18 {strides = array<i32>} : memref<256x1152xf32, #tpu.memory_space<vmem>>, vector<256x128xf32>,
    %c1_31 = arith.constant 1 : index
    %c0_32 = arith.constant 0 : index
    %c0_33 = arith.constant 0 : index
    %20 = vector.load %arg7[%c1_31, %c0_32, %c0_33] : memref<18x18x128xf32, #tpu.memory_space<vmem>>, vector<16x16x128xf32>
    %21 = vector.shape_cast %20 : vector<16x16x128xf32> to vector<256x128xf32>
    %c0_34 = arith.constant 0 : index
    %c384 = arith.constant 384 : index
    %22 = vector.load %arg8[%c0_34, %c384] : memref<256x1152xf32, #tpu.memory_space<vmem>>, vector<256x128xf32>
    tpu.vector_store %arg8[%c0_34, %c384], %21 {strides = array<i32>} : memref<256x1152xf32, #tpu.memory_space<vmem>>, vector<256x128xf32>,
    %c1_35 = arith.constant 1 : index
    %c1_36 = arith.constant 1 : index
    %c0_37 = arith.constant 0 : index
    %23 = vector.load %arg7[%c1_35, %c1_36, %c0_37] : memref<18x18x128xf32, #tpu.memory_space<vmem>>, vector<16x16x128xf32>
    %24 = vector.shape_cast %23 : vector<16x16x128xf32> to vector<256x128xf32>
    %c0_38 = arith.constant 0 : index
    %c512 = arith.constant 512 : index
    %25 = vector.load %arg8[%c0_38, %c512] : memref<256x1152xf32, #tpu.memory_space<vmem>>, vector<256x128xf32>
    tpu.vector_store %arg8[%c0_38, %c512], %24 {strides = array<i32>} : memref<256x1152xf32, #tpu.memory_space<vmem>>, vector<256x128xf32>,
    %c1_39 = arith.constant 1 : index
    %c2_40 = arith.constant 2 : index
    %c0_41 = arith.constant 0 : index
    %26 = vector.load %arg7[%c1_39, %c2_40, %c0_41] : memref<18x18x128xf32, #tpu.memory_space<vmem>>, vector<16x16x128xf32>
    %27 = vector.shape_cast %26 : vector<16x16x128xf32> to vector<256x128xf32>
    %c0_42 = arith.constant 0 : index
    %c640 = arith.constant 640 : index
    %28 = vector.load %arg8[%c0_42, %c640] : memref<256x1152xf32, #tpu.memory_space<vmem>>, vector<256x128xf32>
    tpu.vector_store %arg8[%c0_42, %c640], %27 {strides = array<i32>} : memref<256x1152xf32, #tpu.memory_space<vmem>>, vector<256x128xf32>,
    %c2_43 = arith.constant 2 : index
    %c0_44 = arith.constant 0 : index
    %c0_45 = arith.constant 0 : index
    %29 = vector.load %arg7[%c2_43, %c0_44, %c0_45] : memref<18x18x128xf32, #tpu.memory_space<vmem>>, vector<16x16x128xf32>
    %30 = vector.shape_cast %29 : vector<16x16x128xf32> to vector<256x128xf32>
    %c0_46 = arith.constant 0 : index
    %c768 = arith.constant 768 : index
    %31 = vector.load %arg8[%c0_46, %c768] : memref<256x1152xf32, #tpu.memory_space<vmem>>, vector<256x128xf32>
    tpu.vector_store %arg8[%c0_46, %c768], %30 {strides = array<i32>} : memref<256x1152xf32, #tpu.memory_space<vmem>>, vector<256x128xf32>,
    %c2_47 = arith.constant 2 : index
    %c1_48 = arith.constant 1 : index
    %c0_49 = arith.constant 0 : index
    %32 = vector.load %arg7[%c2_47, %c1_48, %c0_49] : memref<18x18x128xf32, #tpu.memory_space<vmem>>, vector<16x16x128xf32>
    %33 = vector.shape_cast %32 : vector<16x16x128xf32> to vector<256x128xf32>
    %c0_50 = arith.constant 0 : index
    %c896 = arith.constant 896 : index
    %34 = vector.load %arg8[%c0_50, %c896] : memref<256x1152xf32, #tpu.memory_space<vmem>>, vector<256x128xf32>
    tpu.vector_store %arg8[%c0_50, %c896], %33 {strides = array<i32>} : memref<256x1152xf32, #tpu.memory_space<vmem>>, vector<256x128xf32>,
    %c2_51 = arith.constant 2 : index
    %c2_52 = arith.constant 2 : index
    %c0_53 = arith.constant 0 : index
    %35 = vector.load %arg7[%c2_51, %c2_52, %c0_53] : memref<18x18x128xf32, #tpu.memory_space<vmem>>, vector<16x16x128xf32>
    %36 = vector.shape_cast %35 : vector<16x16x128xf32> to vector<256x128xf32>
    %c0_54 = arith.constant 0 : index
    %c1024 = arith.constant 1024 : index
    %37 = vector.load %arg8[%c0_54, %c1024] : memref<256x1152xf32, #tpu.memory_space<vmem>>, vector<256x128xf32>
    tpu.vector_store %arg8[%c0_54, %c1024], %36 {strides = array<i32>} : memref<256x1152xf32, #tpu.memory_space<vmem>>, vector<256x128xf32>,
    %c0_55 = arith.constant 0 : index
    %c0_56 = arith.constant 0 : index
    %38 = vector.load %arg8[%c0_55, %c0_56] : memref<256x1152xf32, #tpu.memory_space<vmem>>, vector<256x1152xf32>
    %c0_57 = arith.constant 0 : index
    %c0_58 = arith.constant 0 : index
    %39 = vector.load %arg2[%c0_57, %c0_58] : memref<1152x128xf32, #tpu.memory_space<vmem>>, vector<1152x128xf32>
    %cst_59 = arith.constant dense<0.000000e+00> : vector<256x128xf32>
    %40 = tpu.matmul %38, %39, %cst_59 {dimension_numbers = #tpu.dot_dimension_numbers<[1], [0], [0], [1], [0, 0, 1, 1], [], []>} : vector<256x1152xf32>, vector<1152x128xf32>, vector<256x128xf32> -> vector<256x128xf32>
    %c0_60 = arith.constant 0 : index
    %c0_61 = arith.constant 0 : index
    %41 = vector.load %arg3[%c0_60, %c0_61] : memref<1x128xf32, #tpu.memory_space<vmem>>, vector<1x128xf32>
    %42 = vector.broadcast %41 : vector<1x128xf32> to vector<256x128xf32>
    %43 = arith.addf %40, %42 : vector<256x128xf32>
    %cst_62 = arith.constant 0.000000e+00 : f32
    %44 = vector.broadcast %cst_62 : f32 to vector<256x128xf32>
    %45 = arith.maximumf %43, %44 : vector<256x128xf32>
    %46 = vector.shape_cast %45 : vector<256x128xf32> to vector<16x16x128xf32>
    %c1_63 = arith.constant 1 : index
    %c1_64 = arith.constant 1 : index
    %c0_65 = arith.constant 0 : index
    %47 = vector.load %arg7[%c1_63, %c1_64, %c0_65] : memref<18x18x128xf32, #tpu.memory_space<vmem>>, vector<16x16x128xf32>
    tpu.vector_store %arg7[%c1_63, %c1_64, %c0_65], %46 {strides = array<i32>} : memref<18x18x128xf32, #tpu.memory_space<vmem>>, vector<16x16x128xf32>,
    %c0_66 = arith.constant 0 : index
    %c0_67 = arith.constant 0 : index
    %c0_68 = arith.constant 0 : index
    %48 = vector.load %arg7[%c0_66, %c0_67, %c0_68] : memref<18x18x128xf32, #tpu.memory_space<vmem>>, vector<16x16x128xf32>
    %49 = vector.shape_cast %48 : vector<16x16x128xf32> to vector<256x128xf32>
    %c0_69 = arith.constant 0 : index
    %c0_70 = arith.constant 0 : index
    %50 = vector.load %arg8[%c0_69, %c0_70] : memref<256x1152xf32, #tpu.memory_space<vmem>>, vector<256x128xf32>
    tpu.vector_store %arg8[%c0_69, %c0_70], %49 {strides = array<i32>} : memref<256x1152xf32, #tpu.memory_space<vmem>>, vector<256x128xf32>,
    %c0_71 = arith.constant 0 : index
    %c1_72 = arith.constant 1 : index
    %c0_73 = arith.constant 0 : index
    %51 = vector.load %arg7[%c0_71, %c1_72, %c0_73] : memref<18x18x128xf32, #tpu.memory_space<vmem>>, vector<16x16x128xf32>
    %52 = vector.shape_cast %51 : vector<16x16x128xf32> to vector<256x128xf32>
    %c0_74 = arith.constant 0 : index
    %c128_75 = arith.constant 128 : index
    %53 = vector.load %arg8[%c0_74, %c128_75] : memref<256x1152xf32, #tpu.memory_space<vmem>>, vector<256x128xf32>
    tpu.vector_store %arg8[%c0_74, %c128_75], %52 {strides = array<i32>} : memref<256x1152xf32, #tpu.memory_space<vmem>>, vector<256x128xf32>,
    %c0_76 = arith.constant 0 : index
    %c2_77 = arith.constant 2 : index
    %c0_78 = arith.constant 0 : index
    %54 = vector.load %arg7[%c0_76, %c2_77, %c0_78] : memref<18x18x128xf32, #tpu.memory_space<vmem>>, vector<16x16x128xf32>
    %55 = vector.shape_cast %54 : vector<16x16x128xf32> to vector<256x128xf32>
    %c0_79 = arith.constant 0 : index
    %c256_80 = arith.constant 256 : index
    %56 = vector.load %arg8[%c0_79, %c256_80] : memref<256x1152xf32, #tpu.memory_space<vmem>>, vector<256x128xf32>
    tpu.vector_store %arg8[%c0_79, %c256_80], %55 {strides = array<i32>} : memref<256x1152xf32, #tpu.memory_space<vmem>>, vector<256x128xf32>,
    %c1_81 = arith.constant 1 : index
    %c0_82 = arith.constant 0 : index
    %c0_83 = arith.constant 0 : index
    %57 = vector.load %arg7[%c1_81, %c0_82, %c0_83] : memref<18x18x128xf32, #tpu.memory_space<vmem>>, vector<16x16x128xf32>
    %58 = vector.shape_cast %57 : vector<16x16x128xf32> to vector<256x128xf32>
    %c0_84 = arith.constant 0 : index
    %c384_85 = arith.constant 384 : index
    %59 = vector.load %arg8[%c0_84, %c384_85] : memref<256x1152xf32, #tpu.memory_space<vmem>>, vector<256x128xf32>
    tpu.vector_store %arg8[%c0_84, %c384_85], %58 {strides = array<i32>} : memref<256x1152xf32, #tpu.memory_space<vmem>>, vector<256x128xf32>,
    %c1_86 = arith.constant 1 : index
    %c1_87 = arith.constant 1 : index
    %c0_88 = arith.constant 0 : index
    %60 = vector.load %arg7[%c1_86, %c1_87, %c0_88] : memref<18x18x128xf32, #tpu.memory_space<vmem>>, vector<16x16x128xf32>
    %61 = vector.shape_cast %60 : vector<16x16x128xf32> to vector<256x128xf32>
    %c0_89 = arith.constant 0 : index
    %c512_90 = arith.constant 512 : index
    %62 = vector.load %arg8[%c0_89, %c512_90] : memref<256x1152xf32, #tpu.memory_space<vmem>>, vector<256x128xf32>
    tpu.vector_store %arg8[%c0_89, %c512_90], %61 {strides = array<i32>} : memref<256x1152xf32, #tpu.memory_space<vmem>>, vector<256x128xf32>,
    %c1_91 = arith.constant 1 : index
    %c2_92 = arith.constant 2 : index
    %c0_93 = arith.constant 0 : index
    %63 = vector.load %arg7[%c1_91, %c2_92, %c0_93] : memref<18x18x128xf32, #tpu.memory_space<vmem>>, vector<16x16x128xf32>
    %64 = vector.shape_cast %63 : vector<16x16x128xf32> to vector<256x128xf32>
    %c0_94 = arith.constant 0 : index
    %c640_95 = arith.constant 640 : index
    %65 = vector.load %arg8[%c0_94, %c640_95] : memref<256x1152xf32, #tpu.memory_space<vmem>>, vector<256x128xf32>
    tpu.vector_store %arg8[%c0_94, %c640_95], %64 {strides = array<i32>} : memref<256x1152xf32, #tpu.memory_space<vmem>>, vector<256x128xf32>,
    %c2_96 = arith.constant 2 : index
    %c0_97 = arith.constant 0 : index
    %c0_98 = arith.constant 0 : index
    %66 = vector.load %arg7[%c2_96, %c0_97, %c0_98] : memref<18x18x128xf32, #tpu.memory_space<vmem>>, vector<16x16x128xf32>
    %67 = vector.shape_cast %66 : vector<16x16x128xf32> to vector<256x128xf32>
    %c0_99 = arith.constant 0 : index
    %c768_100 = arith.constant 768 : index
    %68 = vector.load %arg8[%c0_99, %c768_100] : memref<256x1152xf32, #tpu.memory_space<vmem>>, vector<256x128xf32>
    tpu.vector_store %arg8[%c0_99, %c768_100], %67 {strides = array<i32>} : memref<256x1152xf32, #tpu.memory_space<vmem>>, vector<256x128xf32>,
    %c2_101 = arith.constant 2 : index
    %c1_102 = arith.constant 1 : index
    %c0_103 = arith.constant 0 : index
    %69 = vector.load %arg7[%c2_101, %c1_102, %c0_103] : memref<18x18x128xf32, #tpu.memory_space<vmem>>, vector<16x16x128xf32>
    %70 = vector.shape_cast %69 : vector<16x16x128xf32> to vector<256x128xf32>
    %c0_104 = arith.constant 0 : index
    %c896_105 = arith.constant 896 : index
    %71 = vector.load %arg8[%c0_104, %c896_105] : memref<256x1152xf32, #tpu.memory_space<vmem>>, vector<256x128xf32>
    tpu.vector_store %arg8[%c0_104, %c896_105], %70 {strides = array<i32>} : memref<256x1152xf32, #tpu.memory_space<vmem>>, vector<256x128xf32>,
    %c2_106 = arith.constant 2 : index
    %c2_107 = arith.constant 2 : index
    %c0_108 = arith.constant 0 : index
    %72 = vector.load %arg7[%c2_106, %c2_107, %c0_108] : memref<18x18x128xf32, #tpu.memory_space<vmem>>, vector<16x16x128xf32>
    %73 = vector.shape_cast %72 : vector<16x16x128xf32> to vector<256x128xf32>
    %c0_109 = arith.constant 0 : index
    %c1024_110 = arith.constant 1024 : index
    %74 = vector.load %arg8[%c0_109, %c1024_110] : memref<256x1152xf32, #tpu.memory_space<vmem>>, vector<256x128xf32>
    tpu.vector_store %arg8[%c0_109, %c1024_110], %73 {strides = array<i32>} : memref<256x1152xf32, #tpu.memory_space<vmem>>, vector<256x128xf32>,
    %c0_111 = arith.constant 0 : index
    %c0_112 = arith.constant 0 : index
    %75 = vector.load %arg8[%c0_111, %c0_112] : memref<256x1152xf32, #tpu.memory_space<vmem>>, vector<256x1152xf32>
    %c0_113 = arith.constant 0 : index
    %c0_114 = arith.constant 0 : index
    %76 = vector.load %arg4[%c0_113, %c0_114] : memref<1152x128xf32, #tpu.memory_space<vmem>>, vector<1152x128xf32>
    %cst_115 = arith.constant dense<0.000000e+00> : vector<256x128xf32>
    %77 = tpu.matmul %75, %76, %cst_115 {dimension_numbers = #tpu.dot_dimension_numbers<[1], [0], [0], [1], [0, 0, 1, 1], [], []>} : vector<256x1152xf32>, vector<1152x128xf32>, vector<256x128xf32> -> vector<256x128xf32>
    %c0_116 = arith.constant 0 : index
    %c0_117 = arith.constant 0 : index
    %78 = vector.load %arg5[%c0_116, %c0_117] : memref<1x128xf32, #tpu.memory_space<vmem>>, vector<1x128xf32>
    %79 = vector.broadcast %78 : vector<1x128xf32> to vector<256x128xf32>
    %80 = arith.addf %77, %79 : vector<256x128xf32>
    %c0_118 = arith.constant 0 : index
    %c0_119 = arith.constant 0 : index
    %c0_120 = arith.constant 0 : index
    %c0_121 = arith.constant 0 : index
    %81 = vector.load %arg1[%c0_118, %c0_119, %c0_120, %c0_121] : memref<1x16x16x128xf32, #tpu.memory_space<vmem>>, vector<1x16x16x128xf32>
    %82 = vector.shape_cast %81 : vector<1x16x16x128xf32> to vector<16x16x128xf32>
    %83 = vector.shape_cast %82 : vector<16x16x128xf32> to vector<256x128xf32>
    %84 = arith.addf %80, %83 : vector<256x128xf32>
    %cst_122 = arith.constant 0.000000e+00 : f32
    %85 = vector.broadcast %cst_122 : f32 to vector<256x128xf32>
    %86 = arith.maximumf %84, %85 : vector<256x128xf32>
    %87 = vector.shape_cast %86 : vector<256x128xf32> to vector<1x16x16x128xf32>
    %c0_123 = arith.constant 0 : index
    %c0_124 = arith.constant 0 : index
    %c0_125 = arith.constant 0 : index
    %c0_126 = arith.constant 0 : index
    %88 = vector.load %arg6[%c0_123, %c0_124, %c0_125, %c0_126] : memref<1x16x16x128xf32, #tpu.memory_space<vmem>>, vector<1x16x16x128xf32>
    tpu.vector_store %arg6[%c0_123, %c0_124, %c0_125, %c0_126], %87 {strides = array<i32>} : memref<1x16x16x128xf32, #tpu.memory_space<vmem>>, vector<1x16x16x128xf32>,
    return
  }
  func.func @transform_0(%arg0: i32) -> (i32, i32, i32, i32) {
    %c0_i32 = arith.constant 0 : i32
    %c0_i32_0 = arith.constant 0 : i32
    %c0_i32_1 = arith.constant 0 : i32
    %c0_i32_2 = arith.constant 0 : i32
    return %arg0, %c0_i32, %c0_i32_0, %c0_i32_1 : i32, i32, i32, i32
  }
  func.func @transform_1(%arg0: i32) -> (i32, i32) {
    %c0_i32 = arith.constant 0 : i32
    %c0_i32_0 = arith.constant 0 : i32
    %c0_i32_1 = arith.constant 0 : i32
    return %c0_i32, %c0_i32_0 : i32, i32
  }
  func.func @transform_2(%arg0: i32) -> (i32, i32) {
    %c0_i32 = arith.constant 0 : i32
    %c0_i32_0 = arith.constant 0 : i32
    %c0_i32_1 = arith.constant 0 : i32
    return %c0_i32, %c0_i32_0 : i32, i32
  }
  func.func @transform_3(%arg0: i32) -> (i32, i32) {
    %c0_i32 = arith.constant 0 : i32
    %c0_i32_0 = arith.constant 0 : i32
    %c0_i32_1 = arith.constant 0 : i32
    return %c0_i32, %c0_i32_0 : i32, i32
  }
  func.func @transform_4(%arg0: i32) -> (i32, i32) {
    %c0_i32 = arith.constant 0 : i32
    %c0_i32_0 = arith.constant 0 : i32
    %c0_i32_1 = arith.constant 0 : i32
    return %c0_i32, %c0_i32_0 : i32, i32
  }
  func.func @transform_5(%arg0: i32) -> (i32, i32, i32, i32) {
    %c0_i32 = arith.constant 0 : i32
    %c0_i32_0 = arith.constant 0 : i32
    %c0_i32_1 = arith.constant 0 : i32
    %c0_i32_2 = arith.constant 0 : i32
    return %arg0, %c0_i32, %c0_i32_0, %c0_i32_1 : i32, i32, i32, i32
  }
}

</mosaic_0001>

<llo_original>
// kernel: tpu_custom_call.1
$region0: #{tpu_custom_call.1}
  #allocation0 [shape = 'u32[]', space=smem, size = 0x4, offset = 0x4, fixed_abs, tag = 'smem constant byte address 0x4 - core index']
  #allocation1 [shape = 'u32[144,128]{1,0:T(1,128)}', space=vmem, size = 0x12000, scoped, tag = 'internal scratch']
  #allocation2 [shape = 'f32[18,18,128]{2,1,0:T(8,128)}', space=vmem, size = 0x36000, scoped, tag = 'scratch operand']
  #allocation3 [shape = 'f32[256,1152]{1,0:T(8,128)}', space=vmem, size = 0x120000, scoped, tag = 'scratch operand']
  %s0 = inlined_call_operand.hbm [shape: f32[2,16,16,128], index: 0, kind: input, shape index: {}]
  %s1 = inlined_call_operand.hbm [shape: f32[1152,128], index: 1, kind: input, shape index: {}]
  %s2 = inlined_call_operand.vmem [shape: f32[1,128], index: 2, kind: input, shape index: {}]
  %s3 = inlined_call_operand.hbm [shape: f32[1152,128], index: 3, kind: input, shape index: {}]
  %s4 = inlined_call_operand.vmem [shape: f32[1,128], index: 4, kind: input, shape index: {}]
  %s5 = inlined_call_operand.hbm [shape: f32[2,16,16,128], index: 5, kind: output, shape index: {}]
  %s6 = sld [smem:[#allocation0]]
  $region65: #{tpu_custom_call.1} parent=0
    _
  %s8 = ssub.s32 1, %s6
  %s9 = scalar_select 0, %s8, %s6
  $region1: #{tpu_custom_call.1} parent=0
    #allocation4 [shape = 'u8[262144]{0}', space=vmem, size = 0x40000, scoped, tag = 'input window, operand 0']
    #allocation5 [shape = 's32[2]{0}', space=sflag, size = 0x8, scoped, tag = 'scoped memory for tpu_custom_call.1']
    #allocation6 [shape = 's32[2]{0}', space=sflag, size = 0x8, scoped, tag = 'scoped memory for tpu_custom_call.1']
    #allocation7 [shape = 'u8[589824]{0}', space=vmem, size = 0x90000, scoped, tag = 'input window, operand 1, single buffered']
    #allocation8 [shape = 's32[1]{0}', space=sflag, size = 0x4, scoped, tag = 'scoped memory for tpu_custom_call.1']
    #allocation9 [shape = 'u8[589824]{0}', space=vmem, size = 0x90000, scoped, tag = 'input window, operand 3, single buffered']
    #allocation10 [shape = 'u8[262144]{0}', space=vmem, size = 0x40000, scoped, tag = 'output window, operand 0']
    %10 = vsyncpa [#allocation5], 0
    %s11 = scalar_lea.sflag [#allocation5], 1
    %12 = vsyncpa %s11, 0
    %13 = vsyncpa [#allocation8], 0
    %14 = vsyncpa [#allocation6], 0
    %s15 = scalar_lea.sflag [#allocation6], 1
    %16 = vsyncpa %s15, 0
    loop: start=0, step=1, limit=4
    $region2: #{tpu_custom_call.1} parent=1 // loop_pre_header
      _
    $region3: #{tpu_custom_call.1} parent=1 // loop_header
      %s18 = sphi 0, %s22
      %p19 = scmp.ge.s32.totalorder %s18, 4
      %s28 = sphi 0, %s30
      %s31 = sphi 0, %s28
      %s32 = sphi 0, %s31
      %s48 = sphi 0, %s32
      %s52 = sphi 0, %s52
      %s54 = sphi 0, %s52
      %s55 = sphi 0, %s54
      %s69 = sphi 0, %s55
      %s73 = sphi 0, %s73
      %s75 = sphi 0, %s73
      %s76 = sphi 0, %s75
      %s90 = sphi 0, %s76
      %s94 = sphi 0, %s94
      %s96 = sphi 0, %s94
      %s97 = sphi 0, %s96
      %s111 = sphi 0, %s97
      %s115 = sphi 0, %s115
      %s117 = sphi 0, %s115
      %s118 = sphi 0, %s117
      %s132 = sphi 0, %s118
      %s138 = sphi 0, %s140
      %s141 = sphi 0, %s138
      %s142 = sphi 0, %s141
      %s158 = sphi 0, %s142
    $region4: #{tpu_custom_call.1} parent=1 // loop_header_branch
      %21 = sbr.rel (%p19) target = $region8
    $region5: #{tpu_custom_call.1} parent=1 // loop_body
      %s23 = ssub.s32 %s18, 1
      %s24 = ssub.s32 %s18, 2
      %s25 = sadd.s32 %s18, 1
      %s26 = ssub.s32 %s18, %s25
      %p27 = scmp.eq.s32.totalorder %s26, 0
      %s29 = sadd.s32 %s28, 1
      %s30 = scalar_select %p27, %s28, %s29
      %p33 = pneg %p27
      %p34 = scmp.eq.s32.totalorder %s18, 1
      %p35 = por %p33, %p34
      %p36 = scmp.ne.s32.totalorder %s28, %s31
      %p37 = scmp.eq.s32.totalorder %s18, 0
      %p38 = por %p36, %p37
      %p39 = scmp.ne.s32.totalorder %s28, %s31
      %p40 = scmp.eq.s32.totalorder %s23, 1
      %p41 = por %p39, %p40
      %p42 = scmp.ne.s32.totalorder %s31, %s32
      %p43 = scmp.eq.s32.totalorder %s23, 0
      %p44 = por %p42, %p43
      %p45 = scmp.ne.s32.totalorder %s31, %s32
      %p46 = scmp.eq.s32.totalorder %s24, 1
      %p47 = por %p45, %p46
      %p49 = scmp.ne.s32.totalorder %s32, %s48
      %p50 = scmp.eq.s32.totalorder %s24, 0
      %p51 = por %p49, %p50
      %s53 = sadd.s32 %s52, 1
      %p56 = scmp.eq.s32.totalorder %s18, 1
      %p57 = scmp.ne.s32.totalorder %s52, %s54
      %p58 = scmp.eq.s32.totalorder %s18, 0
      %p59 = por %p57, %p58
      %p60 = scmp.ne.s32.totalorder %s52, %s54
      %p61 = scmp.eq.s32.totalorder %s23, 1
      %p62 = por %p60, %p61
      %p63 = scmp.ne.s32.totalorder %s54, %s55
      %p64 = scmp.eq.s32.totalorder %s23, 0
      %p65 = por %p63, %p64
      %p66 = scmp.ne.s32.totalorder %s54, %s55
      %p67 = scmp.eq.s32.totalorder %s24, 1
      %p68 = por %p66, %p67
      %p70 = scmp.ne.s32.totalorder %s55, %s69
      %p71 = scmp.eq.s32.totalorder %s24, 0
      %p72 = por %p70, %p71
      %s74 = sadd.s32 %s73, 1
      %p77 = scmp.eq.s32.totalorder %s18, 1
      %p78 = scmp.ne.s32.totalorder %s73, %s75
      %p79 = scmp.eq.s32.totalorder %s18, 0
      %p80 = por %p78, %p79
      %p81 = scmp.ne.s32.totalorder %s73, %s75
      %p82 = scmp.eq.s32.totalorder %s23, 1
      %p83 = por %p81, %p82
      %p84 = scmp.ne.s32.totalorder %s75, %s76
      %p85 = scmp.eq.s32.totalorder %s23, 0
      %p86 = por %p84, %p85
      %p87 = scmp.ne.s32.totalorder %s75, %s76
      %p88 = scmp.eq.s32.totalorder %s24, 1
      %p89 = por %p87, %p88
      %p91 = scmp.ne.s32.totalorder %s76, %s90
      %p92 = scmp.eq.s32.totalorder %s24, 0
      %p93 = por %p91, %p92
      %s95 = sadd.s32 %s94, 1
      %p98 = scmp.eq.s32.totalorder %s18, 1
      %p99 = scmp.ne.s32.totalorder %s94, %s96
      %p100 = scmp.eq.s32.totalorder %s18, 0
      %p101 = por %p99, %p100
      %p102 = scmp.ne.s32.totalorder %s94, %s96
      %p103 = scmp.eq.s32.totalorder %s23, 1
      %p104 = por %p102, %p103
      %p105 = scmp.ne.s32.totalorder %s96, %s97
      %p106 = scmp.eq.s32.totalorder %s23, 0
      %p107 = por %p105, %p106
      %p108 = scmp.ne.s32.totalorder %s96, %s97
      %p109 = scmp.eq.s32.totalorder %s24, 1
      %p110 = por %p108, %p109
      %p112 = scmp.ne.s32.totalorder %s97, %s111
      %p113 = scmp.eq.s32.totalorder %s24, 0
      %p114 = por %p112, %p113
      %s116 = sadd.s32 %s115, 1
      %p119 = scmp.eq.s32.totalorder %s18, 1
      %p120 = scmp.ne.s32.totalorder %s115, %s117
      %p121 = scmp.eq.s32.totalorder %s18, 0
      %p122 = por %p120, %p121
      %p123 = scmp.ne.s32.totalorder %s115, %s117
      %p124 = scmp.eq.s32.totalorder %s23, 1
      %p125 = por %p123, %p124
      %p126 = scmp.ne.s32.totalorder %s117, %s118
      %p127 = scmp.eq.s32.totalorder %s23, 0
      %p128 = por %p126, %p127
      %p129 = scmp.ne.s32.totalorder %s117, %s118
      %p130 = scmp.eq.s32.totalorder %s24, 1
      %p131 = por %p129, %p130
      %p133 = scmp.ne.s32.totalorder %s118, %s132
      %p134 = scmp.eq.s32.totalorder %s24, 0
      %p135 = por %p133, %p134
      %s136 = ssub.s32 %s18, %s25
      %p137 = scmp.eq.s32.totalorder %s136, 0
      %s139 = sadd.s32 %s138, 1
      %s140 = scalar_select %p137, %s138, %s139
      %p143 = pneg %p137
      %p144 = scmp.eq.s32.totalorder %s18, 1
      %p145 = por %p143, %p144
      %p146 = scmp.ne.s32.totalorder %s138, %s141
      %p147 = scmp.eq.s32.totalorder %s18, 0
      %p148 = por %p146, %p147
      %p149 = scmp.ne.s32.totalorder %s138, %s141
      %p150 = scmp.eq.s32.totalorder %s23, 1
      %p151 = por %p149, %p150
      %p152 = scmp.ne.s32.totalorder %s141, %s142
      %p153 = scmp.eq.s32.totalorder %s23, 0
      %p154 = por %p152, %p153
      %p155 = scmp.ne.s32.totalorder %s141, %s142
      %p156 = scmp.eq.s32.totalorder %s24, 1
      %p157 = por %p155, %p156
      %p159 = scmp.ne.s32.totalorder %s142, %s158
      %p160 = scmp.eq.s32.totalorder %s24, 0
      %p161 = por %p159, %p160
      %p162 = scmp.le.s32.totalorder 1, %s18
      %p163 = scmp.lt.s32.totalorder %s18, 3
      %p164 = pnand %p162, %p163
      %p165 = pneg %p164
      // Predicated region
      $region9: #{tpu_custom_call.1} parent=5 // pred_check
        _
      $region10: #{tpu_custom_call.1} parent=5 // pred_check_branch
        %167 = sbr.rel (%p164) target = $region12
      $region11: #{tpu_custom_call.1} parent=5 // pred_region
        %s168 = ssub.s32 %s18, 1
        // Predicated region
        $region13: #{tpu_custom_call.1} parent=11 // pred_check
          %p169 = pneg %p65
        $region14: #{tpu_custom_call.1} parent=11 // pred_check_branch
          %171 = sbr.rel (%p169) target = $region16
        $region15: #{tpu_custom_call.1} parent=11 // pred_region
          %s173 = ssub.s32 18432, 18432
          %174 = vsyncadd [#allocation8], %s173
          %s175 = sshll.u32 [#allocation7], 4
          %s176 = int_to_ptr.vmem [resolvable:$true] %s175
          %181 = dma.hbm_to_vmem [thread:$0]  %s1, 18432, %s176, [#allocation8], 128, 128, 8
        $region16: #{tpu_custom_call.1} parent=11 // pred_fallthru
          _
        // Predicated region
        $region17: #{tpu_custom_call.1} parent=11 // pred_check
          %p182 = pneg %p86
        $region18: #{tpu_custom_call.1} parent=11 // pred_check_branch
          %184 = sbr.rel (%p182) target = $region20
        $region19: #{tpu_custom_call.1} parent=11 // pred_region
          _
        $region20: #{tpu_custom_call.1} parent=11 // pred_fallthru
          _
        // Predicated region
        $region21: #{tpu_custom_call.1} parent=11 // pred_check
          %p185 = pneg %p107
        $region22: #{tpu_custom_call.1} parent=11 // pred_check_branch
          %187 = sbr.rel (%p185) target = $region24
        $region23: #{tpu_custom_call.1} parent=11 // pred_region
          %s189 = ssub.s32 18432, 18432
          %190 = vsyncadd [#allocation8], %s189
          %s191 = sshll.u32 [#allocation9], 4
          %s192 = int_to_ptr.vmem [resolvable:$true] %s191
          %197 = dma.hbm_to_vmem [thread:$0]  %s3, 18432, %s192, [#allocation8], 128, 128, 8
        $region24: #{tpu_custom_call.1} parent=11 // pred_fallthru
          _
        // Predicated region
        $region25: #{tpu_custom_call.1} parent=11 // pred_check
          %p198 = pneg %p128
        $region26: #{tpu_custom_call.1} parent=11 // pred_check_branch
          %200 = sbr.rel (%p198) target = $region28
        $region27: #{tpu_custom_call.1} parent=11 // pred_region
          _
        $region28: #{tpu_custom_call.1} parent=11 // pred_fallthru
          _
      $region12: #{tpu_custom_call.1} parent=5 // pred_fallthru
        _
      %p201 = scmp.lt.s32.totalorder %s18, 2
      // Predicated region
      $region29: #{tpu_custom_call.1} parent=5 // pred_check
        %p202 = pneg %p201
      $region30: #{tpu_custom_call.1} parent=5 // pred_check_branch
        %204 = sbr.rel (%p202) target = $region32
      $region31: #{tpu_custom_call.1} parent=5 // pred_region
        // Predicated region
        $region33: #{tpu_custom_call.1} parent=31 // pred_check
          %p205 = pneg %p38
        $region34: #{tpu_custom_call.1} parent=31 // pred_check_branch
          %207 = sbr.rel (%p205) target = $region36
        $region35: #{tpu_custom_call.1} parent=31 // pred_region
          %s208 = sand.u32 %s28, 1
          %s209 = scalar_lea.sflag [#allocation5], %s208
          %s210 = sand.u32 %s28, 1
          %s211 = smul.addr %s210, 256
          %s212 = scalar_lea.vmem [#allocation4], %s211
          %s214 = ssub.s32 4096, 4096
          %215 = vsyncadd %s209, %s214
          %s216 = smul.addr %s18, 32
          %s217 = smul.addr %s216, 128
          %s218 = scalar_lea.hbm %s0, %s217
          %s219 = sshll.u32 %s212, 4
          %s220 = int_to_ptr.vmem [resolvable:$true] %s219
          %225 = dma.hbm_to_vmem [thread:$0]  %s218, 4096, %s220, %s209, 128, 128, 8
        $region36: #{tpu_custom_call.1} parent=31 // pred_fallthru
          _
      $region32: #{tpu_custom_call.1} parent=5 // pred_fallthru
        _
      %p226 = scmp.le.s32.totalorder 1, %s18
      %p227 = scmp.lt.s32.totalorder %s18, 3
      %p228 = pnand %p226, %p227
      %p229 = pneg %p228
      // Predicated region
      $region37: #{tpu_custom_call.1} parent=5 // pred_check
        _
      $region38: #{tpu_custom_call.1} parent=5 // pred_check_branch
        %231 = sbr.rel (%p228) target = $region40
      $region39: #{tpu_custom_call.1} parent=5 // pred_region
        %s232 = ssub.s32 %s18, 1
        %s233 = sand.u32 %s31, 1
        %s234 = scalar_lea.sflag [#allocation5], %s233
        %s235 = sand.u32 %s31, 1
        %s236 = smul.addr %s235, 256
        %s237 = scalar_lea.vmem [#allocation4], %s236
        // Predicated region
        $region41: #{tpu_custom_call.1} parent=39 // pred_check
          %p238 = pneg %p44
        $region42: #{tpu_custom_call.1} parent=39 // pred_check_branch
          %240 = sbr.rel (%p238) target = $region44
        $region43: #{tpu_custom_call.1} parent=39 // pred_region
          %241 = dma.done %s234, 4096
        $region44: #{tpu_custom_call.1} parent=39 // pred_fallthru
          _
        // Predicated region
        $region45: #{tpu_custom_call.1} parent=39 // pred_check
          %p242 = pneg %p65
        $region46: #{tpu_custom_call.1} parent=39 // pred_check_branch
          %244 = sbr.rel (%p242) target = $region48
        $region47: #{tpu_custom_call.1} parent=39 // pred_region
          %245 = dma.done [#allocation8], 18432
        $region48: #{tpu_custom_call.1} parent=39 // pred_fallthru
          _
        // Predicated region
        $region49: #{tpu_custom_call.1} parent=39 // pred_check
          %p246 = pneg %p107
        $region50: #{tpu_custom_call.1} parent=39 // pred_check_branch
          %248 = sbr.rel (%p246) target = $region52
        $region51: #{tpu_custom_call.1} parent=39 // pred_region
          %249 = dma.done [#allocation8], 18432
        $region52: #{tpu_custom_call.1} parent=39 // pred_fallthru
          _
        %s250 = sand.u32 %s31, 1
        %s251 = scalar_lea.sflag [#allocation5], %s250
        %s252 = sand.u32 %s31, 1
        %s253 = smul.addr %s252, 256
        %s254 = scalar_lea.vmem [#allocation4], %s253
        %p255 = pneg %p44
        %p256 = pneg %p41
        %p257 = pneg %p65
        %p258 = pneg %p62
        %p259 = pneg %p86
        %p260 = pneg %p83
        %p261 = pneg %p107
        %p262 = pneg %p104
        %p263 = pneg %p128
        %p264 = pneg %p125
        %p265 = pneg %p154
        %p266 = pneg %p151
        %s267 = sand.u32 %s141, 1
        %s268 = scalar_lea.sflag [#allocation6], %s267
        %s269 = sand.u32 %s141, 1
        %s270 = smul.addr %s269, 256
        %s271 = scalar_lea.vmem [#allocation10], %s270
        %272 = vst [vmem:[#allocation2] sm:$0xff] 0.0
        %273 = vst [vmem:[#allocation2 + $0x8] sm:$0xff] 0.0
        %274 = vst [vmem:[#allocation2 + $0x10] sm:$0x3] 0.0
        %s275 = scalar_lea.vmem [#allocation2], 408
        %276 = vst [vmem:[%s275] sm:$0xff] 0.0
        %277 = vst [vmem:[%s275 + $0x8] sm:$0xff] 0.0
        %278 = vst [vmem:[%s275 + $0x10] sm:$0x3] 0.0
        %279 = vst [vmem:[#allocation2] sm:$0x1] 0.0
        %280 = vst [vmem:[#allocation2 + $0x18] sm:$0x1] 0.0
        %281 = vst [vmem:[#allocation2 + $0x30] sm:$0x1] 0.0
        %282 = vst [vmem:[#allocation2 + $0x48] sm:$0x1] 0.0
        %283 = vst [vmem:[#allocation2 + $0x60] sm:$0x1] 0.0
        %284 = vst [vmem:[#allocation2 + $0x78] sm:$0x1] 0.0
        %285 = vst [vmem:[#allocation2 + $0x90] sm:$0x1] 0.0
        %286 = vst [vmem:[#allocation2 + $0xa8] sm:$0x1] 0.0
        %287 = vst [vmem:[#allocation2 + $0xc0] sm:$0x1] 0.0
        %288 = vst [vmem:[#allocation2 + $0xd8] sm:$0x1] 0.0
        %289 = vst [vmem:[#allocation2 + $0xf0] sm:$0x1] 0.0
        %290 = vst [vmem:[#allocation2 + $0x108] sm:$0x1] 0.0
        %291 = vst [vmem:[#allocation2 + $0x120] sm:$0x1] 0.0
        %292 = vst [vmem:[#allocation2 + $0x138] sm:$0x1] 0.0
        %293 = vst [vmem:[#allocation2 + $0x150] sm:$0x1] 0.0
        %294 = vst [vmem:[#allocation2 + $0x168] sm:$0x1] 0.0
        %295 = vst [vmem:[#allocation2 + $0x180] sm:$0x1] 0.0
        %296 = vst [vmem:[#allocation2 + $0x198] sm:$0x1] 0.0
        %297 = vst [vmem:[#allocation2 + $0x11] sm:$0x1] 0.0
        %298 = vst [vmem:[#allocation2 + $0x29] sm:$0x1] 0.0
        %299 = vst [vmem:[#allocation2 + $0x41] sm:$0x1] 0.0
        %300 = vst [vmem:[#allocation2 + $0x59] sm:$0x1] 0.0
        %301 = vst [vmem:[#allocation2 + $0x71] sm:$0x1] 0.0
        %302 = vst [vmem:[#allocation2 + $0x89] sm:$0x1] 0.0
        %303 = vst [vmem:[#allocation2 + $0xa1] sm:$0x1] 0.0
        %304 = vst [vmem:[#allocation2 + $0xb9] sm:$0x1] 0.0
        %305 = vst [vmem:[#allocation2 + $0xd1] sm:$0x1] 0.0
        %306 = vst [vmem:[#allocation2 + $0xe9] sm:$0x1] 0.0
        %307 = vst [vmem:[#allocation2 + $0x101] sm:$0x1] 0.0
        %308 = vst [vmem:[#allocation2 + $0x119] sm:$0x1] 0.0
        %309 = vst [vmem:[#allocation2 + $0x131] sm:$0x1] 0.0
        %310 = vst [vmem:[#allocation2 + $0x149] sm:$0x1] 0.0
        %311 = vst [vmem:[#allocation2 + $0x161] sm:$0x1] 0.0
        %312 = vst [vmem:[#allocation2 + $0x179] sm:$0x1] 0.0
        %313 = vst [vmem:[#allocation2 + $0x191] sm:$0x1] 0.0
        %314 = vst [vmem:[#allocation2 + $0x1a9] sm:$0x1] 0.0
        %v315 = vld [vmem:[%s237] sm:$0xff]
        %v316 = vld [vmem:[%s237 + $0x8] sm:$0xff]
        %v317 = vld [vmem:[%s237 + $0x10] sm:$0xff]
        %v318 = vld [vmem:[%s237 + $0x18] sm:$0xff]
        %v319 = vld [vmem:[%s237 + $0x20] sm:$0xff]
        %v320 = vld [vmem:[%s237 + $0x28] sm:$0xff]
        %v321 = vld [vmem:[%s237 + $0x30] sm:$0xff]
        %v322 = vld [vmem:[%s237 + $0x38] sm:$0xff]
        %v323 = vld [vmem:[%s237 + $0x40] sm:$0xff]
        %v324 = vld [vmem:[%s237 + $0x48] sm:$0xff]
        %v325 = vld [vmem:[%s237 + $0x50] sm:$0xff]
        %v326 = vld [vmem:[%s237 + $0x58] sm:$0xff]
        %v327 = vld [vmem:[%s237 + $0x60] sm:$0xff]
        %v328 = vld [vmem:[%s237 + $0x68] sm:$0xff]
        %v329 = vld [vmem:[%s237 + $0x70] sm:$0xff]
        %v330 = vld [vmem:[%s237 + $0x78] sm:$0xff]
        %v331 = vld [vmem:[%s237 + $0x80] sm:$0xff]
        %v332 = vld [vmem:[%s237 + $0x88] sm:$0xff]
        %v333 = vld [vmem:[%s237 + $0x90] sm:$0xff]
        %v334 = vld [vmem:[%s237 + $0x98] sm:$0xff]
        %v335 = vld [vmem:[%s237 + $0xa0] sm:$0xff]
        %v336 = vld [vmem:[%s237 + $0xa8] sm:$0xff]
        %v337 = vld [vmem:[%s237 + $0xb0] sm:$0xff]
        %v338 = vld [vmem:[%s237 + $0xb8] sm:$0xff]
        %v339 = vld [vmem:[%s237 + $0xc0] sm:$0xff]
        %v340 = vld [vmem:[%s237 + $0xc8] sm:$0xff]
        %v341 = vld [vmem:[%s237 + $0xd0] sm:$0xff]
        %v342 = vld [vmem:[%s237 + $0xd8] sm:$0xff]
        %v343 = vld [vmem:[%s237 + $0xe0] sm:$0xff]
        %v344 = vld [vmem:[%s237 + $0xe8] sm:$0xff]
        %v345 = vld [vmem:[%s237 + $0xf0] sm:$0xff]
        %v346 = vld [vmem:[%s237 + $0xf8] sm:$0xff]
        %s347 = scalar_lea.vmem [#allocation2], 24
        %348 = vst [vmem:[%s347 + $0x1] sm:$0xff] %v315
        %349 = vst [vmem:[%s347 + $0x9] sm:$0xff] %v316
        %350 = vst [vmem:[%s347 + $0x19] sm:$0xff] %v317
        %351 = vst [vmem:[%s347 + $0x21] sm:$0xff] %v318
        %352 = vst [vmem:[%s347 + $0x31] sm:$0xff] %v319
        %353 = vst [vmem:[%s347 + $0x39] sm:$0xff] %v320
        %354 = vst [vmem:[%s347 + $0x49] sm:$0xff] %v321
        %355 = vst [vmem:[%s347 + $0x51] sm:$0xff] %v322
        %356 = vst [vmem:[%s347 + $0x61] sm:$0xff] %v323
        %357 = vst [vmem:[%s347 + $0x69] sm:$0xff] %v324
        %358 = vst [vmem:[%s347 + $0x79] sm:$0xff] %v325
        %359 = vst [vmem:[%s347 + $0x81] sm:$0xff] %v326
        %360 = vst [vmem:[%s347 + $0x91] sm:$0xff] %v327
        %361 = vst [vmem:[%s347 + $0x99] sm:$0xff] %v328
        %362 = vst [vmem:[%s347 + $0xa9] sm:$0xff] %v329
        %363 = vst [vmem:[%s347 + $0xb1] sm:$0xff] %v330
        %364 = vst [vmem:[%s347 + $0xc1] sm:$0xff] %v331
        %365 = vst [vmem:[%s347 + $0xc9] sm:$0xff] %v332
        %366 = vst [vmem:[%s347 + $0xd9] sm:$0xff] %v333
        %367 = vst [vmem:[%s347 + $0xe1] sm:$0xff] %v334
        %368 = vst [vmem:[%s347 + $0xf1] sm:$0xff] %v335
        %369 = vst [vmem:[%s347 + $0xf9] sm:$0xff] %v336
        %370 = vst [vmem:[%s347 + $0x109] sm:$0xff] %v337
        %371 = vst [vmem:[%s347 + $0x111] sm:$0xff] %v338
        %372 = vst [vmem:[%s347 + $0x121] sm:$0xff] %v339
        %373 = vst [vmem:[%s347 + $0x129] sm:$0xff] %v340
        %374 = vst [vmem:[%s347 + $0x139] sm:$0xff] %v341
        %375 = vst [vmem:[%s347 + $0x141] sm:$0xff] %v342
        %376 = vst [vmem:[%s347 + $0x151] sm:$0xff] %v343
        %377 = vst [vmem:[%s347 + $0x159] sm:$0xff] %v344
        %378 = vst [vmem:[%s347 + $0x169] sm:$0xff] %v345
        %379 = vst [vmem:[%s347 + $0x171] sm:$0xff] %v346
        %v380 = vld [vmem:[#allocation2] sm:$0xff]
        %v381 = vld [vmem:[#allocation2 + $0x8] sm:$0xff]
        %v382 = vld [vmem:[#allocation2 + $0x18] sm:$0xff]
        %v383 = vld [vmem:[#allocation2 + $0x20] sm:$0xff]
        %v384 = vld [vmem:[#allocation2 + $0x30] sm:$0xff]
        %v385 = vld [vmem:[#allocation2 + $0x38] sm:$0xff]
        %v386 = vld [vmem:[#allocation2 + $0x48] sm:$0xff]
        %v387 = vld [vmem:[#allocation2 + $0x50] sm:$0xff]
        %v388 = vld [vmem:[#allocation2 + $0x60] sm:$0xff]
        %v389 = vld [vmem:[#allocation2 + $0x68] sm:$0xff]
        %v390 = vld [vmem:[#allocation2 + $0x78] sm:$0xff]
        %v391 = vld [vmem:[#allocation2 + $0x80] sm:$0xff]
        %v392 = vld [vmem:[#allocation2 + $0x90] sm:$0xff]
        %v393 = vld [vmem:[#allocation2 + $0x98] sm:$0xff]
        %v394 = vld [vmem:[#allocation2 + $0xa8] sm:$0xff]
        %v395 = vld [vmem:[#allocation2 + $0xb0] sm:$0xff]
        %v396 = vld [vmem:[#allocation2 + $0xc0] sm:$0xff]
        %v397 = vld [vmem:[#allocation2 + $0xc8] sm:$0xff]
        %v398 = vld [vmem:[#allocation2 + $0xd8] sm:$0xff]
        %v399 = vld [vmem:[#allocation2 + $0xe0] sm:$0xff]
        %v400 = vld [vmem:[#allocation2 + $0xf0] sm:$0xff]
        %v401 = vld [vmem:[#allocation2 + $0xf8] sm:$0xff]
        %v402 = vld [vmem:[#allocation2 + $0x108] sm:$0xff]
        %v403 = vld [vmem:[#allocation2 + $0x110] sm:$0xff]
        %v404 = vld [vmem:[#allocation2 + $0x120] sm:$0xff]
        %v405 = vld [vmem:[#allocation2 + $0x128] sm:$0xff]
        %v406 = vld [vmem:[#allocation2 + $0x138] sm:$0xff]
        %v407 = vld [vmem:[#allocation2 + $0x140] sm:$0xff]
        %v408 = vld [vmem:[#allocation2 + $0x150] sm:$0xff]
        %v409 = vld [vmem:[#allocation2 + $0x158] sm:$0xff]
        %v410 = vld [vmem:[#allocation2 + $0x168] sm:$0xff]
        %v411 = vld [vmem:[#allocation2 + $0x170] sm:$0xff]
        %412 = vst [vmem:[#allocation3] sm:$0xff] %v380
        %413 = vst [vmem:[#allocation3 + $0x48] sm:$0xff] %v381
        %414 = vst [vmem:[#allocation3 + $0x90] sm:$0xff] %v382
        %415 = vst [vmem:[#allocation3 + $0xd8] sm:$0xff] %v383
        %416 = vst [vmem:[#allocation3 + $0x120] sm:$0xff] %v384
        %417 = vst [vmem:[#allocation3 + $0x168] sm:$0xff] %v385
        %418 = vst [vmem:[#allocation3 + $0x1b0] sm:$0xff] %v386
        %419 = vst [vmem:[#allocation3 + $0x1f8] sm:$0xff] %v387
        %420 = vst [vmem:[#allocation3 + $0x240] sm:$0xff] %v388
        %421 = vst [vmem:[#allocation3 + $0x288] sm:$0xff] %v389
        %422 = vst [vmem:[#allocation3 + $0x2d0] sm:$0xff] %v390
        %423 = vst [vmem:[#allocation3 + $0x318] sm:$0xff] %v391
        %424 = vst [vmem:[#allocation3 + $0x360] sm:$0xff] %v392
        %425 = vst [vmem:[#allocation3 + $0x3a8] sm:$0xff] %v393
        %426 = vst [vmem:[#allocation3 + $0x3f0] sm:$0xff] %v394
        %427 = vst [vmem:[#allocation3 + $0x438] sm:$0xff] %v395
        %428 = vst [vmem:[#allocation3 + $0x480] sm:$0xff] %v396
        %429 = vst [vmem:[#allocation3 + $0x4c8] sm:$0xff] %v397
        %430 = vst [vmem:[#allocation3 + $0x510] sm:$0xff] %v398
        %431 = vst [vmem:[#allocation3 + $0x558] sm:$0xff] %v399
        %432 = vst [vmem:[#allocation3 + $0x5a0] sm:$0xff] %v400
        %433 = vst [vmem:[#allocation3 + $0x5e8] sm:$0xff] %v401
        %434 = vst [vmem:[#allocation3 + $0x630] sm:$0xff] %v402
        %435 = vst [vmem:[#allocation3 + $0x678] sm:$0xff] %v403
        %436 = vst [vmem:[#allocation3 + $0x6c0] sm:$0xff] %v404
        %437 = vst [vmem:[#allocation3 + $0x708] sm:$0xff] %v405
        %438 = vst [vmem:[#allocation3 + $0x750] sm:$0xff] %v406
        %439 = vst [vmem:[#allocation3 + $0x798] sm:$0xff] %v407
        %440 = vst [vmem:[#allocation3 + $0x7e0] sm:$0xff] %v408
        %441 = vst [vmem:[#allocation3 + $0x828] sm:$0xff] %v409
        %442 = vst [vmem:[#allocation3 + $0x870] sm:$0xff] %v410
        %443 = vst [vmem:[#allocation3 + $0x8b8] sm:$0xff] %v411
        %v444 = vld [vmem:[#allocation2 + $0x1] sm:$0xff]
        %v445 = vld [vmem:[#allocation2 + $0x9] sm:$0xff]
        %v446 = vld [vmem:[#allocation2 + $0x19] sm:$0xff]
        %v447 = vld [vmem:[#allocation2 + $0x21] sm:$0xff]
        %v448 = vld [vmem:[#allocation2 + $0x31] sm:$0xff]
        %v449 = vld [vmem:[#allocation2 + $0x39] sm:$0xff]
        %v450 = vld [vmem:[#allocation2 + $0x49] sm:$0xff]
        %v451 = vld [vmem:[#allocation2 + $0x51] sm:$0xff]
        %v452 = vld [vmem:[#allocation2 + $0x61] sm:$0xff]
        %v453 = vld [vmem:[#allocation2 + $0x69] sm:$0xff]
        %v454 = vld [vmem:[#allocation2 + $0x79] sm:$0xff]
        %v455 = vld [vmem:[#allocation2 + $0x81] sm:$0xff]
        %v456 = vld [vmem:[#allocation2 + $0x91] sm:$0xff]
        %v457 = vld [vmem:[#allocation2 + $0x99] sm:$0xff]
        %v458 = vld [vmem:[#allocation2 + $0xa9] sm:$0xff]
        %v459 = vld [vmem:[#allocation2 + $0xb1] sm:$0xff]
        %v460 = vld [vmem:[#allocation2 + $0xc1] sm:$0xff]
        %v461 = vld [vmem:[#allocation2 + $0xc9] sm:$0xff]
        %v462 = vld [vmem:[#allocation2 + $0xd9] sm:$0xff]
        %v463 = vld [vmem:[#allocation2 + $0xe1] sm:$0xff]
        %v464 = vld [vmem:[#allocation2 + $0xf1] sm:$0xff]
        %v465 = vld [vmem:[#allocation2 + $0xf9] sm:$0xff]
        %v466 = vld [vmem:[#allocation2 + $0x109] sm:$0xff]
        %v467 = vld [vmem:[#allocation2 + $0x111] sm:$0xff]
        %v468 = vld [vmem:[#allocation2 + $0x121] sm:$0xff]
        %v469 = vld [vmem:[#allocation2 + $0x129] sm:$0xff]
        %v470 = vld [vmem:[#allocation2 + $0x139] sm:$0xff]
        %v471 = vld [vmem:[#allocation2 + $0x141] sm:$0xff]
        %v472 = vld [vmem:[#allocation2 + $0x151] sm:$0xff]
        %v473 = vld [vmem:[#allocation2 + $0x159] sm:$0xff]
        %v474 = vld [vmem:[#allocation2 + $0x169] sm:$0xff]
        %v475 = vld [vmem:[#allocation2 + $0x171] sm:$0xff]
        %476 = vst [vmem:[#allocation3 + $0x8] sm:$0xff] %v444
        %477 = vst [vmem:[#allocation3 + $0x50] sm:$0xff] %v445
        %478 = vst [vmem:[#allocation3 + $0x98] sm:$0xff] %v446
        %479 = vst [vmem:[#allocation3 + $0xe0] sm:$0xff] %v447
        %480 = vst [vmem:[#allocation3 + $0x128] sm:$0xff] %v448
        %481 = vst [vmem:[#allocation3 + $0x170] sm:$0xff] %v449
        %482 = vst [vmem:[#allocation3 + $0x1b8] sm:$0xff] %v450
        %483 = vst [vmem:[#allocation3 + $0x200] sm:$0xff] %v451
        %484 = vst [vmem:[#allocation3 + $0x248] sm:$0xff] %v452
        %485 = vst [vmem:[#allocation3 + $0x290] sm:$0xff] %v453
        %486 = vst [vmem:[#allocation3 + $0x2d8] sm:$0xff] %v454
        %487 = vst [vmem:[#allocation3 + $0x320] sm:$0xff] %v455
        %488 = vst [vmem:[#allocation3 + $0x368] sm:$0xff] %v456
        %489 = vst [vmem:[#allocation3 + $0x3b0] sm:$0xff] %v457
        %490 = vst [vmem:[#allocation3 + $0x3f8] sm:$0xff] %v458
        %491 = vst [vmem:[#allocation3 + $0x440] sm:$0xff] %v459
        %492 = vst [vmem:[#allocation3 + $0x488] sm:$0xff] %v460
        %493 = vst [vmem:[#allocation3 + $0x4d0] sm:$0xff] %v461
        %494 = vst [vmem:[#allocation3 + $0x518] sm:$0xff] %v462
        %495 = vst [vmem:[#allocation3 + $0x560] sm:$0xff] %v463
        %496 = vst [vmem:[#allocation3 + $0x5a8] sm:$0xff] %v464
        %497 = vst [vmem:[#allocation3 + $0x5f0] sm:$0xff] %v465
        %498 = vst [vmem:[#allocation3 + $0x638] sm:$0xff] %v466
        %499 = vst [vmem:[#allocation3 + $0x680] sm:$0xff] %v467
        %500 = vst [vmem:[#allocation3 + $0x6c8] sm:$0xff] %v468
        %501 = vst [vmem:[#allocation3 + $0x710] sm:$0xff] %v469
        %502 = vst [vmem:[#allocation3 + $0x758] sm:$0xff] %v470
        %503 = vst [vmem:[#allocation3 + $0x7a0] sm:$0xff] %v471
        %504 = vst [vmem:[#allocation3 + $0x7e8] sm:$0xff] %v472
        %505 = vst [vmem:[#allocation3 + $0x830] sm:$0xff] %v473
        %506 = vst [vmem:[#allocation3 + $0x878] sm:$0xff] %v474
        %507 = vst [vmem:[#allocation3 + $0x8c0] sm:$0xff] %v475
        %v508 = vld [vmem:[#allocation2 + $0x2] sm:$0xff]
        %v509 = vld [vmem:[#allocation2 + $0xa] sm:$0xff]
        %v510 = vld [vmem:[#allocation2 + $0x1a] sm:$0xff]
        %v511 = vld [vmem:[#allocation2 + $0x22] sm:$0xff]
        %v512 = vld [vmem:[#allocation2 + $0x32] sm:$0xff]
        %v513 = vld [vmem:[#allocation2 + $0x3a] sm:$0xff]
        %v514 = vld [vmem:[#allocation2 + $0x4a] sm:$0xff]
        %v515 = vld [vmem:[#allocation2 + $0x52] sm:$0xff]
        %v516 = vld [vmem:[#allocation2 + $0x62] sm:$0xff]
        %v517 = vld [vmem:[#allocation2 + $0x6a] sm:$0xff]
        %v518 = vld [vmem:[#allocation2 + $0x7a] sm:$0xff]
        %v519 = vld [vmem:[#allocation2 + $0x82] sm:$0xff]
        %v520 = vld [vmem:[#allocation2 + $0x92] sm:$0xff]
        %v521 = vld [vmem:[#allocation2 + $0x9a] sm:$0xff]
        %v522 = vld [vmem:[#allocation2 + $0xaa] sm:$0xff]
        %v523 = vld [vmem:[#allocation2 + $0xb2] sm:$0xff]
        %v524 = vld [vmem:[#allocation2 + $0xc2] sm:$0xff]
        %v525 = vld [vmem:[#allocation2 + $0xca] sm:$0xff]
        %v526 = vld [vmem:[#allocation2 + $0xda] sm:$0xff]
        %v527 = vld [vmem:[#allocation2 + $0xe2] sm:$0xff]
        %v528 = vld [vmem:[#allocation2 + $0xf2] sm:$0xff]
        %v529 = vld [vmem:[#allocation2 + $0xfa] sm:$0xff]
        %v530 = vld [vmem:[#allocation2 + $0x10a] sm:$0xff]
        %v531 = vld [vmem:[#allocation2 + $0x112] sm:$0xff]
        %v532 = vld [vmem:[#allocation2 + $0x122] sm:$0xff]
        %v533 = vld [vmem:[#allocation2 + $0x12a] sm:$0xff]
        %v534 = vld [vmem:[#allocation2 + $0x13a] sm:$0xff]
        %v535 = vld [vmem:[#allocation2 + $0x142] sm:$0xff]
        %v536 = vld [vmem:[#allocation2 + $0x152] sm:$0xff]
        %v537 = vld [vmem:[#allocation2 + $0x15a] sm:$0xff]
        %v538 = vld [vmem:[#allocation2 + $0x16a] sm:$0xff]
        %v539 = vld [vmem:[#allocation2 + $0x172] sm:$0xff]
        %540 = vst [vmem:[#allocation3 + $0x10] sm:$0xff] %v508
        %541 = vst [vmem:[#allocation3 + $0x58] sm:$0xff] %v509
        %542 = vst [vmem:[#allocation3 + $0xa0] sm:$0xff] %v510
        %543 = vst [vmem:[#allocation3 + $0xe8] sm:$0xff] %v511
        %544 = vst [vmem:[#allocation3 + $0x130] sm:$0xff] %v512
        %545 = vst [vmem:[#allocation3 + $0x178] sm:$0xff] %v513
        %546 = vst [vmem:[#allocation3 + $0x1c0] sm:$0xff] %v514
        %547 = vst [vmem:[#allocation3 + $0x208] sm:$0xff] %v515
        %548 = vst [vmem:[#allocation3 + $0x250] sm:$0xff] %v516
        %549 = vst [vmem:[#allocation3 + $0x298] sm:$0xff] %v517
        %550 = vst [vmem:[#allocation3 + $0x2e0] sm:$0xff] %v518
        %551 = vst [vmem:[#allocation3 + $0x328] sm:$0xff] %v519
        %552 = vst [vmem:[#allocation3 + $0x370] sm:$0xff] %v520
        %553 = vst [vmem:[#allocation3 + $0x3b8] sm:$0xff] %v521
        %554 = vst [vmem:[#allocation3 + $0x400] sm:$0xff] %v522
        %555 = vst [vmem:[#allocation3 + $0x448] sm:$0xff] %v523
        %556 = vst [vmem:[#allocation3 + $0x490] sm:$0xff] %v524
        %557 = vst [vmem:[#allocation3 + $0x4d8] sm:$0xff] %v525
        %558 = vst [vmem:[#allocation3 + $0x520] sm:$0xff] %v526
        %559 = vst [vmem:[#allocation3 + $0x568] sm:$0xff] %v527
        %560 = vst [vmem:[#allocation3 + $0x5b0] sm:$0xff] %v528
        %561 = vst [vmem:[#allocation3 + $0x5f8] sm:$0xff] %v529
        %562 = vst [vmem:[#allocation3 + $0x640] sm:$0xff] %v530
        %563 = vst [vmem:[#allocation3 + $0x688] sm:$0xff] %v531
        %564 = vst [vmem:[#allocation3 + $0x6d0] sm:$0xff] %v532
        %565 = vst [vmem:[#allocation3 + $0x718] sm:$0xff] %v533
        %566 = vst [vmem:[#allocation3 + $0x760] sm:$0xff] %v534
        %567 = vst [vmem:[#allocation3 + $0x7a8] sm:$0xff] %v535
        %568 = vst [vmem:[#allocation3 + $0x7f0] sm:$0xff] %v536
        %569 = vst [vmem:[#allocation3 + $0x838] sm:$0xff] %v537
        %570 = vst [vmem:[#allocation3 + $0x880] sm:$0xff] %v538
        %571 = vst [vmem:[#allocation3 + $0x8c8] sm:$0xff] %v539
        %v572 = vld [vmem:[%s347] sm:$0xff]
        %v573 = vld [vmem:[%s347 + $0x8] sm:$0xff]
        %v574 = vld [vmem:[%s347 + $0x18] sm:$0xff]
        %v575 = vld [vmem:[%s347 + $0x20] sm:$0xff]
        %v576 = vld [vmem:[%s347 + $0x30] sm:$0xff]
        %v577 = vld [vmem:[%s347 + $0x38] sm:$0xff]
        %v578 = vld [vmem:[%s347 + $0x48] sm:$0xff]
        %v579 = vld [vmem:[%s347 + $0x50] sm:$0xff]
        %v580 = vld [vmem:[%s347 + $0x60] sm:$0xff]
        %v581 = vld [vmem:[%s347 + $0x68] sm:$0xff]
        %v582 = vld [vmem:[%s347 + $0x78] sm:$0xff]
        %v583 = vld [vmem:[%s347 + $0x80] sm:$0xff]
        %v584 = vld [vmem:[%s347 + $0x90] sm:$0xff]
        %v585 = vld [vmem:[%s347 + $0x98] sm:$0xff]
        %v586 = vld [vmem:[%s347 + $0xa8] sm:$0xff]
        %v587 = vld [vmem:[%s347 + $0xb0] sm:$0xff]
        %v588 = vld [vmem:[%s347 + $0xc0] sm:$0xff]
        %v589 = vld [vmem:[%s347 + $0xc8] sm:$0xff]
        %v590 = vld [vmem:[%s347 + $0xd8] sm:$0xff]
        %v591 = vld [vmem:[%s347 + $0xe0] sm:$0xff]
        %v592 = vld [vmem:[%s347 + $0xf0] sm:$0xff]
        %v593 = vld [vmem:[%s347 + $0xf8] sm:$0xff]
        %v594 = vld [vmem:[%s347 + $0x108] sm:$0xff]
        %v595 = vld [vmem:[%s347 + $0x110] sm:$0xff]
        %v596 = vld [vmem:[%s347 + $0x120] sm:$0xff]
        %v597 = vld [vmem:[%s347 + $0x128] sm:$0xff]
        %v598 = vld [vmem:[%s347 + $0x138] sm:$0xff]
        %v599 = vld [vmem:[%s347 + $0x140] sm:$0xff]
        %v600 = vld [vmem:[%s347 + $0x150] sm:$0xff]
        %v601 = vld [vmem:[%s347 + $0x158] sm:$0xff]
        %v602 = vld [vmem:[%s347 + $0x168] sm:$0xff]
        %v603 = vld [vmem:[%s347 + $0x170] sm:$0xff]
        %604 = vst [vmem:[#allocation3 + $0x18] sm:$0xff] %v572
        %605 = vst [vmem:[#allocation3 + $0x60] sm:$0xff] %v573
        %606 = vst [vmem:[#allocation3 + $0xa8] sm:$0xff] %v574
        %607 = vst [vmem:[#allocation3 + $0xf0] sm:$0xff] %v575
        %608 = vst [vmem:[#allocation3 + $0x138] sm:$0xff] %v576
        %609 = vst [vmem:[#allocation3 + $0x180] sm:$0xff] %v577
        %610 = vst [vmem:[#allocation3 + $0x1c8] sm:$0xff] %v578
        %611 = vst [vmem:[#allocation3 + $0x210] sm:$0xff] %v579
        %612 = vst [vmem:[#allocation3 + $0x258] sm:$0xff] %v580
        %613 = vst [vmem:[#allocation3 + $0x2a0] sm:$0xff] %v581
        %614 = vst [vmem:[#allocation3 + $0x2e8] sm:$0xff] %v582
        %615 = vst [vmem:[#allocation3 + $0x330] sm:$0xff] %v583
        %616 = vst [vmem:[#allocation3 + $0x378] sm:$0xff] %v584
        %617 = vst [vmem:[#allocation3 + $0x3c0] sm:$0xff] %v585
        %618 = vst [vmem:[#allocation3 + $0x408] sm:$0xff] %v586
        %619 = vst [vmem:[#allocation3 + $0x450] sm:$0xff] %v587
        %620 = vst [vmem:[#allocation3 + $0x498] sm:$0xff] %v588
        %621 = vst [vmem:[#allocation3 + $0x4e0] sm:$0xff] %v589
        %622 = vst [vmem:[#allocation3 + $0x528] sm:$0xff] %v590
        %623 = vst [vmem:[#allocation3 + $0x570] sm:$0xff] %v591
        %624 = vst [vmem:[#allocation3 + $0x5b8] sm:$0xff] %v592
        %625 = vst [vmem:[#allocation3 + $0x600] sm:$0xff] %v593
        %626 = vst [vmem:[#allocation3 + $0x648] sm:$0xff] %v594
        %627 = vst [vmem:[#allocation3 + $0x690] sm:$0xff] %v595
        %628 = vst [vmem:[#allocation3 + $0x6d8] sm:$0xff] %v596
        %629 = vst [vmem:[#allocation3 + $0x720] sm:$0xff] %v597
        %630 = vst [vmem:[#allocation3 + $0x768] sm:$0xff] %v598
        %631 = vst [vmem:[#allocation3 + $0x7b0] sm:$0xff] %v599
        %632 = vst [vmem:[#allocation3 + $0x7f8] sm:$0xff] %v600
        %633 = vst [vmem:[#allocation3 + $0x840] sm:$0xff] %v601
        %634 = vst [vmem:[#allocation3 + $0x888] sm:$0xff] %v602
        %635 = vst [vmem:[#allocation3 + $0x8d0] sm:$0xff] %v603
        %v636 = vld [vmem:[%s347 + $0x1] sm:$0xff]
        %v637 = vld [vmem:[%s347 + $0x9] sm:$0xff]
        %v638 = vld [vmem:[%s347 + $0x19] sm:$0xff]
        %v639 = vld [vmem:[%s347 + $0x21] sm:$0xff]
        %v640 = vld [vmem:[%s347 + $0x31] sm:$0xff]
        %v641 = vld [vmem:[%s347 + $0x39] sm:$0xff]
        %v642 = vld [vmem:[%s347 + $0x49] sm:$0xff]
        %v643 = vld [vmem:[%s347 + $0x51] sm:$0xff]
        %v644 = vld [vmem:[%s347 + $0x61] sm:$0xff]
        %v645 = vld [vmem:[%s347 + $0x69] sm:$0xff]
        %v646 = vld [vmem:[%s347 + $0x79] sm:$0xff]
        %v647 = vld [vmem:[%s347 + $0x81] sm:$0xff]
        %v648 = vld [vmem:[%s347 + $0x91] sm:$0xff]
        %v649 = vld [vmem:[%s347 + $0x99] sm:$0xff]
        %v650 = vld [vmem:[%s347 + $0xa9] sm:$0xff]
        %v651 = vld [vmem:[%s347 + $0xb1] sm:$0xff]
        %v652 = vld [vmem:[%s347 + $0xc1] sm:$0xff]
        %v653 = vld [vmem:[%s347 + $0xc9] sm:$0xff]
        %v654 = vld [vmem:[%s347 + $0xd9] sm:$0xff]
        %v655 = vld [vmem:[%s347 + $0xe1] sm:$0xff]
        %v656 = vld [vmem:[%s347 + $0xf1] sm:$0xff]
        %v657 = vld [vmem:[%s347 + $0xf9] sm:$0xff]
        %v658 = vld [vmem:[%s347 + $0x109] sm:$0xff]
        %v659 = vld [vmem:[%s347 + $0x111] sm:$0xff]
        %v660 = vld [vmem:[%s347 + $0x121] sm:$0xff]
        %v661 = vld [vmem:[%s347 + $0x129] sm:$0xff]
        %v662 = vld [vmem:[%s347 + $0x139] sm:$0xff]
        %v663 = vld [vmem:[%s347 + $0x141] sm:$0xff]
        %v664 = vld [vmem:[%s347 + $0x151] sm:$0xff]
        %v665 = vld [vmem:[%s347 + $0x159] sm:$0xff]
        %v666 = vld [vmem:[%s347 + $0x169] sm:$0xff]
        %v667 = vld [vmem:[%s347 + $0x171] sm:$0xff]
        %668 = vst [vmem:[#allocation3 + $0x20] sm:$0xff] %v636
        %669 = vst [vmem:[#allocation3 + $0x68] sm:$0xff] %v637
        %670 = vst [vmem:[#allocation3 + $0xb0] sm:$0xff] %v638
        %671 = vst [vmem:[#allocation3 + $0xf8] sm:$0xff] %v639
        %672 = vst [vmem:[#allocation3 + $0x140] sm:$0xff] %v640
        %673 = vst [vmem:[#allocation3 + $0x188] sm:$0xff] %v641
        %674 = vst [vmem:[#allocation3 + $0x1d0] sm:$0xff] %v642
        %675 = vst [vmem:[#allocation3 + $0x218] sm:$0xff] %v643
        %676 = vst [vmem:[#allocation3 + $0x260] sm:$0xff] %v644
        %677 = vst [vmem:[#allocation3 + $0x2a8] sm:$0xff] %v645
        %678 = vst [vmem:[#allocation3 + $0x2f0] sm:$0xff] %v646
        %679 = vst [vmem:[#allocation3 + $0x338] sm:$0xff] %v647
        %680 = vst [vmem:[#allocation3 + $0x380] sm:$0xff] %v648
        %681 = vst [vmem:[#allocation3 + $0x3c8] sm:$0xff] %v649
        %682 = vst [vmem:[#allocation3 + $0x410] sm:$0xff] %v650
        %683 = vst [vmem:[#allocation3 + $0x458] sm:$0xff] %v651
        %684 = vst [vmem:[#allocation3 + $0x4a0] sm:$0xff] %v652
        %685 = vst [vmem:[#allocation3 + $0x4e8] sm:$0xff] %v653
        %686 = vst [vmem:[#allocation3 + $0x530] sm:$0xff] %v654
        %687 = vst [vmem:[#allocation3 + $0x578] sm:$0xff] %v655
        %688 = vst [vmem:[#allocation3 + $0x5c0] sm:$0xff] %v656
        %689 = vst [vmem:[#allocation3 + $0x608] sm:$0xff] %v657
        %690 = vst [vmem:[#allocation3 + $0x650] sm:$0xff] %v658
        %691 = vst [vmem:[#allocation3 + $0x698] sm:$0xff] %v659
        %692 = vst [vmem:[#allocation3 + $0x6e0] sm:$0xff] %v660
        %693 = vst [vmem:[#allocation3 + $0x728] sm:$0xff] %v661
        %694 = vst [vmem:[#allocation3 + $0x770] sm:$0xff] %v662
        %695 = vst [vmem:[#allocation3 + $0x7b8] sm:$0xff] %v663
        %696 = vst [vmem:[#allocation3 + $0x800] sm:$0xff] %v664
        %697 = vst [vmem:[#allocation3 + $0x848] sm:$0xff] %v665
        %698 = vst [vmem:[#allocation3 + $0x890] sm:$0xff] %v666
        %699 = vst [vmem:[#allocation3 + $0x8d8] sm:$0xff] %v667
        %v700 = vld [vmem:[%s347 + $0x2] sm:$0xff]
        %v701 = vld [vmem:[%s347 + $0xa] sm:$0xff]
        %v702 = vld [vmem:[%s347 + $0x1a] sm:$0xff]
        %v703 = vld [vmem:[%s347 + $0x22] sm:$0xff]
        %v704 = vld [vmem:[%s347 + $0x32] sm:$0xff]
        %v705 = vld [vmem:[%s347 + $0x3a] sm:$0xff]
        %v706 = vld [vmem:[%s347 + $0x4a] sm:$0xff]
        %v707 = vld [vmem:[%s347 + $0x52] sm:$0xff]
        %v708 = vld [vmem:[%s347 + $0x62] sm:$0xff]
        %v709 = vld [vmem:[%s347 + $0x6a] sm:$0xff]
        %v710 = vld [vmem:[%s347 + $0x7a] sm:$0xff]
        %v711 = vld [vmem:[%s347 + $0x82] sm:$0xff]
        %v712 = vld [vmem:[%s347 + $0x92] sm:$0xff]
        %v713 = vld [vmem:[%s347 + $0x9a] sm:$0xff]
        %v714 = vld [vmem:[%s347 + $0xaa] sm:$0xff]
        %v715 = vld [vmem:[%s347 + $0xb2] sm:$0xff]
        %v716 = vld [vmem:[%s347 + $0xc2] sm:$0xff]
        %v717 = vld [vmem:[%s347 + $0xca] sm:$0xff]
        %v718 = vld [vmem:[%s347 + $0xda] sm:$0xff]
        %v719 = vld [vmem:[%s347 + $0xe2] sm:$0xff]
        %v720 = vld [vmem:[%s347 + $0xf2] sm:$0xff]
        %v721 = vld [vmem:[%s347 + $0xfa] sm:$0xff]
        %v722 = vld [vmem:[%s347 + $0x10a] sm:$0xff]
        %v723 = vld [vmem:[%s347 + $0x112] sm:$0xff]
        %v724 = vld [vmem:[%s347 + $0x122] sm:$0xff]
        %v725 = vld [vmem:[%s347 + $0x12a] sm:$0xff]
        %v726 = vld [vmem:[%s347 + $0x13a] sm:$0xff]
        %v727 = vld [vmem:[%s347 + $0x142] sm:$0xff]
        %v728 = vld [vmem:[%s347 + $0x152] sm:$0xff]
        %v729 = vld [vmem:[%s347 + $0x15a] sm:$0xff]
        %v730 = vld [vmem:[%s347 + $0x16a] sm:$0xff]
        %v731 = vld [vmem:[%s347 + $0x172] sm:$0xff]
        %732 = vst [vmem:[#allocation3 + $0x28] sm:$0xff] %v700
        %733 = vst [vmem:[#allocation3 + $0x70] sm:$0xff] %v701
        %734 = vst [vmem:[#allocation3 + $0xb8] sm:$0xff] %v702
        %735 = vst [vmem:[#allocation3 + $0x100] sm:$0xff] %v703
        %736 = vst [vmem:[#allocation3 + $0x148] sm:$0xff] %v704
        %737 = vst [vmem:[#allocation3 + $0x190] sm:$0xff] %v705
        %738 = vst [vmem:[#allocation3 + $0x1d8] sm:$0xff] %v706
        %739 = vst [vmem:[#allocation3 + $0x220] sm:$0xff] %v707
        %740 = vst [vmem:[#allocation3 + $0x268] sm:$0xff] %v708
        %741 = vst [vmem:[#allocation3 + $0x2b0] sm:$0xff] %v709
        %742 = vst [vmem:[#allocation3 + $0x2f8] sm:$0xff] %v710
        %743 = vst [vmem:[#allocation3 + $0x340] sm:$0xff] %v711
        %744 = vst [vmem:[#allocation3 + $0x388] sm:$0xff] %v712
        %745 = vst [vmem:[#allocation3 + $0x3d0] sm:$0xff] %v713
        %746 = vst [vmem:[#allocation3 + $0x418] sm:$0xff] %v714
        %747 = vst [vmem:[#allocation3 + $0x460] sm:$0xff] %v715
        %748 = vst [vmem:[#allocation3 + $0x4a8] sm:$0xff] %v716
        %749 = vst [vmem:[#allocation3 + $0x4f0] sm:$0xff] %v717
        %750 = vst [vmem:[#allocation3 + $0x538] sm:$0xff] %v718
        %751 = vst [vmem:[#allocation3 + $0x580] sm:$0xff] %v719
        %752 = vst [vmem:[#allocation3 + $0x5c8] sm:$0xff] %v720
        %753 = vst [vmem:[#allocation3 + $0x610] sm:$0xff] %v721
        %754 = vst [vmem:[#allocation3 + $0x658] sm:$0xff] %v722
        %755 = vst [vmem:[#allocation3 + $0x6a0] sm:$0xff] %v723
        %756 = vst [vmem:[#allocation3 + $0x6e8] sm:$0xff] %v724
        %757 = vst [vmem:[#allocation3 + $0x730] sm:$0xff] %v725
        %758 = vst [vmem:[#allocation3 + $0x778] sm:$0xff] %v726
        %759 = vst [vmem:[#allocation3 + $0x7c0] sm:$0xff] %v727
        %760 = vst [vmem:[#allocation3 + $0x808] sm:$0xff] %v728
        %761 = vst [vmem:[#allocation3 + $0x850] sm:$0xff] %v729
        %762 = vst [vmem:[#allocation3 + $0x898] sm:$0xff] %v730
        %763 = vst [vmem:[#allocation3 + $0x8e0] sm:$0xff] %v731
        %s764 = scalar_lea.vmem [#allocation2], 48
        %v765 = vld [vmem:[%s764] sm:$0xff]
        %v766 = vld [vmem:[%s764 + $0x8] sm:$0xff]
        %v767 = vld [vmem:[%s764 + $0x18] sm:$0xff]
        %v768 = vld [vmem:[%s764 + $0x20] sm:$0xff]
        %v769 = vld [vmem:[%s764 + $0x30] sm:$0xff]
        %v770 = vld [vmem:[%s764 + $0x38] sm:$0xff]
        %v771 = vld [vmem:[%s764 + $0x48] sm:$0xff]
        %v772 = vld [vmem:[%s764 + $0x50] sm:$0xff]
        %v773 = vld [vmem:[%s764 + $0x60] sm:$0xff]
        %v774 = vld [vmem:[%s764 + $0x68] sm:$0xff]
        %v775 = vld [vmem:[%s764 + $0x78] sm:$0xff]
        %v776 = vld [vmem:[%s764 + $0x80] sm:$0xff]
        %v777 = vld [vmem:[%s764 + $0x90] sm:$0xff]
        %v778 = vld [vmem:[%s764 + $0x98] sm:$0xff]
        %v779 = vld [vmem:[%s764 + $0xa8] sm:$0xff]
        %v780 = vld [vmem:[%s764 + $0xb0] sm:$0xff]
        %v781 = vld [vmem:[%s764 + $0xc0] sm:$0xff]
        %v782 = vld [vmem:[%s764 + $0xc8] sm:$0xff]
        %v783 = vld [vmem:[%s764 + $0xd8] sm:$0xff]
        %v784 = vld [vmem:[%s764 + $0xe0] sm:$0xff]
        %v785 = vld [vmem:[%s764 + $0xf0] sm:$0xff]
        %v786 = vld [vmem:[%s764 + $0xf8] sm:$0xff]
        %v787 = vld [vmem:[%s764 + $0x108] sm:$0xff]
        %v788 = vld [vmem:[%s764 + $0x110] sm:$0xff]
        %v789 = vld [vmem:[%s764 + $0x120] sm:$0xff]
        %v790 = vld [vmem:[%s764 + $0x128] sm:$0xff]
        %v791 = vld [vmem:[%s764 + $0x138] sm:$0xff]
        %v792 = vld [vmem:[%s764 + $0x140] sm:$0xff]
        %v793 = vld [vmem:[%s764 + $0x150] sm:$0xff]
        %v794 = vld [vmem:[%s764 + $0x158] sm:$0xff]
        %v795 = vld [vmem:[%s764 + $0x168] sm:$0xff]
        %v796 = vld [vmem:[%s764 + $0x170] sm:$0xff]
        %797 = vst [vmem:[#allocation3 + $0x30] sm:$0xff] %v765
        %798 = vst [vmem:[#allocation3 + $0x78] sm:$0xff] %v766
        %799 = vst [vmem:[#allocation3 + $0xc0] sm:$0xff] %v767
        %800 = vst [vmem:[#allocation3 + $0x108] sm:$0xff] %v768
        %801 = vst [vmem:[#allocation3 + $0x150] sm:$0xff] %v769
        %802 = vst [vmem:[#allocation3 + $0x198] sm:$0xff] %v770
        %803 = vst [vmem:[#allocation3 + $0x1e0] sm:$0xff] %v771
        %804 = vst [vmem:[#allocation3 + $0x228] sm:$0xff] %v772
        %805 = vst [vmem:[#allocation3 + $0x270] sm:$0xff] %v773
        %806 = vst [vmem:[#allocation3 + $0x2b8] sm:$0xff] %v774
        %807 = vst [vmem:[#allocation3 + $0x300] sm:$0xff] %v775
        %808 = vst [vmem:[#allocation3 + $0x348] sm:$0xff] %v776
        %809 = vst [vmem:[#allocation3 + $0x390] sm:$0xff] %v777
        %810 = vst [vmem:[#allocation3 + $0x3d8] sm:$0xff] %v778
        %811 = vst [vmem:[#allocation3 + $0x420] sm:$0xff] %v779
        %812 = vst [vmem:[#allocation3 + $0x468] sm:$0xff] %v780
        %813 = vst [vmem:[#allocation3 + $0x4b0] sm:$0xff] %v781
        %814 = vst [vmem:[#allocation3 + $0x4f8] sm:$0xff] %v782
        %815 = vst [vmem:[#allocation3 + $0x540] sm:$0xff] %v783
        %816 = vst [vmem:[#allocation3 + $0x588] sm:$0xff] %v784
        %817 = vst [vmem:[#allocation3 + $0x5d0] sm:$0xff] %v785
        %818 = vst [vmem:[#allocation3 + $0x618] sm:$0xff] %v786
        %819 = vst [vmem:[#allocation3 + $0x660] sm:$0xff] %v787
        %820 = vst [vmem:[#allocation3 + $0x6a8] sm:$0xff] %v788
        %821 = vst [vmem:[#allocation3 + $0x6f0] sm:$0xff] %v789
        %822 = vst [vmem:[#allocation3 + $0x738] sm:$0xff] %v790
        %823 = vst [vmem:[#allocation3 + $0x780] sm:$0xff] %v791
        %824 = vst [vmem:[#allocation3 + $0x7c8] sm:$0xff] %v792
        %825 = vst [vmem:[#allocation3 + $0x810] sm:$0xff] %v793
        %826 = vst [vmem:[#allocation3 + $0x858] sm:$0xff] %v794
        %827 = vst [vmem:[#allocation3 + $0x8a0] sm:$0xff] %v795
        %828 = vst [vmem:[#allocation3 + $0x8e8] sm:$0xff] %v796
        %v829 = vld [vmem:[%s764 + $0x1] sm:$0xff]
        %v830 = vld [vmem:[%s764 + $0x9] sm:$0xff]
        %v831 = vld [vmem:[%s764 + $0x19] sm:$0xff]
        %v832 = vld [vmem:[%s764 + $0x21] sm:$0xff]
        %v833 = vld [vmem:[%s764 + $0x31] sm:$0xff]
        %v834 = vld [vmem:[%s764 + $0x39] sm:$0xff]
        %v835 = vld [vmem:[%s764 + $0x49] sm:$0xff]
        %v836 = vld [vmem:[%s764 + $0x51] sm:$0xff]
        %v837 = vld [vmem:[%s764 + $0x61] sm:$0xff]
        %v838 = vld [vmem:[%s764 + $0x69] sm:$0xff]
        %v839 = vld [vmem:[%s764 + $0x79] sm:$0xff]
        %v840 = vld [vmem:[%s764 + $0x81] sm:$0xff]
        %v841 = vld [vmem:[%s764 + $0x91] sm:$0xff]
        %v842 = vld [vmem:[%s764 + $0x99] sm:$0xff]
        %v843 = vld [vmem:[%s764 + $0xa9] sm:$0xff]
        %v844 = vld [vmem:[%s764 + $0xb1] sm:$0xff]
        %v845 = vld [vmem:[%s764 + $0xc1] sm:$0xff]
        %v846 = vld [vmem:[%s764 + $0xc9] sm:$0xff]
        %v847 = vld [vmem:[%s764 + $0xd9] sm:$0xff]
        %v848 = vld [vmem:[%s764 + $0xe1] sm:$0xff]
        %v849 = vld [vmem:[%s764 + $0xf1] sm:$0xff]
        %v850 = vld [vmem:[%s764 + $0xf9] sm:$0xff]
        %v851 = vld [vmem:[%s764 + $0x109] sm:$0xff]
        %v852 = vld [vmem:[%s764 + $0x111] sm:$0xff]
        %v853 = vld [vmem:[%s764 + $0x121] sm:$0xff]
        %v854 = vld [vmem:[%s764 + $0x129] sm:$0xff]
        %v855 = vld [vmem:[%s764 + $0x139] sm:$0xff]
        %v856 = vld [vmem:[%s764 + $0x141] sm:$0xff]
        %v857 = vld [vmem:[%s764 + $0x151] sm:$0xff]
        %v858 = vld [vmem:[%s764 + $0x159] sm:$0xff]
        %v859 = vld [vmem:[%s764 + $0x169] sm:$0xff]
        %v860 = vld [vmem:[%s764 + $0x171] sm:$0xff]
        %861 = vst [vmem:[#allocation3 + $0x38] sm:$0xff] %v829
        %862 = vst [vmem:[#allocation3 + $0x80] sm:$0xff] %v830
        %863 = vst [vmem:[#allocation3 + $0xc8] sm:$0xff] %v831
        %864 = vst [vmem:[#allocation3 + $0x110] sm:$0xff] %v832
        %865 = vst [vmem:[#allocation3 + $0x158] sm:$0xff] %v833
        %866 = vst [vmem:[#allocation3 + $0x1a0] sm:$0xff] %v834
        %867 = vst [vmem:[#allocation3 + $0x1e8] sm:$0xff] %v835
        %868 = vst [vmem:[#allocation3 + $0x230] sm:$0xff] %v836
        %869 = vst [vmem:[#allocation3 + $0x278] sm:$0xff] %v837
        %870 = vst [vmem:[#allocation3 + $0x2c0] sm:$0xff] %v838
        %871 = vst [vmem:[#allocation3 + $0x308] sm:$0xff] %v839
        %872 = vst [vmem:[#allocation3 + $0x350] sm:$0xff] %v840
        %873 = vst [vmem:[#allocation3 + $0x398] sm:$0xff] %v841
        %874 = vst [vmem:[#allocation3 + $0x3e0] sm:$0xff] %v842
        %875 = vst [vmem:[#allocation3 + $0x428] sm:$0xff] %v843
        %876 = vst [vmem:[#allocation3 + $0x470] sm:$0xff] %v844
        %877 = vst [vmem:[#allocation3 + $0x4b8] sm:$0xff] %v845
        %878 = vst [vmem:[#allocation3 + $0x500] sm:$0xff] %v846
        %879 = vst [vmem:[#allocation3 + $0x548] sm:$0xff] %v847
        %880 = vst [vmem:[#allocation3 + $0x590] sm:$0xff] %v848
        %881 = vst [vmem:[#allocation3 + $0x5d8] sm:$0xff] %v849
        %882 = vst [vmem:[#allocation3 + $0x620] sm:$0xff] %v850
        %883 = vst [vmem:[#allocation3 + $0x668] sm:$0xff] %v851
        %884 = vst [vmem:[#allocation3 + $0x6b0] sm:$0xff] %v852
        %885 = vst [vmem:[#allocation3 + $0x6f8] sm:$0xff] %v853
        %886 = vst [vmem:[#allocation3 + $0x740] sm:$0xff] %v854
        %887 = vst [vmem:[#allocation3 + $0x788] sm:$0xff] %v855
        %888 = vst [vmem:[#allocation3 + $0x7d0] sm:$0xff] %v856
        %889 = vst [vmem:[#allocation3 + $0x818] sm:$0xff] %v857
        %890 = vst [vmem:[#allocation3 + $0x860] sm:$0xff] %v858
        %891 = vst [vmem:[#allocation3 + $0x8a8] sm:$0xff] %v859
        %892 = vst [vmem:[#allocation3 + $0x8f0] sm:$0xff] %v860
        %v893 = vld [vmem:[%s764 + $0x2] sm:$0xff]
        %v894 = vld [vmem:[%s764 + $0xa] sm:$0xff]
        %v895 = vld [vmem:[%s764 + $0x1a] sm:$0xff]
        %v896 = vld [vmem:[%s764 + $0x22] sm:$0xff]
        %v897 = vld [vmem:[%s764 + $0x32] sm:$0xff]
        %v898 = vld [vmem:[%s764 + $0x3a] sm:$0xff]
        %v899 = vld [vmem:[%s764 + $0x4a] sm:$0xff]
        %v900 = vld [vmem:[%s764 + $0x52] sm:$0xff]
        %v901 = vld [vmem:[%s764 + $0x62] sm:$0xff]
        %v902 = vld [vmem:[%s764 + $0x6a] sm:$0xff]
        %v903 = vld [vmem:[%s764 + $0x7a] sm:$0xff]
        %v904 = vld [vmem:[%s764 + $0x82] sm:$0xff]
        %v905 = vld [vmem:[%s764 + $0x92] sm:$0xff]
        %v906 = vld [vmem:[%s764 + $0x9a] sm:$0xff]
        %v907 = vld [vmem:[%s764 + $0xaa] sm:$0xff]
        %v908 = vld [vmem:[%s764 + $0xb2] sm:$0xff]
        %v909 = vld [vmem:[%s764 + $0xc2] sm:$0xff]
        %v910 = vld [vmem:[%s764 + $0xca] sm:$0xff]
        %v911 = vld [vmem:[%s764 + $0xda] sm:$0xff]
        %v912 = vld [vmem:[%s764 + $0xe2] sm:$0xff]
        %v913 = vld [vmem:[%s764 + $0xf2] sm:$0xff]
        %v914 = vld [vmem:[%s764 + $0xfa] sm:$0xff]
        %v915 = vld [vmem:[%s764 + $0x10a] sm:$0xff]
        %v916 = vld [vmem:[%s764 + $0x112] sm:$0xff]
        %v917 = vld [vmem:[%s764 + $0x122] sm:$0xff]
        %v918 = vld [vmem:[%s764 + $0x12a] sm:$0xff]
        %v919 = vld [vmem:[%s764 + $0x13a] sm:$0xff]
        %v920 = vld [vmem:[%s764 + $0x142] sm:$0xff]
        %v921 = vld [vmem:[%s764 + $0x152] sm:$0xff]
        %v922 = vld [vmem:[%s764 + $0x15a] sm:$0xff]
        %v923 = vld [vmem:[%s764 + $0x16a] sm:$0xff]
        %v924 = vld [vmem:[%s764 + $0x172] sm:$0xff]
        %925 = vst [vmem:[#allocation3 + $0x40] sm:$0xff] %v893
        %926 = vst [vmem:[#allocation3 + $0x88] sm:$0xff] %v894
        %927 = vst [vmem:[#allocation3 + $0xd0] sm:$0xff] %v895
        %928 = vst [vmem:[#allocation3 + $0x118] sm:$0xff] %v896
        %929 = vst [vmem:[#allocation3 + $0x160] sm:$0xff] %v897
        %930 = vst [vmem:[#allocation3 + $0x1a8] sm:$0xff] %v898
        %931 = vst [vmem:[#allocation3 + $0x1f0] sm:$0xff] %v899
        %932 = vst [vmem:[#allocation3 + $0x238] sm:$0xff] %v900
        %933 = vst [vmem:[#allocation3 + $0x280] sm:$0xff] %v901
        %934 = vst [vmem:[#allocation3 + $0x2c8] sm:$0xff] %v902
        %935 = vst [vmem:[#allocation3 + $0x310] sm:$0xff] %v903
        %936 = vst [vmem:[#allocation3 + $0x358] sm:$0xff] %v904
        %937 = vst [vmem:[#allocation3 + $0x3a0] sm:$0xff] %v905
        %938 = vst [vmem:[#allocation3 + $0x3e8] sm:$0xff] %v906
        %939 = vst [vmem:[#allocation3 + $0x430] sm:$0xff] %v907
        %940 = vst [vmem:[#allocation3 + $0x478] sm:$0xff] %v908
        %941 = vst [vmem:[#allocation3 + $0x4c0] sm:$0xff] %v909
        %942 = vst [vmem:[#allocation3 + $0x508] sm:$0xff] %v910
        %943 = vst [vmem:[#allocation3 + $0x550] sm:$0xff] %v911
        %944 = vst [vmem:[#allocation3 + $0x598] sm:$0xff] %v912
        %945 = vst [vmem:[#allocation3 + $0x5e0] sm:$0xff] %v913
        %946 = vst [vmem:[#allocation3 + $0x628] sm:$0xff] %v914
        %947 = vst [vmem:[#allocation3 + $0x670] sm:$0xff] %v915
        %948 = vst [vmem:[#allocation3 + $0x6b8] sm:$0xff] %v916
        %949 = vst [vmem:[#allocation3 + $0x700] sm:$0xff] %v917
        %950 = vst [vmem:[#allocation3 + $0x748] sm:$0xff] %v918
        %951 = vst [vmem:[#allocation3 + $0x790] sm:$0xff] %v919
        %952 = vst [vmem:[#allocation3 + $0x7d8] sm:$0xff] %v920
        %953 = vst [vmem:[#allocation3 + $0x820] sm:$0xff] %v921
        %954 = vst [vmem:[#allocation3 + $0x868] sm:$0xff] %v922
        %955 = vst [vmem:[#allocation3 + $0x8b0] sm:$0xff] %v923
        %956 = vst [vmem:[#allocation3 + $0x8f8] sm:$0xff] %v924
        %v957 = vld [vmem:[#allocation3] sm:$0xff]
        %v958 = vld [vmem:[#allocation3 + $0x8] sm:$0xff]
        %v959 = vld [vmem:[#allocation3 + $0x10] sm:$0xff]
        %v960 = vld [vmem:[#allocation3 + $0x18] sm:$0xff]
        %v961 = vld [vmem:[#allocation3 + $0x20] sm:$0xff]
        %v962 = vld [vmem:[#allocation3 + $0x28] sm:$0xff]
        %v963 = vld [vmem:[#allocation3 + $0x30] sm:$0xff]
        %v964 = vld [vmem:[#allocation3 + $0x38] sm:$0xff]
        %v965 = vld [vmem:[#allocation3 + $0x40] sm:$0xff]
        %v966 = vld [vmem:[#allocation3 + $0x48] sm:$0xff]
        %v967 = vld [vmem:[#allocation3 + $0x50] sm:$0xff]
        %v968 = vld [vmem:[#allocation3 + $0x58] sm:$0xff]
        %v969 = vld [vmem:[#allocation3 + $0x60] sm:$0xff]
        %v970 = vld [vmem:[#allocation3 + $0x68] sm:$0xff]
        %v971 = vld [vmem:[#allocation3 + $0x70] sm:$0xff]
        %v972 = vld [vmem:[#allocation3 + $0x78] sm:$0xff]
        %v973 = vld [vmem:[#allocation3 + $0x80] sm:$0xff]
        %v974 = vld [vmem:[#allocation3 + $0x88] sm:$0xff]
        %v975 = vld [vmem:[#allocation3 + $0x90] sm:$0xff]
        %v976 = vld [vmem:[#allocation3 + $0x98] sm:$0xff]
        %v977 = vld [vmem:[#allocation3 + $0xa0] sm:$0xff]
        %v978 = vld [vmem:[#allocation3 + $0xa8] sm:$0xff]
        %v979 = vld [vmem:[#allocation3 + $0xb0] sm:$0xff]
        %v980 = vld [vmem:[#allocation3 + $0xb8] sm:$0xff]
        %v981 = vld [vmem:[#allocation3 + $0xc0] sm:$0xff]
        %v982 = vld [vmem:[#allocation3 + $0xc8] sm:$0xff]
        %v983 = vld [vmem:[#allocation3 + $0xd0] sm:$0xff]
        %v984 = vld [vmem:[#allocation3 + $0xd8] sm:$0xff]
        %v985 = vld [vmem:[#allocation3 + $0xe0] sm:$0xff]
        %v986 = vld [vmem:[#allocation3 + $0xe8] sm:$0xff]
        %v987 = vld [vmem:[#allocation3 + $0xf0] sm:$0xff]
        %v988 = vld [vmem:[#allocation3 + $0xf8] sm:$0xff]
        %v989 = vld [vmem:[#allocation3 + $0x100] sm:$0xff]
        %v990 = vld [vmem:[#allocation3 + $0x108] sm:$0xff]
        %v991 = vld [vmem:[#allocation3 + $0x110] sm:$0xff]
        %v992 = vld [vmem:[#allocation3 + $0x118] sm:$0xff]
        %v993 = vld [vmem:[#allocation3 + $0x120] sm:$0xff]
        %v994 = vld [vmem:[#allocation3 + $0x128] sm:$0xff]
        %v995 = vld [vmem:[#allocation3 + $0x130] sm:$0xff]
        %v996 = vld [vmem:[#allocation3 + $0x138] sm:$0xff]
        %v997 = vld [vmem:[#allocation3 + $0x140] sm:$0xff]
        %v998 = vld [vmem:[#allocation3 + $0x148] sm:$0xff]
        %v999 = vld [vmem:[#allocation3 + $0x150] sm:$0xff]
        %v1000 = vld [vmem:[#allocation3 + $0x158] sm:$0xff]
        %v1001 = vld [vmem:[#allocation3 + $0x160] sm:$0xff]
        %v1002 = vld [vmem:[#allocation3 + $0x168] sm:$0xff]
        %v1003 = vld [vmem:[#allocation3 + $0x170] sm:$0xff]
        %v1004 = vld [vmem:[#allocation3 + $0x178] sm:$0xff]
        %v1005 = vld [vmem:[#allocation3 + $0x180] sm:$0xff]
        %v1006 = vld [vmem:[#allocation3 + $0x188] sm:$0xff]
        %v1007 = vld [vmem:[#allocation3 + $0x190] sm:$0xff]
        %v1008 = vld [vmem:[#allocation3 + $0x198] sm:$0xff]
        %v1009 = vld [vmem:[#allocation3 + $0x1a0] sm:$0xff]
        %v1010 = vld [vmem:[#allocation3 + $0x1a8] sm:$0xff]
        %v1011 = vld [vmem:[#allocation3 + $0x1b0] sm:$0xff]
        %v1012 = vld [vmem:[#allocation3 + $0x1b8] sm:$0xff]
        %v1013 = vld [vmem:[#allocation3 + $0x1c0] sm:$0xff]
        %v1014 = vld [vmem:[#allocation3 + $0x1c8] sm:$0xff]
        %v1015 = vld [vmem:[#allocation3 + $0x1d0] sm:$0xff]
        %v1016 = vld [vmem:[#allocation3 + $0x1d8] sm:$0xff]
        %v1017 = vld [vmem:[#allocation3 + $0x1e0] sm:$0xff]
        %v1018 = vld [vmem:[#allocation3 + $0x1e8] sm:$0xff]
        %v1019 = vld [vmem:[#allocation3 + $0x1f0] sm:$0xff]
        %v1020 = vld [vmem:[#allocation3 + $0x1f8] sm:$0xff]
        %v1021 = vld [vmem:[#allocation3 + $0x200] sm:$0xff]
        %v1022 = vld [vmem:[#allocation3 + $0x208] sm:$0xff]
        %v1023 = vld [vmem:[#allocation3 + $0x210] sm:$0xff]
        %v1024 = vld [vmem:[#allocation3 + $0x218] sm:$0xff]
        %v1025 = vld [vmem:[#allocation3 + $0x220] sm:$0xff]
        %v1026 = vld [vmem:[#allocation3 + $0x228] sm:$0xff]
        %v1027 = vld [vmem:[#allocation3 + $0x230] sm:$0xff]
        %v1028 = vld [vmem:[#allocation3 + $0x238] sm:$0xff]
        %v1029 = vld [vmem:[#allocation3 + $0x240] sm:$0xff]
        %v1030 = vld [vmem:[#allocation3 + $0x248] sm:$0xff]
        %v1031 = vld [vmem:[#allocation3 + $0x250] sm:$0xff]
        %v1032 = vld [vmem:[#allocation3 + $0x258] sm:$0xff]
        %v1033 = vld [vmem:[#allocation3 + $0x260] sm:$0xff]
        %v1034 = vld [vmem:[#allocation3 + $0x268] sm:$0xff]
        %v1035 = vld [vmem:[#allocation3 + $0x270] sm:$0xff]
        %v1036 = vld [vmem:[#allocation3 + $0x278] sm:$0xff]
        %v1037 = vld [vmem:[#allocation3 + $0x280] sm:$0xff]
        %v1038 = vld [vmem:[#allocation3 + $0x288] sm:$0xff]
        %v1039 = vld [vmem:[#allocation3 + $0x290] sm:$0xff]
        %v1040 = vld [vmem:[#allocation3 + $0x298] sm:$0xff]
        %v1041 = vld [vmem:[#allocation3 + $0x2a0] sm:$0xff]
        %v1042 = vld [vmem:[#allocation3 + $0x2a8] sm:$0xff]
        %v1043 = vld [vmem:[#allocation3 + $0x2b0] sm:$0xff]
        %v1044 = vld [vmem:[#allocation3 + $0x2b8] sm:$0xff]
        %v1045 = vld [vmem:[#allocation3 + $0x2c0] sm:$0xff]
        %v1046 = vld [vmem:[#allocation3 + $0x2c8] sm:$0xff]
        %v1047 = vld [vmem:[#allocation3 + $0x2d0] sm:$0xff]
        %v1048 = vld [vmem:[#allocation3 + $0x2d8] sm:$0xff]
        %v1049 = vld [vmem:[#allocation3 + $0x2e0] sm:$0xff]
        %v1050 = vld [vmem:[#allocation3 + $0x2e8] sm:$0xff]
        %v1051 = vld [vmem:[#allocation3 + $0x2f0] sm:$0xff]
        %v1052 = vld [vmem:[#allocation3 + $0x2f8] sm:$0xff]
        %v1053 = vld [vmem:[#allocation3 + $0x300] sm:$0xff]
        %v1054 = vld [vmem:[#allocation3 + $0x308] sm:$0xff]
        %v1055 = vld [vmem:[#allocation3 + $0x310] sm:$0xff]
        %v1056 = vld [vmem:[#allocation3 + $0x318] sm:$0xff]
        %v1057 = vld [vmem:[#allocation3 + $0x320] sm:$0xff]
        %v1058 = vld [vmem:[#allocation3 + $0x328] sm:$0xff]
        %v1059 = vld [vmem:[#allocation3 + $0x330] sm:$0xff]
        %v1060 = vld [vmem:[#allocation3 + $0x338] sm:$0xff]
        %v1061 = vld [vmem:[#allocation3 + $0x340] sm:$0xff]
        %v1062 = vld [vmem:[#allocation3 + $0x348] sm:$0xff]
        %v1063 = vld [vmem:[#allocation3 + $0x350] sm:$0xff]
        %v1064 = vld [vmem:[#allocation3 + $0x358] sm:$0xff]
        %v1065 = vld [vmem:[#allocation3 + $0x360] sm:$0xff]
        %v1066 = vld [vmem:[#allocation3 + $0x368] sm:$0xff]
        %v1067 = vld [vmem:[#allocation3 + $0x370] sm:$0xff]
        %v1068 = vld [vmem:[#allocation3 + $0x378] sm:$0xff]
        %v1069 = vld [vmem:[#allocation3 + $0x380] sm:$0xff]
        %v1070 = vld [vmem:[#allocation3 + $0x388] sm:$0xff]
        %v1071 = vld [vmem:[#allocation3 + $0x390] sm:$0xff]
        %v1072 = vld [vmem:[#allocation3 + $0x398] sm:$0xff]
        %v1073 = vld [vmem:[#allocation3 + $0x3a0] sm:$0xff]
        %v1074 = vld [vmem:[#allocation3 + $0x3a8] sm:$0xff]
        %v1075 = vld [vmem:[#allocation3 + $0x3b0] sm:$0xff]
        %v1076 = vld [vmem:[#allocation3 + $0x3b8] sm:$0xff]
        %v1077 = vld [vmem:[#allocation3 + $0x3c0] sm:$0xff]
        %v1078 = vld [vmem:[#allocation3 + $0x3c8] sm:$0xff]
        %v1079 = vld [vmem:[#allocation3 + $0x3d0] sm:$0xff]
        %v1080 = vld [vmem:[#allocation3 + $0x3d8] sm:$0xff]
        %v1081 = vld [vmem:[#allocation3 + $0x3e0] sm:$0xff]
        %v1082 = vld [vmem:[#allocation3 + $0x3e8] sm:$0xff]
        %v1083 = vld [vmem:[#allocation3 + $0x3f0] sm:$0xff]
        %v1084 = vld [vmem:[#allocation3 + $0x3f8] sm:$0xff]
        %v1085 = vld [vmem:[#allocation3 + $0x400] sm:$0xff]
        %v1086 = vld [vmem:[#allocation3 + $0x408] sm:$0xff]
        %v1087 = vld [vmem:[#allocation3 + $0x410] sm:$0xff]
        %v1088 = vld [vmem:[#allocation3 + $0x418] sm:$0xff]
        %v1089 = vld [vmem:[#allocation3 + $0x420] sm:$0xff]
        %v1090 = vld [vmem:[#allocation3 + $0x428] sm:$0xff]
        %v1091 = vld [vmem:[#allocation3 + $0x430] sm:$0xff]
        %v1092 = vld [vmem:[#allocation3 + $0x438] sm:$0xff]
        %v1093 = vld [vmem:[#allocation3 + $0x440] sm:$0xff]
        %v1094 = vld [vmem:[#allocation3 + $0x448] sm:$0xff]
        %v1095 = vld [vmem:[#allocation3 + $0x450] sm:$0xff]
        %v1096 = vld [vmem:[#allocation3 + $0x458] sm:$0xff]
        %v1097 = vld [vmem:[#allocation3 + $0x460] sm:$0xff]
        %v1098 = vld [vmem:[#allocation3 + $0x468] sm:$0xff]
        %v1099 = vld [vmem:[#allocation3 + $0x470] sm:$0xff]
        %v1100 = vld [vmem:[#allocation3 + $0x478] sm:$0xff]
        %v1101 = vld [vmem:[#allocation3 + $0x480] sm:$0xff]
        %v1102 = vld [vmem:[#allocation3 + $0x488] sm:$0xff]
        %v1103 = vld [vmem:[#allocation3 + $0x490] sm:$0xff]
        %v1104 = vld [vmem:[#allocation3 + $0x498] sm:$0xff]
        %v1105 = vld [vmem:[#allocation3 + $0x4a0] sm:$0xff]
        %v1106 = vld [vmem:[#allocation3 + $0x4a8] sm:$0xff]
        %v1107 = vld [vmem:[#allocation3 + $0x4b0] sm:$0xff]
        %v1108 = vld [vmem:[#allocation3 + $0x4b8] sm:$0xff]
        %v1109 = vld [vmem:[#allocation3 + $0x4c0] sm:$0xff]
        %v1110 = vld [vmem:[#allocation3 + $0x4c8] sm:$0xff]
        %v1111 = vld [vmem:[#allocation3 + $0x4d0] sm:$0xff]
        %v1112 = vld [vmem:[#allocation3 + $0x4d8] sm:$0xff]
        %v1113 = vld [vmem:[#allocation3 + $0x4e0] sm:$0xff]
        %v1114 = vld [vmem:[#allocation3 + $0x4e8] sm:$0xff]
        %v1115 = vld [vmem:[#allocation3 + $0x4f0] sm:$0xff]
        %v1116 = vld [vmem:[#allocation3 + $0x4f8] sm:$0xff]
        %v1117 = vld [vmem:[#allocation3 + $0x500] sm:$0xff]
        %v1118 = vld [vmem:[#allocation3 + $0x508] sm:$0xff]
        %v1119 = vld [vmem:[#allocation3 + $0x510] sm:$0xff]
        %v1120 = vld [vmem:[#allocation3 + $0x518] sm:$0xff]
        %v1121 = vld [vmem:[#allocation3 + $0x520] sm:$0xff]
        %v1122 = vld [vmem:[#allocation3 + $0x528] sm:$0xff]
        %v1123 = vld [vmem:[#allocation3 + $0x530] sm:$0xff]
        %v1124 = vld [vmem:[#allocation3 + $0x538] sm:$0xff]
        %v1125 = vld [vmem:[#allocation3 + $0x540] sm:$0xff]
        %v1126 = vld [vmem:[#allocation3 + $0x548] sm:$0xff]
        %v1127 = vld [vmem:[#allocation3 + $0x550] sm:$0xff]
        %v1128 = vld [vmem:[#allocation3 + $0x558] sm:$0xff]
        %v1129 = vld [vmem:[#allocation3 + $0x560] sm:$0xff]
        %v1130 = vld [vmem:[#allocation3 + $0x568] sm:$0xff]
        %v1131 = vld [vmem:[#allocation3 + $0x570] sm:$0xff]
        %v1132 = vld [vmem:[#allocation3 + $0x578] sm:$0xff]
        %v1133 = vld [vmem:[#allocation3 + $0x580] sm:$0xff]
        %v1134 = vld [vmem:[#allocation3 + $0x588] sm:$0xff]
        %v1135 = vld [vmem:[#allocation3 + $0x590] sm:$0xff]
        %v1136 = vld [vmem:[#allocation3 + $0x598] sm:$0xff]
        %v1137 = vld [vmem:[#allocation3 + $0x5a0] sm:$0xff]
        %v1138 = vld [vmem:[#allocation3 + $0x5a8] sm:$0xff]
        %v1139 = vld [vmem:[#allocation3 + $0x5b0] sm:$0xff]
        %v1140 = vld [vmem:[#allocation3 + $0x5b8] sm:$0xff]
        %v1141 = vld [vmem:[#allocation3 + $0x5c0] sm:$0xff]
        %v1142 = vld [vmem:[#allocation3 + $0x5c8] sm:$0xff]
        %v1143 = vld [vmem:[#allocation3 + $0x5d0] sm:$0xff]
        %v1144 = vld [vmem:[#allocation3 + $0x5d8] sm:$0xff]
        %v1145 = vld [vmem:[#allocation3 + $0x5e0] sm:$0xff]
        %v1146 = vld [vmem:[#allocation3 + $0x5e8] sm:$0xff]
        %v1147 = vld [vmem:[#allocation3 + $0x5f0] sm:$0xff]
        %v1148 = vld [vmem:[#allocation3 + $0x5f8] sm:$0xff]
        %v1149 = vld [vmem:[#allocation3 + $0x600] sm:$0xff]
        %v1150 = vld [vmem:[#allocation3 + $0x608] sm:$0xff]
        %v1151 = vld [vmem:[#allocation3 + $0x610] sm:$0xff]
        %v1152 = vld [vmem:[#allocation3 + $0x618] sm:$0xff]
        %v1153 = vld [vmem:[#allocation3 + $0x620] sm:$0xff]
        %v1154 = vld [vmem:[#allocation3 + $0x628] sm:$0xff]
        %v1155 = vld [vmem:[#allocation3 + $0x630] sm:$0xff]
        %v1156 = vld [vmem:[#allocation3 + $0x638] sm:$0xff]
        %v1157 = vld [vmem:[#allocation3 + $0x640] sm:$0xff]
        %v1158 = vld [vmem:[#allocation3 + $0x648] sm:$0xff]
        %v1159 = vld [vmem:[#allocation3 + $0x650] sm:$0xff]
        %v1160 = vld [vmem:[#allocation3 + $0x658] sm:$0xff]
        %v1161 = vld [vmem:[#allocation3 + $0x660] sm:$0xff]
        %v1162 = vld [vmem:[#allocation3 + $0x668] sm:$0xff]
        %v1163 = vld [vmem:[#allocation3 + $0x670] sm:$0xff]
        %v1164 = vld [vmem:[#allocation3 + $0x678] sm:$0xff]
        %v1165 = vld [vmem:[#allocation3 + $0x680] sm:$0xff]
        %v1166 = vld [vmem:[#allocation3 + $0x688] sm:$0xff]
        %v1167 = vld [vmem:[#allocation3 + $0x690] sm:$0xff]
        %v1168 = vld [vmem:[#allocation3 + $0x698] sm:$0xff]
        %v1169 = vld [vmem:[#allocation3 + $0x6a0] sm:$0xff]
        %v1170 = vld [vmem:[#allocation3 + $0x6a8] sm:$0xff]
        %v1171 = vld [vmem:[#allocation3 + $0x6b0] sm:$0xff]
        %v1172 = vld [vmem:[#allocation3 + $0x6b8] sm:$0xff]
        %v1173 = vld [vmem:[#allocation3 + $0x6c0] sm:$0xff]
        %v1174 = vld [vmem:[#allocation3 + $0x6c8] sm:$0xff]
        %v1175 = vld [vmem:[#allocation3 + $0x6d0] sm:$0xff]
        %v1176 = vld [vmem:[#allocation3 + $0x6d8] sm:$0xff]
        %v1177 = vld [vmem:[#allocation3 + $0x6e0] sm:$0xff]
        %v1178 = vld [vmem:[#allocation3 + $0x6e8] sm:$0xff]
        %v1179 = vld [vmem:[#allocation3 + $0x6f0] sm:$0xff]
        %v1180 = vld [vmem:[#allocation3 + $0x6f8] sm:$0xff]
        %v1181 = vld [vmem:[#allocation3 + $0x700] sm:$0xff]
        %v1182 = vld [vmem:[#allocation3 + $0x708] sm:$0xff]
        %v1183 = vld [vmem:[#allocation3 + $0x710] sm:$0xff]
        %v1184 = vld [vmem:[#allocation3 + $0x718] sm:$0xff]
        %v1185 = vld [vmem:[#allocation3 + $0x720] sm:$0xff]
        %v1186 = vld [vmem:[#allocation3 + $0x728] sm:$0xff]
        %v1187 = vld [vmem:[#allocation3 + $0x730] sm:$0xff]
        %v1188 = vld [vmem:[#allocation3 + $0x738] sm:$0xff]
        %v1189 = vld [vmem:[#allocation3 + $0x740] sm:$0xff]
        %v1190 = vld [vmem:[#allocation3 + $0x748] sm:$0xff]
        %v1191 = vld [vmem:[#allocation3 + $0x750] sm:$0xff]
        %v1192 = vld [vmem:[#allocation3 + $0x758] sm:$0xff]
        %v1193 = vld [vmem:[#allocation3 + $0x760] sm:$0xff]
        %v1194 = vld [vmem:[#allocation3 + $0x768] sm:$0xff]
        %v1195 = vld [vmem:[#allocation3 + $0x770] sm:$0xff]
        %v1196 = vld [vmem:[#allocation3 + $0x778] sm:$0xff]
        %v1197 = vld [vmem:[#allocation3 + $0x780] sm:$0xff]
        %v1198 = vld [vmem:[#allocation3 + $0x788] sm:$0xff]
        %v1199 = vld [vmem:[#allocation3 + $0x790] sm:$0xff]
        %v1200 = vld [vmem:[#allocation3 + $0x798] sm:$0xff]
        %v1201 = vld [vmem:[#allocation3 + $0x7a0] sm:$0xff]
        %v1202 = vld [vmem:[#allocation3 + $0x7a8] sm:$0xff]
        %v1203 = vld [vmem:[#allocation3 + $0x7b0] sm:$0xff]
        %v1204 = vld [vmem:[#allocation3 + $0x7b8] sm:$0xff]
        %v1205 = vld [vmem:[#allocation3 + $0x7c0] sm:$0xff]
        %v1206 = vld [vmem:[#allocation3 + $0x7c8] sm:$0xff]
        %v1207 = vld [vmem:[#allocation3 + $0x7d0] sm:$0xff]
        %v1208 = vld [vmem:[#allocation3 + $0x7d8] sm:$0xff]
        %v1209 = vld [vmem:[#allocation3 + $0x7e0] sm:$0xff]
        %v1210 = vld [vmem:[#allocation3 + $0x7e8] sm:$0xff]
        %v1211 = vld [vmem:[#allocation3 + $0x7f0] sm:$0xff]
        %v1212 = vld [vmem:[#allocation3 + $0x7f8] sm:$0xff]
        %v1213 = vld [vmem:[#allocation3 + $0x800] sm:$0xff]
        %v1214 = vld [vmem:[#allocation3 + $0x808] sm:$0xff]
        %v1215 = vld [vmem:[#allocation3 + $0x810] sm:$0xff]
        %v1216 = vld [vmem:[#allocation3 + $0x818] sm:$0xff]
        %v1217 = vld [vmem:[#allocation3 + $0x820] sm:$0xff]
        %v1218 = vld [vmem:[#allocation3 + $0x828] sm:$0xff]
        %v1219 = vld [vmem:[#allocation3 + $0x830] sm:$0xff]
        %v1220 = vld [vmem:[#allocation3 + $0x838] sm:$0xff]
        %v1221 = vld [vmem:[#allocation3 + $0x840] sm:$0xff]
        %v1222 = vld [vmem:[#allocation3 + $0x848] sm:$0xff]
        %v1223 = vld [vmem:[#allocation3 + $0x850] sm:$0xff]
        %v1224 = vld [vmem:[#allocation3 + $0x858] sm:$0xff]
        %v1225 = vld [vmem:[#allocation3 + $0x860] sm:$0xff]
        %v1226 = vld [vmem:[#allocation3 + $0x868] sm:$0xff]
        %v1227 = vld [vmem:[#allocation3 + $0x870] sm:$0xff]
        %v1228 = vld [vmem:[#allocation3 + $0x878] sm:$0xff]
        %v1229 = vld [vmem:[#allocation3 + $0x880] sm:$0xff]
        %v1230 = vld [vmem:[#allocation3 + $0x888] sm:$0xff]
        %v1231 = vld [vmem:[#allocation3 + $0x890] sm:$0xff]
        %v1232 = vld [vmem:[#allocation3 + $0x898] sm:$0xff]
        %v1233 = vld [vmem:[#allocation3 + $0x8a0] sm:$0xff]
        %v1234 = vld [vmem:[#allocation3 + $0x8a8] sm:$0xff]
        %v1235 = vld [vmem:[#allocation3 + $0x8b0] sm:$0xff]
        %v1236 = vld [vmem:[#allocation3 + $0x8b8] sm:$0xff]
        %v1237 = vld [vmem:[#allocation3 + $0x8c0] sm:$0xff]
        %v1238 = vld [vmem:[#allocation3 + $0x8c8] sm:$0xff]
        %v1239 = vld [vmem:[#allocation3 + $0x8d0] sm:$0xff]
        %v1240 = vld [vmem:[#allocation3 + $0x8d8] sm:$0xff]
        %v1241 = vld [vmem:[#allocation3 + $0x8e0] sm:$0xff]
        %v1242 = vld [vmem:[#allocation3 + $0x8e8] sm:$0xff]
        %v1243 = vld [vmem:[#allocation3 + $0x8f0] sm:$0xff]
        %v1244 = vld [vmem:[#allocation3 + $0x8f8] sm:$0xff]
        %v1245 = vld [vmem:[#allocation7] sm:$0xff]
        %v1246 = vld [vmem:[#allocation7 + $0x8] sm:$0xff]
        %v1247 = vld [vmem:[#allocation7 + $0x10] sm:$0xff]
        %v1248 = vld [vmem:[#allocation7 + $0x18] sm:$0xff]
        %v1249 = vld [vmem:[#allocation7 + $0x20] sm:$0xff]
        %v1250 = vld [vmem:[#allocation7 + $0x28] sm:$0xff]
        %v1251 = vld [vmem:[#allocation7 + $0x30] sm:$0xff]
        %v1252 = vld [vmem:[#allocation7 + $0x38] sm:$0xff]
        %v1253 = vld [vmem:[#allocation7 + $0x40] sm:$0xff]
        %v1254 = vld [vmem:[#allocation7 + $0x48] sm:$0xff]
        %v1255 = vld [vmem:[#allocation7 + $0x50] sm:$0xff]
        %v1256 = vld [vmem:[#allocation7 + $0x58] sm:$0xff]
        %v1257 = vld [vmem:[#allocation7 + $0x60] sm:$0xff]
        %v1258 = vld [vmem:[#allocation7 + $0x68] sm:$0xff]
        %v1259 = vld [vmem:[#allocation7 + $0x70] sm:$0xff]
        %v1260 = vld [vmem:[#allocation7 + $0x78] sm:$0xff]
        %v1261 = vld [vmem:[#allocation7 + $0x80] sm:$0xff]
        %v1262 = vld [vmem:[#allocation7 + $0x88] sm:$0xff]
        %v1263 = vld [vmem:[#allocation7 + $0x90] sm:$0xff]
        %v1264 = vld [vmem:[#allocation7 + $0x98] sm:$0xff]
        %v1265 = vld [vmem:[#allocation7 + $0xa0] sm:$0xff]
        %v1266 = vld [vmem:[#allocation7 + $0xa8] sm:$0xff]
        %v1267 = vld [vmem:[#allocation7 + $0xb0] sm:$0xff]
        %v1268 = vld [vmem:[#allocation7 + $0xb8] sm:$0xff]
        %v1269 = vld [vmem:[#allocation7 + $0xc0] sm:$0xff]
        %v1270 = vld [vmem:[#allocation7 + $0xc8] sm:$0xff]
        %v1271 = vld [vmem:[#allocation7 + $0xd0] sm:$0xff]
        %v1272 = vld [vmem:[#allocation7 + $0xd8] sm:$0xff]
        %v1273 = vld [vmem:[#allocation7 + $0xe0] sm:$0xff]
        %v1274 = vld [vmem:[#allocation7 + $0xe8] sm:$0xff]
        %v1275 = vld [vmem:[#allocation7 + $0xf0] sm:$0xff]
        %v1276 = vld [vmem:[#allocation7 + $0xf8] sm:$0xff]
        %v1277 = vld [vmem:[#allocation7 + $0x100] sm:$0xff]
        %v1278 = vld [vmem:[#allocation7 + $0x108] sm:$0xff]
        %v1279 = vld [vmem:[#allocation7 + $0x110] sm:$0xff]
        %v1280 = vld [vmem:[#allocation7 + $0x118] sm:$0xff]
        %v1281 = vld [vmem:[#allocation7 + $0x120] sm:$0xff]
        %v1282 = vld [vmem:[#allocation7 + $0x128] sm:$0xff]
        %v1283 = vld [vmem:[#allocation7 + $0x130] sm:$0xff]
        %v1284 = vld [vmem:[#allocation7 + $0x138] sm:$0xff]
        %v1285 = vld [vmem:[#allocation7 + $0x140] sm:$0xff]
        %v1286 = vld [vmem:[#allocation7 + $0x148] sm:$0xff]
        %v1287 = vld [vmem:[#allocation7 + $0x150] sm:$0xff]
        %v1288 = vld [vmem:[#allocation7 + $0x158] sm:$0xff]
        %v1289 = vld [vmem:[#allocation7 + $0x160] sm:$0xff]
        %v1290 = vld [vmem:[#allocation7 + $0x168] sm:$0xff]
        %v1291 = vld [vmem:[#allocation7 + $0x170] sm:$0xff]
        %v1292 = vld [vmem:[#allocation7 + $0x178] sm:$0xff]
        %v1293 = vld [vmem:[#allocation7 + $0x180] sm:$0xff]
        %v1294 = vld [vmem:[#allocation7 + $0x188] sm:$0xff]
        %v1295 = vld [vmem:[#allocation7 + $0x190] sm:$0xff]
        %v1296 = vld [vmem:[#allocation7 + $0x198] sm:$0xff]
        %v1297 = vld [vmem:[#allocation7 + $0x1a0] sm:$0xff]
        %v1298 = vld [vmem:[#allocation7 + $0x1a8] sm:$0xff]
        %v1299 = vld [vmem:[#allocation7 + $0x1b0] sm:$0xff]
        %v1300 = vld [vmem:[#allocation7 + $0x1b8] sm:$0xff]
        %v1301 = vld [vmem:[#allocation7 + $0x1c0] sm:$0xff]
        %v1302 = vld [vmem:[#allocation7 + $0x1c8] sm:$0xff]
        %v1303 = vld [vmem:[#allocation7 + $0x1d0] sm:$0xff]
        %v1304 = vld [vmem:[#allocation7 + $0x1d8] sm:$0xff]
        %v1305 = vld [vmem:[#allocation7 + $0x1e0] sm:$0xff]
        %v1306 = vld [vmem:[#allocation7 + $0x1e8] sm:$0xff]
        %v1307 = vld [vmem:[#allocation7 + $0x1f0] sm:$0xff]
        %v1308 = vld [vmem:[#allocation7 + $0x1f8] sm:$0xff]
        %v1309 = vld [vmem:[#allocation7 + $0x200] sm:$0xff]
        %v1310 = vld [vmem:[#allocation7 + $0x208] sm:$0xff]
        %v1311 = vld [vmem:[#allocation7 + $0x210] sm:$0xff]
        %v1312 = vld [vmem:[#allocation7 + $0x218] sm:$0xff]
        %v1313 = vld [vmem:[#allocation7 + $0x220] sm:$0xff]
        %v1314 = vld [vmem:[#allocation7 + $0x228] sm:$0xff]
        %v1315 = vld [vmem:[#allocation7 + $0x230] sm:$0xff]
        %v1316 = vld [vmem:[#allocation7 + $0x238] sm:$0xff]
        %v1317 = vld [vmem:[#allocation7 + $0x240] sm:$0xff]
        %v1318 = vld [vmem:[#allocation7 + $0x248] sm:$0xff]
        %v1319 = vld [vmem:[#allocation7 + $0x250] sm:$0xff]
        %v1320 = vld [vmem:[#allocation7 + $0x258] sm:$0xff]
        %v1321 = vld [vmem:[#allocation7 + $0x260] sm:$0xff]
        %v1322 = vld [vmem:[#allocation7 + $0x268] sm:$0xff]
        %v1323 = vld [vmem:[#allocation7 + $0x270] sm:$0xff]
        %v1324 = vld [vmem:[#allocation7 + $0x278] sm:$0xff]
        %v1325 = vld [vmem:[#allocation7 + $0x280] sm:$0xff]
        %v1326 = vld [vmem:[#allocation7 + $0x288] sm:$0xff]
        %v1327 = vld [vmem:[#allocation7 + $0x290] sm:$0xff]
        %v1328 = vld [vmem:[#allocation7 + $0x298] sm:$0xff]
        %v1329 = vld [vmem:[#allocation7 + $0x2a0] sm:$0xff]
        %v1330 = vld [vmem:[#allocation7 + $0x2a8] sm:$0xff]
        %v1331 = vld [vmem:[#allocation7 + $0x2b0] sm:$0xff]
        %v1332 = vld [vmem:[#allocation7 + $0x2b8] sm:$0xff]
        %v1333 = vld [vmem:[#allocation7 + $0x2c0] sm:$0xff]
        %v1334 = vld [vmem:[#allocation7 + $0x2c8] sm:$0xff]
        %v1335 = vld [vmem:[#allocation7 + $0x2d0] sm:$0xff]
        %v1336 = vld [vmem:[#allocation7 + $0x2d8] sm:$0xff]
        %v1337 = vld [vmem:[#allocation7 + $0x2e0] sm:$0xff]
        %v1338 = vld [vmem:[#allocation7 + $0x2e8] sm:$0xff]
        %v1339 = vld [vmem:[#allocation7 + $0x2f0] sm:$0xff]
        %v1340 = vld [vmem:[#allocation7 + $0x2f8] sm:$0xff]
        %v1341 = vld [vmem:[#allocation7 + $0x300] sm:$0xff]
        %v1342 = vld [vmem:[#allocation7 + $0x308] sm:$0xff]
        %v1343 = vld [vmem:[#allocation7 + $0x310] sm:$0xff]
        %v1344 = vld [vmem:[#allocation7 + $0x318] sm:$0xff]
        %v1345 = vld [vmem:[#allocation7 + $0x320] sm:$0xff]
        %v1346 = vld [vmem:[#allocation7 + $0x328] sm:$0xff]
        %v1347 = vld [vmem:[#allocation7 + $0x330] sm:$0xff]
        %v1348 = vld [vmem:[#allocation7 + $0x338] sm:$0xff]
        %v1349 = vld [vmem:[#allocation7 + $0x340] sm:$0xff]
        %v1350 = vld [vmem:[#allocation7 + $0x348] sm:$0xff]
        %v1351 = vld [vmem:[#allocation7 + $0x350] sm:$0xff]
        %v1352 = vld [vmem:[#allocation7 + $0x358] sm:$0xff]
        %v1353 = vld [vmem:[#allocation7 + $0x360] sm:$0xff]
        %v1354 = vld [vmem:[#allocation7 + $0x368] sm:$0xff]
        %v1355 = vld [vmem:[#allocation7 + $0x370] sm:$0xff]
        %v1356 = vld [vmem:[#allocation7 + $0x378] sm:$0xff]
        %v1357 = vld [vmem:[#allocation7 + $0x380] sm:$0xff]
        %v1358 = vld [vmem:[#allocation7 + $0x388] sm:$0xff]
        %v1359 = vld [vmem:[#allocation7 + $0x390] sm:$0xff]
        %v1360 = vld [vmem:[#allocation7 + $0x398] sm:$0xff]
        %v1361 = vld [vmem:[#allocation7 + $0x3a0] sm:$0xff]
        %v1362 = vld [vmem:[#allocation7 + $0x3a8] sm:$0xff]
        %v1363 = vld [vmem:[#allocation7 + $0x3b0] sm:$0xff]
        %v1364 = vld [vmem:[#allocation7 + $0x3b8] sm:$0xff]
        %v1365 = vld [vmem:[#allocation7 + $0x3c0] sm:$0xff]
        %v1366 = vld [vmem:[#allocation7 + $0x3c8] sm:$0xff]
        %v1367 = vld [vmem:[#allocation7 + $0x3d0] sm:$0xff]
        %v1368 = vld [vmem:[#allocation7 + $0x3d8] sm:$0xff]
        %v1369 = vld [vmem:[#allocation7 + $0x3e0] sm:$0xff]
        %v1370 = vld [vmem:[#allocation7 + $0x3e8] sm:$0xff]
        %v1371 = vld [vmem:[#allocation7 + $0x3f0] sm:$0xff]
        %v1372 = vld [vmem:[#allocation7 + $0x3f8] sm:$0xff]
        %v1373 = vld [vmem:[#allocation7 + $0x400] sm:$0xff]
        %v1374 = vld [vmem:[#allocation7 + $0x408] sm:$0xff]
        %v1375 = vld [vmem:[#allocation7 + $0x410] sm:$0xff]
        %v1376 = vld [vmem:[#allocation7 + $0x418] sm:$0xff]
        %v1377 = vld [vmem:[#allocation7 + $0x420] sm:$0xff]
        %v1378 = vld [vmem:[#allocation7 + $0x428] sm:$0xff]
        %v1379 = vld [vmem:[#allocation7 + $0x430] sm:$0xff]
        %v1380 = vld [vmem:[#allocation7 + $0x438] sm:$0xff]
        %v1381 = vld [vmem:[#allocation7 + $0x440] sm:$0xff]
        %v1382 = vld [vmem:[#allocation7 + $0x448] sm:$0xff]
        %v1383 = vld [vmem:[#allocation7 + $0x450] sm:$0xff]
        %v1384 = vld [vmem:[#allocation7 + $0x458] sm:$0xff]
        %v1385 = vld [vmem:[#allocation7 + $0x460] sm:$0xff]
        %v1386 = vld [vmem:[#allocation7 + $0x468] sm:$0xff]
        %v1387 = vld [vmem:[#allocation7 + $0x470] sm:$0xff]
        %v1388 = vld [vmem:[#allocation7 + $0x478] sm:$0xff]
        %v1389 = vld [vmem:[%s2] sm:$0x1]
        %v1391 = vlaneseq
        %v1392 = vshrl.u32 %v1391, 7
        %v1393 = vsub.s32 0, %v1392
        %v1394 = vrot.slane %v1389, %v1393
        %1396 = vmatprep.subr.mxu0 0.0
        %1397 = vmatpush1.msra.mxu0 %v1245
        %1398 = vmatprep.subr.mxu0 0.0
        %1399 = vmatpush1.msra.mxu0 %v1246
        %1400 = vmatprep.subr.mxu0 0.0
        %1401 = vmatpush1.msra.mxu0 %v1247
        %1402 = vmatprep.subr.mxu0 0.0
        %1403 = vmatpush1.msra.mxu0 %v1248
        %1404 = vmatprep.subr.mxu0 0.0
        %1405 = vmatpush1.msra.mxu0 %v1249
        %1406 = vmatprep.subr.mxu0 0.0
        %1407 = vmatpush1.msra.mxu0 %v1250
        %1408 = vmatprep.subr.mxu0 0.0
        %1409 = vmatpush1.msra.mxu0 %v1251
        %1410 = vmatprep.subr.mxu0 0.0
        %1411 = vmatpush1.msra.mxu0 %v1252
        %1412 = vmatprep.subr.mxu0 0.0
        %1413 = vmatpush1.msra.mxu0 %v1253
        %1414 = vmatprep.subr.mxu0 0.0
        %1415 = vmatpush1.msra.mxu0 %v1254
        %1416 = vmatprep.subr.mxu0 0.0
        %1417 = vmatpush1.msra.mxu0 %v1255
        %1418 = vmatprep.subr.mxu0 0.0
        %1419 = vmatpush1.msra.mxu0 %v1256
        %1420 = vmatprep.subr.mxu0 0.0
        %1421 = vmatpush1.msra.mxu0 %v1257
        %1422 = vmatprep.subr.mxu0 0.0
        %1423 = vmatpush1.msra.mxu0 %v1258
        %1424 = vmatprep.subr.mxu0 0.0
        %1425 = vmatpush1.msra.mxu0 %v1259
        %1426 = vmatprep.subr.mxu0 0.0
        %1427 = vmatpush1.msra.mxu0 %v1260
        %1428 = vmatprep.subr.mxu0 0.0
        %1429 = vmatpush1.msra.mxu0 %v1261
        %1430 = vmatprep.subr.mxu0 0.0
        %1431 = vmatpush1.msra.mxu0 %v1262
        %1432 = vmatprep.subr.mxu0 0.0
        %1433 = vmatpush1.msra.mxu0 %v1263
        %1434 = vmatprep.subr.mxu0 0.0
        %1435 = vmatpush1.msra.mxu0 %v1264
        %1436 = vmatprep.subr.mxu0 0.0
        %1437 = vmatpush1.msra.mxu0 %v1265
        %1438 = vmatprep.subr.mxu0 0.0
        %1439 = vmatpush1.msra.mxu0 %v1266
        %1440 = vmatprep.subr.mxu0 0.0
        %1441 = vmatpush1.msra.mxu0 %v1267
        %1442 = vmatprep.subr.mxu0 0.0
        %1443 = vmatpush1.msra.mxu0 %v1268
        %1444 = vmatprep.subr.mxu0 0.0
        %1445 = vmatpush1.msra.mxu0 %v1269
        %1446 = vmatprep.subr.mxu0 0.0
        %1447 = vmatpush1.msra.mxu0 %v1270
        %1448 = vmatprep.subr.mxu0 0.0
        %1449 = vmatpush1.msra.mxu0 %v1271
        %1450 = vmatprep.subr.mxu0 0.0
        %1451 = vmatpush1.msra.mxu0 %v1272
        %1452 = vmatprep.subr.mxu0 0.0
        %1453 = vmatpush1.msra.mxu0 %v1273
        %1454 = vmatprep.subr.mxu0 0.0
        %1455 = vmatpush1.msra.mxu0 %v1274
        %1456 = vmatprep.subr.mxu0 0.0
        %1457 = vmatpush1.msra.mxu0 %v1275
        %1458 = vmatprep.subr.mxu0 0.0
        %1459 = vmatpush1.msra.mxu0 %v1276
        %1460 = vmatprep.mubr.f32.mxu0 %v958
        %1461 = vmatmul.mubr.f32.gmra.mrb[0].mxu0 %v957
        %v1462 = vpop.f32.mrb[0].mxu0
        %v1463 = vadd.f32 %v1394, %v1462
        %v1464 = vpop.f32.mrb[0].mxu0
        %1465 = vmatprep.mubr.f32.mxu0 %v967
        %1466 = vmatmul.mubr.f32.gmra.mrb[0].mxu0 %v966
        %v1467 = vpop.f32.mrb[0].mxu0
        %v1468 = vadd.f32 %v1394, %v1467
        %v1469 = vpop.f32.mrb[0].mxu0
        %1470 = vmatprep.mubr.f32.mxu0 %v976
        %1471 = vmatmul.mubr.f32.gmra.mrb[0].mxu0 %v975
        %v1472 = vpop.f32.mrb[0].mxu0
        %v1473 = vadd.f32 %v1394, %v1472
        %v1474 = vpop.f32.mrb[0].mxu0
        %1475 = vmatprep.mubr.f32.mxu0 %v985
        %1476 = vmatmul.mubr.f32.gmra.mrb[0].mxu0 %v984
        %v1477 = vpop.f32.mrb[0].mxu0
        %v1478 = vadd.f32 %v1394, %v1477
        %v1479 = vpop.f32.mrb[0].mxu0
        %1480 = vmatprep.mubr.f32.mxu0 %v994
        %1481 = vmatmul.mubr.f32.gmra.mrb[0].mxu0 %v993
        %v1482 = vpop.f32.mrb[0].mxu0
        %v1483 = vadd.f32 %v1394, %v1482
        %v1484 = vpop.f32.mrb[0].mxu0
        %1485 = vmatprep.mubr.f32.mxu0 %v1003
        %1486 = vmatmul.mubr.f32.gmra.mrb[0].mxu0 %v1002
        %v1487 = vpop.f32.mrb[0].mxu0
        %v1488 = vadd.f32 %v1394, %v1487
        %v1489 = vpop.f32.mrb[0].mxu0
        %1490 = vmatprep.mubr.f32.mxu0 %v1012
        %1491 = vmatmul.mubr.f32.gmra.mrb[0].mxu0 %v1011
        %v1492 = vpop.f32.mrb[0].mxu0
        %v1493 = vadd.f32 %v1394, %v1492
        %v1494 = vpop.f32.mrb[0].mxu0
        %1495 = vmatprep.mubr.f32.mxu0 %v1021
        %1496 = vmatmul.mubr.f32.gmra.mrb[0].mxu0 %v1020
        %v1497 = vpop.f32.mrb[0].mxu0
        %v1498 = vadd.f32 %v1394, %v1497
        %v1499 = vpop.f32.mrb[0].mxu0
        %1500 = vmatprep.mubr.f32.mxu0 %v1030
        %1501 = vmatmul.mubr.f32.gmra.mrb[0].mxu0 %v1029
        %v1502 = vpop.f32.mrb[0].mxu0
        %v1503 = vadd.f32 %v1394, %v1502
        %v1504 = vpop.f32.mrb[0].mxu0
        %1505 = vmatprep.mubr.f32.mxu0 %v1039
        %1506 = vmatmul.mubr.f32.gmra.mrb[0].mxu0 %v1038
        %v1507 = vpop.f32.mrb[0].mxu0
        %v1508 = vadd.f32 %v1394, %v1507
        %v1509 = vpop.f32.mrb[0].mxu0
        %1510 = vmatprep.mubr.f32.mxu0 %v1048
        %1511 = vmatmul.mubr.f32.gmra.mrb[0].mxu0 %v1047
        %v1512 = vpop.f32.mrb[0].mxu0
        %v1513 = vadd.f32 %v1394, %v1512
        %v1514 = vpop.f32.mrb[0].mxu0
        %1515 = vmatprep.mubr.f32.mxu0 %v1057
        %1516 = vmatmul.mubr.f32.gmra.mrb[0].mxu0 %v1056
        %v1517 = vpop.f32.mrb[0].mxu0
        %v1518 = vadd.f32 %v1394, %v1517
        %v1519 = vpop.f32.mrb[0].mxu0
        %1520 = vmatprep.mubr.f32.mxu0 %v1066
        %1521 = vmatmul.mubr.f32.gmra.mrb[0].mxu0 %v1065
        %v1522 = vpop.f32.mrb[0].mxu0
        %v1523 = vadd.f32 %v1394, %v1522
        %v1524 = vpop.f32.mrb[0].mxu0
        %1525 = vmatprep.mubr.f32.mxu0 %v1075
        %1526 = vmatmul.mubr.f32.gmra.mrb[0].mxu0 %v1074
        %v1527 = vpop.f32.mrb[0].mxu0
        %v1528 = vadd.f32 %v1394, %v1527
        %v1529 = vpop.f32.mrb[0].mxu0
        %1530 = vmatprep.mubr.f32.mxu0 %v1084
        %1531 = vmatmul.mubr.f32.gmra.mrb[0].mxu0 %v1083
        %v1532 = vpop.f32.mrb[0].mxu0
        %v1533 = vadd.f32 %v1394, %v1532
        %v1534 = vpop.f32.mrb[0].mxu0
        %1535 = vmatprep.mubr.f32.mxu0 %v1093
        %1536 = vmatmul.mubr.f32.gmra.mrb[0].mxu0 %v1092
        %v1537 = vpop.f32.mrb[0].mxu0
        %v1538 = vadd.f32 %v1394, %v1537
        %v1539 = vpop.f32.mrb[0].mxu0
        %1540 = vmatprep.mubr.f32.mxu0 %v1102
        %1541 = vmatmul.mubr.f32.gmra.mrb[0].mxu0 %v1101
        %v1542 = vpop.f32.mrb[0].mxu0
        %v1543 = vadd.f32 %v1394, %v1542
        %v1544 = vpop.f32.mrb[0].mxu0
        %1545 = vmatprep.mubr.f32.mxu0 %v1111
        %1546 = vmatmul.mubr.f32.gmra.mrb[0].mxu0 %v1110
        %v1547 = vpop.f32.mrb[0].mxu0
        %v1548 = vadd.f32 %v1394, %v1547
        %v1549 = vpop.f32.mrb[0].mxu0
        %1550 = vmatprep.mubr.f32.mxu0 %v1120
        %1551 = vmatmul.mubr.f32.gmra.mrb[0].mxu0 %v1119
        %v1552 = vpop.f32.mrb[0].mxu0
        %v1553 = vadd.f32 %v1394, %v1552
        %v1554 = vpop.f32.mrb[0].mxu0
        %1555 = vmatprep.mubr.f32.mxu0 %v1129
        %1556 = vmatmul.mubr.f32.gmra.mrb[0].mxu0 %v1128
        %v1557 = vpop.f32.mrb[0].mxu0
        %v1558 = vadd.f32 %v1394, %v1557
        %v1559 = vpop.f32.mrb[0].mxu0
        %1560 = vmatprep.mubr.f32.mxu0 %v1138
        %1561 = vmatmul.mubr.f32.gmra.mrb[0].mxu0 %v1137
        %v1562 = vpop.f32.mrb[0].mxu0
        %v1563 = vadd.f32 %v1394, %v1562
        %v1564 = vpop.f32.mrb[0].mxu0
        %1565 = vmatprep.mubr.f32.mxu0 %v1147
        %1566 = vmatmul.mubr.f32.gmra.mrb[0].mxu0 %v1146
        %v1567 = vpop.f32.mrb[0].mxu0
        %v1568 = vadd.f32 %v1394, %v1567
        %v1569 = vpop.f32.mrb[0].mxu0
        %1570 = vmatprep.mubr.f32.mxu0 %v1156
        %1571 = vmatmul.mubr.f32.gmra.mrb[0].mxu0 %v1155
        %v1572 = vpop.f32.mrb[0].mxu0
        %v1573 = vadd.f32 %v1394, %v1572
        %v1574 = vpop.f32.mrb[0].mxu0
        %1575 = vmatprep.mubr.f32.mxu0 %v1165
        %1576 = vmatmul.mubr.f32.gmra.mrb[0].mxu0 %v1164
        %v1577 = vpop.f32.mrb[0].mxu0
        %v1578 = vadd.f32 %v1394, %v1577
        %v1579 = vpop.f32.mrb[0].mxu0
        %1580 = vmatprep.mubr.f32.mxu0 %v1174
        %1581 = vmatmul.mubr.f32.gmra.mrb[0].mxu0 %v1173
        %v1582 = vpop.f32.mrb[0].mxu0
        %v1583 = vadd.f32 %v1394, %v1582
        %v1584 = vpop.f32.mrb[0].mxu0
        %1585 = vmatprep.mubr.f32.mxu0 %v1183
        %1586 = vmatmul.mubr.f32.gmra.mrb[0].mxu0 %v1182
        %v1587 = vpop.f32.mrb[0].mxu0
        %v1588 = vadd.f32 %v1394, %v1587
        %v1589 = vpop.f32.mrb[0].mxu0
        %1590 = vmatprep.mubr.f32.mxu0 %v1192
        %1591 = vmatmul.mubr.f32.gmra.mrb[0].mxu0 %v1191
        %v1592 = vpop.f32.mrb[0].mxu0
        %v1593 = vadd.f32 %v1394, %v1592
        %v1594 = vpop.f32.mrb[0].mxu0
        %1595 = vmatprep.mubr.f32.mxu0 %v1201
        %1596 = vmatmul.mubr.f32.gmra.mrb[0].mxu0 %v1200
        %v1597 = vpop.f32.mrb[0].mxu0
        %v1598 = vadd.f32 %v1394, %v1597
        %v1599 = vpop.f32.mrb[0].mxu0
        %1600 = vmatprep.mubr.f32.mxu0 %v1210
        %1601 = vmatmul.mubr.f32.gmra.mrb[0].mxu0 %v1209
        %v1602 = vpop.f32.mrb[0].mxu0
        %v1603 = vadd.f32 %v1394, %v1602
        %v1604 = vpop.f32.mrb[0].mxu0
        %1605 = vmatprep.mubr.f32.mxu0 %v1219
        %1606 = vmatmul.mubr.f32.gmra.mrb[0].mxu0 %v1218
        %v1607 = vpop.f32.mrb[0].mxu0
        %v1608 = vadd.f32 %v1394, %v1607
        %v1609 = vpop.f32.mrb[0].mxu0
        %1610 = vmatprep.mubr.f32.mxu0 %v1228
        %1611 = vmatmul.mubr.f32.gmra.mrb[0].mxu0 %v1227
        %v1612 = vpop.f32.mrb[0].mxu0
        %v1613 = vadd.f32 %v1394, %v1612
        %v1614 = vpop.f32.mrb[0].mxu0
        %1615 = vmatprep.mubr.f32.mxu0 %v1237
        %1616 = vmatmul.mubr.f32.gmra.mrb[0].mxu0 %v1236
        %v1617 = vpop.f32.mrb[0].mxu0
        %v1618 = vadd.f32 %v1394, %v1617
        %v1619 = vpop.f32.mrb[0].mxu0
        %1620 = vdwg.mxu0
        %1621 = vmatprep.subr.mxu0 0.0
        %1622 = vmatpush1.msra.mxu0 %v1277
        %1623 = vmatprep.subr.mxu0 0.0
        %1624 = vmatpush1.msra.mxu0 %v1278
        %1625 = vmatprep.subr.mxu0 0.0
        %1626 = vmatpush1.msra.mxu0 %v1279
        %1627 = vmatprep.subr.mxu0 0.0
        %1628 = vmatpush1.msra.mxu0 %v1280
        %1629 = vmatprep.subr.mxu0 0.0
        %1630 = vmatpush1.msra.mxu0 %v1281
        %1631 = vmatprep.subr.mxu0 0.0
        %1632 = vmatpush1.msra.mxu0 %v1282
        %1633 = vmatprep.subr.mxu0 0.0
        %1634 = vmatpush1.msra.mxu0 %v1283
        %1635 = vmatprep.subr.mxu0 0.0
        %1636 = vmatpush1.msra.mxu0 %v1284
        %1637 = vmatprep.subr.mxu0 0.0
        %1638 = vmatpush1.msra.mxu0 %v1285
        %1639 = vmatprep.subr.mxu0 0.0
        %1640 = vmatpush1.msra.mxu0 %v1286
        %1641 = vmatprep.subr.mxu0 0.0
        %1642 = vmatpush1.msra.mxu0 %v1287
        %1643 = vmatprep.subr.mxu0 0.0
        %1644 = vmatpush1.msra.mxu0 %v1288
        %1645 = vmatprep.subr.mxu0 0.0
        %1646 = vmatpush1.msra.mxu0 %v1289
        %1647 = vmatprep.subr.mxu0 0.0
        %1648 = vmatpush1.msra.mxu0 %v1290
        %1649 = vmatprep.subr.mxu0 0.0
        %1650 = vmatpush1.msra.mxu0 %v1291
        %1651 = vmatprep.subr.mxu0 0.0
        %1652 = vmatpush1.msra.mxu0 %v1292
        %1653 = vmatprep.subr.mxu0 0.0
        %1654 = vmatpush1.msra.mxu0 %v1293
        %1655 = vmatprep.subr.mxu0 0.0
        %1656 = vmatpush1.msra.mxu0 %v1294
        %1657 = vmatprep.subr.mxu0 0.0
        %1658 = vmatpush1.msra.mxu0 %v1295
        %1659 = vmatprep.subr.mxu0 0.0
        %1660 = vmatpush1.msra.mxu0 %v1296
        %1661 = vmatprep.subr.mxu0 0.0
        %1662 = vmatpush1.msra.mxu0 %v1297
        %1663 = vmatprep.subr.mxu0 0.0
        %1664 = vmatpush1.msra.mxu0 %v1298
        %1665 = vmatprep.subr.mxu0 0.0
        %1666 = vmatpush1.msra.mxu0 %v1299
        %1667 = vmatprep.subr.mxu0 0.0
        %1668 = vmatpush1.msra.mxu0 %v1300
        %1669 = vmatprep.subr.mxu0 0.0
        %1670 = vmatpush1.msra.mxu0 %v1301
        %1671 = vmatprep.subr.mxu0 0.0
        %1672 = vmatpush1.msra.mxu0 %v1302
        %1673 = vmatprep.subr.mxu0 0.0
        %1674 = vmatpush1.msra.mxu0 %v1303
        %1675 = vmatprep.subr.mxu0 0.0
        %1676 = vmatpush1.msra.mxu0 %v1304
        %1677 = vmatprep.subr.mxu0 0.0
        %1678 = vmatpush1.msra.mxu0 %v1305
        %1679 = vmatprep.subr.mxu0 0.0
        %1680 = vmatpush1.msra.mxu0 %v1306
        %1681 = vmatprep.subr.mxu0 0.0
        %1682 = vmatpush1.msra.mxu0 %v1307
        %1683 = vmatprep.subr.mxu0 0.0
        %1684 = vmatpush1.msra.mxu0 %v1308
        %1685 = vmatprep.mubr.f32.mxu0 %v960
        %1686 = vmatmul.mubr.f32.gmra.mrb[0].mxu0 %v959
        %v1687 = vpop.f32.mrb[0].mxu0
        %v1688 = vadd.f32 %v1463, %v1687
        %v1689 = vpop.f32.mrb[0].mxu0
        %1690 = vmatprep.mubr.f32.mxu0 %v969
        %1691 = vmatmul.mubr.f32.gmra.mrb[0].mxu0 %v968
        %v1692 = vpop.f32.mrb[0].mxu0
        %v1693 = vadd.f32 %v1468, %v1692
        %v1694 = vpop.f32.mrb[0].mxu0
        %1695 = vmatprep.mubr.f32.mxu0 %v978
        %1696 = vmatmul.mubr.f32.gmra.mrb[0].mxu0 %v977
        %v1697 = vpop.f32.mrb[0].mxu0
        %v1698 = vadd.f32 %v1473, %v1697
        %v1699 = vpop.f32.mrb[0].mxu0
        %1700 = vmatprep.mubr.f32.mxu0 %v987
        %1701 = vmatmul.mubr.f32.gmra.mrb[0].mxu0 %v986
        %v1702 = vpop.f32.mrb[0].mxu0
        %v1703 = vadd.f32 %v1478, %v1702
        %v1704 = vpop.f32.mrb[0].mxu0
        %1705 = vmatprep.mubr.f32.mxu0 %v996
        %1706 = vmatmul.mubr.f32.gmra.mrb[0].mxu0 %v995
        %v1707 = vpop.f32.mrb[0].mxu0
        %v1708 = vadd.f32 %v1483, %v1707
        %v1709 = vpop.f32.mrb[0].mxu0
        %1710 = vmatprep.mubr.f32.mxu0 %v1005
        %1711 = vmatmul.mubr.f32.gmra.mrb[0].mxu0 %v1004
        %v1712 = vpop.f32.mrb[0].mxu0
        %v1713 = vadd.f32 %v1488, %v1712
        %v1714 = vpop.f32.mrb[0].mxu0
        %1715 = vmatprep.mubr.f32.mxu0 %v1014
        %1716 = vmatmul.mubr.f32.gmra.mrb[0].mxu0 %v1013
        %v1717 = vpop.f32.mrb[0].mxu0
        %v1718 = vadd.f32 %v1493, %v1717
        %v1719 = vpop.f32.mrb[0].mxu0
        %1720 = vmatprep.mubr.f32.mxu0 %v1023
        %1721 = vmatmul.mubr.f32.gmra.mrb[0].mxu0 %v1022
        %v1722 = vpop.f32.mrb[0].mxu0
        %v1723 = vadd.f32 %v1498, %v1722
        %v1724 = vpop.f32.mrb[0].mxu0
        %1725 = vmatprep.mubr.f32.mxu0 %v1032
        %1726 = vmatmul.mubr.f32.gmra.mrb[0].mxu0 %v1031
        %v1727 = vpop.f32.mrb[0].mxu0
        %v1728 = vadd.f32 %v1503, %v1727
        %v1729 = vpop.f32.mrb[0].mxu0
        %1730 = vmatprep.mubr.f32.mxu0 %v1041
        %1731 = vmatmul.mubr.f32.gmra.mrb[0].mxu0 %v1040
        %v1732 = vpop.f32.mrb[0].mxu0
        %v1733 = vadd.f32 %v1508, %v1732
        %v1734 = vpop.f32.mrb[0].mxu0
        %1735 = vmatprep.mubr.f32.mxu0 %v1050
        %1736 = vmatmul.mubr.f32.gmra.mrb[0].mxu0 %v1049
        %v1737 = vpop.f32.mrb[0].mxu0
        %v1738 = vadd.f32 %v1513, %v1737
        %v1739 = vpop.f32.mrb[0].mxu0
        %1740 = vmatprep.mubr.f32.mxu0 %v1059
        %1741 = vmatmul.mubr.f32.gmra.mrb[0].mxu0 %v1058
        %v1742 = vpop.f32.mrb[0].mxu0
        %v1743 = vadd.f32 %v1518, %v1742
        %v1744 = vpop.f32.mrb[0].mxu0
        %1745 = vmatprep.mubr.f32.mxu0 %v1068
        %1746 = vmatmul.mubr.f32.gmra.mrb[0].mxu0 %v1067
        %v1747 = vpop.f32.mrb[0].mxu0
        %v1748 = vadd.f32 %v1523, %v1747
        %v1749 = vpop.f32.mrb[0].mxu0
        %1750 = vmatprep.mubr.f32.mxu0 %v1077
        %1751 = vmatmul.mubr.f32.gmra.mrb[0].mxu0 %v1076
        %v1752 = vpop.f32.mrb[0].mxu0
        %v1753 = vadd.f32 %v1528, %v1752
        %v1754 = vpop.f32.mrb[0].mxu0
        %1755 = vmatprep.mubr.f32.mxu0 %v1086
        %1756 = vmatmul.mubr.f32.gmra.mrb[0].mxu0 %v1085
        %v1757 = vpop.f32.mrb[0].mxu0
        %v1758 = vadd.f32 %v1533, %v1757
        %v1759 = vpop.f32.mrb[0].mxu0
        %1760 = vmatprep.mubr.f32.mxu0 %v1095
        %1761 = vmatmul.mubr.f32.gmra.mrb[0].mxu0 %v1094
        %v1762 = vpop.f32.mrb[0].mxu0
        %v1763 = vadd.f32 %v1538, %v1762
        %v1764 = vpop.f32.mrb[0].mxu0
        %1765 = vmatprep.mubr.f32.mxu0 %v1104
        %1766 = vmatmul.mubr.f32.gmra.mrb[0].mxu0 %v1103
        %v1767 = vpop.f32.mrb[0].mxu0
        %v1768 = vadd.f32 %v1543, %v1767
        %v1769 = vpop.f32.mrb[0].mxu0
        %1770 = vmatprep.mubr.f32.mxu0 %v1113
        %1771 = vmatmul.mubr.f32.gmra.mrb[0].mxu0 %v1112
        %v1772 = vpop.f32.mrb[0].mxu0
        %v1773 = vadd.f32 %v1548, %v1772
        %v1774 = vpop.f32.mrb[0].mxu0
        %1775 = vmatprep.mubr.f32.mxu0 %v1122
        %1776 = vmatmul.mubr.f32.gmra.mrb[0].mxu0 %v1121
        %v1777 = vpop.f32.mrb[0].mxu0
        %v1778 = vadd.f32 %v1553, %v1777
        %v1779 = vpop.f32.mrb[0].mxu0
        %1780 = vmatprep.mubr.f32.mxu0 %v1131
        %1781 = vmatmul.mubr.f32.gmra.mrb[0].mxu0 %v1130
        %v1782 = vpop.f32.mrb[0].mxu0
        %v1783 = vadd.f32 %v1558, %v1782
        %v1784 = vpop.f32.mrb[0].mxu0
        %1785 = vmatprep.mubr.f32.mxu0 %v1140
        %1786 = vmatmul.mubr.f32.gmra.mrb[0].mxu0 %v1139
        %v1787 = vpop.f32.mrb[0].mxu0
        %v1788 = vadd.f32 %v1563, %v1787
        %v1789 = vpop.f32.mrb[0].mxu0
        %1790 = vmatprep.mubr.f32.mxu0 %v1149
        %1791 = vmatmul.mubr.f32.gmra.mrb[0].mxu0 %v1148
        %v1792 = vpop.f32.mrb[0].mxu0
        %v1793 = vadd.f32 %v1568, %v1792
        %v1794 = vpop.f32.mrb[0].mxu0
        %1795 = vmatprep.mubr.f32.mxu0 %v1158
        %1796 = vmatmul.mubr.f32.gmra.mrb[0].mxu0 %v1157
        %v1797 = vpop.f32.mrb[0].mxu0
        %v1798 = vadd.f32 %v1573, %v1797
        %v1799 = vpop.f32.mrb[0].mxu0
        %1800 = vmatprep.mubr.f32.mxu0 %v1167
        %1801 = vmatmul.mubr.f32.gmra.mrb[0].mxu0 %v1166
        %v1802 = vpop.f32.mrb[0].mxu0
        %v1803 = vadd.f32 %v1578, %v1802
        %v1804 = vpop.f32.mrb[0].mxu0
        %1805 = vmatprep.mubr.f32.mxu0 %v1176
        %1806 = vmatmul.mubr.f32.gmra.mrb[0].mxu0 %v1175
        %v1807 = vpop.f32.mrb[0].mxu0
        %v1808 = vadd.f32 %v1583, %v1807
        %v1809 = vpop.f32.mrb[0].mxu0
        %1810 = vmatprep.mubr.f32.mxu0 %v1185
        %1811 = vmatmul.mubr.f32.gmra.mrb[0].mxu0 %v1184
        %v1812 = vpop.f32.mrb[0].mxu0
        %v1813 = vadd.f32 %v1588, %v1812
        %v1814 = vpop.f32.mrb[0].mxu0
        %1815 = vmatprep.mubr.f32.mxu0 %v1194
        %1816 = vmatmul.mubr.f32.gmra.mrb[0].mxu0 %v1193
        %v1817 = vpop.f32.mrb[0].mxu0
        %v1818 = vadd.f32 %v1593, %v1817
        %v1819 = vpop.f32.mrb[0].mxu0
        %1820 = vmatprep.mubr.f32.mxu0 %v1203
        %1821 = vmatmul.mubr.f32.gmra.mrb[0].mxu0 %v1202
        %v1822 = vpop.f32.mrb[0].mxu0
        %v1823 = vadd.f32 %v1598, %v1822
        %v1824 = vpop.f32.mrb[0].mxu0
        %1825 = vmatprep.mubr.f32.mxu0 %v1212
        %1826 = vmatmul.mubr.f32.gmra.mrb[0].mxu0 %v1211
        %v1827 = vpop.f32.mrb[0].mxu0
        %v1828 = vadd.f32 %v1603, %v1827
        %v1829 = vpop.f32.mrb[0].mxu0
        %1830 = vmatprep.mubr.f32.mxu0 %v1221
        %1831 = vmatmul.mubr.f32.gmra.mrb[0].mxu0 %v1220
        %v1832 = vpop.f32.mrb[0].mxu0
        %v1833 = vadd.f32 %v1608, %v1832
        %v1834 = vpop.f32.mrb[0].mxu0
        %1835 = vmatprep.mubr.f32.mxu0 %v1230
        %1836 = vmatmul.mubr.f32.gmra.mrb[0].mxu0 %v1229
        %v1837 = vpop.f32.mrb[0].mxu0
        %v1838 = vadd.f32 %v1613, %v1837
        %v1839 = vpop.f32.mrb[0].mxu0
        %1840 = vmatprep.mubr.f32.mxu0 %v1239
        %1841 = vmatmul.mubr.f32.gmra.mrb[0].mxu0 %v1238
        %v1842 = vpop.f32.mrb[0].mxu0
        %v1843 = vadd.f32 %v1618, %v1842
        %v1844 = vpop.f32.mrb[0].mxu0
        %1845 = vdwg.mxu0
        %1846 = vmatprep.subr.mxu0 0.0
        %1847 = vmatpush1.msra.mxu0 %v1309
        %1848 = vmatprep.subr.mxu0 0.0
        %1849 = vmatpush1.msra.mxu0 %v1310
        %1850 = vmatprep.subr.mxu0 0.0
        %1851 = vmatpush1.msra.mxu0 %v1311
        %1852 = vmatprep.subr.mxu0 0.0
        %1853 = vmatpush1.msra.mxu0 %v1312
        %1854 = vmatprep.subr.mxu0 0.0
        %1855 = vmatpush1.msra.mxu0 %v1313
        %1856 = vmatprep.subr.mxu0 0.0
        %1857 = vmatpush1.msra.mxu0 %v1314
        %1858 = vmatprep.subr.mxu0 0.0
        %1859 = vmatpush1.msra.mxu0 %v1315
        %1860 = vmatprep.subr.mxu0 0.0
        %1861 = vmatpush1.msra.mxu0 %v1316
        %1862 = vmatprep.subr.mxu0 0.0
        %1863 = vmatpush1.msra.mxu0 %v1317
        %1864 = vmatprep.subr.mxu0 0.0
        %1865 = vmatpush1.msra.mxu0 %v1318
        %1866 = vmatprep.subr.mxu0 0.0
        %1867 = vmatpush1.msra.mxu0 %v1319
        %1868 = vmatprep.subr.mxu0 0.0
        %1869 = vmatpush1.msra.mxu0 %v1320
        %1870 = vmatprep.subr.mxu0 0.0
        %1871 = vmatpush1.msra.mxu0 %v1321
        %1872 = vmatprep.subr.mxu0 0.0
        %1873 = vmatpush1.msra.mxu0 %v1322
        %1874 = vmatprep.subr.mxu0 0.0
        %1875 = vmatpush1.msra.mxu0 %v1323
        %1876 = vmatprep.subr.mxu0 0.0
        %1877 = vmatpush1.msra.mxu0 %v1324
        %1878 = vmatprep.subr.mxu0 0.0
        %1879 = vmatpush1.msra.mxu0 %v1325
        %1880 = vmatprep.subr.mxu0 0.0
        %1881 = vmatpush1.msra.mxu0 %v1326
        %1882 = vmatprep.subr.mxu0 0.0
        %1883 = vmatpush1.msra.mxu0 %v1327
        %1884 = vmatprep.subr.mxu0 0.0
        %1885 = vmatpush1.msra.mxu0 %v1328
        %1886 = vmatprep.subr.mxu0 0.0
        %1887 = vmatpush1.msra.mxu0 %v1329
        %1888 = vmatprep.subr.mxu0 0.0
        %1889 = vmatpush1.msra.mxu0 %v1330
        %1890 = vmatprep.subr.mxu0 0.0
        %1891 = vmatpush1.msra.mxu0 %v1331
        %1892 = vmatprep.subr.mxu0 0.0
        %1893 = vmatpush1.msra.mxu0 %v1332
        %1894 = vmatprep.subr.mxu0 0.0
        %1895 = vmatpush1.msra.mxu0 %v1333
        %1896 = vmatprep.subr.mxu0 0.0
        %1897 = vmatpush1.msra.mxu0 %v1334
        %1898 = vmatprep.subr.mxu0 0.0
        %1899 = vmatpush1.msra.mxu0 %v1335
        %1900 = vmatprep.subr.mxu0 0.0
        %1901 = vmatpush1.msra.mxu0 %v1336
        %1902 = vmatprep.subr.mxu0 0.0
        %1903 = vmatpush1.msra.mxu0 %v1337
        %1904 = vmatprep.subr.mxu0 0.0
        %1905 = vmatpush1.msra.mxu0 %v1338
        %1906 = vmatprep.subr.mxu0 0.0
        %1907 = vmatpush1.msra.mxu0 %v1339
        %1908 = vmatprep.subr.mxu0 0.0
        %1909 = vmatpush1.msra.mxu0 %v1340
        %1910 = vmatprep.mubr.f32.mxu0 %v962
        %1911 = vmatmul.mubr.f32.gmra.mrb[0].mxu0 %v961
        %v1912 = vpop.f32.mrb[0].mxu0
        %v1913 = vadd.f32 %v1688, %v1912
        %v1914 = vpop.f32.mrb[0].mxu0
        %1915 = vmatprep.mubr.f32.mxu0 %v971
        %1916 = vmatmul.mubr.f32.gmra.mrb[0].mxu0 %v970
        %v1917 = vpop.f32.mrb[0].mxu0
        %v1918 = vadd.f32 %v1693, %v1917
        %v1919 = vpop.f32.mrb[0].mxu0
        %1920 = vmatprep.mubr.f32.mxu0 %v980
        %1921 = vmatmul.mubr.f32.gmra.mrb[0].mxu0 %v979
        %v1922 = vpop.f32.mrb[0].mxu0
        %v1923 = vadd.f32 %v1698, %v1922
        %v1924 = vpop.f32.mrb[0].mxu0
        %1925 = vmatprep.mubr.f32.mxu0 %v989
        %1926 = vmatmul.mubr.f32.gmra.mrb[0].mxu0 %v988
        %v1927 = vpop.f32.mrb[0].mxu0
        %v1928 = vadd.f32 %v1703, %v1927
        %v1929 = vpop.f32.mrb[0].mxu0
        %1930 = vmatprep.mubr.f32.mxu0 %v998
        %1931 = vmatmul.mubr.f32.gmra.mrb[0].mxu0 %v997
        %v1932 = vpop.f32.mrb[0].mxu0
        %v1933 = vadd.f32 %v1708, %v1932
        %v1934 = vpop.f32.mrb[0].mxu0
        %1935 = vmatprep.mubr.f32.mxu0 %v1007
        %1936 = vmatmul.mubr.f32.gmra.mrb[0].mxu0 %v1006
        %v1937 = vpop.f32.mrb[0].mxu0
        %v1938 = vadd.f32 %v1713, %v1937
        %v1939 = vpop.f32.mrb[0].mxu0
        %1940 = vmatprep.mubr.f32.mxu0 %v1016
        %1941 = vmatmul.mubr.f32.gmra.mrb[0].mxu0 %v1015
        %v1942 = vpop.f32.mrb[0].mxu0
        %v1943 = vadd.f32 %v1718, %v1942
        %v1944 = vpop.f32.mrb[0].mxu0
        %1945 = vmatprep.mubr.f32.mxu0 %v1025
        %1946 = vmatmul.mubr.f32.gmra.mrb[0].mxu0 %v1024
        %v1947 = vpop.f32.mrb[0].mxu0
        %v1948 = vadd.f32 %v1723, %v1947
        %v1949 = vpop.f32.mrb[0].mxu0
        %1950 = vmatprep.mubr.f32.mxu0 %v1034
        %1951 = vmatmul.mubr.f32.gmra.mrb[0].mxu0 %v1033
        %v1952 = vpop.f32.mrb[0].mxu0
        %v1953 = vadd.f32 %v1728, %v1952
        %v1954 = vpop.f32.mrb[0].mxu0
        %1955 = vmatprep.mubr.f32.mxu0 %v1043
        %1956 = vmatmul.mubr.f32.gmra.mrb[0].mxu0 %v1042
        %v1957 = vpop.f32.mrb[0].mxu0
        %v1958 = vadd.f32 %v1733, %v1957
        %v1959 = vpop.f32.mrb[0].mxu0
        %1960 = vmatprep.mubr.f32.mxu0 %v1052
        %1961 = vmatmul.mubr.f32.gmra.mrb[0].mxu0 %v1051
        %v1962 = vpop.f32.mrb[0].mxu0
        %v1963 = vadd.f32 %v1738, %v1962
        %v1964 = vpop.f32.mrb[0].mxu0
        %1965 = vmatprep.mubr.f32.mxu0 %v1061
        %1966 = vmatmul.mubr.f32.gmra.mrb[0].mxu0 %v1060
        %v1967 = vpop.f32.mrb[0].mxu0
        %v1968 = vadd.f32 %v1743, %v1967
        %v1969 = vpop.f32.mrb[0].mxu0
        %1970 = vmatprep.mubr.f32.mxu0 %v1070
        %1971 = vmatmul.mubr.f32.gmra.mrb[0].mxu0 %v1069
        %v1972 = vpop.f32.mrb[0].mxu0
        %v1973 = vadd.f32 %v1748, %v1972
        %v1974 = vpop.f32.mrb[0].mxu0
        %1975 = vmatprep.mubr.f32.mxu0 %v1079
        %1976 = vmatmul.mubr.f32.gmra.mrb[0].mxu0 %v1078
        %v1977 = vpop.f32.mrb[0].mxu0
        %v1978 = vadd.f32 %v1753, %v1977
        %v1979 = vpop.f32.mrb[0].mxu0
        %1980 = vmatprep.mubr.f32.mxu0 %v1088
        %1981 = vmatmul.mubr.f32.gmra.mrb[0].mxu0 %v1087
        %v1982 = vpop.f32.mrb[0].mxu0
        %v1983 = vadd.f32 %v1758, %v1982
        %v1984 = vpop.f32.mrb[0].mxu0
        %1985 = vmatprep.mubr.f32.mxu0 %v1097
        %1986 = vmatmul.mubr.f32.gmra.mrb[0].mxu0 %v1096
        %v1987 = vpop.f32.mrb[0].mxu0
        %v1988 = vadd.f32 %v1763, %v1987
        %v1989 = vpop.f32.mrb[0].mxu0
        %1990 = vmatprep.mubr.f32.mxu0 %v1106
        %1991 = vmatmul.mubr.f32.gmra.mrb[0].mxu0 %v1105
        %v1992 = vpop.f32.mrb[0].mxu0
        %v1993 = vadd.f32 %v1768, %v1992
        %v1994 = vpop.f32.mrb[0].mxu0
        %1995 = vmatprep.mubr.f32.mxu0 %v1115
        %1996 = vmatmul.mubr.f32.gmra.mrb[0].mxu0 %v1114
        %v1997 = vpop.f32.mrb[0].mxu0
        %v1998 = vadd.f32 %v1773, %v1997
        %v1999 = vpop.f32.mrb[0].mxu0
        %2000 = vmatprep.mubr.f32.mxu0 %v1124
        %2001 = vmatmul.mubr.f32.gmra.mrb[0].mxu0 %v1123
        %v2002 = vpop.f32.mrb[0].mxu0
        %v2003 = vadd.f32 %v1778, %v2002
        %v2004 = vpop.f32.mrb[0].mxu0
        %2005 = vmatprep.mubr.f32.mxu0 %v1133
        %2006 = vmatmul.mubr.f32.gmra.mrb[0].mxu0 %v1132
        %v2007 = vpop.f32.mrb[0].mxu0
        %v2008 = vadd.f32 %v1783, %v2007
        %v2009 = vpop.f32.mrb[0].mxu0
        %2010 = vmatprep.mubr.f32.mxu0 %v1142
        %2011 = vmatmul.mubr.f32.gmra.mrb[0].mxu0 %v1141
        %v2012 = vpop.f32.mrb[0].mxu0
        %v2013 = vadd.f32 %v1788, %v2012
        %v2014 = vpop.f32.mrb[0].mxu0
        %2015 = vmatprep.mubr.f32.mxu0 %v1151
        %2016 = vmatmul.mubr.f32.gmra.mrb[0].mxu0 %v1150
        %v2017 = vpop.f32.mrb[0].mxu0
        %v2018 = vadd.f32 %v1793, %v2017
        %v2019 = vpop.f32.mrb[0].mxu0
        %2020 = vmatprep.mubr.f32.mxu0 %v1160
        %2021 = vmatmul.mubr.f32.gmra.mrb[0].mxu0 %v1159
        %v2022 = vpop.f32.mrb[0].mxu0
        %v2023 = vadd.f32 %v1798, %v2022
        %v2024 = vpop.f32.mrb[0].mxu0
        %2025 = vmatprep.mubr.f32.mxu0 %v1169
        %2026 = vmatmul.mubr.f32.gmra.mrb[0].mxu0 %v1168
        %v2027 = vpop.f32.mrb[0].mxu0
        %v2028 = vadd.f32 %v1803, %v2027
        %v2029 = vpop.f32.mrb[0].mxu0
        %2030 = vmatprep.mubr.f32.mxu0 %v1178
        %2031 = vmatmul.mubr.f32.gmra.mrb[0].mxu0 %v1177
        %v2032 = vpop.f32.mrb[0].mxu0
        %v2033 = vadd.f32 %v1808, %v2032
        %v2034 = vpop.f32.mrb[0].mxu0
        %2035 = vmatprep.mubr.f32.mxu0 %v1187
        %2036 = vmatmul.mubr.f32.gmra.mrb[0].mxu0 %v1186
        %v2037 = vpop.f32.mrb[0].mxu0
        %v2038 = vadd.f32 %v1813, %v2037
        %v2039 = vpop.f32.mrb[0].mxu0
        %2040 = vmatprep.mubr.f32.mxu0 %v1196
        %2041 = vmatmul.mubr.f32.gmra.mrb[0].mxu0 %v1195
        %v2042 = vpop.f32.mrb[0].mxu0
        %v2043 = vadd.f32 %v1818, %v2042
        %v2044 = vpop.f32.mrb[0].mxu0
        %2045 = vmatprep.mubr.f32.mxu0 %v1205
        %2046 = vmatmul.mubr.f32.gmra.mrb[0].mxu0 %v1204
        %v2047 = vpop.f32.mrb[0].mxu0
        %v2048 = vadd.f32 %v1823, %v2047
        %v2049 = vpop.f32.mrb[0].mxu0
        %2050 = vmatprep.mubr.f32.mxu0 %v1214
        %2051 = vmatmul.mubr.f32.gmra.mrb[0].mxu0 %v1213
        %v2052 = vpop.f32.mrb[0].mxu0
        %v2053 = vadd.f32 %v1828, %v2052
        %v2054 = vpop.f32.mrb[0].mxu0
        %2055 = vmatprep.mubr.f32.mxu0 %v1223
        %2056 = vmatmul.mubr.f32.gmra.mrb[0].mxu0 %v1222
        %v2057 = vpop.f32.mrb[0].mxu0
        %v2058 = vadd.f32 %v1833, %v2057
        %v2059 = vpop.f32.mrb[0].mxu0
        %2060 = vmatprep.mubr.f32.mxu0 %v1232
        %2061 = vmatmul.mubr.f32.gmra.mrb[0].mxu0 %v1231
        %v2062 = vpop.f32.mrb[0].mxu0
        %v2063 = vadd.f32 %v1838, %v2062
        %v2064 = vpop.f32.mrb[0].mxu0
        %2065 = vmatprep.mubr.f32.mxu0 %v1241
        %2066 = vmatmul.mubr.f32.gmra.mrb[0].mxu0 %v1240
        %v2067 = vpop.f32.mrb[0].mxu0
        %v2068 = vadd.f32 %v1843, %v2067
        %v2069 = vpop.f32.mrb[0].mxu0
        %2070 = vdwg.mxu0
        %2071 = vmatprep.subr.mxu0 0.0
        %2072 = vmatpush1.msra.mxu0 %v1341
        %2073 = vmatprep.subr.mxu0 0.0
        %2074 = vmatpush1.msra.mxu0 %v1342
        %2075 = vmatprep.subr.mxu0 0.0
        %2076 = vmatpush1.msra.mxu0 %v1343
        %2077 = vmatprep.subr.mxu0 0.0
        %2078 = vmatpush1.msra.mxu0 %v1344
        %2079 = vmatprep.subr.mxu0 0.0
        %2080 = vmatpush1.msra.mxu0 %v1345
        %2081 = vmatprep.subr.mxu0 0.0
        %2082 = vmatpush1.msra.mxu0 %v1346
        %2083 = vmatprep.subr.mxu0 0.0
        %2084 = vmatpush1.msra.mxu0 %v1347
        %2085 = vmatprep.subr.mxu0 0.0
        %2086 = vmatpush1.msra.mxu0 %v1348
        %2087 = vmatprep.subr.mxu0 0.0
        %2088 = vmatpush1.msra.mxu0 %v1349
        %2089 = vmatprep.subr.mxu0 0.0
        %2090 = vmatpush1.msra.mxu0 %v1350
        %2091 = vmatprep.subr.mxu0 0.0
        %2092 = vmatpush1.msra.mxu0 %v1351
        %2093 = vmatprep.subr.mxu0 0.0
        %2094 = vmatpush1.msra.mxu0 %v1352
        %2095 = vmatprep.subr.mxu0 0.0
        %2096 = vmatpush1.msra.mxu0 %v1353
        %2097 = vmatprep.subr.mxu0 0.0
        %2098 = vmatpush1.msra.mxu0 %v1354
        %2099 = vmatprep.subr.mxu0 0.0
        %2100 = vmatpush1.msra.mxu0 %v1355
        %2101 = vmatprep.subr.mxu0 0.0
        %2102 = vmatpush1.msra.mxu0 %v1356
        %2103 = vmatprep.subr.mxu0 0.0
        %2104 = vmatpush1.msra.mxu0 %v1357
        %2105 = vmatprep.subr.mxu0 0.0
        %2106 = vmatpush1.msra.mxu0 %v1358
        %2107 = vmatprep.subr.mxu0 0.0
        %2108 = vmatpush1.msra.mxu0 %v1359
        %2109 = vmatprep.subr.mxu0 0.0
        %2110 = vmatpush1.msra.mxu0 %v1360
        %2111 = vmatprep.subr.mxu0 0.0
        %2112 = vmatpush1.msra.mxu0 %v1361
        %2113 = vmatprep.subr.mxu0 0.0
        %2114 = vmatpush1.msra.mxu0 %v1362
        %2115 = vmatprep.subr.mxu0 0.0
        %2116 = vmatpush1.msra.mxu0 %v1363
        %2117 = vmatprep.subr.mxu0 0.0
        %2118 = vmatpush1.msra.mxu0 %v1364
        %2119 = vmatprep.subr.mxu0 0.0
        %2120 = vmatpush1.msra.mxu0 %v1365
        %2121 = vmatprep.subr.mxu0 0.0
        %2122 = vmatpush1.msra.mxu0 %v1366
        %2123 = vmatprep.subr.mxu0 0.0
        %2124 = vmatpush1.msra.mxu0 %v1367
        %2125 = vmatprep.subr.mxu0 0.0
        %2126 = vmatpush1.msra.mxu0 %v1368
        %2127 = vmatprep.subr.mxu0 0.0
        %2128 = vmatpush1.msra.mxu0 %v1369
        %2129 = vmatprep.subr.mxu0 0.0
        %2130 = vmatpush1.msra.mxu0 %v1370
        %2131 = vmatprep.subr.mxu0 0.0
        %2132 = vmatpush1.msra.mxu0 %v1371
        %2133 = vmatprep.subr.mxu0 0.0
        %2134 = vmatpush1.msra.mxu0 %v1372
        %2135 = vmatprep.mubr.f32.mxu0 %v964
        %2136 = vmatmul.mubr.f32.gmra.mrb[0].mxu0 %v963
        %v2137 = vpop.f32.mrb[0].mxu0
        %v2138 = vadd.f32 %v1913, %v2137
        %v2139 = vpop.f32.mrb[0].mxu0
        %2140 = vmatprep.mubr.f32.mxu0 %v973
        %2141 = vmatmul.mubr.f32.gmra.mrb[0].mxu0 %v972
        %v2142 = vpop.f32.mrb[0].mxu0
        %v2143 = vadd.f32 %v1918, %v2142
        %v2144 = vpop.f32.mrb[0].mxu0
        %2145 = vmatprep.mubr.f32.mxu0 %v982
        %2146 = vmatmul.mubr.f32.gmra.mrb[0].mxu0 %v981
        %v2147 = vpop.f32.mrb[0].mxu0
        %v2148 = vadd.f32 %v1923, %v2147
        %v2149 = vpop.f32.mrb[0].mxu0
        %2150 = vmatprep.mubr.f32.mxu0 %v991
        %2151 = vmatmul.mubr.f32.gmra.mrb[0].mxu0 %v990
        %v2152 = vpop.f32.mrb[0].mxu0
        %v2153 = vadd.f32 %v1928, %v2152
        %v2154 = vpop.f32.mrb[0].mxu0
        %2155 = vmatprep.mubr.f32.mxu0 %v1000
        %2156 = vmatmul.mubr.f32.gmra.mrb[0].mxu0 %v999
        %v2157 = vpop.f32.mrb[0].mxu0
        %v2158 = vadd.f32 %v1933, %v2157
        %v2159 = vpop.f32.mrb[0].mxu0
        %2160 = vmatprep.mubr.f32.mxu0 %v1009
        %2161 = vmatmul.mubr.f32.gmra.mrb[0].mxu0 %v1008
        %v2162 = vpop.f32.mrb[0].mxu0
        %v2163 = vadd.f32 %v1938, %v2162
        %v2164 = vpop.f32.mrb[0].mxu0
        %2165 = vmatprep.mubr.f32.mxu0 %v1018
        %2166 = vmatmul.mubr.f32.gmra.mrb[0].mxu0 %v1017
        %v2167 = vpop.f32.mrb[0].mxu0
        %v2168 = vadd.f32 %v1943, %v2167
        %v2169 = vpop.f32.mrb[0].mxu0
        %2170 = vmatprep.mubr.f32.mxu0 %v1027
        %2171 = vmatmul.mubr.f32.gmra.mrb[0].mxu0 %v1026
        %v2172 = vpop.f32.mrb[0].mxu0
        %v2173 = vadd.f32 %v1948, %v2172
        %v2174 = vpop.f32.mrb[0].mxu0
        %2175 = vmatprep.mubr.f32.mxu0 %v1036
        %2176 = vmatmul.mubr.f32.gmra.mrb[0].mxu0 %v1035
        %v2177 = vpop.f32.mrb[0].mxu0
        %v2178 = vadd.f32 %v1953, %v2177
        %v2179 = vpop.f32.mrb[0].mxu0
        %2180 = vmatprep.mubr.f32.mxu0 %v1045
        %2181 = vmatmul.mubr.f32.gmra.mrb[0].mxu0 %v1044
        %v2182 = vpop.f32.mrb[0].mxu0
        %v2183 = vadd.f32 %v1958, %v2182
        %v2184 = vpop.f32.mrb[0].mxu0
        %2185 = vmatprep.mubr.f32.mxu0 %v1054
        %2186 = vmatmul.mubr.f32.gmra.mrb[0].mxu0 %v1053
        %v2187 = vpop.f32.mrb[0].mxu0
        %v2188 = vadd.f32 %v1963, %v2187
        %v2189 = vpop.f32.mrb[0].mxu0
        %2190 = vmatprep.mubr.f32.mxu0 %v1063
        %2191 = vmatmul.mubr.f32.gmra.mrb[0].mxu0 %v1062
        %v2192 = vpop.f32.mrb[0].mxu0
        %v2193 = vadd.f32 %v1968, %v2192
        %v2194 = vpop.f32.mrb[0].mxu0
        %2195 = vmatprep.mubr.f32.mxu0 %v1072
        %2196 = vmatmul.mubr.f32.gmra.mrb[0].mxu0 %v1071
        %v2197 = vpop.f32.mrb[0].mxu0
        %v2198 = vadd.f32 %v1973, %v2197
        %v2199 = vpop.f32.mrb[0].mxu0
        %2200 = vmatprep.mubr.f32.mxu0 %v1081
        %2201 = vmatmul.mubr.f32.gmra.mrb[0].mxu0 %v1080
        %v2202 = vpop.f32.mrb[0].mxu0
        %v2203 = vadd.f32 %v1978, %v2202
        %v2204 = vpop.f32.mrb[0].mxu0
        %2205 = vmatprep.mubr.f32.mxu0 %v1090
        %2206 = vmatmul.mubr.f32.gmra.mrb[0].mxu0 %v1089
        %v2207 = vpop.f32.mrb[0].mxu0
        %v2208 = vadd.f32 %v1983, %v2207
        %v2209 = vpop.f32.mrb[0].mxu0
        %2210 = vmatprep.mubr.f32.mxu0 %v1099
        %2211 = vmatmul.mubr.f32.gmra.mrb[0].mxu0 %v1098
        %v2212 = vpop.f32.mrb[0].mxu0
        %v2213 = vadd.f32 %v1988, %v2212
        %v2214 = vpop.f32.mrb[0].mxu0
        %2215 = vmatprep.mubr.f32.mxu0 %v1108
        %2216 = vmatmul.mubr.f32.gmra.mrb[0].mxu0 %v1107
        %v2217 = vpop.f32.mrb[0].mxu0
        %v2218 = vadd.f32 %v1993, %v2217
        %v2219 = vpop.f32.mrb[0].mxu0
        %2220 = vmatprep.mubr.f32.mxu0 %v1117
        %2221 = vmatmul.mubr.f32.gmra.mrb[0].mxu0 %v1116
        %v2222 = vpop.f32.mrb[0].mxu0
        %v2223 = vadd.f32 %v1998, %v2222
        %v2224 = vpop.f32.mrb[0].mxu0
        %2225 = vmatprep.mubr.f32.mxu0 %v1126
        %2226 = vmatmul.mubr.f32.gmra.mrb[0].mxu0 %v1125
        %v2227 = vpop.f32.mrb[0].mxu0
        %v2228 = vadd.f32 %v2003, %v2227
        %v2229 = vpop.f32.mrb[0].mxu0
        %2230 = vmatprep.mubr.f32.mxu0 %v1135
        %2231 = vmatmul.mubr.f32.gmra.mrb[0].mxu0 %v1134
        %v2232 = vpop.f32.mrb[0].mxu0
        %v2233 = vadd.f32 %v2008, %v2232
        %v2234 = vpop.f32.mrb[0].mxu0
        %2235 = vmatprep.mubr.f32.mxu0 %v1144
        %2236 = vmatmul.mubr.f32.gmra.mrb[0].mxu0 %v1143
        %v2237 = vpop.f32.mrb[0].mxu0
        %v2238 = vadd.f32 %v2013, %v2237
        %v2239 = vpop.f32.mrb[0].mxu0
        %2240 = vmatprep.mubr.f32.mxu0 %v1153
        %2241 = vmatmul.mubr.f32.gmra.mrb[0].mxu0 %v1152
        %v2242 = vpop.f32.mrb[0].mxu0
        %v2243 = vadd.f32 %v2018, %v2242
        %v2244 = vpop.f32.mrb[0].mxu0
        %2245 = vmatprep.mubr.f32.mxu0 %v1162
        %2246 = vmatmul.mubr.f32.gmra.mrb[0].mxu0 %v1161
        %v2247 = vpop.f32.mrb[0].mxu0
        %v2248 = vadd.f32 %v2023, %v2247
        %v2249 = vpop.f32.mrb[0].mxu0
        %2250 = vmatprep.mubr.f32.mxu0 %v1171
        %2251 = vmatmul.mubr.f32.gmra.mrb[0].mxu0 %v1170
        %v2252 = vpop.f32.mrb[0].mxu0
        %v2253 = vadd.f32 %v2028, %v2252
        %v2254 = vpop.f32.mrb[0].mxu0
        %2255 = vmatprep.mubr.f32.mxu0 %v1180
        %2256 = vmatmul.mubr.f32.gmra.mrb[0].mxu0 %v1179
        %v2257 = vpop.f32.mrb[0].mxu0
        %v2258 = vadd.f32 %v2033, %v2257
        %v2259 = vpop.f32.mrb[0].mxu0
        %2260 = vmatprep.mubr.f32.mxu0 %v1189
        %2261 = vmatmul.mubr.f32.gmra.mrb[0].mxu0 %v1188
        %v2262 = vpop.f32.mrb[0].mxu0
        %v2263 = vadd.f32 %v2038, %v2262
        %v2264 = vpop.f32.mrb[0].mxu0
        %2265 = vmatprep.mubr.f32.mxu0 %v1198
        %2266 = vmatmul.mubr.f32.gmra.mrb[0].mxu0 %v1197
        %v2267 = vpop.f32.mrb[0].mxu0
        %v2268 = vadd.f32 %v2043, %v2267
        %v2269 = vpop.f32.mrb[0].mxu0
        %2270 = vmatprep.mubr.f32.mxu0 %v1207
        %2271 = vmatmul.mubr.f32.gmra.mrb[0].mxu0 %v1206
        %v2272 = vpop.f32.mrb[0].mxu0
        %v2273 = vadd.f32 %v2048, %v2272
        %v2274 = vpop.f32.mrb[0].mxu0
        %2275 = vmatprep.mubr.f32.mxu0 %v1216
        %2276 = vmatmul.mubr.f32.gmra.mrb[0].mxu0 %v1215
        %v2277 = vpop.f32.mrb[0].mxu0
        %v2278 = vadd.f32 %v2053, %v2277
        %v2279 = vpop.f32.mrb[0].mxu0
        %2280 = vmatprep.mubr.f32.mxu0 %v1225
        %2281 = vmatmul.mubr.f32.gmra.mrb[0].mxu0 %v1224
        %v2282 = vpop.f32.mrb[0].mxu0
        %v2283 = vadd.f32 %v2058, %v2282
        %v2284 = vpop.f32.mrb[0].mxu0
        %2285 = vmatprep.mubr.f32.mxu0 %v1234
        %2286 = vmatmul.mubr.f32.gmra.mrb[0].mxu0 %v1233
        %v2287 = vpop.f32.mrb[0].mxu0
        %v2288 = vadd.f32 %v2063, %v2287
        %v2289 = vpop.f32.mrb[0].mxu0
        %2290 = vmatprep.mubr.f32.mxu0 %v1243
        %2291 = vmatmul.mubr.f32.gmra.mrb[0].mxu0 %v1242
        %v2292 = vpop.f32.mrb[0].mxu0
        %v2293 = vadd.f32 %v2068, %v2292
        %v2294 = vpop.f32.mrb[0].mxu0
        %2295 = vdwg.mxu0
        %2296 = vmatprep.subr.mxu0 0.0
        %2297 = vmatpush1.msra.mxu0 %v1373
        %2298 = vmatprep.subr.mxu0 0.0
        %2299 = vmatpush1.msra.mxu0 %v1374
        %2300 = vmatprep.subr.mxu0 0.0
        %2301 = vmatpush1.msra.mxu0 %v1375
        %2302 = vmatprep.subr.mxu0 0.0
        %2303 = vmatpush1.msra.mxu0 %v1376
        %2304 = vmatprep.subr.mxu0 0.0
        %2305 = vmatpush1.msra.mxu0 %v1377
        %2306 = vmatprep.subr.mxu0 0.0
        %2307 = vmatpush1.msra.mxu0 %v1378
        %2308 = vmatprep.subr.mxu0 0.0
        %2309 = vmatpush1.msra.mxu0 %v1379
        %2310 = vmatprep.subr.mxu0 0.0
        %2311 = vmatpush1.msra.mxu0 %v1380
        %2312 = vmatprep.subr.mxu0 0.0
        %2313 = vmatpush1.msra.mxu0 %v1381
        %2314 = vmatprep.subr.mxu0 0.0
        %2315 = vmatpush1.msra.mxu0 %v1382
        %2316 = vmatprep.subr.mxu0 0.0
        %2317 = vmatpush1.msra.mxu0 %v1383
        %2318 = vmatprep.subr.mxu0 0.0
        %2319 = vmatpush1.msra.mxu0 %v1384
        %2320 = vmatprep.subr.mxu0 0.0
        %2321 = vmatpush1.msra.mxu0 %v1385
        %2322 = vmatprep.subr.mxu0 0.0
        %2323 = vmatpush1.msra.mxu0 %v1386
        %2324 = vmatprep.subr.mxu0 0.0
        %2325 = vmatpush1.msra.mxu0 %v1387
        %2326 = vmatprep.subr.mxu0 0.0
        %2327 = vmatpush1.msra.mxu0 %v1388
        %2328 = vmatprep.subr.mxu0 0.0
        %2329 = vmatpush1.msra.mxu0 0.0
        %2330 = vmatprep.subr.mxu0 0.0
        %2331 = vmatpush1.msra.mxu0 0.0
        %2332 = vmatprep.subr.mxu0 0.0
        %2333 = vmatpush1.msra.mxu0 0.0
        %2334 = vmatprep.subr.mxu0 0.0
        %2335 = vmatpush1.msra.mxu0 0.0
        %2336 = vmatprep.subr.mxu0 0.0
        %2337 = vmatpush1.msra.mxu0 0.0
        %2338 = vmatprep.subr.mxu0 0.0
        %2339 = vmatpush1.msra.mxu0 0.0
        %2340 = vmatprep.subr.mxu0 0.0
        %2341 = vmatpush1.msra.mxu0 0.0
        %2342 = vmatprep.subr.mxu0 0.0
        %2343 = vmatpush1.msra.mxu0 0.0
        %2344 = vmatprep.subr.mxu0 0.0
        %2345 = vmatpush1.msra.mxu0 0.0
        %2346 = vmatprep.subr.mxu0 0.0
        %2347 = vmatpush1.msra.mxu0 0.0
        %2348 = vmatprep.subr.mxu0 0.0
        %2349 = vmatpush1.msra.mxu0 0.0
        %2350 = vmatprep.subr.mxu0 0.0
        %2351 = vmatpush1.msra.mxu0 0.0
        %2352 = vmatprep.subr.mxu0 0.0
        %2353 = vmatpush1.msra.mxu0 0.0
        %2354 = vmatprep.subr.mxu0 0.0
        %2355 = vmatpush1.msra.mxu0 0.0
        %2356 = vmatprep.subr.mxu0 0.0
        %2357 = vmatpush1.msra.mxu0 0.0
        %2358 = vmatprep.subr.mxu0 0.0
        %2359 = vmatpush1.msra.mxu0 0.0
        %2360 = vmatprep.mubr.f32.mxu0 0.0
        %2361 = vmatmul.mubr.f32.gmra.mrb[0].mxu0 %v965
        %v2362 = vpop.f32.mrb[0].mxu0
        %v2363 = vadd.f32 %v2138, %v2362
        %v2364 = vpop.f32.mrb[0].mxu0
        %2365 = vmatprep.mubr.f32.mxu0 0.0
        %2366 = vmatmul.mubr.f32.gmra.mrb[0].mxu0 %v974
        %v2367 = vpop.f32.mrb[0].mxu0
        %v2368 = vadd.f32 %v2143, %v2367
        %v2369 = vpop.f32.mrb[0].mxu0
        %2370 = vmatprep.mubr.f32.mxu0 0.0
        %2371 = vmatmul.mubr.f32.gmra.mrb[0].mxu0 %v983
        %v2372 = vpop.f32.mrb[0].mxu0
        %v2373 = vadd.f32 %v2148, %v2372
        %v2374 = vpop.f32.mrb[0].mxu0
        %2375 = vmatprep.mubr.f32.mxu0 0.0
        %2376 = vmatmul.mubr.f32.gmra.mrb[0].mxu0 %v992
        %v2377 = vpop.f32.mrb[0].mxu0
        %v2378 = vadd.f32 %v2153, %v2377
        %v2379 = vpop.f32.mrb[0].mxu0
        %2380 = vmatprep.mubr.f32.mxu0 0.0
        %2381 = vmatmul.mubr.f32.gmra.mrb[0].mxu0 %v1001
        %v2382 = vpop.f32.mrb[0].mxu0
        %v2383 = vadd.f32 %v2158, %v2382
        %v2384 = vpop.f32.mrb[0].mxu0
        %2385 = vmatprep.mubr.f32.mxu0 0.0
        %2386 = vmatmul.mubr.f32.gmra.mrb[0].mxu0 %v1010
        %v2387 = vpop.f32.mrb[0].mxu0
        %v2388 = vadd.f32 %v2163, %v2387
        %v2389 = vpop.f32.mrb[0].mxu0
        %2390 = vmatprep.mubr.f32.mxu0 0.0
        %2391 = vmatmul.mubr.f32.gmra.mrb[0].mxu0 %v1019
        %v2392 = vpop.f32.mrb[0].mxu0
        %v2393 = vadd.f32 %v2168, %v2392
        %v2394 = vpop.f32.mrb[0].mxu0
        %2395 = vmatprep.mubr.f32.mxu0 0.0
        %2396 = vmatmul.mubr.f32.gmra.mrb[0].mxu0 %v1028
        %v2397 = vpop.f32.mrb[0].mxu0
        %v2398 = vadd.f32 %v2173, %v2397
        %v2399 = vpop.f32.mrb[0].mxu0
        %2400 = vmatprep.mubr.f32.mxu0 0.0
        %2401 = vmatmul.mubr.f32.gmra.mrb[0].mxu0 %v1037
        %v2402 = vpop.f32.mrb[0].mxu0
        %v2403 = vadd.f32 %v2178, %v2402
        %v2404 = vpop.f32.mrb[0].mxu0
        %2405 = vmatprep.mubr.f32.mxu0 0.0
        %2406 = vmatmul.mubr.f32.gmra.mrb[0].mxu0 %v1046
        %v2407 = vpop.f32.mrb[0].mxu0
        %v2408 = vadd.f32 %v2183, %v2407
        %v2409 = vpop.f32.mrb[0].mxu0
        %2410 = vmatprep.mubr.f32.mxu0 0.0
        %2411 = vmatmul.mubr.f32.gmra.mrb[0].mxu0 %v1055
        %v2412 = vpop.f32.mrb[0].mxu0
        %v2413 = vadd.f32 %v2188, %v2412
        %v2414 = vpop.f32.mrb[0].mxu0
        %2415 = vmatprep.mubr.f32.mxu0 0.0
        %2416 = vmatmul.mubr.f32.gmra.mrb[0].mxu0 %v1064
        %v2417 = vpop.f32.mrb[0].mxu0
        %v2418 = vadd.f32 %v2193, %v2417
        %v2419 = vpop.f32.mrb[0].mxu0
        %2420 = vmatprep.mubr.f32.mxu0 0.0
        %2421 = vmatmul.mubr.f32.gmra.mrb[0].mxu0 %v1073
        %v2422 = vpop.f32.mrb[0].mxu0
        %v2423 = vadd.f32 %v2198, %v2422
        %v2424 = vpop.f32.mrb[0].mxu0
        %2425 = vmatprep.mubr.f32.mxu0 0.0
        %2426 = vmatmul.mubr.f32.gmra.mrb[0].mxu0 %v1082
        %v2427 = vpop.f32.mrb[0].mxu0
        %v2428 = vadd.f32 %v2203, %v2427
        %v2429 = vpop.f32.mrb[0].mxu0
        %2430 = vmatprep.mubr.f32.mxu0 0.0
        %2431 = vmatmul.mubr.f32.gmra.mrb[0].mxu0 %v1091
        %v2432 = vpop.f32.mrb[0].mxu0
        %v2433 = vadd.f32 %v2208, %v2432
        %v2434 = vpop.f32.mrb[0].mxu0
        %2435 = vmatprep.mubr.f32.mxu0 0.0
        %2436 = vmatmul.mubr.f32.gmra.mrb[0].mxu0 %v1100
        %v2437 = vpop.f32.mrb[0].mxu0
        %v2438 = vadd.f32 %v2213, %v2437
        %v2439 = vpop.f32.mrb[0].mxu0
        %2440 = vmatprep.mubr.f32.mxu0 0.0
        %2441 = vmatmul.mubr.f32.gmra.mrb[0].mxu0 %v1109
        %v2442 = vpop.f32.mrb[0].mxu0
        %v2443 = vadd.f32 %v2218, %v2442
        %v2444 = vpop.f32.mrb[0].mxu0
        %2445 = vmatprep.mubr.f32.mxu0 0.0
        %2446 = vmatmul.mubr.f32.gmra.mrb[0].mxu0 %v1118
        %v2447 = vpop.f32.mrb[0].mxu0
        %v2448 = vadd.f32 %v2223, %v2447
        %v2449 = vpop.f32.mrb[0].mxu0
        %2450 = vmatprep.mubr.f32.mxu0 0.0
        %2451 = vmatmul.mubr.f32.gmra.mrb[0].mxu0 %v1127
        %v2452 = vpop.f32.mrb[0].mxu0
        %v2453 = vadd.f32 %v2228, %v2452
        %v2454 = vpop.f32.mrb[0].mxu0
        %2455 = vmatprep.mubr.f32.mxu0 0.0
        %2456 = vmatmul.mubr.f32.gmra.mrb[0].mxu0 %v1136
        %v2457 = vpop.f32.mrb[0].mxu0
        %v2458 = vadd.f32 %v2233, %v2457
        %v2459 = vpop.f32.mrb[0].mxu0
        %2460 = vmatprep.mubr.f32.mxu0 0.0
        %2461 = vmatmul.mubr.f32.gmra.mrb[0].mxu0 %v1145
        %v2462 = vpop.f32.mrb[0].mxu0
        %v2463 = vadd.f32 %v2238, %v2462
        %v2464 = vpop.f32.mrb[0].mxu0
        %2465 = vmatprep.mubr.f32.mxu0 0.0
        %2466 = vmatmul.mubr.f32.gmra.mrb[0].mxu0 %v1154
        %v2467 = vpop.f32.mrb[0].mxu0
        %v2468 = vadd.f32 %v2243, %v2467
        %v2469 = vpop.f32.mrb[0].mxu0
        %2470 = vmatprep.mubr.f32.mxu0 0.0
        %2471 = vmatmul.mubr.f32.gmra.mrb[0].mxu0 %v1163
        %v2472 = vpop.f32.mrb[0].mxu0
        %v2473 = vadd.f32 %v2248, %v2472
        %v2474 = vpop.f32.mrb[0].mxu0
        %2475 = vmatprep.mubr.f32.mxu0 0.0
        %2476 = vmatmul.mubr.f32.gmra.mrb[0].mxu0 %v1172
        %v2477 = vpop.f32.mrb[0].mxu0
        %v2478 = vadd.f32 %v2253, %v2477
        %v2479 = vpop.f32.mrb[0].mxu0
        %2480 = vmatprep.mubr.f32.mxu0 0.0
        %2481 = vmatmul.mubr.f32.gmra.mrb[0].mxu0 %v1181
        %v2482 = vpop.f32.mrb[0].mxu0
        %v2483 = vadd.f32 %v2258, %v2482
        %v2484 = vpop.f32.mrb[0].mxu0
        %2485 = vmatprep.mubr.f32.mxu0 0.0
        %2486 = vmatmul.mubr.f32.gmra.mrb[0].mxu0 %v1190
        %v2487 = vpop.f32.mrb[0].mxu0
        %v2488 = vadd.f32 %v2263, %v2487
        %v2489 = vpop.f32.mrb[0].mxu0
        %2490 = vmatprep.mubr.f32.mxu0 0.0
        %2491 = vmatmul.mubr.f32.gmra.mrb[0].mxu0 %v1199
        %v2492 = vpop.f32.mrb[0].mxu0
        %v2493 = vadd.f32 %v2268, %v2492
        %v2494 = vpop.f32.mrb[0].mxu0
        %2495 = vmatprep.mubr.f32.mxu0 0.0
        %2496 = vmatmul.mubr.f32.gmra.mrb[0].mxu0 %v1208
        %v2497 = vpop.f32.mrb[0].mxu0
        %v2498 = vadd.f32 %v2273, %v2497
        %v2499 = vpop.f32.mrb[0].mxu0
        %2500 = vmatprep.mubr.f32.mxu0 0.0
        %2501 = vmatmul.mubr.f32.gmra.mrb[0].mxu0 %v1217
        %v2502 = vpop.f32.mrb[0].mxu0
        %v2503 = vadd.f32 %v2278, %v2502
        %v2504 = vpop.f32.mrb[0].mxu0
        %2505 = vmatprep.mubr.f32.mxu0 0.0
        %2506 = vmatmul.mubr.f32.gmra.mrb[0].mxu0 %v1226
        %v2507 = vpop.f32.mrb[0].mxu0
        %v2508 = vadd.f32 %v2283, %v2507
        %v2509 = vpop.f32.mrb[0].mxu0
        %2510 = vmatprep.mubr.f32.mxu0 0.0
        %2511 = vmatmul.mubr.f32.gmra.mrb[0].mxu0 %v1235
        %v2512 = vpop.f32.mrb[0].mxu0
        %v2513 = vadd.f32 %v2288, %v2512
        %v2514 = vpop.f32.mrb[0].mxu0
        %2515 = vmatprep.mubr.f32.mxu0 0.0
        %2516 = vmatmul.mubr.f32.gmra.mrb[0].mxu0 %v1244
        %v2517 = vpop.f32.mrb[0].mxu0
        %v2518 = vadd.f32 %v2293, %v2517
        %v2519 = vpop.f32.mrb[0].mxu0
        %2520 = vdwg.mxu0
        %v2521 = vmax.f32 %v2363, 0.0
        %v2522 = vmax.f32 %v2368, 0.0
        %v2523 = vmax.f32 %v2373, 0.0
        %v2524 = vmax.f32 %v2378, 0.0
        %v2525 = vmax.f32 %v2383, 0.0
        %v2526 = vmax.f32 %v2388, 0.0
        %v2527 = vmax.f32 %v2393, 0.0
        %v2528 = vmax.f32 %v2398, 0.0
        %v2529 = vmax.f32 %v2403, 0.0
        %v2530 = vmax.f32 %v2408, 0.0
        %v2531 = vmax.f32 %v2413, 0.0
        %v2532 = vmax.f32 %v2418, 0.0
        %v2533 = vmax.f32 %v2423, 0.0
        %v2534 = vmax.f32 %v2428, 0.0
        %v2535 = vmax.f32 %v2433, 0.0
        %v2536 = vmax.f32 %v2438, 0.0
        %v2537 = vmax.f32 %v2443, 0.0
        %v2538 = vmax.f32 %v2448, 0.0
        %v2539 = vmax.f32 %v2453, 0.0
        %v2540 = vmax.f32 %v2458, 0.0
        %v2541 = vmax.f32 %v2463, 0.0
        %v2542 = vmax.f32 %v2468, 0.0
        %v2543 = vmax.f32 %v2473, 0.0
        %v2544 = vmax.f32 %v2478, 0.0
        %v2545 = vmax.f32 %v2483, 0.0
        %v2546 = vmax.f32 %v2488, 0.0
        %v2547 = vmax.f32 %v2493, 0.0
        %v2548 = vmax.f32 %v2498, 0.0
        %v2549 = vmax.f32 %v2503, 0.0
        %v2550 = vmax.f32 %v2508, 0.0
        %v2551 = vmax.f32 %v2513, 0.0
        %v2552 = vmax.f32 %v2518, 0.0
        %2553 = vst [vmem:[%s347 + $0x1] sm:$0xff] %v2521
        %2554 = vst [vmem:[%s347 + $0x9] sm:$0xff] %v2522
        %2555 = vst [vmem:[%s347 + $0x19] sm:$0xff] %v2523
        %2556 = vst [vmem:[%s347 + $0x21] sm:$0xff] %v2524
        %2557 = vst [vmem:[%s347 + $0x31] sm:$0xff] %v2525
        %2558 = vst [vmem:[%s347 + $0x39] sm:$0xff] %v2526
        %2559 = vst [vmem:[%s347 + $0x49] sm:$0xff] %v2527
        %2560 = vst [vmem:[%s347 + $0x51] sm:$0xff] %v2528
        %2561 = vst [vmem:[%s347 + $0x61] sm:$0xff] %v2529
        %2562 = vst [vmem:[%s347 + $0x69] sm:$0xff] %v2530
        %2563 = vst [vmem:[%s347 + $0x79] sm:$0xff] %v2531
        %2564 = vst [vmem:[%s347 + $0x81] sm:$0xff] %v2532
        %2565 = vst [vmem:[%s347 + $0x91] sm:$0xff] %v2533
        %2566 = vst [vmem:[%s347 + $0x99] sm:$0xff] %v2534
        %2567 = vst [vmem:[%s347 + $0xa9] sm:$0xff] %v2535
        %2568 = vst [vmem:[%s347 + $0xb1] sm:$0xff] %v2536
        %2569 = vst [vmem:[%s347 + $0xc1] sm:$0xff] %v2537
        %2570 = vst [vmem:[%s347 + $0xc9] sm:$0xff] %v2538
        %2571 = vst [vmem:[%s347 + $0xd9] sm:$0xff] %v2539
        %2572 = vst [vmem:[%s347 + $0xe1] sm:$0xff] %v2540
        %2573 = vst [vmem:[%s347 + $0xf1] sm:$0xff] %v2541
        %2574 = vst [vmem:[%s347 + $0xf9] sm:$0xff] %v2542
        %2575 = vst [vmem:[%s347 + $0x109] sm:$0xff] %v2543
        %2576 = vst [vmem:[%s347 + $0x111] sm:$0xff] %v2544
        %2577 = vst [vmem:[%s347 + $0x121] sm:$0xff] %v2545
        %2578 = vst [vmem:[%s347 + $0x129] sm:$0xff] %v2546
        %2579 = vst [vmem:[%s347 + $0x139] sm:$0xff] %v2547
        %2580 = vst [vmem:[%s347 + $0x141] sm:$0xff] %v2548
        %2581 = vst [vmem:[%s347 + $0x151] sm:$0xff] %v2549
        %2582 = vst [vmem:[%s347 + $0x159] sm:$0xff] %v2550
        %2583 = vst [vmem:[%s347 + $0x169] sm:$0xff] %v2551
        %2584 = vst [vmem:[%s347 + $0x171] sm:$0xff] %v2552
        %v2585 = vld [vmem:[#allocation2] sm:$0xff]
        %v2586 = vld [vmem:[#allocation2 + $0x8] sm:$0xff]
        %v2587 = vld [vmem:[#allocation2 + $0x18] sm:$0xff]
        %v2588 = vld [vmem:[#allocation2 + $0x20] sm:$0xff]
        %v2589 = vld [vmem:[#allocation2 + $0x30] sm:$0xff]
        %v2590 = vld [vmem:[#allocation2 + $0x38] sm:$0xff]
        %v2591 = vld [vmem:[#allocation2 + $0x48] sm:$0xff]
        %v2592 = vld [vmem:[#allocation2 + $0x50] sm:$0xff]
        %v2593 = vld [vmem:[#allocation2 + $0x60] sm:$0xff]
        %v2594 = vld [vmem:[#allocation2 + $0x68] sm:$0xff]
        %v2595 = vld [vmem:[#allocation2 + $0x78] sm:$0xff]
        %v2596 = vld [vmem:[#allocation2 + $0x80] sm:$0xff]
        %v2597 = vld [vmem:[#allocation2 + $0x90] sm:$0xff]
        %v2598 = vld [vmem:[#allocation2 + $0x98] sm:$0xff]
        %v2599 = vld [vmem:[#allocation2 + $0xa8] sm:$0xff]
        %v2600 = vld [vmem:[#allocation2 + $0xb0] sm:$0xff]
        %v2601 = vld [vmem:[#allocation2 + $0xc0] sm:$0xff]
        %v2602 = vld [vmem:[#allocation2 + $0xc8] sm:$0xff]
        %v2603 = vld [vmem:[#allocation2 + $0xd8] sm:$0xff]
        %v2604 = vld [vmem:[#allocation2 + $0xe0] sm:$0xff]
        %v2605 = vld [vmem:[#allocation2 + $0xf0] sm:$0xff]
        %v2606 = vld [vmem:[#allocation2 + $0xf8] sm:$0xff]
        %v2607 = vld [vmem:[#allocation2 + $0x108] sm:$0xff]
        %v2608 = vld [vmem:[#allocation2 + $0x110] sm:$0xff]
        %v2609 = vld [vmem:[#allocation2 + $0x120] sm:$0xff]
        %v2610 = vld [vmem:[#allocation2 + $0x128] sm:$0xff]
        %v2611 = vld [vmem:[#allocation2 + $0x138] sm:$0xff]
        %v2612 = vld [vmem:[#allocation2 + $0x140] sm:$0xff]
        %v2613 = vld [vmem:[#allocation2 + $0x150] sm:$0xff]
        %v2614 = vld [vmem:[#allocation2 + $0x158] sm:$0xff]
        %v2615 = vld [vmem:[#allocation2 + $0x168] sm:$0xff]
        %v2616 = vld [vmem:[#allocation2 + $0x170] sm:$0xff]
        %2617 = vst [vmem:[#allocation3] sm:$0xff] %v2585
        %2618 = vst [vmem:[#allocation3 + $0x48] sm:$0xff] %v2586
        %2619 = vst [vmem:[#allocation3 + $0x90] sm:$0xff] %v2587
        %2620 = vst [vmem:[#allocation3 + $0xd8] sm:$0xff] %v2588
        %2621 = vst [vmem:[#allocation3 + $0x120] sm:$0xff] %v2589
        %2622 = vst [vmem:[#allocation3 + $0x168] sm:$0xff] %v2590
        %2623 = vst [vmem:[#allocation3 + $0x1b0] sm:$0xff] %v2591
        %2624 = vst [vmem:[#allocation3 + $0x1f8] sm:$0xff] %v2592
        %2625 = vst [vmem:[#allocation3 + $0x240] sm:$0xff] %v2593
        %2626 = vst [vmem:[#allocation3 + $0x288] sm:$0xff] %v2594
        %2627 = vst [vmem:[#allocation3 + $0x2d0] sm:$0xff] %v2595
        %2628 = vst [vmem:[#allocation3 + $0x318] sm:$0xff] %v2596
        %2629 = vst [vmem:[#allocation3 + $0x360] sm:$0xff] %v2597
        %2630 = vst [vmem:[#allocation3 + $0x3a8] sm:$0xff] %v2598
        %2631 = vst [vmem:[#allocation3 + $0x3f0] sm:$0xff] %v2599
        %2632 = vst [vmem:[#allocation3 + $0x438] sm:$0xff] %v2600
        %2633 = vst [vmem:[#allocation3 + $0x480] sm:$0xff] %v2601
        %2634 = vst [vmem:[#allocation3 + $0x4c8] sm:$0xff] %v2602
        %2635 = vst [vmem:[#allocation3 + $0x510] sm:$0xff] %v2603
        %2636 = vst [vmem:[#allocation3 + $0x558] sm:$0xff] %v2604
        %2637 = vst [vmem:[#allocation3 + $0x5a0] sm:$0xff] %v2605
        %2638 = vst [vmem:[#allocation3 + $0x5e8] sm:$0xff] %v2606
        %2639 = vst [vmem:[#allocation3 + $0x630] sm:$0xff] %v2607
        %2640 = vst [vmem:[#allocation3 + $0x678] sm:$0xff] %v2608
        %2641 = vst [vmem:[#allocation3 + $0x6c0] sm:$0xff] %v2609
        %2642 = vst [vmem:[#allocation3 + $0x708] sm:$0xff] %v2610
        %2643 = vst [vmem:[#allocation3 + $0x750] sm:$0xff] %v2611
        %2644 = vst [vmem:[#allocation3 + $0x798] sm:$0xff] %v2612
        %2645 = vst [vmem:[#allocation3 + $0x7e0] sm:$0xff] %v2613
        %2646 = vst [vmem:[#allocation3 + $0x828] sm:$0xff] %v2614
        %2647 = vst [vmem:[#allocation3 + $0x870] sm:$0xff] %v2615
        %2648 = vst [vmem:[#allocation3 + $0x8b8] sm:$0xff] %v2616
        %v2649 = vld [vmem:[#allocation2 + $0x1] sm:$0xff]
        %v2650 = vld [vmem:[#allocation2 + $0x9] sm:$0xff]
        %v2651 = vld [vmem:[#allocation2 + $0x19] sm:$0xff]
        %v2652 = vld [vmem:[#allocation2 + $0x21] sm:$0xff]
        %v2653 = vld [vmem:[#allocation2 + $0x31] sm:$0xff]
        %v2654 = vld [vmem:[#allocation2 + $0x39] sm:$0xff]
        %v2655 = vld [vmem:[#allocation2 + $0x49] sm:$0xff]
        %v2656 = vld [vmem:[#allocation2 + $0x51] sm:$0xff]
        %v2657 = vld [vmem:[#allocation2 + $0x61] sm:$0xff]
        %v2658 = vld [vmem:[#allocation2 + $0x69] sm:$0xff]
        %v2659 = vld [vmem:[#allocation2 + $0x79] sm:$0xff]
        %v2660 = vld [vmem:[#allocation2 + $0x81] sm:$0xff]
        %v2661 = vld [vmem:[#allocation2 + $0x91] sm:$0xff]
        %v2662 = vld [vmem:[#allocation2 + $0x99] sm:$0xff]
        %v2663 = vld [vmem:[#allocation2 + $0xa9] sm:$0xff]
        %v2664 = vld [vmem:[#allocation2 + $0xb1] sm:$0xff]
        %v2665 = vld [vmem:[#allocation2 + $0xc1] sm:$0xff]
        %v2666 = vld [vmem:[#allocation2 + $0xc9] sm:$0xff]
        %v2667 = vld [vmem:[#allocation2 + $0xd9] sm:$0xff]
        %v2668 = vld [vmem:[#allocation2 + $0xe1] sm:$0xff]
        %v2669 = vld [vmem:[#allocation2 + $0xf1] sm:$0xff]
        %v2670 = vld [vmem:[#allocation2 + $0xf9] sm:$0xff]
        %v2671 = vld [vmem:[#allocation2 + $0x109] sm:$0xff]
        %v2672 = vld [vmem:[#allocation2 + $0x111] sm:$0xff]
        %v2673 = vld [vmem:[#allocation2 + $0x121] sm:$0xff]
        %v2674 = vld [vmem:[#allocation2 + $0x129] sm:$0xff]
        %v2675 = vld [vmem:[#allocation2 + $0x139] sm:$0xff]
        %v2676 = vld [vmem:[#allocation2 + $0x141] sm:$0xff]
        %v2677 = vld [vmem:[#allocation2 + $0x151] sm:$0xff]
        %v2678 = vld [vmem:[#allocation2 + $0x159] sm:$0xff]
        %v2679 = vld [vmem:[#allocation2 + $0x169] sm:$0xff]
        %v2680 = vld [vmem:[#allocation2 + $0x171] sm:$0xff]
        %2681 = vst [vmem:[#allocation3 + $0x8] sm:$0xff] %v2649
        %2682 = vst [vmem:[#allocation3 + $0x50] sm:$0xff] %v2650
        %2683 = vst [vmem:[#allocation3 + $0x98] sm:$0xff] %v2651
        %2684 = vst [vmem:[#allocation3 + $0xe0] sm:$0xff] %v2652
        %2685 = vst [vmem:[#allocation3 + $0x128] sm:$0xff] %v2653
        %2686 = vst [vmem:[#allocation3 + $0x170] sm:$0xff] %v2654
        %2687 = vst [vmem:[#allocation3 + $0x1b8] sm:$0xff] %v2655
        %2688 = vst [vmem:[#allocation3 + $0x200] sm:$0xff] %v2656
        %2689 = vst [vmem:[#allocation3 + $0x248] sm:$0xff] %v2657
        %2690 = vst [vmem:[#allocation3 + $0x290] sm:$0xff] %v2658
        %2691 = vst [vmem:[#allocation3 + $0x2d8] sm:$0xff] %v2659
        %2692 = vst [vmem:[#allocation3 + $0x320] sm:$0xff] %v2660
        %2693 = vst [vmem:[#allocation3 + $0x368] sm:$0xff] %v2661
        %2694 = vst [vmem:[#allocation3 + $0x3b0] sm:$0xff] %v2662
        %2695 = vst [vmem:[#allocation3 + $0x3f8] sm:$0xff] %v2663
        %2696 = vst [vmem:[#allocation3 + $0x440] sm:$0xff] %v2664
        %2697 = vst [vmem:[#allocation3 + $0x488] sm:$0xff] %v2665
        %2698 = vst [vmem:[#allocation3 + $0x4d0] sm:$0xff] %v2666
        %2699 = vst [vmem:[#allocation3 + $0x518] sm:$0xff] %v2667
        %2700 = vst [vmem:[#allocation3 + $0x560] sm:$0xff] %v2668
        %2701 = vst [vmem:[#allocation3 + $0x5a8] sm:$0xff] %v2669
        %2702 = vst [vmem:[#allocation3 + $0x5f0] sm:$0xff] %v2670
        %2703 = vst [vmem:[#allocation3 + $0x638] sm:$0xff] %v2671
        %2704 = vst [vmem:[#allocation3 + $0x680] sm:$0xff] %v2672
        %2705 = vst [vmem:[#allocation3 + $0x6c8] sm:$0xff] %v2673
        %2706 = vst [vmem:[#allocation3 + $0x710] sm:$0xff] %v2674
        %2707 = vst [vmem:[#allocation3 + $0x758] sm:$0xff] %v2675
        %2708 = vst [vmem:[#allocation3 + $0x7a0] sm:$0xff] %v2676
        %2709 = vst [vmem:[#allocation3 + $0x7e8] sm:$0xff] %v2677
        %2710 = vst [vmem:[#allocation3 + $0x830] sm:$0xff] %v2678
        %2711 = vst [vmem:[#allocation3 + $0x878] sm:$0xff] %v2679
        %2712 = vst [vmem:[#allocation3 + $0x8c0] sm:$0xff] %v2680
        %v2713 = vld [vmem:[#allocation2 + $0x2] sm:$0xff]
        %v2714 = vld [vmem:[#allocation2 + $0xa] sm:$0xff]
        %v2715 = vld [vmem:[#allocation2 + $0x1a] sm:$0xff]
        %v2716 = vld [vmem:[#allocation2 + $0x22] sm:$0xff]
        %v2717 = vld [vmem:[#allocation2 + $0x32] sm:$0xff]
        %v2718 = vld [vmem:[#allocation2 + $0x3a] sm:$0xff]
        %v2719 = vld [vmem:[#allocation2 + $0x4a] sm:$0xff]
        %v2720 = vld [vmem:[#allocation2 + $0x52] sm:$0xff]
        %v2721 = vld [vmem:[#allocation2 + $0x62] sm:$0xff]
        %v2722 = vld [vmem:[#allocation2 + $0x6a] sm:$0xff]
        %v2723 = vld [vmem:[#allocation2 + $0x7a] sm:$0xff]
        %v2724 = vld [vmem:[#allocation2 + $0x82] sm:$0xff]
        %v2725 = vld [vmem:[#allocation2 + $0x92] sm:$0xff]
        %v2726 = vld [vmem:[#allocation2 + $0x9a] sm:$0xff]
        %v2727 = vld [vmem:[#allocation2 + $0xaa] sm:$0xff]
        %v2728 = vld [vmem:[#allocation2 + $0xb2] sm:$0xff]
        %v2729 = vld [vmem:[#allocation2 + $0xc2] sm:$0xff]
        %v2730 = vld [vmem:[#allocation2 + $0xca] sm:$0xff]
        %v2731 = vld [vmem:[#allocation2 + $0xda] sm:$0xff]
        %v2732 = vld [vmem:[#allocation2 + $0xe2] sm:$0xff]
        %v2733 = vld [vmem:[#allocation2 + $0xf2] sm:$0xff]
        %v2734 = vld [vmem:[#allocation2 + $0xfa] sm:$0xff]
        %v2735 = vld [vmem:[#allocation2 + $0x10a] sm:$0xff]
        %v2736 = vld [vmem:[#allocation2 + $0x112] sm:$0xff]
        %v2737 = vld [vmem:[#allocation2 + $0x122] sm:$0xff]
        %v2738 = vld [vmem:[#allocation2 + $0x12a] sm:$0xff]
        %v2739 = vld [vmem:[#allocation2 + $0x13a] sm:$0xff]
        %v2740 = vld [vmem:[#allocation2 + $0x142] sm:$0xff]
        %v2741 = vld [vmem:[#allocation2 + $0x152] sm:$0xff]
        %v2742 = vld [vmem:[#allocation2 + $0x15a] sm:$0xff]
        %v2743 = vld [vmem:[#allocation2 + $0x16a] sm:$0xff]
        %v2744 = vld [vmem:[#allocation2 + $0x172] sm:$0xff]
        %2745 = vst [vmem:[#allocation3 + $0x10] sm:$0xff] %v2713
        %2746 = vst [vmem:[#allocation3 + $0x58] sm:$0xff] %v2714
        %2747 = vst [vmem:[#allocation3 + $0xa0] sm:$0xff] %v2715
        %2748 = vst [vmem:[#allocation3 + $0xe8] sm:$0xff] %v2716
        %2749 = vst [vmem:[#allocation3 + $0x130] sm:$0xff] %v2717
        %2750 = vst [vmem:[#allocation3 + $0x178] sm:$0xff] %v2718
        %2751 = vst [vmem:[#allocation3 + $0x1c0] sm:$0xff] %v2719
        %2752 = vst [vmem:[#allocation3 + $0x208] sm:$0xff] %v2720
        %2753 = vst [vmem:[#allocation3 + $0x250] sm:$0xff] %v2721
        %2754 = vst [vmem:[#allocation3 + $0x298] sm:$0xff] %v2722
        %2755 = vst [vmem:[#allocation3 + $0x2e0] sm:$0xff] %v2723
        %2756 = vst [vmem:[#allocation3 + $0x328] sm:$0xff] %v2724
        %2757 = vst [vmem:[#allocation3 + $0x370] sm:$0xff] %v2725
        %2758 = vst [vmem:[#allocation3 + $0x3b8] sm:$0xff] %v2726
        %2759 = vst [vmem:[#allocation3 + $0x400] sm:$0xff] %v2727
        %2760 = vst [vmem:[#allocation3 + $0x448] sm:$0xff] %v2728
        %2761 = vst [vmem:[#allocation3 + $0x490] sm:$0xff] %v2729
        %2762 = vst [vmem:[#allocation3 + $0x4d8] sm:$0xff] %v2730
        %2763 = vst [vmem:[#allocation3 + $0x520] sm:$0xff] %v2731
        %2764 = vst [vmem:[#allocation3 + $0x568] sm:$0xff] %v2732
        %2765 = vst [vmem:[#allocation3 + $0x5b0] sm:$0xff] %v2733
        %2766 = vst [vmem:[#allocation3 + $0x5f8] sm:$0xff] %v2734
        %2767 = vst [vmem:[#allocation3 + $0x640] sm:$0xff] %v2735
        %2768 = vst [vmem:[#allocation3 + $0x688] sm:$0xff] %v2736
        %2769 = vst [vmem:[#allocation3 + $0x6d0] sm:$0xff] %v2737
        %2770 = vst [vmem:[#allocation3 + $0x718] sm:$0xff] %v2738
        %2771 = vst [vmem:[#allocation3 + $0x760] sm:$0xff] %v2739
        %2772 = vst [vmem:[#allocation3 + $0x7a8] sm:$0xff] %v2740
        %2773 = vst [vmem:[#allocation3 + $0x7f0] sm:$0xff] %v2741
        %2774 = vst [vmem:[#allocation3 + $0x838] sm:$0xff] %v2742
        %2775 = vst [vmem:[#allocation3 + $0x880] sm:$0xff] %v2743
        %2776 = vst [vmem:[#allocation3 + $0x8c8] sm:$0xff] %v2744
        %v2777 = vld [vmem:[%s347] sm:$0xff]
        %v2778 = vld [vmem:[%s347 + $0x8] sm:$0xff]
        %v2779 = vld [vmem:[%s347 + $0x18] sm:$0xff]
        %v2780 = vld [vmem:[%s347 + $0x20] sm:$0xff]
        %v2781 = vld [vmem:[%s347 + $0x30] sm:$0xff]
        %v2782 = vld [vmem:[%s347 + $0x38] sm:$0xff]
        %v2783 = vld [vmem:[%s347 + $0x48] sm:$0xff]
        %v2784 = vld [vmem:[%s347 + $0x50] sm:$0xff]
        %v2785 = vld [vmem:[%s347 + $0x60] sm:$0xff]
        %v2786 = vld [vmem:[%s347 + $0x68] sm:$0xff]
        %v2787 = vld [vmem:[%s347 + $0x78] sm:$0xff]
        %v2788 = vld [vmem:[%s347 + $0x80] sm:$0xff]
        %v2789 = vld [vmem:[%s347 + $0x90] sm:$0xff]
        %v2790 = vld [vmem:[%s347 + $0x98] sm:$0xff]
        %v2791 = vld [vmem:[%s347 + $0xa8] sm:$0xff]
        %v2792 = vld [vmem:[%s347 + $0xb0] sm:$0xff]
        %v2793 = vld [vmem:[%s347 + $0xc0] sm:$0xff]
        %v2794 = vld [vmem:[%s347 + $0xc8] sm:$0xff]
        %v2795 = vld [vmem:[%s347 + $0xd8] sm:$0xff]
        %v2796 = vld [vmem:[%s347 + $0xe0] sm:$0xff]
        %v2797 = vld [vmem:[%s347 + $0xf0] sm:$0xff]
        %v2798 = vld [vmem:[%s347 + $0xf8] sm:$0xff]
        %v2799 = vld [vmem:[%s347 + $0x108] sm:$0xff]
        %v2800 = vld [vmem:[%s347 + $0x110] sm:$0xff]
        %v2801 = vld [vmem:[%s347 + $0x120] sm:$0xff]
        %v2802 = vld [vmem:[%s347 + $0x128] sm:$0xff]
        %v2803 = vld [vmem:[%s347 + $0x138] sm:$0xff]
        %v2804 = vld [vmem:[%s347 + $0x140] sm:$0xff]
        %v2805 = vld [vmem:[%s347 + $0x150] sm:$0xff]
        %v2806 = vld [vmem:[%s347 + $0x158] sm:$0xff]
        %v2807 = vld [vmem:[%s347 + $0x168] sm:$0xff]
        %v2808 = vld [vmem:[%s347 + $0x170] sm:$0xff]
        %2809 = vst [vmem:[#allocation3 + $0x18] sm:$0xff] %v2777
        %2810 = vst [vmem:[#allocation3 + $0x60] sm:$0xff] %v2778
        %2811 = vst [vmem:[#allocation3 + $0xa8] sm:$0xff] %v2779
        %2812 = vst [vmem:[#allocation3 + $0xf0] sm:$0xff] %v2780
        %2813 = vst [vmem:[#allocation3 + $0x138] sm:$0xff] %v2781
        %2814 = vst [vmem:[#allocation3 + $0x180] sm:$0xff] %v2782
        %2815 = vst [vmem:[#allocation3 + $0x1c8] sm:$0xff] %v2783
        %2816 = vst [vmem:[#allocation3 + $0x210] sm:$0xff] %v2784
        %2817 = vst [vmem:[#allocation3 + $0x258] sm:$0xff] %v2785
        %2818 = vst [vmem:[#allocation3 + $0x2a0] sm:$0xff] %v2786
        %2819 = vst [vmem:[#allocation3 + $0x2e8] sm:$0xff] %v2787
        %2820 = vst [vmem:[#allocation3 + $0x330] sm:$0xff] %v2788
        %2821 = vst [vmem:[#allocation3 + $0x378] sm:$0xff] %v2789
        %2822 = vst [vmem:[#allocation3 + $0x3c0] sm:$0xff] %v2790
        %2823 = vst [vmem:[#allocation3 + $0x408] sm:$0xff] %v2791
        %2824 = vst [vmem:[#allocation3 + $0x450] sm:$0xff] %v2792
        %2825 = vst [vmem:[#allocation3 + $0x498] sm:$0xff] %v2793
        %2826 = vst [vmem:[#allocation3 + $0x4e0] sm:$0xff] %v2794
        %2827 = vst [vmem:[#allocation3 + $0x528] sm:$0xff] %v2795
        %2828 = vst [vmem:[#allocation3 + $0x570] sm:$0xff] %v2796
        %2829 = vst [vmem:[#allocation3 + $0x5b8] sm:$0xff] %v2797
        %2830 = vst [vmem:[#allocation3 + $0x600] sm:$0xff] %v2798
        %2831 = vst [vmem:[#allocation3 + $0x648] sm:$0xff] %v2799
        %2832 = vst [vmem:[#allocation3 + $0x690] sm:$0xff] %v2800
        %2833 = vst [vmem:[#allocation3 + $0x6d8] sm:$0xff] %v2801
        %2834 = vst [vmem:[#allocation3 + $0x720] sm:$0xff] %v2802
        %2835 = vst [vmem:[#allocation3 + $0x768] sm:$0xff] %v2803
        %2836 = vst [vmem:[#allocation3 + $0x7b0] sm:$0xff] %v2804
        %2837 = vst [vmem:[#allocation3 + $0x7f8] sm:$0xff] %v2805
        %2838 = vst [vmem:[#allocation3 + $0x840] sm:$0xff] %v2806
        %2839 = vst [vmem:[#allocation3 + $0x888] sm:$0xff] %v2807
        %2840 = vst [vmem:[#allocation3 + $0x8d0] sm:$0xff] %v2808
        %v2841 = vld [vmem:[%s347 + $0x1] sm:$0xff]
        %v2842 = vld [vmem:[%s347 + $0x9] sm:$0xff]
        %v2843 = vld [vmem:[%s347 + $0x19] sm:$0xff]
        %v2844 = vld [vmem:[%s347 + $0x21] sm:$0xff]
        %v2845 = vld [vmem:[%s347 + $0x31] sm:$0xff]
        %v2846 = vld [vmem:[%s347 + $0x39] sm:$0xff]
        %v2847 = vld [vmem:[%s347 + $0x49] sm:$0xff]
        %v2848 = vld [vmem:[%s347 + $0x51] sm:$0xff]
        %v2849 = vld [vmem:[%s347 + $0x61] sm:$0xff]
        %v2850 = vld [vmem:[%s347 + $0x69] sm:$0xff]
        %v2851 = vld [vmem:[%s347 + $0x79] sm:$0xff]
        %v2852 = vld [vmem:[%s347 + $0x81] sm:$0xff]
        %v2853 = vld [vmem:[%s347 + $0x91] sm:$0xff]
        %v2854 = vld [vmem:[%s347 + $0x99] sm:$0xff]
        %v2855 = vld [vmem:[%s347 + $0xa9] sm:$0xff]
        %v2856 = vld [vmem:[%s347 + $0xb1] sm:$0xff]
        %v2857 = vld [vmem:[%s347 + $0xc1] sm:$0xff]
        %v2858 = vld [vmem:[%s347 + $0xc9] sm:$0xff]
        %v2859 = vld [vmem:[%s347 + $0xd9] sm:$0xff]
        %v2860 = vld [vmem:[%s347 + $0xe1] sm:$0xff]
        %v2861 = vld [vmem:[%s347 + $0xf1] sm:$0xff]
        %v2862 = vld [vmem:[%s347 + $0xf9] sm:$0xff]
        %v2863 = vld [vmem:[%s347 + $0x109] sm:$0xff]
        %v2864 = vld [vmem:[%s347 + $0x111] sm:$0xff]
        %v2865 = vld [vmem:[%s347 + $0x121] sm:$0xff]
        %v2866 = vld [vmem:[%s347 + $0x129] sm:$0xff]
        %v2867 = vld [vmem:[%s347 + $0x139] sm:$0xff]
        %v2868 = vld [vmem:[%s347 + $0x141] sm:$0xff]
        %v2869 = vld [vmem:[%s347 + $0x151] sm:$0xff]
        %v2870 = vld [vmem:[%s347 + $0x159] sm:$0xff]
        %v2871 = vld [vmem:[%s347 + $0x169] sm:$0xff]
        %v2872 = vld [vmem:[%s347 + $0x171] sm:$0xff]
        %2873 = vst [vmem:[#allocation3 + $0x20] sm:$0xff] %v2841
        %2874 = vst [vmem:[#allocation3 + $0x68] sm:$0xff] %v2842
        %2875 = vst [vmem:[#allocation3 + $0xb0] sm:$0xff] %v2843
        %2876 = vst [vmem:[#allocation3 + $0xf8] sm:$0xff] %v2844
        %2877 = vst [vmem:[#allocation3 + $0x140] sm:$0xff] %v2845
        %2878 = vst [vmem:[#allocation3 + $0x188] sm:$0xff] %v2846
        %2879 = vst [vmem:[#allocation3 + $0x1d0] sm:$0xff] %v2847
        %2880 = vst [vmem:[#allocation3 + $0x218] sm:$0xff] %v2848
        %2881 = vst [vmem:[#allocation3 + $0x260] sm:$0xff] %v2849
        %2882 = vst [vmem:[#allocation3 + $0x2a8] sm:$0xff] %v2850
        %2883 = vst [vmem:[#allocation3 + $0x2f0] sm:$0xff] %v2851
        %2884 = vst [vmem:[#allocation3 + $0x338] sm:$0xff] %v2852
        %2885 = vst [vmem:[#allocation3 + $0x380] sm:$0xff] %v2853
        %2886 = vst [vmem:[#allocation3 + $0x3c8] sm:$0xff] %v2854
        %2887 = vst [vmem:[#allocation3 + $0x410] sm:$0xff] %v2855
        %2888 = vst [vmem:[#allocation3 + $0x458] sm:$0xff] %v2856
        %2889 = vst [vmem:[#allocation3 + $0x4a0] sm:$0xff] %v2857
        %2890 = vst [vmem:[#allocation3 + $0x4e8] sm:$0xff] %v2858
        %2891 = vst [vmem:[#allocation3 + $0x530] sm:$0xff] %v2859
        %2892 = vst [vmem:[#allocation3 + $0x578] sm:$0xff] %v2860
        %2893 = vst [vmem:[#allocation3 + $0x5c0] sm:$0xff] %v2861
        %2894 = vst [vmem:[#allocation3 + $0x608] sm:$0xff] %v2862
        %2895 = vst [vmem:[#allocation3 + $0x650] sm:$0xff] %v2863
        %2896 = vst [vmem:[#allocation3 + $0x698] sm:$0xff] %v2864
        %2897 = vst [vmem:[#allocation3 + $0x6e0] sm:$0xff] %v2865
        %2898 = vst [vmem:[#allocation3 + $0x728] sm:$0xff] %v2866
        %2899 = vst [vmem:[#allocation3 + $0x770] sm:$0xff] %v2867
        %2900 = vst [vmem:[#allocation3 + $0x7b8] sm:$0xff] %v2868
        %2901 = vst [vmem:[#allocation3 + $0x800] sm:$0xff] %v2869
        %2902 = vst [vmem:[#allocation3 + $0x848] sm:$0xff] %v2870
        %2903 = vst [vmem:[#allocation3 + $0x890] sm:$0xff] %v2871
        %2904 = vst [vmem:[#allocation3 + $0x8d8] sm:$0xff] %v2872
        %v2905 = vld [vmem:[%s347 + $0x2] sm:$0xff]
        %v2906 = vld [vmem:[%s347 + $0xa] sm:$0xff]
        %v2907 = vld [vmem:[%s347 + $0x1a] sm:$0xff]
        %v2908 = vld [vmem:[%s347 + $0x22] sm:$0xff]
        %v2909 = vld [vmem:[%s347 + $0x32] sm:$0xff]
        %v2910 = vld [vmem:[%s347 + $0x3a] sm:$0xff]
        %v2911 = vld [vmem:[%s347 + $0x4a] sm:$0xff]
        %v2912 = vld [vmem:[%s347 + $0x52] sm:$0xff]
        %v2913 = vld [vmem:[%s347 + $0x62] sm:$0xff]
        %v2914 = vld [vmem:[%s347 + $0x6a] sm:$0xff]
        %v2915 = vld [vmem:[%s347 + $0x7a] sm:$0xff]
        %v2916 = vld [vmem:[%s347 + $0x82] sm:$0xff]
        %v2917 = vld [vmem:[%s347 + $0x92] sm:$0xff]
        %v2918 = vld [vmem:[%s347 + $0x9a] sm:$0xff]
        %v2919 = vld [vmem:[%s347 + $0xaa] sm:$0xff]
        %v2920 = vld [vmem:[%s347 + $0xb2] sm:$0xff]
        %v2921 = vld [vmem:[%s347 + $0xc2] sm:$0xff]
        %v2922 = vld [vmem:[%s347 + $0xca] sm:$0xff]
        %v2923 = vld [vmem:[%s347 + $0xda] sm:$0xff]
        %v2924 = vld [vmem:[%s347 + $0xe2] sm:$0xff]
        %v2925 = vld [vmem:[%s347 + $0xf2] sm:$0xff]
        %v2926 = vld [vmem:[%s347 + $0xfa] sm:$0xff]
        %v2927 = vld [vmem:[%s347 + $0x10a] sm:$0xff]
        %v2928 = vld [vmem:[%s347 + $0x112] sm:$0xff]
        %v2929 = vld [vmem:[%s347 + $0x122] sm:$0xff]
        %v2930 = vld [vmem:[%s347 + $0x12a] sm:$0xff]
        %v2931 = vld [vmem:[%s347 + $0x13a] sm:$0xff]
        %v2932 = vld [vmem:[%s347 + $0x142] sm:$0xff]
        %v2933 = vld [vmem:[%s347 + $0x152] sm:$0xff]
        %v2934 = vld [vmem:[%s347 + $0x15a] sm:$0xff]
        %v2935 = vld [vmem:[%s347 + $0x16a] sm:$0xff]
        %v2936 = vld [vmem:[%s347 + $0x172] sm:$0xff]
        %2937 = vst [vmem:[#allocation3 + $0x28] sm:$0xff] %v2905
        %2938 = vst [vmem:[#allocation3 + $0x70] sm:$0xff] %v2906
        %2939 = vst [vmem:[#allocation3 + $0xb8] sm:$0xff] %v2907
        %2940 = vst [vmem:[#allocation3 + $0x100] sm:$0xff] %v2908
        %2941 = vst [vmem:[#allocation3 + $0x148] sm:$0xff] %v2909
        %2942 = vst [vmem:[#allocation3 + $0x190] sm:$0xff] %v2910
        %2943 = vst [vmem:[#allocation3 + $0x1d8] sm:$0xff] %v2911
        %2944 = vst [vmem:[#allocation3 + $0x220] sm:$0xff] %v2912
        %2945 = vst [vmem:[#allocation3 + $0x268] sm:$0xff] %v2913
        %2946 = vst [vmem:[#allocation3 + $0x2b0] sm:$0xff] %v2914
        %2947 = vst [vmem:[#allocation3 + $0x2f8] sm:$0xff] %v2915
        %2948 = vst [vmem:[#allocation3 + $0x340] sm:$0xff] %v2916
        %2949 = vst [vmem:[#allocation3 + $0x388] sm:$0xff] %v2917
        %2950 = vst [vmem:[#allocation3 + $0x3d0] sm:$0xff] %v2918
        %2951 = vst [vmem:[#allocation3 + $0x418] sm:$0xff] %v2919
        %2952 = vst [vmem:[#allocation3 + $0x460] sm:$0xff] %v2920
        %2953 = vst [vmem:[#allocation3 + $0x4a8] sm:$0xff] %v2921
        %2954 = vst [vmem:[#allocation3 + $0x4f0] sm:$0xff] %v2922
        %2955 = vst [vmem:[#allocation3 + $0x538] sm:$0xff] %v2923
        %2956 = vst [vmem:[#allocation3 + $0x580] sm:$0xff] %v2924
        %2957 = vst [vmem:[#allocation3 + $0x5c8] sm:$0xff] %v2925
        %2958 = vst [vmem:[#allocation3 + $0x610] sm:$0xff] %v2926
        %2959 = vst [vmem:[#allocation3 + $0x658] sm:$0xff] %v2927
        %2960 = vst [vmem:[#allocation3 + $0x6a0] sm:$0xff] %v2928
        %2961 = vst [vmem:[#allocation3 + $0x6e8] sm:$0xff] %v2929
        %2962 = vst [vmem:[#allocation3 + $0x730] sm:$0xff] %v2930
        %2963 = vst [vmem:[#allocation3 + $0x778] sm:$0xff] %v2931
        %2964 = vst [vmem:[#allocation3 + $0x7c0] sm:$0xff] %v2932
        %2965 = vst [vmem:[#allocation3 + $0x808] sm:$0xff] %v2933
        %2966 = vst [vmem:[#allocation3 + $0x850] sm:$0xff] %v2934
        %2967 = vst [vmem:[#allocation3 + $0x898] sm:$0xff] %v2935
        %2968 = vst [vmem:[#allocation3 + $0x8e0] sm:$0xff] %v2936
        %v2969 = vld [vmem:[%s764] sm:$0xff]
        %v2970 = vld [vmem:[%s764 + $0x8] sm:$0xff]
        %v2971 = vld [vmem:[%s764 + $0x18] sm:$0xff]
        %v2972 = vld [vmem:[%s764 + $0x20] sm:$0xff]
        %v2973 = vld [vmem:[%s764 + $0x30] sm:$0xff]
        %v2974 = vld [vmem:[%s764 + $0x38] sm:$0xff]
        %v2975 = vld [vmem:[%s764 + $0x48] sm:$0xff]
        %v2976 = vld [vmem:[%s764 + $0x50] sm:$0xff]
        %v2977 = vld [vmem:[%s764 + $0x60] sm:$0xff]
        %v2978 = vld [vmem:[%s764 + $0x68] sm:$0xff]
        %v2979 = vld [vmem:[%s764 + $0x78] sm:$0xff]
        %v2980 = vld [vmem:[%s764 + $0x80] sm:$0xff]
        %v2981 = vld [vmem:[%s764 + $0x90] sm:$0xff]
        %v2982 = vld [vmem:[%s764 + $0x98] sm:$0xff]
        %v2983 = vld [vmem:[%s764 + $0xa8] sm:$0xff]
        %v2984 = vld [vmem:[%s764 + $0xb0] sm:$0xff]
        %v2985 = vld [vmem:[%s764 + $0xc0] sm:$0xff]
        %v2986 = vld [vmem:[%s764 + $0xc8] sm:$0xff]
        %v2987 = vld [vmem:[%s764 + $0xd8] sm:$0xff]
        %v2988 = vld [vmem:[%s764 + $0xe0] sm:$0xff]
        %v2989 = vld [vmem:[%s764 + $0xf0] sm:$0xff]
        %v2990 = vld [vmem:[%s764 + $0xf8] sm:$0xff]
        %v2991 = vld [vmem:[%s764 + $0x108] sm:$0xff]
        %v2992 = vld [vmem:[%s764 + $0x110] sm:$0xff]
        %v2993 = vld [vmem:[%s764 + $0x120] sm:$0xff]
        %v2994 = vld [vmem:[%s764 + $0x128] sm:$0xff]
        %v2995 = vld [vmem:[%s764 + $0x138] sm:$0xff]
        %v2996 = vld [vmem:[%s764 + $0x140] sm:$0xff]
        %v2997 = vld [vmem:[%s764 + $0x150] sm:$0xff]
        %v2998 = vld [vmem:[%s764 + $0x158] sm:$0xff]
        %v2999 = vld [vmem:[%s764 + $0x168] sm:$0xff]
        %v3000 = vld [vmem:[%s764 + $0x170] sm:$0xff]
        %3001 = vst [vmem:[#allocation3 + $0x30] sm:$0xff] %v2969
        %3002 = vst [vmem:[#allocation3 + $0x78] sm:$0xff] %v2970
        %3003 = vst [vmem:[#allocation3 + $0xc0] sm:$0xff] %v2971
        %3004 = vst [vmem:[#allocation3 + $0x108] sm:$0xff] %v2972
        %3005 = vst [vmem:[#allocation3 + $0x150] sm:$0xff] %v2973
        %3006 = vst [vmem:[#allocation3 + $0x198] sm:$0xff] %v2974
        %3007 = vst [vmem:[#allocation3 + $0x1e0] sm:$0xff] %v2975
        %3008 = vst [vmem:[#allocation3 + $0x228] sm:$0xff] %v2976
        %3009 = vst [vmem:[#allocation3 + $0x270] sm:$0xff] %v2977
        %3010 = vst [vmem:[#allocation3 + $0x2b8] sm:$0xff] %v2978
        %3011 = vst [vmem:[#allocation3 + $0x300] sm:$0xff] %v2979
        %3012 = vst [vmem:[#allocation3 + $0x348] sm:$0xff] %v2980
        %3013 = vst [vmem:[#allocation3 + $0x390] sm:$0xff] %v2981
        %3014 = vst [vmem:[#allocation3 + $0x3d8] sm:$0xff] %v2982
        %3015 = vst [vmem:[#allocation3 + $0x420] sm:$0xff] %v2983
        %3016 = vst [vmem:[#allocation3 + $0x468] sm:$0xff] %v2984
        %3017 = vst [vmem:[#allocation3 + $0x4b0] sm:$0xff] %v2985
        %3018 = vst [vmem:[#allocation3 + $0x4f8] sm:$0xff] %v2986
        %3019 = vst [vmem:[#allocation3 + $0x540] sm:$0xff] %v2987
        %3020 = vst [vmem:[#allocation3 + $0x588] sm:$0xff] %v2988
        %3021 = vst [vmem:[#allocation3 + $0x5d0] sm:$0xff] %v2989
        %3022 = vst [vmem:[#allocation3 + $0x618] sm:$0xff] %v2990
        %3023 = vst [vmem:[#allocation3 + $0x660] sm:$0xff] %v2991
        %3024 = vst [vmem:[#allocation3 + $0x6a8] sm:$0xff] %v2992
        %3025 = vst [vmem:[#allocation3 + $0x6f0] sm:$0xff] %v2993
        %3026 = vst [vmem:[#allocation3 + $0x738] sm:$0xff] %v2994
        %3027 = vst [vmem:[#allocation3 + $0x780] sm:$0xff] %v2995
        %3028 = vst [vmem:[#allocation3 + $0x7c8] sm:$0xff] %v2996
        %3029 = vst [vmem:[#allocation3 + $0x810] sm:$0xff] %v2997
        %3030 = vst [vmem:[#allocation3 + $0x858] sm:$0xff] %v2998
        %3031 = vst [vmem:[#allocation3 + $0x8a0] sm:$0xff] %v2999
        %3032 = vst [vmem:[#allocation3 + $0x8e8] sm:$0xff] %v3000
        %v3033 = vld [vmem:[%s764 + $0x1] sm:$0xff]
        %v3034 = vld [vmem:[%s764 + $0x9] sm:$0xff]
        %v3035 = vld [vmem:[%s764 + $0x19] sm:$0xff]
        %v3036 = vld [vmem:[%s764 + $0x21] sm:$0xff]
        %v3037 = vld [vmem:[%s764 + $0x31] sm:$0xff]
        %v3038 = vld [vmem:[%s764 + $0x39] sm:$0xff]
        %v3039 = vld [vmem:[%s764 + $0x49] sm:$0xff]
        %v3040 = vld [vmem:[%s764 + $0x51] sm:$0xff]
        %v3041 = vld [vmem:[%s764 + $0x61] sm:$0xff]
        %v3042 = vld [vmem:[%s764 + $0x69] sm:$0xff]
        %v3043 = vld [vmem:[%s764 + $0x79] sm:$0xff]
        %v3044 = vld [vmem:[%s764 + $0x81] sm:$0xff]
        %v3045 = vld [vmem:[%s764 + $0x91] sm:$0xff]
        %v3046 = vld [vmem:[%s764 + $0x99] sm:$0xff]
        %v3047 = vld [vmem:[%s764 + $0xa9] sm:$0xff]
        %v3048 = vld [vmem:[%s764 + $0xb1] sm:$0xff]
        %v3049 = vld [vmem:[%s764 + $0xc1] sm:$0xff]
        %v3050 = vld [vmem:[%s764 + $0xc9] sm:$0xff]
        %v3051 = vld [vmem:[%s764 + $0xd9] sm:$0xff]
        %v3052 = vld [vmem:[%s764 + $0xe1] sm:$0xff]
        %v3053 = vld [vmem:[%s764 + $0xf1] sm:$0xff]
        %v3054 = vld [vmem:[%s764 + $0xf9] sm:$0xff]
        %v3055 = vld [vmem:[%s764 + $0x109] sm:$0xff]
        %v3056 = vld [vmem:[%s764 + $0x111] sm:$0xff]
        %v3057 = vld [vmem:[%s764 + $0x121] sm:$0xff]
        %v3058 = vld [vmem:[%s764 + $0x129] sm:$0xff]
        %v3059 = vld [vmem:[%s764 + $0x139] sm:$0xff]
        %v3060 = vld [vmem:[%s764 + $0x141] sm:$0xff]
        %v3061 = vld [vmem:[%s764 + $0x151] sm:$0xff]
        %v3062 = vld [vmem:[%s764 + $0x159] sm:$0xff]
        %v3063 = vld [vmem:[%s764 + $0x169] sm:$0xff]
        %v3064 = vld [vmem:[%s764 + $0x171] sm:$0xff]
        %3065 = vst [vmem:[#allocation3 + $0x38] sm:$0xff] %v3033
        %3066 = vst [vmem:[#allocation3 + $0x80] sm:$0xff] %v3034
        %3067 = vst [vmem:[#allocation3 + $0xc8] sm:$0xff] %v3035
        %3068 = vst [vmem:[#allocation3 + $0x110] sm:$0xff] %v3036
        %3069 = vst [vmem:[#allocation3 + $0x158] sm:$0xff] %v3037
        %3070 = vst [vmem:[#allocation3 + $0x1a0] sm:$0xff] %v3038
        %3071 = vst [vmem:[#allocation3 + $0x1e8] sm:$0xff] %v3039
        %3072 = vst [vmem:[#allocation3 + $0x230] sm:$0xff] %v3040
        %3073 = vst [vmem:[#allocation3 + $0x278] sm:$0xff] %v3041
        %3074 = vst [vmem:[#allocation3 + $0x2c0] sm:$0xff] %v3042
        %3075 = vst [vmem:[#allocation3 + $0x308] sm:$0xff] %v3043
        %3076 = vst [vmem:[#allocation3 + $0x350] sm:$0xff] %v3044
        %3077 = vst [vmem:[#allocation3 + $0x398] sm:$0xff] %v3045
        %3078 = vst [vmem:[#allocation3 + $0x3e0] sm:$0xff] %v3046
        %3079 = vst [vmem:[#allocation3 + $0x428] sm:$0xff] %v3047
        %3080 = vst [vmem:[#allocation3 + $0x470] sm:$0xff] %v3048
        %3081 = vst [vmem:[#allocation3 + $0x4b8] sm:$0xff] %v3049
        %3082 = vst [vmem:[#allocation3 + $0x500] sm:$0xff] %v3050
        %3083 = vst [vmem:[#allocation3 + $0x548] sm:$0xff] %v3051
        %3084 = vst [vmem:[#allocation3 + $0x590] sm:$0xff] %v3052
        %3085 = vst [vmem:[#allocation3 + $0x5d8] sm:$0xff] %v3053
        %3086 = vst [vmem:[#allocation3 + $0x620] sm:$0xff] %v3054
        %3087 = vst [vmem:[#allocation3 + $0x668] sm:$0xff] %v3055
        %3088 = vst [vmem:[#allocation3 + $0x6b0] sm:$0xff] %v3056
        %3089 = vst [vmem:[#allocation3 + $0x6f8] sm:$0xff] %v3057
        %3090 = vst [vmem:[#allocation3 + $0x740] sm:$0xff] %v3058
        %3091 = vst [vmem:[#allocation3 + $0x788] sm:$0xff] %v3059
        %3092 = vst [vmem:[#allocation3 + $0x7d0] sm:$0xff] %v3060
        %3093 = vst [vmem:[#allocation3 + $0x818] sm:$0xff] %v3061
        %3094 = vst [vmem:[#allocation3 + $0x860] sm:$0xff] %v3062
        %3095 = vst [vmem:[#allocation3 + $0x8a8] sm:$0xff] %v3063
        %3096 = vst [vmem:[#allocation3 + $0x8f0] sm:$0xff] %v3064
        %v3097 = vld [vmem:[%s764 + $0x2] sm:$0xff]
        %v3098 = vld [vmem:[%s764 + $0xa] sm:$0xff]
        %v3099 = vld [vmem:[%s764 + $0x1a] sm:$0xff]
        %v3100 = vld [vmem:[%s764 + $0x22] sm:$0xff]
        %v3101 = vld [vmem:[%s764 + $0x32] sm:$0xff]
        %v3102 = vld [vmem:[%s764 + $0x3a] sm:$0xff]
        %v3103 = vld [vmem:[%s764 + $0x4a] sm:$0xff]
        %v3104 = vld [vmem:[%s764 + $0x52] sm:$0xff]
        %v3105 = vld [vmem:[%s764 + $0x62] sm:$0xff]
        %v3106 = vld [vmem:[%s764 + $0x6a] sm:$0xff]
        %v3107 = vld [vmem:[%s764 + $0x7a] sm:$0xff]
        %v3108 = vld [vmem:[%s764 + $0x82] sm:$0xff]
        %v3109 = vld [vmem:[%s764 + $0x92] sm:$0xff]
        %v3110 = vld [vmem:[%s764 + $0x9a] sm:$0xff]
        %v3111 = vld [vmem:[%s764 + $0xaa] sm:$0xff]
        %v3112 = vld [vmem:[%s764 + $0xb2] sm:$0xff]
        %v3113 = vld [vmem:[%s764 + $0xc2] sm:$0xff]
        %v3114 = vld [vmem:[%s764 + $0xca] sm:$0xff]
        %v3115 = vld [vmem:[%s764 + $0xda] sm:$0xff]
        %v3116 = vld [vmem:[%s764 + $0xe2] sm:$0xff]
        %v3117 = vld [vmem:[%s764 + $0xf2] sm:$0xff]
        %v3118 = vld [vmem:[%s764 + $0xfa] sm:$0xff]
        %v3119 = vld [vmem:[%s764 + $0x10a] sm:$0xff]
        %v3120 = vld [vmem:[%s764 + $0x112] sm:$0xff]
        %v3121 = vld [vmem:[%s764 + $0x122] sm:$0xff]
        %v3122 = vld [vmem:[%s764 + $0x12a] sm:$0xff]
        %v3123 = vld [vmem:[%s764 + $0x13a] sm:$0xff]
        %v3124 = vld [vmem:[%s764 + $0x142] sm:$0xff]
        %v3125 = vld [vmem:[%s764 + $0x152] sm:$0xff]
        %v3126 = vld [vmem:[%s764 + $0x15a] sm:$0xff]
        %v3127 = vld [vmem:[%s764 + $0x16a] sm:$0xff]
        %v3128 = vld [vmem:[%s764 + $0x172] sm:$0xff]
        %3129 = vst [vmem:[#allocation3 + $0x40] sm:$0xff] %v3097
        %3130 = vst [vmem:[#allocation3 + $0x88] sm:$0xff] %v3098
        %3131 = vst [vmem:[#allocation3 + $0xd0] sm:$0xff] %v3099
        %3132 = vst [vmem:[#allocation3 + $0x118] sm:$0xff] %v3100
        %3133 = vst [vmem:[#allocation3 + $0x160] sm:$0xff] %v3101
        %3134 = vst [vmem:[#allocation3 + $0x1a8] sm:$0xff] %v3102
        %3135 = vst [vmem:[#allocation3 + $0x1f0] sm:$0xff] %v3103
        %3136 = vst [vmem:[#allocation3 + $0x238] sm:$0xff] %v3104
        %3137 = vst [vmem:[#allocation3 + $0x280] sm:$0xff] %v3105
        %3138 = vst [vmem:[#allocation3 + $0x2c8] sm:$0xff] %v3106
        %3139 = vst [vmem:[#allocation3 + $0x310] sm:$0xff] %v3107
        %3140 = vst [vmem:[#allocation3 + $0x358] sm:$0xff] %v3108
        %3141 = vst [vmem:[#allocation3 + $0x3a0] sm:$0xff] %v3109
        %3142 = vst [vmem:[#allocation3 + $0x3e8] sm:$0xff] %v3110
        %3143 = vst [vmem:[#allocation3 + $0x430] sm:$0xff] %v3111
        %3144 = vst [vmem:[#allocation3 + $0x478] sm:$0xff] %v3112
        %3145 = vst [vmem:[#allocation3 + $0x4c0] sm:$0xff] %v3113
        %3146 = vst [vmem:[#allocation3 + $0x508] sm:$0xff] %v3114
        %3147 = vst [vmem:[#allocation3 + $0x550] sm:$0xff] %v3115
        %3148 = vst [vmem:[#allocation3 + $0x598] sm:$0xff] %v3116
        %3149 = vst [vmem:[#allocation3 + $0x5e0] sm:$0xff] %v3117
        %3150 = vst [vmem:[#allocation3 + $0x628] sm:$0xff] %v3118
        %3151 = vst [vmem:[#allocation3 + $0x670] sm:$0xff] %v3119
        %3152 = vst [vmem:[#allocation3 + $0x6b8] sm:$0xff] %v3120
        %3153 = vst [vmem:[#allocation3 + $0x700] sm:$0xff] %v3121
        %3154 = vst [vmem:[#allocation3 + $0x748] sm:$0xff] %v3122
        %3155 = vst [vmem:[#allocation3 + $0x790] sm:$0xff] %v3123
        %3156 = vst [vmem:[#allocation3 + $0x7d8] sm:$0xff] %v3124
        %3157 = vst [vmem:[#allocation3 + $0x820] sm:$0xff] %v3125
        %3158 = vst [vmem:[#allocation3 + $0x868] sm:$0xff] %v3126
        %3159 = vst [vmem:[#allocation3 + $0x8b0] sm:$0xff] %v3127
        %3160 = vst [vmem:[#allocation3 + $0x8f8] sm:$0xff] %v3128
        %v3161 = vld [vmem:[#allocation3] sm:$0xff]
        %v3162 = vld [vmem:[#allocation3 + $0x8] sm:$0xff]
        %v3163 = vld [vmem:[#allocation3 + $0x10] sm:$0xff]
        %v3164 = vld [vmem:[#allocation3 + $0x18] sm:$0xff]
        %v3165 = vld [vmem:[#allocation3 + $0x20] sm:$0xff]
        %v3166 = vld [vmem:[#allocation3 + $0x28] sm:$0xff]
        %v3167 = vld [vmem:[#allocation3 + $0x30] sm:$0xff]
        %v3168 = vld [vmem:[#allocation3 + $0x38] sm:$0xff]
        %v3169 = vld [vmem:[#allocation3 + $0x40] sm:$0xff]
        %v3170 = vld [vmem:[#allocation3 + $0x48] sm:$0xff]
        %v3171 = vld [vmem:[#allocation3 + $0x50] sm:$0xff]
        %v3172 = vld [vmem:[#allocation3 + $0x58] sm:$0xff]
        %v3173 = vld [vmem:[#allocation3 + $0x60] sm:$0xff]
        %v3174 = vld [vmem:[#allocation3 + $0x68] sm:$0xff]
        %v3175 = vld [vmem:[#allocation3 + $0x70] sm:$0xff]
        %v3176 = vld [vmem:[#allocation3 + $0x78] sm:$0xff]
        %v3177 = vld [vmem:[#allocation3 + $0x80] sm:$0xff]
        %v3178 = vld [vmem:[#allocation3 + $0x88] sm:$0xff]
        %v3179 = vld [vmem:[#allocation3 + $0x90] sm:$0xff]
        %v3180 = vld [vmem:[#allocation3 + $0x98] sm:$0xff]
        %v3181 = vld [vmem:[#allocation3 + $0xa0] sm:$0xff]
        %v3182 = vld [vmem:[#allocation3 + $0xa8] sm:$0xff]
        %v3183 = vld [vmem:[#allocation3 + $0xb0] sm:$0xff]
        %v3184 = vld [vmem:[#allocation3 + $0xb8] sm:$0xff]
        %v3185 = vld [vmem:[#allocation3 + $0xc0] sm:$0xff]
        %v3186 = vld [vmem:[#allocation3 + $0xc8] sm:$0xff]
        %v3187 = vld [vmem:[#allocation3 + $0xd0] sm:$0xff]
        %v3188 = vld [vmem:[#allocation3 + $0xd8] sm:$0xff]
        %v3189 = vld [vmem:[#allocation3 + $0xe0] sm:$0xff]
        %v3190 = vld [vmem:[#allocation3 + $0xe8] sm:$0xff]
        %v3191 = vld [vmem:[#allocation3 + $0xf0] sm:$0xff]
        %v3192 = vld [vmem:[#allocation3 + $0xf8] sm:$0xff]
        %v3193 = vld [vmem:[#allocation3 + $0x100] sm:$0xff]
        %v3194 = vld [vmem:[#allocation3 + $0x108] sm:$0xff]
        %v3195 = vld [vmem:[#allocation3 + $0x110] sm:$0xff]
        %v3196 = vld [vmem:[#allocation3 + $0x118] sm:$0xff]
        %v3197 = vld [vmem:[#allocation3 + $0x120] sm:$0xff]
        %v3198 = vld [vmem:[#allocation3 + $0x128] sm:$0xff]
        %v3199 = vld [vmem:[#allocation3 + $0x130] sm:$0xff]
        %v3200 = vld [vmem:[#allocation3 + $0x138] sm:$0xff]
        %v3201 = vld [vmem:[#allocation3 + $0x140] sm:$0xff]
        %v3202 = vld [vmem:[#allocation3 + $0x148] sm:$0xff]
        %v3203 = vld [vmem:[#allocation3 + $0x150] sm:$0xff]
        %v3204 = vld [vmem:[#allocation3 + $0x158] sm:$0xff]
        %v3205 = vld [vmem:[#allocation3 + $0x160] sm:$0xff]
        %v3206 = vld [vmem:[#allocation3 + $0x168] sm:$0xff]
        %v3207 = vld [vmem:[#allocation3 + $0x170] sm:$0xff]
        %v3208 = vld [vmem:[#allocation3 + $0x178] sm:$0xff]
        %v3209 = vld [vmem:[#allocation3 + $0x180] sm:$0xff]
        %v3210 = vld [vmem:[#allocation3 + $0x188] sm:$0xff]
        %v3211 = vld [vmem:[#allocation3 + $0x190] sm:$0xff]
        %v3212 = vld [vmem:[#allocation3 + $0x198] sm:$0xff]
        %v3213 = vld [vmem:[#allocation3 + $0x1a0] sm:$0xff]
        %v3214 = vld [vmem:[#allocation3 + $0x1a8] sm:$0xff]
        %v3215 = vld [vmem:[#allocation3 + $0x1b0] sm:$0xff]
        %v3216 = vld [vmem:[#allocation3 + $0x1b8] sm:$0xff]
        %v3217 = vld [vmem:[#allocation3 + $0x1c0] sm:$0xff]
        %v3218 = vld [vmem:[#allocation3 + $0x1c8] sm:$0xff]
        %v3219 = vld [vmem:[#allocation3 + $0x1d0] sm:$0xff]
        %v3220 = vld [vmem:[#allocation3 + $0x1d8] sm:$0xff]
        %v3221 = vld [vmem:[#allocation3 + $0x1e0] sm:$0xff]
        %v3222 = vld [vmem:[#allocation3 + $0x1e8] sm:$0xff]
        %v3223 = vld [vmem:[#allocation3 + $0x1f0] sm:$0xff]
        %v3224 = vld [vmem:[#allocation3 + $0x1f8] sm:$0xff]
        %v3225 = vld [vmem:[#allocation3 + $0x200] sm:$0xff]
        %v3226 = vld [vmem:[#allocation3 + $0x208] sm:$0xff]
        %v3227 = vld [vmem:[#allocation3 + $0x210] sm:$0xff]
        %v3228 = vld [vmem:[#allocation3 + $0x218] sm:$0xff]
        %v3229 = vld [vmem:[#allocation3 + $0x220] sm:$0xff]
        %v3230 = vld [vmem:[#allocation3 + $0x228] sm:$0xff]
        %v3231 = vld [vmem:[#allocation3 + $0x230] sm:$0xff]
        %v3232 = vld [vmem:[#allocation3 + $0x238] sm:$0xff]
        %v3233 = vld [vmem:[#allocation3 + $0x240] sm:$0xff]
        %v3234 = vld [vmem:[#allocation3 + $0x248] sm:$0xff]
        %v3235 = vld [vmem:[#allocation3 + $0x250] sm:$0xff]
        %v3236 = vld [vmem:[#allocation3 + $0x258] sm:$0xff]
        %v3237 = vld [vmem:[#allocation3 + $0x260] sm:$0xff]
        %v3238 = vld [vmem:[#allocation3 + $0x268] sm:$0xff]
        %v3239 = vld [vmem:[#allocation3 + $0x270] sm:$0xff]
        %v3240 = vld [vmem:[#allocation3 + $0x278] sm:$0xff]
        %v3241 = vld [vmem:[#allocation3 + $0x280] sm:$0xff]
        %v3242 = vld [vmem:[#allocation3 + $0x288] sm:$0xff]
        %v3243 = vld [vmem:[#allocation3 + $0x290] sm:$0xff]
        %v3244 = vld [vmem:[#allocation3 + $0x298] sm:$0xff]
        %v3245 = vld [vmem:[#allocation3 + $0x2a0] sm:$0xff]
        %v3246 = vld [vmem:[#allocation3 + $0x2a8] sm:$0xff]
        %v3247 = vld [vmem:[#allocation3 + $0x2b0] sm:$0xff]
        %v3248 = vld [vmem:[#allocation3 + $0x2b8] sm:$0xff]
        %v3249 = vld [vmem:[#allocation3 + $0x2c0] sm:$0xff]
        %v3250 = vld [vmem:[#allocation3 + $0x2c8] sm:$0xff]
        %v3251 = vld [vmem:[#allocation3 + $0x2d0] sm:$0xff]
        %v3252 = vld [vmem:[#allocation3 + $0x2d8] sm:$0xff]
        %v3253 = vld [vmem:[#allocation3 + $0x2e0] sm:$0xff]
        %v3254 = vld [vmem:[#allocation3 + $0x2e8] sm:$0xff]
        %v3255 = vld [vmem:[#allocation3 + $0x2f0] sm:$0xff]
        %v3256 = vld [vmem:[#allocation3 + $0x2f8] sm:$0xff]
        %v3257 = vld [vmem:[#allocation3 + $0x300] sm:$0xff]
        %v3258 = vld [vmem:[#allocation3 + $0x308] sm:$0xff]
        %v3259 = vld [vmem:[#allocation3 + $0x310] sm:$0xff]
        %v3260 = vld [vmem:[#allocation3 + $0x318] sm:$0xff]
        %v3261 = vld [vmem:[#allocation3 + $0x320] sm:$0xff]
        %v3262 = vld [vmem:[#allocation3 + $0x328] sm:$0xff]
        %v3263 = vld [vmem:[#allocation3 + $0x330] sm:$0xff]
        %v3264 = vld [vmem:[#allocation3 + $0x338] sm:$0xff]
        %v3265 = vld [vmem:[#allocation3 + $0x340] sm:$0xff]
        %v3266 = vld [vmem:[#allocation3 + $0x348] sm:$0xff]
        %v3267 = vld [vmem:[#allocation3 + $0x350] sm:$0xff]
        %v3268 = vld [vmem:[#allocation3 + $0x358] sm:$0xff]
        %v3269 = vld [vmem:[#allocation3 + $0x360] sm:$0xff]
        %v3270 = vld [vmem:[#allocation3 + $0x368] sm:$0xff]
        %v3271 = vld [vmem:[#allocation3 + $0x370] sm:$0xff]
        %v3272 = vld [vmem:[#allocation3 + $0x378] sm:$0xff]
        %v3273 = vld [vmem:[#allocation3 + $0x380] sm:$0xff]
        %v3274 = vld [vmem:[#allocation3 + $0x388] sm:$0xff]
        %v3275 = vld [vmem:[#allocation3 + $0x390] sm:$0xff]
        %v3276 = vld [vmem:[#allocation3 + $0x398] sm:$0xff]
        %v3277 = vld [vmem:[#allocation3 + $0x3a0] sm:$0xff]
        %v3278 = vld [vmem:[#allocation3 + $0x3a8] sm:$0xff]
        %v3279 = vld [vmem:[#allocation3 + $0x3b0] sm:$0xff]
        %v3280 = vld [vmem:[#allocation3 + $0x3b8] sm:$0xff]
        %v3281 = vld [vmem:[#allocation3 + $0x3c0] sm:$0xff]
        %v3282 = vld [vmem:[#allocation3 + $0x3c8] sm:$0xff]
        %v3283 = vld [vmem:[#allocation3 + $0x3d0] sm:$0xff]
        %v3284 = vld [vmem:[#allocation3 + $0x3d8] sm:$0xff]
        %v3285 = vld [vmem:[#allocation3 + $0x3e0] sm:$0xff]
        %v3286 = vld [vmem:[#allocation3 + $0x3e8] sm:$0xff]
        %v3287 = vld [vmem:[#allocation3 + $0x3f0] sm:$0xff]
        %v3288 = vld [vmem:[#allocation3 + $0x3f8] sm:$0xff]
        %v3289 = vld [vmem:[#allocation3 + $0x400] sm:$0xff]
        %v3290 = vld [vmem:[#allocation3 + $0x408] sm:$0xff]
        %v3291 = vld [vmem:[#allocation3 + $0x410] sm:$0xff]
        %v3292 = vld [vmem:[#allocation3 + $0x418] sm:$0xff]
        %v3293 = vld [vmem:[#allocation3 + $0x420] sm:$0xff]
        %v3294 = vld [vmem:[#allocation3 + $0x428] sm:$0xff]
        %v3295 = vld [vmem:[#allocation3 + $0x430] sm:$0xff]
        %v3296 = vld [vmem:[#allocation3 + $0x438] sm:$0xff]
        %v3297 = vld [vmem:[#allocation3 + $0x440] sm:$0xff]
        %v3298 = vld [vmem:[#allocation3 + $0x448] sm:$0xff]
        %v3299 = vld [vmem:[#allocation3 + $0x450] sm:$0xff]
        %v3300 = vld [vmem:[#allocation3 + $0x458] sm:$0xff]
        %v3301 = vld [vmem:[#allocation3 + $0x460] sm:$0xff]
        %v3302 = vld [vmem:[#allocation3 + $0x468] sm:$0xff]
        %v3303 = vld [vmem:[#allocation3 + $0x470] sm:$0xff]
        %v3304 = vld [vmem:[#allocation3 + $0x478] sm:$0xff]
        %v3305 = vld [vmem:[#allocation3 + $0x480] sm:$0xff]
        %v3306 = vld [vmem:[#allocation3 + $0x488] sm:$0xff]
        %v3307 = vld [vmem:[#allocation3 + $0x490] sm:$0xff]
        %v3308 = vld [vmem:[#allocation3 + $0x498] sm:$0xff]
        %v3309 = vld [vmem:[#allocation3 + $0x4a0] sm:$0xff]
        %v3310 = vld [vmem:[#allocation3 + $0x4a8] sm:$0xff]
        %v3311 = vld [vmem:[#allocation3 + $0x4b0] sm:$0xff]
        %v3312 = vld [vmem:[#allocation3 + $0x4b8] sm:$0xff]
        %v3313 = vld [vmem:[#allocation3 + $0x4c0] sm:$0xff]
        %v3314 = vld [vmem:[#allocation3 + $0x4c8] sm:$0xff]
        %v3315 = vld [vmem:[#allocation3 + $0x4d0] sm:$0xff]
        %v3316 = vld [vmem:[#allocation3 + $0x4d8] sm:$0xff]
        %v3317 = vld [vmem:[#allocation3 + $0x4e0] sm:$0xff]
        %v3318 = vld [vmem:[#allocation3 + $0x4e8] sm:$0xff]
        %v3319 = vld [vmem:[#allocation3 + $0x4f0] sm:$0xff]
        %v3320 = vld [vmem:[#allocation3 + $0x4f8] sm:$0xff]
        %v3321 = vld [vmem:[#allocation3 + $0x500] sm:$0xff]
        %v3322 = vld [vmem:[#allocation3 + $0x508] sm:$0xff]
        %v3323 = vld [vmem:[#allocation3 + $0x510] sm:$0xff]
        %v3324 = vld [vmem:[#allocation3 + $0x518] sm:$0xff]
        %v3325 = vld [vmem:[#allocation3 + $0x520] sm:$0xff]
        %v3326 = vld [vmem:[#allocation3 + $0x528] sm:$0xff]
        %v3327 = vld [vmem:[#allocation3 + $0x530] sm:$0xff]
        %v3328 = vld [vmem:[#allocation3 + $0x538] sm:$0xff]
        %v3329 = vld [vmem:[#allocation3 + $0x540] sm:$0xff]
        %v3330 = vld [vmem:[#allocation3 + $0x548] sm:$0xff]
        %v3331 = vld [vmem:[#allocation3 + $0x550] sm:$0xff]
        %v3332 = vld [vmem:[#allocation3 + $0x558] sm:$0xff]
        %v3333 = vld [vmem:[#allocation3 + $0x560] sm:$0xff]
        %v3334 = vld [vmem:[#allocation3 + $0x568] sm:$0xff]
        %v3335 = vld [vmem:[#allocation3 + $0x570] sm:$0xff]
        %v3336 = vld [vmem:[#allocation3 + $0x578] sm:$0xff]
        %v3337 = vld [vmem:[#allocation3 + $0x580] sm:$0xff]
        %v3338 = vld [vmem:[#allocation3 + $0x588] sm:$0xff]
        %v3339 = vld [vmem:[#allocation3 + $0x590] sm:$0xff]
        %v3340 = vld [vmem:[#allocation3 + $0x598] sm:$0xff]
        %v3341 = vld [vmem:[#allocation3 + $0x5a0] sm:$0xff]
        %v3342 = vld [vmem:[#allocation3 + $0x5a8] sm:$0xff]
        %v3343 = vld [vmem:[#allocation3 + $0x5b0] sm:$0xff]
        %v3344 = vld [vmem:[#allocation3 + $0x5b8] sm:$0xff]
        %v3345 = vld [vmem:[#allocation3 + $0x5c0] sm:$0xff]
        %v3346 = vld [vmem:[#allocation3 + $0x5c8] sm:$0xff]
        %v3347 = vld [vmem:[#allocation3 + $0x5d0] sm:$0xff]
        %v3348 = vld [vmem:[#allocation3 + $0x5d8] sm:$0xff]
        %v3349 = vld [vmem:[#allocation3 + $0x5e0] sm:$0xff]
        %v3350 = vld [vmem:[#allocation3 + $0x5e8] sm:$0xff]
        %v3351 = vld [vmem:[#allocation3 + $0x5f0] sm:$0xff]
        %v3352 = vld [vmem:[#allocation3 + $0x5f8] sm:$0xff]
        %v3353 = vld [vmem:[#allocation3 + $0x600] sm:$0xff]
        %v3354 = vld [vmem:[#allocation3 + $0x608] sm:$0xff]
        %v3355 = vld [vmem:[#allocation3 + $0x610] sm:$0xff]
        %v3356 = vld [vmem:[#allocation3 + $0x618] sm:$0xff]
        %v3357 = vld [vmem:[#allocation3 + $0x620] sm:$0xff]
        %v3358 = vld [vmem:[#allocation3 + $0x628] sm:$0xff]
        %v3359 = vld [vmem:[#allocation3 + $0x630] sm:$0xff]
        %v3360 = vld [vmem:[#allocation3 + $0x638] sm:$0xff]
        %v3361 = vld [vmem:[#allocation3 + $0x640] sm:$0xff]
        %v3362 = vld [vmem:[#allocation3 + $0x648] sm:$0xff]
        %v3363 = vld [vmem:[#allocation3 + $0x650] sm:$0xff]
        %v3364 = vld [vmem:[#allocation3 + $0x658] sm:$0xff]
        %v3365 = vld [vmem:[#allocation3 + $0x660] sm:$0xff]
        %v3366 = vld [vmem:[#allocation3 + $0x668] sm:$0xff]
        %v3367 = vld [vmem:[#allocation3 + $0x670] sm:$0xff]
        %v3368 = vld [vmem:[#allocation3 + $0x678] sm:$0xff]
        %v3369 = vld [vmem:[#allocation3 + $0x680] sm:$0xff]
        %v3370 = vld [vmem:[#allocation3 + $0x688] sm:$0xff]
        %v3371 = vld [vmem:[#allocation3 + $0x690] sm:$0xff]
        %v3372 = vld [vmem:[#allocation3 + $0x698] sm:$0xff]
        %v3373 = vld [vmem:[#allocation3 + $0x6a0] sm:$0xff]
        %v3374 = vld [vmem:[#allocation3 + $0x6a8] sm:$0xff]
        %v3375 = vld [vmem:[#allocation3 + $0x6b0] sm:$0xff]
        %v3376 = vld [vmem:[#allocation3 + $0x6b8] sm:$0xff]
        %v3377 = vld [vmem:[#allocation3 + $0x6c0] sm:$0xff]
        %v3378 = vld [vmem:[#allocation3 + $0x6c8] sm:$0xff]
        %v3379 = vld [vmem:[#allocation3 + $0x6d0] sm:$0xff]
        %v3380 = vld [vmem:[#allocation3 + $0x6d8] sm:$0xff]
        %v3381 = vld [vmem:[#allocation3 + $0x6e0] sm:$0xff]
        %v3382 = vld [vmem:[#allocation3 + $0x6e8] sm:$0xff]
        %v3383 = vld [vmem:[#allocation3 + $0x6f0] sm:$0xff]
        %v3384 = vld [vmem:[#allocation3 + $0x6f8] sm:$0xff]
        %v3385 = vld [vmem:[#allocation3 + $0x700] sm:$0xff]
        %v3386 = vld [vmem:[#allocation3 + $0x708] sm:$0xff]
        %v3387 = vld [vmem:[#allocation3 + $0x710] sm:$0xff]
        %v3388 = vld [vmem:[#allocation3 + $0x718] sm:$0xff]
        %v3389 = vld [vmem:[#allocation3 + $0x720] sm:$0xff]
        %v3390 = vld [vmem:[#allocation3 + $0x728] sm:$0xff]
        %v3391 = vld [vmem:[#allocation3 + $0x730] sm:$0xff]
        %v3392 = vld [vmem:[#allocation3 + $0x738] sm:$0xff]
        %v3393 = vld [vmem:[#allocation3 + $0x740] sm:$0xff]
        %v3394 = vld [vmem:[#allocation3 + $0x748] sm:$0xff]
        %v3395 = vld [vmem:[#allocation3 + $0x750] sm:$0xff]
        %v3396 = vld [vmem:[#allocation3 + $0x758] sm:$0xff]
        %v3397 = vld [vmem:[#allocation3 + $0x760] sm:$0xff]
        %v3398 = vld [vmem:[#allocation3 + $0x768] sm:$0xff]
        %v3399 = vld [vmem:[#allocation3 + $0x770] sm:$0xff]
        %v3400 = vld [vmem:[#allocation3 + $0x778] sm:$0xff]
        %v3401 = vld [vmem:[#allocation3 + $0x780] sm:$0xff]
        %v3402 = vld [vmem:[#allocation3 + $0x788] sm:$0xff]
        %v3403 = vld [vmem:[#allocation3 + $0x790] sm:$0xff]
        %v3404 = vld [vmem:[#allocation3 + $0x798] sm:$0xff]
        %v3405 = vld [vmem:[#allocation3 + $0x7a0] sm:$0xff]
        %v3406 = vld [vmem:[#allocation3 + $0x7a8] sm:$0xff]
        %v3407 = vld [vmem:[#allocation3 + $0x7b0] sm:$0xff]
        %v3408 = vld [vmem:[#allocation3 + $0x7b8] sm:$0xff]
        %v3409 = vld [vmem:[#allocation3 + $0x7c0] sm:$0xff]
        %v3410 = vld [vmem:[#allocation3 + $0x7c8] sm:$0xff]
        %v3411 = vld [vmem:[#allocation3 + $0x7d0] sm:$0xff]
        %v3412 = vld [vmem:[#allocation3 + $0x7d8] sm:$0xff]
        %v3413 = vld [vmem:[#allocation3 + $0x7e0] sm:$0xff]
        %v3414 = vld [vmem:[#allocation3 + $0x7e8] sm:$0xff]
        %v3415 = vld [vmem:[#allocation3 + $0x7f0] sm:$0xff]
        %v3416 = vld [vmem:[#allocation3 + $0x7f8] sm:$0xff]
        %v3417 = vld [vmem:[#allocation3 + $0x800] sm:$0xff]
        %v3418 = vld [vmem:[#allocation3 + $0x808] sm:$0xff]
        %v3419 = vld [vmem:[#allocation3 + $0x810] sm:$0xff]
        %v3420 = vld [vmem:[#allocation3 + $0x818] sm:$0xff]
        %v3421 = vld [vmem:[#allocation3 + $0x820] sm:$0xff]
        %v3422 = vld [vmem:[#allocation3 + $0x828] sm:$0xff]
        %v3423 = vld [vmem:[#allocation3 + $0x830] sm:$0xff]
        %v3424 = vld [vmem:[#allocation3 + $0x838] sm:$0xff]
        %v3425 = vld [vmem:[#allocation3 + $0x840] sm:$0xff]
        %v3426 = vld [vmem:[#allocation3 + $0x848] sm:$0xff]
        %v3427 = vld [vmem:[#allocation3 + $0x850] sm:$0xff]
        %v3428 = vld [vmem:[#allocation3 + $0x858] sm:$0xff]
        %v3429 = vld [vmem:[#allocation3 + $0x860] sm:$0xff]
        %v3430 = vld [vmem:[#allocation3 + $0x868] sm:$0xff]
        %v3431 = vld [vmem:[#allocation3 + $0x870] sm:$0xff]
        %v3432 = vld [vmem:[#allocation3 + $0x878] sm:$0xff]
        %v3433 = vld [vmem:[#allocation3 + $0x880] sm:$0xff]
        %v3434 = vld [vmem:[#allocation3 + $0x888] sm:$0xff]
        %v3435 = vld [vmem:[#allocation3 + $0x890] sm:$0xff]
        %v3436 = vld [vmem:[#allocation3 + $0x898] sm:$0xff]
        %v3437 = vld [vmem:[#allocation3 + $0x8a0] sm:$0xff]
        %v3438 = vld [vmem:[#allocation3 + $0x8a8] sm:$0xff]
        %v3439 = vld [vmem:[#allocation3 + $0x8b0] sm:$0xff]
        %v3440 = vld [vmem:[#allocation3 + $0x8b8] sm:$0xff]
        %v3441 = vld [vmem:[#allocation3 + $0x8c0] sm:$0xff]
        %v3442 = vld [vmem:[#allocation3 + $0x8c8] sm:$0xff]
        %v3443 = vld [vmem:[#allocation3 + $0x8d0] sm:$0xff]
        %v3444 = vld [vmem:[#allocation3 + $0x8d8] sm:$0xff]
        %v3445 = vld [vmem:[#allocation3 + $0x8e0] sm:$0xff]
        %v3446 = vld [vmem:[#allocation3 + $0x8e8] sm:$0xff]
        %v3447 = vld [vmem:[#allocation3 + $0x8f0] sm:$0xff]
        %v3448 = vld [vmem:[#allocation3 + $0x8f8] sm:$0xff]
        %v3449 = vld [vmem:[#allocation9] sm:$0xff]
        %v3450 = vld [vmem:[#allocation9 + $0x8] sm:$0xff]
        %v3451 = vld [vmem:[#allocation9 + $0x10] sm:$0xff]
        %v3452 = vld [vmem:[#allocation9 + $0x18] sm:$0xff]
        %v3453 = vld [vmem:[#allocation9 + $0x20] sm:$0xff]
        %v3454 = vld [vmem:[#allocation9 + $0x28] sm:$0xff]
        %v3455 = vld [vmem:[#allocation9 + $0x30] sm:$0xff]
        %v3456 = vld [vmem:[#allocation9 + $0x38] sm:$0xff]
        %v3457 = vld [vmem:[#allocation9 + $0x40] sm:$0xff]
        %v3458 = vld [vmem:[#allocation9 + $0x48] sm:$0xff]
        %v3459 = vld [vmem:[#allocation9 + $0x50] sm:$0xff]
        %v3460 = vld [vmem:[#allocation9 + $0x58] sm:$0xff]
        %v3461 = vld [vmem:[#allocation9 + $0x60] sm:$0xff]
        %v3462 = vld [vmem:[#allocation9 + $0x68] sm:$0xff]
        %v3463 = vld [vmem:[#allocation9 + $0x70] sm:$0xff]
        %v3464 = vld [vmem:[#allocation9 + $0x78] sm:$0xff]
        %v3465 = vld [vmem:[#allocation9 + $0x80] sm:$0xff]
        %v3466 = vld [vmem:[#allocation9 + $0x88] sm:$0xff]
        %v3467 = vld [vmem:[#allocation9 + $0x90] sm:$0xff]
        %v3468 = vld [vmem:[#allocation9 + $0x98] sm:$0xff]
        %v3469 = vld [vmem:[#allocation9 + $0xa0] sm:$0xff]
        %v3470 = vld [vmem:[#allocation9 + $0xa8] sm:$0xff]
        %v3471 = vld [vmem:[#allocation9 + $0xb0] sm:$0xff]
        %v3472 = vld [vmem:[#allocation9 + $0xb8] sm:$0xff]
        %v3473 = vld [vmem:[#allocation9 + $0xc0] sm:$0xff]
        %v3474 = vld [vmem:[#allocation9 + $0xc8] sm:$0xff]
        %v3475 = vld [vmem:[#allocation9 + $0xd0] sm:$0xff]
        %v3476 = vld [vmem:[#allocation9 + $0xd8] sm:$0xff]
        %v3477 = vld [vmem:[#allocation9 + $0xe0] sm:$0xff]
        %v3478 = vld [vmem:[#allocation9 + $0xe8] sm:$0xff]
        %v3479 = vld [vmem:[#allocation9 + $0xf0] sm:$0xff]
        %v3480 = vld [vmem:[#allocation9 + $0xf8] sm:$0xff]
        %v3481 = vld [vmem:[#allocation9 + $0x100] sm:$0xff]
        %v3482 = vld [vmem:[#allocation9 + $0x108] sm:$0xff]
        %v3483 = vld [vmem:[#allocation9 + $0x110] sm:$0xff]
        %v3484 = vld [vmem:[#allocation9 + $0x118] sm:$0xff]
        %v3485 = vld [vmem:[#allocation9 + $0x120] sm:$0xff]
        %v3486 = vld [vmem:[#allocation9 + $0x128] sm:$0xff]
        %v3487 = vld [vmem:[#allocation9 + $0x130] sm:$0xff]
        %v3488 = vld [vmem:[#allocation9 + $0x138] sm:$0xff]
        %v3489 = vld [vmem:[#allocation9 + $0x140] sm:$0xff]
        %v3490 = vld [vmem:[#allocation9 + $0x148] sm:$0xff]
        %v3491 = vld [vmem:[#allocation9 + $0x150] sm:$0xff]
        %v3492 = vld [vmem:[#allocation9 + $0x158] sm:$0xff]
        %v3493 = vld [vmem:[#allocation9 + $0x160] sm:$0xff]
        %v3494 = vld [vmem:[#allocation9 + $0x168] sm:$0xff]
        %v3495 = vld [vmem:[#allocation9 + $0x170] sm:$0xff]
        %v3496 = vld [vmem:[#allocation9 + $0x178] sm:$0xff]
        %v3497 = vld [vmem:[#allocation9 + $0x180] sm:$0xff]
        %v3498 = vld [vmem:[#allocation9 + $0x188] sm:$0xff]
        %v3499 = vld [vmem:[#allocation9 + $0x190] sm:$0xff]
        %v3500 = vld [vmem:[#allocation9 + $0x198] sm:$0xff]
        %v3501 = vld [vmem:[#allocation9 + $0x1a0] sm:$0xff]
        %v3502 = vld [vmem:[#allocation9 + $0x1a8] sm:$0xff]
        %v3503 = vld [vmem:[#allocation9 + $0x1b0] sm:$0xff]
        %v3504 = vld [vmem:[#allocation9 + $0x1b8] sm:$0xff]
        %v3505 = vld [vmem:[#allocation9 + $0x1c0] sm:$0xff]
        %v3506 = vld [vmem:[#allocation9 + $0x1c8] sm:$0xff]
        %v3507 = vld [vmem:[#allocation9 + $0x1d0] sm:$0xff]
        %v3508 = vld [vmem:[#allocation9 + $0x1d8] sm:$0xff]
        %v3509 = vld [vmem:[#allocation9 + $0x1e0] sm:$0xff]
        %v3510 = vld [vmem:[#allocation9 + $0x1e8] sm:$0xff]
        %v3511 = vld [vmem:[#allocation9 + $0x1f0] sm:$0xff]
        %v3512 = vld [vmem:[#allocation9 + $0x1f8] sm:$0xff]
        %v3513 = vld [vmem:[#allocation9 + $0x200] sm:$0xff]
        %v3514 = vld [vmem:[#allocation9 + $0x208] sm:$0xff]
        %v3515 = vld [vmem:[#allocation9 + $0x210] sm:$0xff]
        %v3516 = vld [vmem:[#allocation9 + $0x218] sm:$0xff]
        %v3517 = vld [vmem:[#allocation9 + $0x220] sm:$0xff]
        %v3518 = vld [vmem:[#allocation9 + $0x228] sm:$0xff]
        %v3519 = vld [vmem:[#allocation9 + $0x230] sm:$0xff]
        %v3520 = vld [vmem:[#allocation9 + $0x238] sm:$0xff]
        %v3521 = vld [vmem:[#allocation9 + $0x240] sm:$0xff]
        %v3522 = vld [vmem:[#allocation9 + $0x248] sm:$0xff]
        %v3523 = vld [vmem:[#allocation9 + $0x250] sm:$0xff]
        %v3524 = vld [vmem:[#allocation9 + $0x258] sm:$0xff]
        %v3525 = vld [vmem:[#allocation9 + $0x260] sm:$0xff]
        %v3526 = vld [vmem:[#allocation9 + $0x268] sm:$0xff]
        %v3527 = vld [vmem:[#allocation9 + $0x270] sm:$0xff]
        %v3528 = vld [vmem:[#allocation9 + $0x278] sm:$0xff]
        %v3529 = vld [vmem:[#allocation9 + $0x280] sm:$0xff]
        %v3530 = vld [vmem:[#allocation9 + $0x288] sm:$0xff]
        %v3531 = vld [vmem:[#allocation9 + $0x290] sm:$0xff]
        %v3532 = vld [vmem:[#allocation9 + $0x298] sm:$0xff]
        %v3533 = vld [vmem:[#allocation9 + $0x2a0] sm:$0xff]
        %v3534 = vld [vmem:[#allocation9 + $0x2a8] sm:$0xff]
        %v3535 = vld [vmem:[#allocation9 + $0x2b0] sm:$0xff]
        %v3536 = vld [vmem:[#allocation9 + $0x2b8] sm:$0xff]
        %v3537 = vld [vmem:[#allocation9 + $0x2c0] sm:$0xff]
        %v3538 = vld [vmem:[#allocation9 + $0x2c8] sm:$0xff]
        %v3539 = vld [vmem:[#allocation9 + $0x2d0] sm:$0xff]
        %v3540 = vld [vmem:[#allocation9 + $0x2d8] sm:$0xff]
        %v3541 = vld [vmem:[#allocation9 + $0x2e0] sm:$0xff]
        %v3542 = vld [vmem:[#allocation9 + $0x2e8] sm:$0xff]
        %v3543 = vld [vmem:[#allocation9 + $0x2f0] sm:$0xff]
        %v3544 = vld [vmem:[#allocation9 + $0x2f8] sm:$0xff]
        %v3545 = vld [vmem:[#allocation9 + $0x300] sm:$0xff]
        %v3546 = vld [vmem:[#allocation9 + $0x308] sm:$0xff]
        %v3547 = vld [vmem:[#allocation9 + $0x310] sm:$0xff]
        %v3548 = vld [vmem:[#allocation9 + $0x318] sm:$0xff]
        %v3549 = vld [vmem:[#allocation9 + $0x320] sm:$0xff]
        %v3550 = vld [vmem:[#allocation9 + $0x328] sm:$0xff]
        %v3551 = vld [vmem:[#allocation9 + $0x330] sm:$0xff]
        %v3552 = vld [vmem:[#allocation9 + $0x338] sm:$0xff]
        %v3553 = vld [vmem:[#allocation9 + $0x340] sm:$0xff]
        %v3554 = vld [vmem:[#allocation9 + $0x348] sm:$0xff]
        %v3555 = vld [vmem:[#allocation9 + $0x350] sm:$0xff]
        %v3556 = vld [vmem:[#allocation9 + $0x358] sm:$0xff]
        %v3557 = vld [vmem:[#allocation9 + $0x360] sm:$0xff]
        %v3558 = vld [vmem:[#allocation9 + $0x368] sm:$0xff]
        %v3559 = vld [vmem:[#allocation9 + $0x370] sm:$0xff]
        %v3560 = vld [vmem:[#allocation9 + $0x378] sm:$0xff]
        %v3561 = vld [vmem:[#allocation9 + $0x380] sm:$0xff]
        %v3562 = vld [vmem:[#allocation9 + $0x388] sm:$0xff]
        %v3563 = vld [vmem:[#allocation9 + $0x390] sm:$0xff]
        %v3564 = vld [vmem:[#allocation9 + $0x398] sm:$0xff]
        %v3565 = vld [vmem:[#allocation9 + $0x3a0] sm:$0xff]
        %v3566 = vld [vmem:[#allocation9 + $0x3a8] sm:$0xff]
        %v3567 = vld [vmem:[#allocation9 + $0x3b0] sm:$0xff]
        %v3568 = vld [vmem:[#allocation9 + $0x3b8] sm:$0xff]
        %v3569 = vld [vmem:[#allocation9 + $0x3c0] sm:$0xff]
        %v3570 = vld [vmem:[#allocation9 + $0x3c8] sm:$0xff]
        %v3571 = vld [vmem:[#allocation9 + $0x3d0] sm:$0xff]
        %v3572 = vld [vmem:[#allocation9 + $0x3d8] sm:$0xff]
        %v3573 = vld [vmem:[#allocation9 + $0x3e0] sm:$0xff]
        %v3574 = vld [vmem:[#allocation9 + $0x3e8] sm:$0xff]
        %v3575 = vld [vmem:[#allocation9 + $0x3f0] sm:$0xff]
        %v3576 = vld [vmem:[#allocation9 + $0x3f8] sm:$0xff]
        %v3577 = vld [vmem:[#allocation9 + $0x400] sm:$0xff]
        %v3578 = vld [vmem:[#allocation9 + $0x408] sm:$0xff]
        %v3579 = vld [vmem:[#allocation9 + $0x410] sm:$0xff]
        %v3580 = vld [vmem:[#allocation9 + $0x418] sm:$0xff]
        %v3581 = vld [vmem:[#allocation9 + $0x420] sm:$0xff]
        %v3582 = vld [vmem:[#allocation9 + $0x428] sm:$0xff]
        %v3583 = vld [vmem:[#allocation9 + $0x430] sm:$0xff]
        %v3584 = vld [vmem:[#allocation9 + $0x438] sm:$0xff]
        %v3585 = vld [vmem:[#allocation9 + $0x440] sm:$0xff]
        %v3586 = vld [vmem:[#allocation9 + $0x448] sm:$0xff]
        %v3587 = vld [vmem:[#allocation9 + $0x450] sm:$0xff]
        %v3588 = vld [vmem:[#allocation9 + $0x458] sm:$0xff]
        %v3589 = vld [vmem:[#allocation9 + $0x460] sm:$0xff]
        %v3590 = vld [vmem:[#allocation9 + $0x468] sm:$0xff]
        %v3591 = vld [vmem:[#allocation9 + $0x470] sm:$0xff]
        %v3592 = vld [vmem:[#allocation9 + $0x478] sm:$0xff]
        %v3593 = vld [vmem:[%s4] sm:$0x1]
        %v3595 = vlaneseq
        %v3596 = vshrl.u32 %v3595, 7
        %v3597 = vsub.s32 0, %v3596
        %v3598 = vrot.slane %v3593, %v3597
        %3600 = vmatprep.subr.mxu0 0.0
        %3601 = vmatpush1.msra.mxu0 %v3449
        %3602 = vmatprep.subr.mxu0 0.0
        %3603 = vmatpush1.msra.mxu0 %v3450
        %3604 = vmatprep.subr.mxu0 0.0
        %3605 = vmatpush1.msra.mxu0 %v3451
        %3606 = vmatprep.subr.mxu0 0.0
        %3607 = vmatpush1.msra.mxu0 %v3452
        %3608 = vmatprep.subr.mxu0 0.0
        %3609 = vmatpush1.msra.mxu0 %v3453
        %3610 = vmatprep.subr.mxu0 0.0
        %3611 = vmatpush1.msra.mxu0 %v3454
        %3612 = vmatprep.subr.mxu0 0.0
        %3613 = vmatpush1.msra.mxu0 %v3455
        %3614 = vmatprep.subr.mxu0 0.0
        %3615 = vmatpush1.msra.mxu0 %v3456
        %3616 = vmatprep.subr.mxu0 0.0
        %3617 = vmatpush1.msra.mxu0 %v3457
        %3618 = vmatprep.subr.mxu0 0.0
        %3619 = vmatpush1.msra.mxu0 %v3458
        %3620 = vmatprep.subr.mxu0 0.0
        %3621 = vmatpush1.msra.mxu0 %v3459
        %3622 = vmatprep.subr.mxu0 0.0
        %3623 = vmatpush1.msra.mxu0 %v3460
        %3624 = vmatprep.subr.mxu0 0.0
        %3625 = vmatpush1.msra.mxu0 %v3461
        %3626 = vmatprep.subr.mxu0 0.0
        %3627 = vmatpush1.msra.mxu0 %v3462
        %3628 = vmatprep.subr.mxu0 0.0
        %3629 = vmatpush1.msra.mxu0 %v3463
        %3630 = vmatprep.subr.mxu0 0.0
        %3631 = vmatpush1.msra.mxu0 %v3464
        %3632 = vmatprep.subr.mxu0 0.0
        %3633 = vmatpush1.msra.mxu0 %v3465
        %3634 = vmatprep.subr.mxu0 0.0
        %3635 = vmatpush1.msra.mxu0 %v3466
        %3636 = vmatprep.subr.mxu0 0.0
        %3637 = vmatpush1.msra.mxu0 %v3467
        %3638 = vmatprep.subr.mxu0 0.0
        %3639 = vmatpush1.msra.mxu0 %v3468
        %3640 = vmatprep.subr.mxu0 0.0
        %3641 = vmatpush1.msra.mxu0 %v3469
        %3642 = vmatprep.subr.mxu0 0.0
        %3643 = vmatpush1.msra.mxu0 %v3470
        %3644 = vmatprep.subr.mxu0 0.0
        %3645 = vmatpush1.msra.mxu0 %v3471
        %3646 = vmatprep.subr.mxu0 0.0
        %3647 = vmatpush1.msra.mxu0 %v3472
        %3648 = vmatprep.subr.mxu0 0.0
        %3649 = vmatpush1.msra.mxu0 %v3473
        %3650 = vmatprep.subr.mxu0 0.0
        %3651 = vmatpush1.msra.mxu0 %v3474
        %3652 = vmatprep.subr.mxu0 0.0
        %3653 = vmatpush1.msra.mxu0 %v3475
        %3654 = vmatprep.subr.mxu0 0.0
        %3655 = vmatpush1.msra.mxu0 %v3476
        %3656 = vmatprep.subr.mxu0 0.0
        %3657 = vmatpush1.msra.mxu0 %v3477
        %3658 = vmatprep.subr.mxu0 0.0
        %3659 = vmatpush1.msra.mxu0 %v3478
        %3660 = vmatprep.subr.mxu0 0.0
        %3661 = vmatpush1.msra.mxu0 %v3479
        %3662 = vmatprep.subr.mxu0 0.0
        %3663 = vmatpush1.msra.mxu0 %v3480
        %3664 = vmatprep.mubr.f32.mxu0 %v3162
        %3665 = vmatmul.mubr.f32.gmra.mrb[0].mxu0 %v3161
        %v3666 = vpop.f32.mrb[0].mxu0
        %v3667 = vadd.f32 %v3598, %v3666
        %v3668 = vpop.f32.mrb[0].mxu0
        %3669 = vmatprep.mubr.f32.mxu0 %v3171
        %3670 = vmatmul.mubr.f32.gmra.mrb[0].mxu0 %v3170
        %v3671 = vpop.f32.mrb[0].mxu0
        %v3672 = vadd.f32 %v3598, %v3671
        %v3673 = vpop.f32.mrb[0].mxu0
        %3674 = vmatprep.mubr.f32.mxu0 %v3180
        %3675 = vmatmul.mubr.f32.gmra.mrb[0].mxu0 %v3179
        %v3676 = vpop.f32.mrb[0].mxu0
        %v3677 = vadd.f32 %v3598, %v3676
        %v3678 = vpop.f32.mrb[0].mxu0
        %3679 = vmatprep.mubr.f32.mxu0 %v3189
        %3680 = vmatmul.mubr.f32.gmra.mrb[0].mxu0 %v3188
        %v3681 = vpop.f32.mrb[0].mxu0
        %v3682 = vadd.f32 %v3598, %v3681
        %v3683 = vpop.f32.mrb[0].mxu0
        %3684 = vmatprep.mubr.f32.mxu0 %v3198
        %3685 = vmatmul.mubr.f32.gmra.mrb[0].mxu0 %v3197
        %v3686 = vpop.f32.mrb[0].mxu0
        %v3687 = vadd.f32 %v3598, %v3686
        %v3688 = vpop.f32.mrb[0].mxu0
        %3689 = vmatprep.mubr.f32.mxu0 %v3207
        %3690 = vmatmul.mubr.f32.gmra.mrb[0].mxu0 %v3206
        %v3691 = vpop.f32.mrb[0].mxu0
        %v3692 = vadd.f32 %v3598, %v3691
        %v3693 = vpop.f32.mrb[0].mxu0
        %3694 = vmatprep.mubr.f32.mxu0 %v3216
        %3695 = vmatmul.mubr.f32.gmra.mrb[0].mxu0 %v3215
        %v3696 = vpop.f32.mrb[0].mxu0
        %v3697 = vadd.f32 %v3598, %v3696
        %v3698 = vpop.f32.mrb[0].mxu0
        %3699 = vmatprep.mubr.f32.mxu0 %v3225
        %3700 = vmatmul.mubr.f32.gmra.mrb[0].mxu0 %v3224
        %v3701 = vpop.f32.mrb[0].mxu0
        %v3702 = vadd.f32 %v3598, %v3701
        %v3703 = vpop.f32.mrb[0].mxu0
        %3704 = vmatprep.mubr.f32.mxu0 %v3234
        %3705 = vmatmul.mubr.f32.gmra.mrb[0].mxu0 %v3233
        %v3706 = vpop.f32.mrb[0].mxu0
        %v3707 = vadd.f32 %v3598, %v3706
        %v3708 = vpop.f32.mrb[0].mxu0
        %3709 = vmatprep.mubr.f32.mxu0 %v3243
        %3710 = vmatmul.mubr.f32.gmra.mrb[0].mxu0 %v3242
        %v3711 = vpop.f32.mrb[0].mxu0
        %v3712 = vadd.f32 %v3598, %v3711
        %v3713 = vpop.f32.mrb[0].mxu0
        %3714 = vmatprep.mubr.f32.mxu0 %v3252
        %3715 = vmatmul.mubr.f32.gmra.mrb[0].mxu0 %v3251
        %v3716 = vpop.f32.mrb[0].mxu0
        %v3717 = vadd.f32 %v3598, %v3716
        %v3718 = vpop.f32.mrb[0].mxu0
        %3719 = vmatprep.mubr.f32.mxu0 %v3261
        %3720 = vmatmul.mubr.f32.gmra.mrb[0].mxu0 %v3260
        %v3721 = vpop.f32.mrb[0].mxu0
        %v3722 = vadd.f32 %v3598, %v3721
        %v3723 = vpop.f32.mrb[0].mxu0
        %3724 = vmatprep.mubr.f32.mxu0 %v3270
        %3725 = vmatmul.mubr.f32.gmra.mrb[0].mxu0 %v3269
        %v3726 = vpop.f32.mrb[0].mxu0
        %v3727 = vadd.f32 %v3598, %v3726
        %v3728 = vpop.f32.mrb[0].mxu0
        %3729 = vmatprep.mubr.f32.mxu0 %v3279
        %3730 = vmatmul.mubr.f32.gmra.mrb[0].mxu0 %v3278
        %v3731 = vpop.f32.mrb[0].mxu0
        %v3732 = vadd.f32 %v3598, %v3731
        %v3733 = vpop.f32.mrb[0].mxu0
        %3734 = vmatprep.mubr.f32.mxu0 %v3288
        %3735 = vmatmul.mubr.f32.gmra.mrb[0].mxu0 %v3287
        %v3736 = vpop.f32.mrb[0].mxu0
        %v3737 = vadd.f32 %v3598, %v3736
        %v3738 = vpop.f32.mrb[0].mxu0
        %3739 = vmatprep.mubr.f32.mxu0 %v3297
        %3740 = vmatmul.mubr.f32.gmra.mrb[0].mxu0 %v3296
        %v3741 = vpop.f32.mrb[0].mxu0
        %v3742 = vadd.f32 %v3598, %v3741
        %v3743 = vpop.f32.mrb[0].mxu0
        %3744 = vmatprep.mubr.f32.mxu0 %v3306
        %3745 = vmatmul.mubr.f32.gmra.mrb[0].mxu0 %v3305
        %v3746 = vpop.f32.mrb[0].mxu0
        %v3747 = vadd.f32 %v3598, %v3746
        %v3748 = vpop.f32.mrb[0].mxu0
        %3749 = vmatprep.mubr.f32.mxu0 %v3315
        %3750 = vmatmul.mubr.f32.gmra.mrb[0].mxu0 %v3314
        %v3751 = vpop.f32.mrb[0].mxu0
        %v3752 = vadd.f32 %v3598, %v3751
        %v3753 = vpop.f32.mrb[0].mxu0
        %3754 = vmatprep.mubr.f32.mxu0 %v3324
        %3755 = vmatmul.mubr.f32.gmra.mrb[0].mxu0 %v3323
        %v3756 = vpop.f32.mrb[0].mxu0
        %v3757 = vadd.f32 %v3598, %v3756
        %v3758 = vpop.f32.mrb[0].mxu0
        %3759 = vmatprep.mubr.f32.mxu0 %v3333
        %3760 = vmatmul.mubr.f32.gmra.mrb[0].mxu0 %v3332
        %v3761 = vpop.f32.mrb[0].mxu0
        %v3762 = vadd.f32 %v3598, %v3761
        %v3763 = vpop.f32.mrb[0].mxu0
        %3764 = vmatprep.mubr.f32.mxu0 %v3342
        %3765 = vmatmul.mubr.f32.gmra.mrb[0].mxu0 %v3341
        %v3766 = vpop.f32.mrb[0].mxu0
        %v3767 = vadd.f32 %v3598, %v3766
        %v3768 = vpop.f32.mrb[0].mxu0
        %3769 = vmatprep.mubr.f32.mxu0 %v3351
        %3770 = vmatmul.mubr.f32.gmra.mrb[0].mxu0 %v3350
        %v3771 = vpop.f32.mrb[0].mxu0
        %v3772 = vadd.f32 %v3598, %v3771
        %v3773 = vpop.f32.mrb[0].mxu0
        %3774 = vmatprep.mubr.f32.mxu0 %v3360
        %3775 = vmatmul.mubr.f32.gmra.mrb[0].mxu0 %v3359
        %v3776 = vpop.f32.mrb[0].mxu0
        %v3777 = vadd.f32 %v3598, %v3776
        %v3778 = vpop.f32.mrb[0].mxu0
        %3779 = vmatprep.mubr.f32.mxu0 %v3369
        %3780 = vmatmul.mubr.f32.gmra.mrb[0].mxu0 %v3368
        %v3781 = vpop.f32.mrb[0].mxu0
        %v3782 = vadd.f32 %v3598, %v3781
        %v3783 = vpop.f32.mrb[0].mxu0
        %3784 = vmatprep.mubr.f32.mxu0 %v3378
        %3785 = vmatmul.mubr.f32.gmra.mrb[0].mxu0 %v3377
        %v3786 = vpop.f32.mrb[0].mxu0
        %v3787 = vadd.f32 %v3598, %v3786
        %v3788 = vpop.f32.mrb[0].mxu0
        %3789 = vmatprep.mubr.f32.mxu0 %v3387
        %3790 = vmatmul.mubr.f32.gmra.mrb[0].mxu0 %v3386
        %v3791 = vpop.f32.mrb[0].mxu0
        %v3792 = vadd.f32 %v3598, %v3791
        %v3793 = vpop.f32.mrb[0].mxu0
        %3794 = vmatprep.mubr.f32.mxu0 %v3396
        %3795 = vmatmul.mubr.f32.gmra.mrb[0].mxu0 %v3395
        %v3796 = vpop.f32.mrb[0].mxu0
        %v3797 = vadd.f32 %v3598, %v3796
        %v3798 = vpop.f32.mrb[0].mxu0
        %3799 = vmatprep.mubr.f32.mxu0 %v3405
        %3800 = vmatmul.mubr.f32.gmra.mrb[0].mxu0 %v3404
        %v3801 = vpop.f32.mrb[0].mxu0
        %v3802 = vadd.f32 %v3598, %v3801
        %v3803 = vpop.f32.mrb[0].mxu0
        %3804 = vmatprep.mubr.f32.mxu0 %v3414
        %3805 = vmatmul.mubr.f32.gmra.mrb[0].mxu0 %v3413
        %v3806 = vpop.f32.mrb[0].mxu0
        %v3807 = vadd.f32 %v3598, %v3806
        %v3808 = vpop.f32.mrb[0].mxu0
        %3809 = vmatprep.mubr.f32.mxu0 %v3423
        %3810 = vmatmul.mubr.f32.gmra.mrb[0].mxu0 %v3422
        %v3811 = vpop.f32.mrb[0].mxu0
        %v3812 = vadd.f32 %v3598, %v3811
        %v3813 = vpop.f32.mrb[0].mxu0
        %3814 = vmatprep.mubr.f32.mxu0 %v3432
        %3815 = vmatmul.mubr.f32.gmra.mrb[0].mxu0 %v3431
        %v3816 = vpop.f32.mrb[0].mxu0
        %v3817 = vadd.f32 %v3598, %v3816
        %v3818 = vpop.f32.mrb[0].mxu0
        %3819 = vmatprep.mubr.f32.mxu0 %v3441
        %3820 = vmatmul.mubr.f32.gmra.mrb[0].mxu0 %v3440
        %v3821 = vpop.f32.mrb[0].mxu0
        %v3822 = vadd.f32 %v3598, %v3821
        %v3823 = vpop.f32.mrb[0].mxu0
        %3824 = vdwg.mxu0
        %3825 = vmatprep.subr.mxu0 0.0
        %3826 = vmatpush1.msra.mxu0 %v3481
        %3827 = vmatprep.subr.mxu0 0.0
        %3828 = vmatpush1.msra.mxu0 %v3482
        %3829 = vmatprep.subr.mxu0 0.0
        %3830 = vmatpush1.msra.mxu0 %v3483
        %3831 = vmatprep.subr.mxu0 0.0
        %3832 = vmatpush1.msra.mxu0 %v3484
        %3833 = vmatprep.subr.mxu0 0.0
        %3834 = vmatpush1.msra.mxu0 %v3485
        %3835 = vmatprep.subr.mxu0 0.0
        %3836 = vmatpush1.msra.mxu0 %v3486
        %3837 = vmatprep.subr.mxu0 0.0
        %3838 = vmatpush1.msra.mxu0 %v3487
        %3839 = vmatprep.subr.mxu0 0.0
        %3840 = vmatpush1.msra.mxu0 %v3488
        %3841 = vmatprep.subr.mxu0 0.0
        %3842 = vmatpush1.msra.mxu0 %v3489
        %3843 = vmatprep.subr.mxu0 0.0
        %3844 = vmatpush1.msra.mxu0 %v3490
        %3845 = vmatprep.subr.mxu0 0.0
        %3846 = vmatpush1.msra.mxu0 %v3491
        %3847 = vmatprep.subr.mxu0 0.0
        %3848 = vmatpush1.msra.mxu0 %v3492
        %3849 = vmatprep.subr.mxu0 0.0
        %3850 = vmatpush1.msra.mxu0 %v3493
        %3851 = vmatprep.subr.mxu0 0.0
        %3852 = vmatpush1.msra.mxu0 %v3494
        %3853 = vmatprep.subr.mxu0 0.0
        %3854 = vmatpush1.msra.mxu0 %v3495
        %3855 = vmatprep.subr.mxu0 0.0
        %3856 = vmatpush1.msra.mxu0 %v3496
        %3857 = vmatprep.subr.mxu0 0.0
        %3858 = vmatpush1.msra.mxu0 %v3497
        %3859 = vmatprep.subr.mxu0 0.0
        %3860 = vmatpush1.msra.mxu0 %v3498
        %3861 = vmatprep.subr.mxu0 0.0
        %3862 = vmatpush1.msra.mxu0 %v3499
        %3863 = vmatprep.subr.mxu0 0.0
        %3864 = vmatpush1.msra.mxu0 %v3500
        %3865 = vmatprep.subr.mxu0 0.0
        %3866 = vmatpush1.msra.mxu0 %v3501
        %3867 = vmatprep.subr.mxu0 0.0
        %3868 = vmatpush1.msra.mxu0 %v3502
        %3869 = vmatprep.subr.mxu0 0.0
        %3870 = vmatpush1.msra.mxu0 %v3503
        %3871 = vmatprep.subr.mxu0 0.0
        %3872 = vmatpush1.msra.mxu0 %v3504
        %3873 = vmatprep.subr.mxu0 0.0
        %3874 = vmatpush1.msra.mxu0 %v3505
        %3875 = vmatprep.subr.mxu0 0.0
        %3876 = vmatpush1.msra.mxu0 %v3506
        %3877 = vmatprep.subr.mxu0 0.0
        %3878 = vmatpush1.msra.mxu0 %v3507
        %3879 = vmatprep.subr.mxu0 0.0
        %3880 = vmatpush1.msra.mxu0 %v3508
        %3881 = vmatprep.subr.mxu0 0.0
        %3882 = vmatpush1.msra.mxu0 %v3509
        %3883 = vmatprep.subr.mxu0 0.0
        %3884 = vmatpush1.msra.mxu0 %v3510
        %3885 = vmatprep.subr.mxu0 0.0
        %3886 = vmatpush1.msra.mxu0 %v3511
        %3887 = vmatprep.subr.mxu0 0.0
        %3888 = vmatpush1.msra.mxu0 %v3512
        %3889 = vmatprep.mubr.f32.mxu0 %v3164
        %3890 = vmatmul.mubr.f32.gmra.mrb[0].mxu0 %v3163
        %v3891 = vpop.f32.mrb[0].mxu0
        %v3892 = vadd.f32 %v3667, %v3891
        %v3893 = vpop.f32.mrb[0].mxu0
        %3894 = vmatprep.mubr.f32.mxu0 %v3173
        %3895 = vmatmul.mubr.f32.gmra.mrb[0].mxu0 %v3172
        %v3896 = vpop.f32.mrb[0].mxu0
        %v3897 = vadd.f32 %v3672, %v3896
        %v3898 = vpop.f32.mrb[0].mxu0
        %3899 = vmatprep.mubr.f32.mxu0 %v3182
        %3900 = vmatmul.mubr.f32.gmra.mrb[0].mxu0 %v3181
        %v3901 = vpop.f32.mrb[0].mxu0
        %v3902 = vadd.f32 %v3677, %v3901
        %v3903 = vpop.f32.mrb[0].mxu0
        %3904 = vmatprep.mubr.f32.mxu0 %v3191
        %3905 = vmatmul.mubr.f32.gmra.mrb[0].mxu0 %v3190
        %v3906 = vpop.f32.mrb[0].mxu0
        %v3907 = vadd.f32 %v3682, %v3906
        %v3908 = vpop.f32.mrb[0].mxu0
        %3909 = vmatprep.mubr.f32.mxu0 %v3200
        %3910 = vmatmul.mubr.f32.gmra.mrb[0].mxu0 %v3199
        %v3911 = vpop.f32.mrb[0].mxu0
        %v3912 = vadd.f32 %v3687, %v3911
        %v3913 = vpop.f32.mrb[0].mxu0
        %3914 = vmatprep.mubr.f32.mxu0 %v3209
        %3915 = vmatmul.mubr.f32.gmra.mrb[0].mxu0 %v3208
        %v3916 = vpop.f32.mrb[0].mxu0
        %v3917 = vadd.f32 %v3692, %v3916
        %v3918 = vpop.f32.mrb[0].mxu0
        %3919 = vmatprep.mubr.f32.mxu0 %v3218
        %3920 = vmatmul.mubr.f32.gmra.mrb[0].mxu0 %v3217
        %v3921 = vpop.f32.mrb[0].mxu0
        %v3922 = vadd.f32 %v3697, %v3921
        %v3923 = vpop.f32.mrb[0].mxu0
        %3924 = vmatprep.mubr.f32.mxu0 %v3227
        %3925 = vmatmul.mubr.f32.gmra.mrb[0].mxu0 %v3226
        %v3926 = vpop.f32.mrb[0].mxu0
        %v3927 = vadd.f32 %v3702, %v3926
        %v3928 = vpop.f32.mrb[0].mxu0
        %3929 = vmatprep.mubr.f32.mxu0 %v3236
        %3930 = vmatmul.mubr.f32.gmra.mrb[0].mxu0 %v3235
        %v3931 = vpop.f32.mrb[0].mxu0
        %v3932 = vadd.f32 %v3707, %v3931
        %v3933 = vpop.f32.mrb[0].mxu0
        %3934 = vmatprep.mubr.f32.mxu0 %v3245
        %3935 = vmatmul.mubr.f32.gmra.mrb[0].mxu0 %v3244
        %v3936 = vpop.f32.mrb[0].mxu0
        %v3937 = vadd.f32 %v3712, %v3936
        %v3938 = vpop.f32.mrb[0].mxu0
        %3939 = vmatprep.mubr.f32.mxu0 %v3254
        %3940 = vmatmul.mubr.f32.gmra.mrb[0].mxu0 %v3253
        %v3941 = vpop.f32.mrb[0].mxu0
        %v3942 = vadd.f32 %v3717, %v3941
        %v3943 = vpop.f32.mrb[0].mxu0
        %3944 = vmatprep.mubr.f32.mxu0 %v3263
        %3945 = vmatmul.mubr.f32.gmra.mrb[0].mxu0 %v3262
        %v3946 = vpop.f32.mrb[0].mxu0
        %v3947 = vadd.f32 %v3722, %v3946
        %v3948 = vpop.f32.mrb[0].mxu0
        %3949 = vmatprep.mubr.f32.mxu0 %v3272
        %3950 = vmatmul.mubr.f32.gmra.mrb[0].mxu0 %v3271
        %v3951 = vpop.f32.mrb[0].mxu0
        %v3952 = vadd.f32 %v3727, %v3951
        %v3953 = vpop.f32.mrb[0].mxu0
        %3954 = vmatprep.mubr.f32.mxu0 %v3281
        %3955 = vmatmul.mubr.f32.gmra.mrb[0].mxu0 %v3280
        %v3956 = vpop.f32.mrb[0].mxu0
        %v3957 = vadd.f32 %v3732, %v3956
        %v3958 = vpop.f32.mrb[0].mxu0
        %3959 = vmatprep.mubr.f32.mxu0 %v3290
        %3960 = vmatmul.mubr.f32.gmra.mrb[0].mxu0 %v3289
        %v3961 = vpop.f32.mrb[0].mxu0
        %v3962 = vadd.f32 %v3737, %v3961
        %v3963 = vpop.f32.mrb[0].mxu0
        %3964 = vmatprep.mubr.f32.mxu0 %v3299
        %3965 = vmatmul.mubr.f32.gmra.mrb[0].mxu0 %v3298
        %v3966 = vpop.f32.mrb[0].mxu0
        %v3967 = vadd.f32 %v3742, %v3966
        %v3968 = vpop.f32.mrb[0].mxu0
        %3969 = vmatprep.mubr.f32.mxu0 %v3308
        %3970 = vmatmul.mubr.f32.gmra.mrb[0].mxu0 %v3307
        %v3971 = vpop.f32.mrb[0].mxu0
        %v3972 = vadd.f32 %v3747, %v3971
        %v3973 = vpop.f32.mrb[0].mxu0
        %3974 = vmatprep.mubr.f32.mxu0 %v3317
        %3975 = vmatmul.mubr.f32.gmra.mrb[0].mxu0 %v3316
        %v3976 = vpop.f32.mrb[0].mxu0
        %v3977 = vadd.f32 %v3752, %v3976
        %v3978 = vpop.f32.mrb[0].mxu0
        %3979 = vmatprep.mubr.f32.mxu0 %v3326
        %3980 = vmatmul.mubr.f32.gmra.mrb[0].mxu0 %v3325
        %v3981 = vpop.f32.mrb[0].mxu0
        %v3982 = vadd.f32 %v3757, %v3981
        %v3983 = vpop.f32.mrb[0].mxu0
        %3984 = vmatprep.mubr.f32.mxu0 %v3335
        %3985 = vmatmul.mubr.f32.gmra.mrb[0].mxu0 %v3334
        %v3986 = vpop.f32.mrb[0].mxu0
        %v3987 = vadd.f32 %v3762, %v3986
        %v3988 = vpop.f32.mrb[0].mxu0
        %3989 = vmatprep.mubr.f32.mxu0 %v3344
        %3990 = vmatmul.mubr.f32.gmra.mrb[0].mxu0 %v3343
        %v3991 = vpop.f32.mrb[0].mxu0
        %v3992 = vadd.f32 %v3767, %v3991
        %v3993 = vpop.f32.mrb[0].mxu0
        %3994 = vmatprep.mubr.f32.mxu0 %v3353
        %3995 = vmatmul.mubr.f32.gmra.mrb[0].mxu0 %v3352
        %v3996 = vpop.f32.mrb[0].mxu0
        %v3997 = vadd.f32 %v3772, %v3996
        %v3998 = vpop.f32.mrb[0].mxu0
        %3999 = vmatprep.mubr.f32.mxu0 %v3362
        %4000 = vmatmul.mubr.f32.gmra.mrb[0].mxu0 %v3361
        %v4001 = vpop.f32.mrb[0].mxu0
        %v4002 = vadd.f32 %v3777, %v4001
        %v4003 = vpop.f32.mrb[0].mxu0
        %4004 = vmatprep.mubr.f32.mxu0 %v3371
        %4005 = vmatmul.mubr.f32.gmra.mrb[0].mxu0 %v3370
        %v4006 = vpop.f32.mrb[0].mxu0
        %v4007 = vadd.f32 %v3782, %v4006
        %v4008 = vpop.f32.mrb[0].mxu0
        %4009 = vmatprep.mubr.f32.mxu0 %v3380
        %4010 = vmatmul.mubr.f32.gmra.mrb[0].mxu0 %v3379
        %v4011 = vpop.f32.mrb[0].mxu0
        %v4012 = vadd.f32 %v3787, %v4011
        %v4013 = vpop.f32.mrb[0].mxu0
        %4014 = vmatprep.mubr.f32.mxu0 %v3389
        %4015 = vmatmul.mubr.f32.gmra.mrb[0].mxu0 %v3388
        %v4016 = vpop.f32.mrb[0].mxu0
        %v4017 = vadd.f32 %v3792, %v4016
        %v4018 = vpop.f32.mrb[0].mxu0
        %4019 = vmatprep.mubr.f32.mxu0 %v3398
        %4020 = vmatmul.mubr.f32.gmra.mrb[0].mxu0 %v3397
        %v4021 = vpop.f32.mrb[0].mxu0
        %v4022 = vadd.f32 %v3797, %v4021
        %v4023 = vpop.f32.mrb[0].mxu0
        %4024 = vmatprep.mubr.f32.mxu0 %v3407
        %4025 = vmatmul.mubr.f32.gmra.mrb[0].mxu0 %v3406
        %v4026 = vpop.f32.mrb[0].mxu0
        %v4027 = vadd.f32 %v3802, %v4026
        %v4028 = vpop.f32.mrb[0].mxu0
        %4029 = vmatprep.mubr.f32.mxu0 %v3416
        %4030 = vmatmul.mubr.f32.gmra.mrb[0].mxu0 %v3415
        %v4031 = vpop.f32.mrb[0].mxu0
        %v4032 = vadd.f32 %v3807, %v4031
        %v4033 = vpop.f32.mrb[0].mxu0
        %4034 = vmatprep.mubr.f32.mxu0 %v3425
        %4035 = vmatmul.mubr.f32.gmra.mrb[0].mxu0 %v3424
        %v4036 = vpop.f32.mrb[0].mxu0
        %v4037 = vadd.f32 %v3812, %v4036
        %v4038 = vpop.f32.mrb[0].mxu0
        %4039 = vmatprep.mubr.f32.mxu0 %v3434
        %4040 = vmatmul.mubr.f32.gmra.mrb[0].mxu0 %v3433
        %v4041 = vpop.f32.mrb[0].mxu0
        %v4042 = vadd.f32 %v3817, %v4041
        %v4043 = vpop.f32.mrb[0].mxu0
        %4044 = vmatprep.mubr.f32.mxu0 %v3443
        %4045 = vmatmul.mubr.f32.gmra.mrb[0].mxu0 %v3442
        %v4046 = vpop.f32.mrb[0].mxu0
        %v4047 = vadd.f32 %v3822, %v4046
        %v4048 = vpop.f32.mrb[0].mxu0
        %4049 = vdwg.mxu0
        %4050 = vmatprep.subr.mxu0 0.0
        %4051 = vmatpush1.msra.mxu0 %v3513
        %4052 = vmatprep.subr.mxu0 0.0
        %4053 = vmatpush1.msra.mxu0 %v3514
        %4054 = vmatprep.subr.mxu0 0.0
        %4055 = vmatpush1.msra.mxu0 %v3515
        %4056 = vmatprep.subr.mxu0 0.0
        %4057 = vmatpush1.msra.mxu0 %v3516
        %4058 = vmatprep.subr.mxu0 0.0
        %4059 = vmatpush1.msra.mxu0 %v3517
        %4060 = vmatprep.subr.mxu0 0.0
        %4061 = vmatpush1.msra.mxu0 %v3518
        %4062 = vmatprep.subr.mxu0 0.0
        %4063 = vmatpush1.msra.mxu0 %v3519
        %4064 = vmatprep.subr.mxu0 0.0
        %4065 = vmatpush1.msra.mxu0 %v3520
        %4066 = vmatprep.subr.mxu0 0.0
        %4067 = vmatpush1.msra.mxu0 %v3521
        %4068 = vmatprep.subr.mxu0 0.0
        %4069 = vmatpush1.msra.mxu0 %v3522
        %4070 = vmatprep.subr.mxu0 0.0
        %4071 = vmatpush1.msra.mxu0 %v3523
        %4072 = vmatprep.subr.mxu0 0.0
        %4073 = vmatpush1.msra.mxu0 %v3524
        %4074 = vmatprep.subr.mxu0 0.0
        %4075 = vmatpush1.msra.mxu0 %v3525
        %4076 = vmatprep.subr.mxu0 0.0
        %4077 = vmatpush1.msra.mxu0 %v3526
        %4078 = vmatprep.subr.mxu0 0.0
        %4079 = vmatpush1.msra.mxu0 %v3527
        %4080 = vmatprep.subr.mxu0 0.0
        %4081 = vmatpush1.msra.mxu0 %v3528
        %4082 = vmatprep.subr.mxu0 0.0
        %4083 = vmatpush1.msra.mxu0 %v3529
        %4084 = vmatprep.subr.mxu0 0.0
        %4085 = vmatpush1.msra.mxu0 %v3530
        %4086 = vmatprep.subr.mxu0 0.0
        %4087 = vmatpush1.msra.mxu0 %v3531
        %4088 = vmatprep.subr.mxu0 0.0
        %4089 = vmatpush1.msra.mxu0 %v3532
        %4090 = vmatprep.subr.mxu0 0.0
        %4091 = vmatpush1.msra.mxu0 %v3533
        %4092 = vmatprep.subr.mxu0 0.0
        %4093 = vmatpush1.msra.mxu0 %v3534
        %4094 = vmatprep.subr.mxu0 0.0
        %4095 = vmatpush1.msra.mxu0 %v3535
        %4096 = vmatprep.subr.mxu0 0.0
        %4097 = vmatpush1.msra.mxu0 %v3536
        %4098 = vmatprep.subr.mxu0 0.0
        %4099 = vmatpush1.msra.mxu0 %v3537
        %4100 = vmatprep.subr.mxu0 0.0
        %4101 = vmatpush1.msra.mxu0 %v3538
        %4102 = vmatprep.subr.mxu0 0.0
        %4103 = vmatpush1.msra.mxu0 %v3539
        %4104 = vmatprep.subr.mxu0 0.0
        %4105 = vmatpush1.msra.mxu0 %v3540
        %4106 = vmatprep.subr.mxu0 0.0
        %4107 = vmatpush1.msra.mxu0 %v3541
        %4108 = vmatprep.subr.mxu0 0.0
        %4109 = vmatpush1.msra.mxu0 %v3542
        %4110 = vmatprep.subr.mxu0 0.0
        %4111 = vmatpush1.msra.mxu0 %v3543
        %4112 = vmatprep.subr.mxu0 0.0
        %4113 = vmatpush1.msra.mxu0 %v3544
        %4114 = vmatprep.mubr.f32.mxu0 %v3166
        %4115 = vmatmul.mubr.f32.gmra.mrb[0].mxu0 %v3165
        %v4116 = vpop.f32.mrb[0].mxu0
        %v4117 = vadd.f32 %v3892, %v4116
        %v4118 = vpop.f32.mrb[0].mxu0
        %4119 = vmatprep.mubr.f32.mxu0 %v3175
        %4120 = vmatmul.mubr.f32.gmra.mrb[0].mxu0 %v3174
        %v4121 = vpop.f32.mrb[0].mxu0
        %v4122 = vadd.f32 %v3897, %v4121
        %v4123 = vpop.f32.mrb[0].mxu0
        %4124 = vmatprep.mubr.f32.mxu0 %v3184
        %4125 = vmatmul.mubr.f32.gmra.mrb[0].mxu0 %v3183
        %v4126 = vpop.f32.mrb[0].mxu0
        %v4127 = vadd.f32 %v3902, %v4126
        %v4128 = vpop.f32.mrb[0].mxu0
        %4129 = vmatprep.mubr.f32.mxu0 %v3193
        %4130 = vmatmul.mubr.f32.gmra.mrb[0].mxu0 %v3192
        %v4131 = vpop.f32.mrb[0].mxu0
        %v4132 = vadd.f32 %v3907, %v4131
        %v4133 = vpop.f32.mrb[0].mxu0
        %4134 = vmatprep.mubr.f32.mxu0 %v3202
        %4135 = vmatmul.mubr.f32.gmra.mrb[0].mxu0 %v3201
        %v4136 = vpop.f32.mrb[0].mxu0
        %v4137 = vadd.f32 %v3912, %v4136
        %v4138 = vpop.f32.mrb[0].mxu0
        %4139 = vmatprep.mubr.f32.mxu0 %v3211
        %4140 = vmatmul.mubr.f32.gmra.mrb[0].mxu0 %v3210
        %v4141 = vpop.f32.mrb[0].mxu0
        %v4142 = vadd.f32 %v3917, %v4141
        %v4143 = vpop.f32.mrb[0].mxu0
        %4144 = vmatprep.mubr.f32.mxu0 %v3220
        %4145 = vmatmul.mubr.f32.gmra.mrb[0].mxu0 %v3219
        %v4146 = vpop.f32.mrb[0].mxu0
        %v4147 = vadd.f32 %v3922, %v4146
        %v4148 = vpop.f32.mrb[0].mxu0
        %4149 = vmatprep.mubr.f32.mxu0 %v3229
        %4150 = vmatmul.mubr.f32.gmra.mrb[0].mxu0 %v3228
        %v4151 = vpop.f32.mrb[0].mxu0
        %v4152 = vadd.f32 %v3927, %v4151
        %v4153 = vpop.f32.mrb[0].mxu0
        %4154 = vmatprep.mubr.f32.mxu0 %v3238
        %4155 = vmatmul.mubr.f32.gmra.mrb[0].mxu0 %v3237
        %v4156 = vpop.f32.mrb[0].mxu0
        %v4157 = vadd.f32 %v3932, %v4156
        %v4158 = vpop.f32.mrb[0].mxu0
        %4159 = vmatprep.mubr.f32.mxu0 %v3247
        %4160 = vmatmul.mubr.f32.gmra.mrb[0].mxu0 %v3246
        %v4161 = vpop.f32.mrb[0].mxu0
        %v4162 = vadd.f32 %v3937, %v4161
        %v4163 = vpop.f32.mrb[0].mxu0
        %4164 = vmatprep.mubr.f32.mxu0 %v3256
        %4165 = vmatmul.mubr.f32.gmra.mrb[0].mxu0 %v3255
        %v4166 = vpop.f32.mrb[0].mxu0
        %v4167 = vadd.f32 %v3942, %v4166
        %v4168 = vpop.f32.mrb[0].mxu0
        %4169 = vmatprep.mubr.f32.mxu0 %v3265
        %4170 = vmatmul.mubr.f32.gmra.mrb[0].mxu0 %v3264
        %v4171 = vpop.f32.mrb[0].mxu0
        %v4172 = vadd.f32 %v3947, %v4171
        %v4173 = vpop.f32.mrb[0].mxu0
        %4174 = vmatprep.mubr.f32.mxu0 %v3274
        %4175 = vmatmul.mubr.f32.gmra.mrb[0].mxu0 %v3273
        %v4176 = vpop.f32.mrb[0].mxu0
        %v4177 = vadd.f32 %v3952, %v4176
        %v4178 = vpop.f32.mrb[0].mxu0
        %4179 = vmatprep.mubr.f32.mxu0 %v3283
        %4180 = vmatmul.mubr.f32.gmra.mrb[0].mxu0 %v3282
        %v4181 = vpop.f32.mrb[0].mxu0
        %v4182 = vadd.f32 %v3957, %v4181
        %v4183 = vpop.f32.mrb[0].mxu0
        %4184 = vmatprep.mubr.f32.mxu0 %v3292
        %4185 = vmatmul.mubr.f32.gmra.mrb[0].mxu0 %v3291
        %v4186 = vpop.f32.mrb[0].mxu0
        %v4187 = vadd.f32 %v3962, %v4186
        %v4188 = vpop.f32.mrb[0].mxu0
        %4189 = vmatprep.mubr.f32.mxu0 %v3301
        %4190 = vmatmul.mubr.f32.gmra.mrb[0].mxu0 %v3300
        %v4191 = vpop.f32.mrb[0].mxu0
        %v4192 = vadd.f32 %v3967, %v4191
        %v4193 = vpop.f32.mrb[0].mxu0
        %4194 = vmatprep.mubr.f32.mxu0 %v3310
        %4195 = vmatmul.mubr.f32.gmra.mrb[0].mxu0 %v3309
        %v4196 = vpop.f32.mrb[0].mxu0
        %v4197 = vadd.f32 %v3972, %v4196
        %v4198 = vpop.f32.mrb[0].mxu0
        %4199 = vmatprep.mubr.f32.mxu0 %v3319
        %4200 = vmatmul.mubr.f32.gmra.mrb[0].mxu0 %v3318
        %v4201 = vpop.f32.mrb[0].mxu0
        %v4202 = vadd.f32 %v3977, %v4201
        %v4203 = vpop.f32.mrb[0].mxu0
        %4204 = vmatprep.mubr.f32.mxu0 %v3328
        %4205 = vmatmul.mubr.f32.gmra.mrb[0].mxu0 %v3327
        %v4206 = vpop.f32.mrb[0].mxu0
        %v4207 = vadd.f32 %v3982, %v4206
        %v4208 = vpop.f32.mrb[0].mxu0
        %4209 = vmatprep.mubr.f32.mxu0 %v3337
        %4210 = vmatmul.mubr.f32.gmra.mrb[0].mxu0 %v3336
        %v4211 = vpop.f32.mrb[0].mxu0
        %v4212 = vadd.f32 %v3987, %v4211
        %v4213 = vpop.f32.mrb[0].mxu0
        %4214 = vmatprep.mubr.f32.mxu0 %v3346
        %4215 = vmatmul.mubr.f32.gmra.mrb[0].mxu0 %v3345
        %v4216 = vpop.f32.mrb[0].mxu0
        %v4217 = vadd.f32 %v3992, %v4216
        %v4218 = vpop.f32.mrb[0].mxu0
        %4219 = vmatprep.mubr.f32.mxu0 %v3355
        %4220 = vmatmul.mubr.f32.gmra.mrb[0].mxu0 %v3354
        %v4221 = vpop.f32.mrb[0].mxu0
        %v4222 = vadd.f32 %v3997, %v4221
        %v4223 = vpop.f32.mrb[0].mxu0
        %4224 = vmatprep.mubr.f32.mxu0 %v3364
        %4225 = vmatmul.mubr.f32.gmra.mrb[0].mxu0 %v3363
        %v4226 = vpop.f32.mrb[0].mxu0
        %v4227 = vadd.f32 %v4002, %v4226
        %v4228 = vpop.f32.mrb[0].mxu0
        %4229 = vmatprep.mubr.f32.mxu0 %v3373
        %4230 = vmatmul.mubr.f32.gmra.mrb[0].mxu0 %v3372
        %v4231 = vpop.f32.mrb[0].mxu0
        %v4232 = vadd.f32 %v4007, %v4231
        %v4233 = vpop.f32.mrb[0].mxu0
        %4234 = vmatprep.mubr.f32.mxu0 %v3382
        %4235 = vmatmul.mubr.f32.gmra.mrb[0].mxu0 %v3381
        %v4236 = vpop.f32.mrb[0].mxu0
        %v4237 = vadd.f32 %v4012, %v4236
        %v4238 = vpop.f32.mrb[0].mxu0
        %4239 = vmatprep.mubr.f32.mxu0 %v3391
        %4240 = vmatmul.mubr.f32.gmra.mrb[0].mxu0 %v3390
        %v4241 = vpop.f32.mrb[0].mxu0
        %v4242 = vadd.f32 %v4017, %v4241
        %v4243 = vpop.f32.mrb[0].mxu0
        %4244 = vmatprep.mubr.f32.mxu0 %v3400
        %4245 = vmatmul.mubr.f32.gmra.mrb[0].mxu0 %v3399
        %v4246 = vpop.f32.mrb[0].mxu0
        %v4247 = vadd.f32 %v4022, %v4246
        %v4248 = vpop.f32.mrb[0].mxu0
        %4249 = vmatprep.mubr.f32.mxu0 %v3409
        %4250 = vmatmul.mubr.f32.gmra.mrb[0].mxu0 %v3408
        %v4251 = vpop.f32.mrb[0].mxu0
        %v4252 = vadd.f32 %v4027, %v4251
        %v4253 = vpop.f32.mrb[0].mxu0
        %4254 = vmatprep.mubr.f32.mxu0 %v3418
        %4255 = vmatmul.mubr.f32.gmra.mrb[0].mxu0 %v3417
        %v4256 = vpop.f32.mrb[0].mxu0
        %v4257 = vadd.f32 %v4032, %v4256
        %v4258 = vpop.f32.mrb[0].mxu0
        %4259 = vmatprep.mubr.f32.mxu0 %v3427
        %4260 = vmatmul.mubr.f32.gmra.mrb[0].mxu0 %v3426
        %v4261 = vpop.f32.mrb[0].mxu0
        %v4262 = vadd.f32 %v4037, %v4261
        %v4263 = vpop.f32.mrb[0].mxu0
        %4264 = vmatprep.mubr.f32.mxu0 %v3436
        %4265 = vmatmul.mubr.f32.gmra.mrb[0].mxu0 %v3435
        %v4266 = vpop.f32.mrb[0].mxu0
        %v4267 = vadd.f32 %v4042, %v4266
        %v4268 = vpop.f32.mrb[0].mxu0
        %4269 = vmatprep.mubr.f32.mxu0 %v3445
        %4270 = vmatmul.mubr.f32.gmra.mrb[0].mxu0 %v3444
        %v4271 = vpop.f32.mrb[0].mxu0
        %v4272 = vadd.f32 %v4047, %v4271
        %v4273 = vpop.f32.mrb[0].mxu0
        %4274 = vdwg.mxu0
        %4275 = vmatprep.subr.mxu0 0.0
        %4276 = vmatpush1.msra.mxu0 %v3545
        %4277 = vmatprep.subr.mxu0 0.0
        %4278 = vmatpush1.msra.mxu0 %v3546
        %4279 = vmatprep.subr.mxu0 0.0
        %4280 = vmatpush1.msra.mxu0 %v3547
        %4281 = vmatprep.subr.mxu0 0.0
        %4282 = vmatpush1.msra.mxu0 %v3548
        %4283 = vmatprep.subr.mxu0 0.0
        %4284 = vmatpush1.msra.mxu0 %v3549
        %4285 = vmatprep.subr.mxu0 0.0
        %4286 = vmatpush1.msra.mxu0 %v3550
        %4287 = vmatprep.subr.mxu0 0.0
        %4288 = vmatpush1.msra.mxu0 %v3551
        %4289 = vmatprep.subr.mxu0 0.0
        %4290 = vmatpush1.msra.mxu0 %v3552
        %4291 = vmatprep.subr.mxu0 0.0
        %4292 = vmatpush1.msra.mxu0 %v3553
        %4293 = vmatprep.subr.mxu0 0.0
        %4294 = vmatpush1.msra.mxu0 %v3554
        %4295 = vmatprep.subr.mxu0 0.0
        %4296 = vmatpush1.msra.mxu0 %v3555
        %4297 = vmatprep.subr.mxu0 0.0
        %4298 = vmatpush1.msra.mxu0 %v3556
        %4299 = vmatprep.subr.mxu0 0.0
        %4300 = vmatpush1.msra.mxu0 %v3557
        %4301 = vmatprep.subr.mxu0 0.0
        %4302 = vmatpush1.msra.mxu0 %v3558
        %4303 = vmatprep.subr.mxu0 0.0
        %4304 = vmatpush1.msra.mxu0 %v3559
        %4305 = vmatprep.subr.mxu0 0.0
        %4306 = vmatpush1.msra.mxu0 %v3560
        %4307 = vmatprep.subr.mxu0 0.0
        %4308 = vmatpush1.msra.mxu0 %v3561
        %4309 = vmatprep.subr.mxu0 0.0
        %4310 = vmatpush1.msra.mxu0 %v3562
        %4311 = vmatprep.subr.mxu0 0.0
        %4312 = vmatpush1.msra.mxu0 %v3563
        %4313 = vmatprep.subr.mxu0 0.0
        %4314 = vmatpush1.msra.mxu0 %v3564
        %4315 = vmatprep.subr.mxu0 0.0
        %4316 = vmatpush1.msra.mxu0 %v3565
        %4317 = vmatprep.subr.mxu0 0.0
        %4318 = vmatpush1.msra.mxu0 %v3566
        %4319 = vmatprep.subr.mxu0 0.0
        %4320 = vmatpush1.msra.mxu0 %v3567
        %4321 = vmatprep.subr.mxu0 0.0
        %4322 = vmatpush1.msra.mxu0 %v3568
        %4323 = vmatprep.subr.mxu0 0.0
        %4324 = vmatpush1.msra.mxu0 %v3569
        %4325 = vmatprep.subr.mxu0 0.0
        %4326 = vmatpush1.msra.mxu0 %v3570
        %4327 = vmatprep.subr.mxu0 0.0
        %4328 = vmatpush1.msra.mxu0 %v3571
        %4329 = vmatprep.subr.mxu0 0.0
        %4330 = vmatpush1.msra.mxu0 %v3572
        %4331 = vmatprep.subr.mxu0 0.0
        %4332 = vmatpush1.msra.mxu0 %v3573
        %4333 = vmatprep.subr.mxu0 0.0
        %4334 = vmatpush1.msra.mxu0 %v3574
        %4335 = vmatprep.subr.mxu0 0.0
        %4336 = vmatpush1.msra.mxu0 %v3575
        %4337 = vmatprep.subr.mxu0 0.0
        %4338 = vmatpush1.msra.mxu0 %v3576
        %4339 = vmatprep.mubr.f32.mxu0 %v3168
        %4340 = vmatmul.mubr.f32.gmra.mrb[0].mxu0 %v3167
        %v4341 = vpop.f32.mrb[0].mxu0
        %v4342 = vadd.f32 %v4117, %v4341
        %v4343 = vpop.f32.mrb[0].mxu0
        %4344 = vmatprep.mubr.f32.mxu0 %v3177
        %4345 = vmatmul.mubr.f32.gmra.mrb[0].mxu0 %v3176
        %v4346 = vpop.f32.mrb[0].mxu0
        %v4347 = vadd.f32 %v4122, %v4346
        %v4348 = vpop.f32.mrb[0].mxu0
        %4349 = vmatprep.mubr.f32.mxu0 %v3186
        %4350 = vmatmul.mubr.f32.gmra.mrb[0].mxu0 %v3185
        %v4351 = vpop.f32.mrb[0].mxu0
        %v4352 = vadd.f32 %v4127, %v4351
        %v4353 = vpop.f32.mrb[0].mxu0
        %4354 = vmatprep.mubr.f32.mxu0 %v3195
        %4355 = vmatmul.mubr.f32.gmra.mrb[0].mxu0 %v3194
        %v4356 = vpop.f32.mrb[0].mxu0
        %v4357 = vadd.f32 %v4132, %v4356
        %v4358 = vpop.f32.mrb[0].mxu0
        %4359 = vmatprep.mubr.f32.mxu0 %v3204
        %4360 = vmatmul.mubr.f32.gmra.mrb[0].mxu0 %v3203
        %v4361 = vpop.f32.mrb[0].mxu0
        %v4362 = vadd.f32 %v4137, %v4361
        %v4363 = vpop.f32.mrb[0].mxu0
        %4364 = vmatprep.mubr.f32.mxu0 %v3213
        %4365 = vmatmul.mubr.f32.gmra.mrb[0].mxu0 %v3212
        %v4366 = vpop.f32.mrb[0].mxu0
        %v4367 = vadd.f32 %v4142, %v4366
        %v4368 = vpop.f32.mrb[0].mxu0
        %4369 = vmatprep.mubr.f32.mxu0 %v3222
        %4370 = vmatmul.mubr.f32.gmra.mrb[0].mxu0 %v3221
        %v4371 = vpop.f32.mrb[0].mxu0
        %v4372 = vadd.f32 %v4147, %v4371
        %v4373 = vpop.f32.mrb[0].mxu0
        %4374 = vmatprep.mubr.f32.mxu0 %v3231
        %4375 = vmatmul.mubr.f32.gmra.mrb[0].mxu0 %v3230
        %v4376 = vpop.f32.mrb[0].mxu0
        %v4377 = vadd.f32 %v4152, %v4376
        %v4378 = vpop.f32.mrb[0].mxu0
        %4379 = vmatprep.mubr.f32.mxu0 %v3240
        %4380 = vmatmul.mubr.f32.gmra.mrb[0].mxu0 %v3239
        %v4381 = vpop.f32.mrb[0].mxu0
        %v4382 = vadd.f32 %v4157, %v4381
        %v4383 = vpop.f32.mrb[0].mxu0
        %4384 = vmatprep.mubr.f32.mxu0 %v3249
        %4385 = vmatmul.mubr.f32.gmra.mrb[0].mxu0 %v3248
        %v4386 = vpop.f32.mrb[0].mxu0
        %v4387 = vadd.f32 %v4162, %v4386
        %v4388 = vpop.f32.mrb[0].mxu0
        %4389 = vmatprep.mubr.f32.mxu0 %v3258
        %4390 = vmatmul.mubr.f32.gmra.mrb[0].mxu0 %v3257
        %v4391 = vpop.f32.mrb[0].mxu0
        %v4392 = vadd.f32 %v4167, %v4391
        %v4393 = vpop.f32.mrb[0].mxu0
        %4394 = vmatprep.mubr.f32.mxu0 %v3267
        %4395 = vmatmul.mubr.f32.gmra.mrb[0].mxu0 %v3266
        %v4396 = vpop.f32.mrb[0].mxu0
        %v4397 = vadd.f32 %v4172, %v4396
        %v4398 = vpop.f32.mrb[0].mxu0
        %4399 = vmatprep.mubr.f32.mxu0 %v3276
        %4400 = vmatmul.mubr.f32.gmra.mrb[0].mxu0 %v3275
        %v4401 = vpop.f32.mrb[0].mxu0
        %v4402 = vadd.f32 %v4177, %v4401
        %v4403 = vpop.f32.mrb[0].mxu0
        %4404 = vmatprep.mubr.f32.mxu0 %v3285
        %4405 = vmatmul.mubr.f32.gmra.mrb[0].mxu0 %v3284
        %v4406 = vpop.f32.mrb[0].mxu0
        %v4407 = vadd.f32 %v4182, %v4406
        %v4408 = vpop.f32.mrb[0].mxu0
        %4409 = vmatprep.mubr.f32.mxu0 %v3294
        %4410 = vmatmul.mubr.f32.gmra.mrb[0].mxu0 %v3293
        %v4411 = vpop.f32.mrb[0].mxu0
        %v4412 = vadd.f32 %v4187, %v4411
        %v4413 = vpop.f32.mrb[0].mxu0
        %4414 = vmatprep.mubr.f32.mxu0 %v3303
        %4415 = vmatmul.mubr.f32.gmra.mrb[0].mxu0 %v3302
        %v4416 = vpop.f32.mrb[0].mxu0
        %v4417 = vadd.f32 %v4192, %v4416
        %v4418 = vpop.f32.mrb[0].mxu0
        %4419 = vmatprep.mubr.f32.mxu0 %v3312
        %4420 = vmatmul.mubr.f32.gmra.mrb[0].mxu0 %v3311
        %v4421 = vpop.f32.mrb[0].mxu0
        %v4422 = vadd.f32 %v4197, %v4421
        %v4423 = vpop.f32.mrb[0].mxu0
        %4424 = vmatprep.mubr.f32.mxu0 %v3321
        %4425 = vmatmul.mubr.f32.gmra.mrb[0].mxu0 %v3320
        %v4426 = vpop.f32.mrb[0].mxu0
        %v4427 = vadd.f32 %v4202, %v4426
        %v4428 = vpop.f32.mrb[0].mxu0
        %4429 = vmatprep.mubr.f32.mxu0 %v3330
        %4430 = vmatmul.mubr.f32.gmra.mrb[0].mxu0 %v3329
        %v4431 = vpop.f32.mrb[0].mxu0
        %v4432 = vadd.f32 %v4207, %v4431
        %v4433 = vpop.f32.mrb[0].mxu0
        %4434 = vmatprep.mubr.f32.mxu0 %v3339
        %4435 = vmatmul.mubr.f32.gmra.mrb[0].mxu0 %v3338
        %v4436 = vpop.f32.mrb[0].mxu0
        %v4437 = vadd.f32 %v4212, %v4436
        %v4438 = vpop.f32.mrb[0].mxu0
        %4439 = vmatprep.mubr.f32.mxu0 %v3348
        %4440 = vmatmul.mubr.f32.gmra.mrb[0].mxu0 %v3347
        %v4441 = vpop.f32.mrb[0].mxu0
        %v4442 = vadd.f32 %v4217, %v4441
        %v4443 = vpop.f32.mrb[0].mxu0
        %4444 = vmatprep.mubr.f32.mxu0 %v3357
        %4445 = vmatmul.mubr.f32.gmra.mrb[0].mxu0 %v3356
        %v4446 = vpop.f32.mrb[0].mxu0
        %v4447 = vadd.f32 %v4222, %v4446
        %v4448 = vpop.f32.mrb[0].mxu0
        %4449 = vmatprep.mubr.f32.mxu0 %v3366
        %4450 = vmatmul.mubr.f32.gmra.mrb[0].mxu0 %v3365
        %v4451 = vpop.f32.mrb[0].mxu0
        %v4452 = vadd.f32 %v4227, %v4451
        %v4453 = vpop.f32.mrb[0].mxu0
        %4454 = vmatprep.mubr.f32.mxu0 %v3375
        %4455 = vmatmul.mubr.f32.gmra.mrb[0].mxu0 %v3374
        %v4456 = vpop.f32.mrb[0].mxu0
        %v4457 = vadd.f32 %v4232, %v4456
        %v4458 = vpop.f32.mrb[0].mxu0
        %4459 = vmatprep.mubr.f32.mxu0 %v3384
        %4460 = vmatmul.mubr.f32.gmra.mrb[0].mxu0 %v3383
        %v4461 = vpop.f32.mrb[0].mxu0
        %v4462 = vadd.f32 %v4237, %v4461
        %v4463 = vpop.f32.mrb[0].mxu0
        %4464 = vmatprep.mubr.f32.mxu0 %v3393
        %4465 = vmatmul.mubr.f32.gmra.mrb[0].mxu0 %v3392
        %v4466 = vpop.f32.mrb[0].mxu0
        %v4467 = vadd.f32 %v4242, %v4466
        %v4468 = vpop.f32.mrb[0].mxu0
        %4469 = vmatprep.mubr.f32.mxu0 %v3402
        %4470 = vmatmul.mubr.f32.gmra.mrb[0].mxu0 %v3401
        %v4471 = vpop.f32.mrb[0].mxu0
        %v4472 = vadd.f32 %v4247, %v4471
        %v4473 = vpop.f32.mrb[0].mxu0
        %4474 = vmatprep.mubr.f32.mxu0 %v3411
        %4475 = vmatmul.mubr.f32.gmra.mrb[0].mxu0 %v3410
        %v4476 = vpop.f32.mrb[0].mxu0
        %v4477 = vadd.f32 %v4252, %v4476
        %v4478 = vpop.f32.mrb[0].mxu0
        %4479 = vmatprep.mubr.f32.mxu0 %v3420
        %4480 = vmatmul.mubr.f32.gmra.mrb[0].mxu0 %v3419
        %v4481 = vpop.f32.mrb[0].mxu0
        %v4482 = vadd.f32 %v4257, %v4481
        %v4483 = vpop.f32.mrb[0].mxu0
        %4484 = vmatprep.mubr.f32.mxu0 %v3429
        %4485 = vmatmul.mubr.f32.gmra.mrb[0].mxu0 %v3428
        %v4486 = vpop.f32.mrb[0].mxu0
        %v4487 = vadd.f32 %v4262, %v4486
        %v4488 = vpop.f32.mrb[0].mxu0
        %4489 = vmatprep.mubr.f32.mxu0 %v3438
        %4490 = vmatmul.mubr.f32.gmra.mrb[0].mxu0 %v3437
        %v4491 = vpop.f32.mrb[0].mxu0
        %v4492 = vadd.f32 %v4267, %v4491
        %v4493 = vpop.f32.mrb[0].mxu0
        %4494 = vmatprep.mubr.f32.mxu0 %v3447
        %4495 = vmatmul.mubr.f32.gmra.mrb[0].mxu0 %v3446
        %v4496 = vpop.f32.mrb[0].mxu0
        %v4497 = vadd.f32 %v4272, %v4496
        %v4498 = vpop.f32.mrb[0].mxu0
        %4499 = vdwg.mxu0
        %4500 = vmatprep.subr.mxu0 0.0
        %4501 = vmatpush1.msra.mxu0 %v3577
        %4502 = vmatprep.subr.mxu0 0.0
        %4503 = vmatpush1.msra.mxu0 %v3578
        %4504 = vmatprep.subr.mxu0 0.0
        %4505 = vmatpush1.msra.mxu0 %v3579
        %4506 = vmatprep.subr.mxu0 0.0
        %4507 = vmatpush1.msra.mxu0 %v3580
        %4508 = vmatprep.subr.mxu0 0.0
        %4509 = vmatpush1.msra.mxu0 %v3581
        %4510 = vmatprep.subr.mxu0 0.0
        %4511 = vmatpush1.msra.mxu0 %v3582
        %4512 = vmatprep.subr.mxu0 0.0
        %4513 = vmatpush1.msra.mxu0 %v3583
        %4514 = vmatprep.subr.mxu0 0.0
        %4515 = vmatpush1.msra.mxu0 %v3584
        %4516 = vmatprep.subr.mxu0 0.0
        %4517 = vmatpush1.msra.mxu0 %v3585
        %4518 = vmatprep.subr.mxu0 0.0
        %4519 = vmatpush1.msra.mxu0 %v3586
        %4520 = vmatprep.subr.mxu0 0.0
        %4521 = vmatpush1.msra.mxu0 %v3587
        %4522 = vmatprep.subr.mxu0 0.0
        %4523 = vmatpush1.msra.mxu0 %v3588
        %4524 = vmatprep.subr.mxu0 0.0
        %4525 = vmatpush1.msra.mxu0 %v3589
        %4526 = vmatprep.subr.mxu0 0.0
        %4527 = vmatpush1.msra.mxu0 %v3590
        %4528 = vmatprep.subr.mxu0 0.0
        %4529 = vmatpush1.msra.mxu0 %v3591
        %4530 = vmatprep.subr.mxu0 0.0
        %4531 = vmatpush1.msra.mxu0 %v3592
        %4532 = vmatprep.subr.mxu0 0.0
        %4533 = vmatpush1.msra.mxu0 0.0
        %4534 = vmatprep.subr.mxu0 0.0
        %4535 = vmatpush1.msra.mxu0 0.0
        %4536 = vmatprep.subr.mxu0 0.0
        %4537 = vmatpush1.msra.mxu0 0.0
        %4538 = vmatprep.subr.mxu0 0.0
        %4539 = vmatpush1.msra.mxu0 0.0
        %4540 = vmatprep.subr.mxu0 0.0
        %4541 = vmatpush1.msra.mxu0 0.0
        %4542 = vmatprep.subr.mxu0 0.0
        %4543 = vmatpush1.msra.mxu0 0.0
        %4544 = vmatprep.subr.mxu0 0.0
        %4545 = vmatpush1.msra.mxu0 0.0
        %4546 = vmatprep.subr.mxu0 0.0
        %4547 = vmatpush1.msra.mxu0 0.0
        %4548 = vmatprep.subr.mxu0 0.0
        %4549 = vmatpush1.msra.mxu0 0.0
        %4550 = vmatprep.subr.mxu0 0.0
        %4551 = vmatpush1.msra.mxu0 0.0
        %4552 = vmatprep.subr.mxu0 0.0
        %4553 = vmatpush1.msra.mxu0 0.0
        %4554 = vmatprep.subr.mxu0 0.0
        %4555 = vmatpush1.msra.mxu0 0.0
        %4556 = vmatprep.subr.mxu0 0.0
        %4557 = vmatpush1.msra.mxu0 0.0
        %4558 = vmatprep.subr.mxu0 0.0
        %4559 = vmatpush1.msra.mxu0 0.0
        %4560 = vmatprep.subr.mxu0 0.0
        %4561 = vmatpush1.msra.mxu0 0.0
        %4562 = vmatprep.subr.mxu0 0.0
        %4563 = vmatpush1.msra.mxu0 0.0
        %4564 = vmatprep.mubr.f32.mxu0 0.0
        %4565 = vmatmul.mubr.f32.gmra.mrb[0].mxu0 %v3169
        %v4566 = vpop.f32.mrb[0].mxu0
        %v4567 = vadd.f32 %v4342, %v4566
        %v4568 = vpop.f32.mrb[0].mxu0
        %4569 = vmatprep.mubr.f32.mxu0 0.0
        %4570 = vmatmul.mubr.f32.gmra.mrb[0].mxu0 %v3178
        %v4571 = vpop.f32.mrb[0].mxu0
        %v4572 = vadd.f32 %v4347, %v4571
        %v4573 = vpop.f32.mrb[0].mxu0
        %4574 = vmatprep.mubr.f32.mxu0 0.0
        %4575 = vmatmul.mubr.f32.gmra.mrb[0].mxu0 %v3187
        %v4576 = vpop.f32.mrb[0].mxu0
        %v4577 = vadd.f32 %v4352, %v4576
        %v4578 = vpop.f32.mrb[0].mxu0
        %4579 = vmatprep.mubr.f32.mxu0 0.0
        %4580 = vmatmul.mubr.f32.gmra.mrb[0].mxu0 %v3196
        %v4581 = vpop.f32.mrb[0].mxu0
        %v4582 = vadd.f32 %v4357, %v4581
        %v4583 = vpop.f32.mrb[0].mxu0
        %4584 = vmatprep.mubr.f32.mxu0 0.0
        %4585 = vmatmul.mubr.f32.gmra.mrb[0].mxu0 %v3205
        %v4586 = vpop.f32.mrb[0].mxu0
        %v4587 = vadd.f32 %v4362, %v4586
        %v4588 = vpop.f32.mrb[0].mxu0
        %4589 = vmatprep.mubr.f32.mxu0 0.0
        %4590 = vmatmul.mubr.f32.gmra.mrb[0].mxu0 %v3214
        %v4591 = vpop.f32.mrb[0].mxu0
        %v4592 = vadd.f32 %v4367, %v4591
        %v4593 = vpop.f32.mrb[0].mxu0
        %4594 = vmatprep.mubr.f32.mxu0 0.0
        %4595 = vmatmul.mubr.f32.gmra.mrb[0].mxu0 %v3223
        %v4596 = vpop.f32.mrb[0].mxu0
        %v4597 = vadd.f32 %v4372, %v4596
        %v4598 = vpop.f32.mrb[0].mxu0
        %4599 = vmatprep.mubr.f32.mxu0 0.0
        %4600 = vmatmul.mubr.f32.gmra.mrb[0].mxu0 %v3232
        %v4601 = vpop.f32.mrb[0].mxu0
        %v4602 = vadd.f32 %v4377, %v4601
        %v4603 = vpop.f32.mrb[0].mxu0
        %4604 = vmatprep.mubr.f32.mxu0 0.0
        %4605 = vmatmul.mubr.f32.gmra.mrb[0].mxu0 %v3241
        %v4606 = vpop.f32.mrb[0].mxu0
        %v4607 = vadd.f32 %v4382, %v4606
        %v4608 = vpop.f32.mrb[0].mxu0
        %4609 = vmatprep.mubr.f32.mxu0 0.0
        %4610 = vmatmul.mubr.f32.gmra.mrb[0].mxu0 %v3250
        %v4611 = vpop.f32.mrb[0].mxu0
        %v4612 = vadd.f32 %v4387, %v4611
        %v4613 = vpop.f32.mrb[0].mxu0
        %4614 = vmatprep.mubr.f32.mxu0 0.0
        %4615 = vmatmul.mubr.f32.gmra.mrb[0].mxu0 %v3259
        %v4616 = vpop.f32.mrb[0].mxu0
        %v4617 = vadd.f32 %v4392, %v4616
        %v4618 = vpop.f32.mrb[0].mxu0
        %4619 = vmatprep.mubr.f32.mxu0 0.0
        %4620 = vmatmul.mubr.f32.gmra.mrb[0].mxu0 %v3268
        %v4621 = vpop.f32.mrb[0].mxu0
        %v4622 = vadd.f32 %v4397, %v4621
        %v4623 = vpop.f32.mrb[0].mxu0
        %4624 = vmatprep.mubr.f32.mxu0 0.0
        %4625 = vmatmul.mubr.f32.gmra.mrb[0].mxu0 %v3277
        %v4626 = vpop.f32.mrb[0].mxu0
        %v4627 = vadd.f32 %v4402, %v4626
        %v4628 = vpop.f32.mrb[0].mxu0
        %4629 = vmatprep.mubr.f32.mxu0 0.0
        %4630 = vmatmul.mubr.f32.gmra.mrb[0].mxu0 %v3286
        %v4631 = vpop.f32.mrb[0].mxu0
        %v4632 = vadd.f32 %v4407, %v4631
        %v4633 = vpop.f32.mrb[0].mxu0
        %4634 = vmatprep.mubr.f32.mxu0 0.0
        %4635 = vmatmul.mubr.f32.gmra.mrb[0].mxu0 %v3295
        %v4636 = vpop.f32.mrb[0].mxu0
        %v4637 = vadd.f32 %v4412, %v4636
        %v4638 = vpop.f32.mrb[0].mxu0
        %4639 = vmatprep.mubr.f32.mxu0 0.0
        %4640 = vmatmul.mubr.f32.gmra.mrb[0].mxu0 %v3304
        %v4641 = vpop.f32.mrb[0].mxu0
        %v4642 = vadd.f32 %v4417, %v4641
        %v4643 = vpop.f32.mrb[0].mxu0
        %4644 = vmatprep.mubr.f32.mxu0 0.0
        %4645 = vmatmul.mubr.f32.gmra.mrb[0].mxu0 %v3313
        %v4646 = vpop.f32.mrb[0].mxu0
        %v4647 = vadd.f32 %v4422, %v4646
        %v4648 = vpop.f32.mrb[0].mxu0
        %4649 = vmatprep.mubr.f32.mxu0 0.0
        %4650 = vmatmul.mubr.f32.gmra.mrb[0].mxu0 %v3322
        %v4651 = vpop.f32.mrb[0].mxu0
        %v4652 = vadd.f32 %v4427, %v4651
        %v4653 = vpop.f32.mrb[0].mxu0
        %4654 = vmatprep.mubr.f32.mxu0 0.0
        %4655 = vmatmul.mubr.f32.gmra.mrb[0].mxu0 %v3331
        %v4656 = vpop.f32.mrb[0].mxu0
        %v4657 = vadd.f32 %v4432, %v4656
        %v4658 = vpop.f32.mrb[0].mxu0
        %4659 = vmatprep.mubr.f32.mxu0 0.0
        %4660 = vmatmul.mubr.f32.gmra.mrb[0].mxu0 %v3340
        %v4661 = vpop.f32.mrb[0].mxu0
        %v4662 = vadd.f32 %v4437, %v4661
        %v4663 = vpop.f32.mrb[0].mxu0
        %4664 = vmatprep.mubr.f32.mxu0 0.0
        %4665 = vmatmul.mubr.f32.gmra.mrb[0].mxu0 %v3349
        %v4666 = vpop.f32.mrb[0].mxu0
        %v4667 = vadd.f32 %v4442, %v4666
        %v4668 = vpop.f32.mrb[0].mxu0
        %4669 = vmatprep.mubr.f32.mxu0 0.0
        %4670 = vmatmul.mubr.f32.gmra.mrb[0].mxu0 %v3358
        %v4671 = vpop.f32.mrb[0].mxu0
        %v4672 = vadd.f32 %v4447, %v4671
        %v4673 = vpop.f32.mrb[0].mxu0
        %4674 = vmatprep.mubr.f32.mxu0 0.0
        %4675 = vmatmul.mubr.f32.gmra.mrb[0].mxu0 %v3367
        %v4676 = vpop.f32.mrb[0].mxu0
        %v4677 = vadd.f32 %v4452, %v4676
        %v4678 = vpop.f32.mrb[0].mxu0
        %4679 = vmatprep.mubr.f32.mxu0 0.0
        %4680 = vmatmul.mubr.f32.gmra.mrb[0].mxu0 %v3376
        %v4681 = vpop.f32.mrb[0].mxu0
        %v4682 = vadd.f32 %v4457, %v4681
        %v4683 = vpop.f32.mrb[0].mxu0
        %4684 = vmatprep.mubr.f32.mxu0 0.0
        %4685 = vmatmul.mubr.f32.gmra.mrb[0].mxu0 %v3385
        %v4686 = vpop.f32.mrb[0].mxu0
        %v4687 = vadd.f32 %v4462, %v4686
        %v4688 = vpop.f32.mrb[0].mxu0
        %4689 = vmatprep.mubr.f32.mxu0 0.0
        %4690 = vmatmul.mubr.f32.gmra.mrb[0].mxu0 %v3394
        %v4691 = vpop.f32.mrb[0].mxu0
        %v4692 = vadd.f32 %v4467, %v4691
        %v4693 = vpop.f32.mrb[0].mxu0
        %4694 = vmatprep.mubr.f32.mxu0 0.0
        %4695 = vmatmul.mubr.f32.gmra.mrb[0].mxu0 %v3403
        %v4696 = vpop.f32.mrb[0].mxu0
        %v4697 = vadd.f32 %v4472, %v4696
        %v4698 = vpop.f32.mrb[0].mxu0
        %4699 = vmatprep.mubr.f32.mxu0 0.0
        %4700 = vmatmul.mubr.f32.gmra.mrb[0].mxu0 %v3412
        %v4701 = vpop.f32.mrb[0].mxu0
        %v4702 = vadd.f32 %v4477, %v4701
        %v4703 = vpop.f32.mrb[0].mxu0
        %4704 = vmatprep.mubr.f32.mxu0 0.0
        %4705 = vmatmul.mubr.f32.gmra.mrb[0].mxu0 %v3421
        %v4706 = vpop.f32.mrb[0].mxu0
        %v4707 = vadd.f32 %v4482, %v4706
        %v4708 = vpop.f32.mrb[0].mxu0
        %4709 = vmatprep.mubr.f32.mxu0 0.0
        %4710 = vmatmul.mubr.f32.gmra.mrb[0].mxu0 %v3430
        %v4711 = vpop.f32.mrb[0].mxu0
        %v4712 = vadd.f32 %v4487, %v4711
        %v4713 = vpop.f32.mrb[0].mxu0
        %4714 = vmatprep.mubr.f32.mxu0 0.0
        %4715 = vmatmul.mubr.f32.gmra.mrb[0].mxu0 %v3439
        %v4716 = vpop.f32.mrb[0].mxu0
        %v4717 = vadd.f32 %v4492, %v4716
        %v4718 = vpop.f32.mrb[0].mxu0
        %4719 = vmatprep.mubr.f32.mxu0 0.0
        %4720 = vmatmul.mubr.f32.gmra.mrb[0].mxu0 %v3448
        %v4721 = vpop.f32.mrb[0].mxu0
        %v4722 = vadd.f32 %v4497, %v4721
        %v4723 = vpop.f32.mrb[0].mxu0
        %4724 = vdwg.mxu0
        %v4725 = vld [vmem:[%s237] sm:$0xff]
        %v4726 = vld [vmem:[%s237 + $0x8] sm:$0xff]
        %v4727 = vld [vmem:[%s237 + $0x10] sm:$0xff]
        %v4728 = vld [vmem:[%s237 + $0x18] sm:$0xff]
        %v4729 = vld [vmem:[%s237 + $0x20] sm:$0xff]
        %v4730 = vld [vmem:[%s237 + $0x28] sm:$0xff]
        %v4731 = vld [vmem:[%s237 + $0x30] sm:$0xff]
        %v4732 = vld [vmem:[%s237 + $0x38] sm:$0xff]
        %v4733 = vld [vmem:[%s237 + $0x40] sm:$0xff]
        %v4734 = vld [vmem:[%s237 + $0x48] sm:$0xff]
        %v4735 = vld [vmem:[%s237 + $0x50] sm:$0xff]
        %v4736 = vld [vmem:[%s237 + $0x58] sm:$0xff]
        %v4737 = vld [vmem:[%s237 + $0x60] sm:$0xff]
        %v4738 = vld [vmem:[%s237 + $0x68] sm:$0xff]
        %v4739 = vld [vmem:[%s237 + $0x70] sm:$0xff]
        %v4740 = vld [vmem:[%s237 + $0x78] sm:$0xff]
        %v4741 = vld [vmem:[%s237 + $0x80] sm:$0xff]
        %v4742 = vld [vmem:[%s237 + $0x88] sm:$0xff]
        %v4743 = vld [vmem:[%s237 + $0x90] sm:$0xff]
        %v4744 = vld [vmem:[%s237 + $0x98] sm:$0xff]
        %v4745 = vld [vmem:[%s237 + $0xa0] sm:$0xff]
        %v4746 = vld [vmem:[%s237 + $0xa8] sm:$0xff]
        %v4747 = vld [vmem:[%s237 + $0xb0] sm:$0xff]
        %v4748 = vld [vmem:[%s237 + $0xb8] sm:$0xff]
        %v4749 = vld [vmem:[%s237 + $0xc0] sm:$0xff]
        %v4750 = vld [vmem:[%s237 + $0xc8] sm:$0xff]
        %v4751 = vld [vmem:[%s237 + $0xd0] sm:$0xff]
        %v4752 = vld [vmem:[%s237 + $0xd8] sm:$0xff]
        %v4753 = vld [vmem:[%s237 + $0xe0] sm:$0xff]
        %v4754 = vld [vmem:[%s237 + $0xe8] sm:$0xff]
        %v4755 = vld [vmem:[%s237 + $0xf0] sm:$0xff]
        %v4756 = vld [vmem:[%s237 + $0xf8] sm:$0xff]
        %v4757 = vadd.f32 %v4567, %v4725
        %v4758 = vadd.f32 %v4572, %v4726
        %v4759 = vadd.f32 %v4577, %v4727
        %v4760 = vadd.f32 %v4582, %v4728
        %v4761 = vadd.f32 %v4587, %v4729
        %v4762 = vadd.f32 %v4592, %v4730
        %v4763 = vadd.f32 %v4597, %v4731
        %v4764 = vadd.f32 %v4602, %v4732
        %v4765 = vadd.f32 %v4607, %v4733
        %v4766 = vadd.f32 %v4612, %v4734
        %v4767 = vadd.f32 %v4617, %v4735
        %v4768 = vadd.f32 %v4622, %v4736
        %v4769 = vadd.f32 %v4627, %v4737
        %v4770 = vadd.f32 %v4632, %v4738
        %v4771 = vadd.f32 %v4637, %v4739
        %v4772 = vadd.f32 %v4642, %v4740
        %v4773 = vadd.f32 %v4647, %v4741
        %v4774 = vadd.f32 %v4652, %v4742
        %v4775 = vadd.f32 %v4657, %v4743
        %v4776 = vadd.f32 %v4662, %v4744
        %v4777 = vadd.f32 %v4667, %v4745
        %v4778 = vadd.f32 %v4672, %v4746
        %v4779 = vadd.f32 %v4677, %v4747
        %v4780 = vadd.f32 %v4682, %v4748
        %v4781 = vadd.f32 %v4687, %v4749
        %v4782 = vadd.f32 %v4692, %v4750
        %v4783 = vadd.f32 %v4697, %v4751
        %v4784 = vadd.f32 %v4702, %v4752
        %v4785 = vadd.f32 %v4707, %v4753
        %v4786 = vadd.f32 %v4712, %v4754
        %v4787 = vadd.f32 %v4717, %v4755
        %v4788 = vadd.f32 %v4722, %v4756
        %v4789 = vmax.f32 %v4757, 0.0
        %v4790 = vmax.f32 %v4758, 0.0
        %v4791 = vmax.f32 %v4759, 0.0
        %v4792 = vmax.f32 %v4760, 0.0
        %v4793 = vmax.f32 %v4761, 0.0
        %v4794 = vmax.f32 %v4762, 0.0
        %v4795 = vmax.f32 %v4763, 0.0
        %v4796 = vmax.f32 %v4764, 0.0
        %v4797 = vmax.f32 %v4765, 0.0
        %v4798 = vmax.f32 %v4766, 0.0
        %v4799 = vmax.f32 %v4767, 0.0
        %v4800 = vmax.f32 %v4768, 0.0
        %v4801 = vmax.f32 %v4769, 0.0
        %v4802 = vmax.f32 %v4770, 0.0
        %v4803 = vmax.f32 %v4771, 0.0
        %v4804 = vmax.f32 %v4772, 0.0
        %v4805 = vmax.f32 %v4773, 0.0
        %v4806 = vmax.f32 %v4774, 0.0
        %v4807 = vmax.f32 %v4775, 0.0
        %v4808 = vmax.f32 %v4776, 0.0
        %v4809 = vmax.f32 %v4777, 0.0
        %v4810 = vmax.f32 %v4778, 0.0
        %v4811 = vmax.f32 %v4779, 0.0
        %v4812 = vmax.f32 %v4780, 0.0
        %v4813 = vmax.f32 %v4781, 0.0
        %v4814 = vmax.f32 %v4782, 0.0
        %v4815 = vmax.f32 %v4783, 0.0
        %v4816 = vmax.f32 %v4784, 0.0
        %v4817 = vmax.f32 %v4785, 0.0
        %v4818 = vmax.f32 %v4786, 0.0
        %v4819 = vmax.f32 %v4787, 0.0
        %v4820 = vmax.f32 %v4788, 0.0
        %4821 = vst [vmem:[%s271] sm:$0xff] %v4789
        %4822 = vst [vmem:[%s271 + $0x8] sm:$0xff] %v4790
        %4823 = vst [vmem:[%s271 + $0x10] sm:$0xff] %v4791
        %4824 = vst [vmem:[%s271 + $0x18] sm:$0xff] %v4792
        %4825 = vst [vmem:[%s271 + $0x20] sm:$0xff] %v4793
        %4826 = vst [vmem:[%s271 + $0x28] sm:$0xff] %v4794
        %4827 = vst [vmem:[%s271 + $0x30] sm:$0xff] %v4795
        %4828 = vst [vmem:[%s271 + $0x38] sm:$0xff] %v4796
        %4829 = vst [vmem:[%s271 + $0x40] sm:$0xff] %v4797
        %4830 = vst [vmem:[%s271 + $0x48] sm:$0xff] %v4798
        %4831 = vst [vmem:[%s271 + $0x50] sm:$0xff] %v4799
        %4832 = vst [vmem:[%s271 + $0x58] sm:$0xff] %v4800
        %4833 = vst [vmem:[%s271 + $0x60] sm:$0xff] %v4801
        %4834 = vst [vmem:[%s271 + $0x68] sm:$0xff] %v4802
        %4835 = vst [vmem:[%s271 + $0x70] sm:$0xff] %v4803
        %4836 = vst [vmem:[%s271 + $0x78] sm:$0xff] %v4804
        %4837 = vst [vmem:[%s271 + $0x80] sm:$0xff] %v4805
        %4838 = vst [vmem:[%s271 + $0x88] sm:$0xff] %v4806
        %4839 = vst [vmem:[%s271 + $0x90] sm:$0xff] %v4807
        %4840 = vst [vmem:[%s271 + $0x98] sm:$0xff] %v4808
        %4841 = vst [vmem:[%s271 + $0xa0] sm:$0xff] %v4809
        %4842 = vst [vmem:[%s271 + $0xa8] sm:$0xff] %v4810
        %4843 = vst [vmem:[%s271 + $0xb0] sm:$0xff] %v4811
        %4844 = vst [vmem:[%s271 + $0xb8] sm:$0xff] %v4812
        %4845 = vst [vmem:[%s271 + $0xc0] sm:$0xff] %v4813
        %4846 = vst [vmem:[%s271 + $0xc8] sm:$0xff] %v4814
        %4847 = vst [vmem:[%s271 + $0xd0] sm:$0xff] %v4815
        %4848 = vst [vmem:[%s271 + $0xd8] sm:$0xff] %v4816
        %4849 = vst [vmem:[%s271 + $0xe0] sm:$0xff] %v4817
        %4850 = vst [vmem:[%s271 + $0xe8] sm:$0xff] %v4818
        %4851 = vst [vmem:[%s271 + $0xf0] sm:$0xff] %v4819
        %4852 = vst [vmem:[%s271 + $0xf8] sm:$0xff] %v4820
        %s4853 = sand.u32 %s141, 1
        %s4854 = scalar_lea.sflag [#allocation6], %s4853
        %s4855 = sand.u32 %s141, 1
        %s4856 = smul.addr %s4855, 256
        %s4857 = scalar_lea.vmem [#allocation10], %s4856
        // Predicated region
        $region53: #{tpu_custom_call.1} parent=39 // pred_check
          %p4858 = pneg %p151
        $region54: #{tpu_custom_call.1} parent=39 // pred_check_branch
          %4860 = sbr.rel (%p4858) target = $region56
        $region55: #{tpu_custom_call.1} parent=39 // pred_region
          %s4862 = ssub.s32 4096, 4096
          %4863 = vsyncadd %s4854, %s4862
          %s4864 = smul.addr %s23, 32
          %s4865 = smul.addr %s4864, 128
          %s4866 = scalar_lea.hbm %s5, %s4865
          %s4867 = sshll.u32 %s4857, 4
          %s4868 = int_to_ptr.vmem [resolvable:$true] %s4867
          %4873 = dma.vmem_to_hbm [thread:$0]  %s4868, 4096, %s4866, %s4854, 128, 128, 8
        $region56: #{tpu_custom_call.1} parent=39 // pred_fallthru
          _
      $region40: #{tpu_custom_call.1} parent=5 // pred_fallthru
        _
      %p4874 = scmp.le.s32.totalorder 2, %s18
      // Predicated region
      $region57: #{tpu_custom_call.1} parent=5 // pred_check
        %p4875 = pneg %p4874
      $region58: #{tpu_custom_call.1} parent=5 // pred_check_branch
        %4877 = sbr.rel (%p4875) target = $region60
      $region59: #{tpu_custom_call.1} parent=5 // pred_region
        %s4878 = ssub.s32 %s18, 2
        // Predicated region
        $region61: #{tpu_custom_call.1} parent=59 // pred_check
          %p4879 = pneg %p157
        $region62: #{tpu_custom_call.1} parent=59 // pred_check_branch
          %4881 = sbr.rel (%p4879) target = $region64
        $region63: #{tpu_custom_call.1} parent=59 // pred_region
          %s4882 = sand.u32 %s142, 1
          %s4883 = scalar_lea.sflag [#allocation6], %s4882
          %s4884 = sand.u32 %s142, 1
          %s4885 = smul.addr %s4884, 256
          %s4886 = scalar_lea.vmem [#allocation10], %s4885
          %4887 = dma.done %s4883, 4096
        $region64: #{tpu_custom_call.1} parent=59 // pred_fallthru
          _
      $region60: #{tpu_custom_call.1} parent=5 // pred_fallthru
        _
    $region6: #{tpu_custom_call.1} parent=1 // loop_footer
      %s22 = sadd.s32 1, %s18
    $region7: #{tpu_custom_call.1} parent=1 // loop_footer_branch
      %17 = sbr.rel target = $region3
    $region8: #{tpu_custom_call.1} parent=1 // loop_exit
      _
    %4888 = vsyncpa [#allocation5], 1
    %s4889 = scalar_lea.sflag [#allocation5], 1
    %4890 = vsyncpa %s4889, 1
    %4891 = vsyncpa [#allocation8], 1
    %4892 = vsyncpa [#allocation6], 1
    %s4893 = scalar_lea.sflag [#allocation6], 1
    %4894 = vsyncpa %s4893, 1

</llo_original>
